<compile_context>
chip_gen: v7x
topology: tpu7x:2x2x1
jax: 0.10.0
libtpu: 0.0.40
codegen_flags: <defaults>
</compile_context>

<pallas_src>
import functools

import jax
import jax.numpy as jnp
from jax import lax
from jax.experimental import pallas as pl
from jax.experimental.pallas import tpu as pltpu


# ----------------------------------------------------------------------------
# Pallas kernels
# ----------------------------------------------------------------------------
def _mm_bias_act_kernel(x_ref, w_ref, b_ref, o_ref, *, relu):
    """o = [relu](x @ w + b); bf16 MXU matmul, f32 accumulate + epilogue."""
    acc = jnp.dot(x_ref[...], w_ref[...], preferred_element_type=jnp.float32)
    acc = acc + b_ref[...]
    if relu:
        acc = jnp.maximum(acc, 0.0)
    o_ref[...] = acc.astype(o_ref.dtype)


def _mm_bias_add_kernel(x_ref, w_ref, b_ref, r_ref, o_ref):
    """Fused FPN level: o = x @ w + b + r.

    r is the nearest-2x-upsampled coarser FPN output; the top-down add is an
    exact f32 VPU add (no f32 matmul through the bf16 MXU), so lateral conv +
    top-down add happen in a single kernel with a single HBM write.
    """
    acc = jnp.dot(x_ref[...], w_ref[...], preferred_element_type=jnp.float32)
    acc = acc + b_ref[...] + r_ref[...].astype(jnp.float32)
    o_ref[...] = acc.astype(o_ref.dtype)


# ----------------------------------------------------------------------------
# Matmul wrapper (tiling / specs)
# ----------------------------------------------------------------------------
# Per-grid-step VMEM budget (double-buffered estimate); conservative so the
# same code stays inside v7x's 32 MiB default scoped VMEM (64 MiB physical).
_VMEM_STEP_BUDGET = 12 * 1024 * 1024


def fused_matmul(x, w, b2, residual=None, *, relu=False, out_dtype=jnp.float32):
    """out = x @ w + b2 (+ residual) [+ ReLU].

    x:(M,K) bf16, w:(K,N) bf16, b2:(1,N) f32, residual:(M,N) f32 -> (M,N).

    Small problems run as ONE full-array block (grid (1,)): at these shapes
    the forward is launch/step-overhead bound (~0.35 us per grid step >> MXU
    time), so fewer/larger blocks win on every TPU generation.  Larger M is
    tiled remainder-safely (zero-pad to a multiple of tm) so per-step VMEM
    stays bounded on v7x.
    """
    M, K = x.shape
    _, N = w.shape
    xb = jnp.dtype(x.dtype).itemsize
    ob = jnp.dtype(out_dtype).itemsize
    rb = jnp.dtype(residual.dtype).itemsize if residual is not None else 0

    def step_bytes(tm):
        return 2 * (tm * K * xb + K * N * 2 + N * 4 + tm * N * (rb + ob))

    if step_bytes(M) <= _VMEM_STEP_BUDGET:
        tm = M                                   # single full block
    else:
        tm = 512
        while tm > 8 and step_bytes(tm) > _VMEM_STEP_BUDGET:
            tm //= 2
    mp = ((M + tm - 1) // tm) * tm
    if mp != M:
        x = jnp.pad(x, ((0, mp - M), (0, 0)))
        if residual is not None:
            residual = jnp.pad(residual, ((0, mp - M), (0, 0)))

    in_specs = [
        pl.BlockSpec((tm, K), lambda i: (i, 0)),
        pl.BlockSpec((K, N), lambda i: (0, 0)),
        pl.BlockSpec((1, N), lambda i: (0, 0)),
    ]
    args = [x, w, b2]
    if residual is None:
        kernel = functools.partial(_mm_bias_act_kernel, relu=relu)
    else:
        in_specs.append(pl.BlockSpec((tm, N), lambda i: (i, 0)))
        args.append(residual)
        kernel = _mm_bias_add_kernel

    # TODO(synk): add K-axis ("arbitrary") tiling with an f32 accumulator
    # scratch before scaling to detection-size inputs on v7x; K always fits
    # whole at these channel counts.
    out = pl.pallas_call(
        kernel,
        out_shape=jax.ShapeDtypeStruct((mp, N), out_dtype),
        grid_spec=pltpu.PrefetchScalarGridSpec(
            num_scalar_prefetch=0,
            grid=(mp // tm,),
            in_specs=in_specs,
            out_specs=pl.BlockSpec((tm, N), lambda i: (i, 0)),
        ),
        compiler_params=pltpu.CompilerParams(
            dimension_semantics=("parallel",)),
    )(*args)
    return out if mp == M else out[:M]


# ----------------------------------------------------------------------------
# Conv / FPN wrappers (layout glue in XLA, matmul in Pallas)
# ----------------------------------------------------------------------------
def conv3x3(x_nhwc, wm, b2, *, stride, relu, out_dtype=jnp.bfloat16):
    """3x3 conv, padding=1.  x bf16 NHWC; wm:(9*Cin, Cout) bf16 (packed at init)."""
    N, H, W, C = x_nhwc.shape
    cout = wm.shape[1]
    xp = jnp.pad(x_nhwc, ((0, 0), (1, 1), (1, 1), (0, 0)))
    Ho = (H + 2 - 3) // stride + 1
    Wo = (W + 2 - 3) // stride + 1
    taps = [xp[:, i:i + stride * (Ho - 1) + 1:stride,
               j:j + stride * (Wo - 1) + 1:stride, :]
            for i in range(3) for j in range(3)]
    # TODO(synk): im2col window extraction stays in XLA; a 9-tap in-kernel
    # accumulation needs strided sublane windows that BlockSpec cannot express
    # for stride-2 convs.  Negligible traffic at these spatial sizes.
    cols = jnp.concatenate(taps, axis=-1).reshape(N * Ho * Wo, 9 * C)
    out = fused_matmul(cols, wm, b2, relu=relu, out_dtype=out_dtype)
    return out.reshape(N, Ho, Wo, cout)


def fpn_level(feat_nhwc, wm, b2, td_out=None):
    """Lateral 1x1 conv, optionally fused with the nearest-2x top-down add."""
    N, H, W, C = feat_nhwc.shape
    cout = wm.shape[1]
    x = feat_nhwc.reshape(N * H * W, C)          # already bf16 from the trunk
    residual = None
    if td_out is not None:
        # Nearest-2x upsample of the coarser FPN output: cheap XLA broadcast
        # (linear in pixel count), added exactly in f32 on the VPU inside the
        # lateral-conv kernel.
        up = jnp.repeat(jnp.repeat(td_out, 2, axis=1), 2, axis=2)
        residual = up[:, :H, :W, :].reshape(N * H * W, cout)
    out = fused_matmul(x, wm, b2, residual=residual, relu=False,
                       out_dtype=jnp.float32)
    return out.reshape(N, H, W, cout)


# ----------------------------------------------------------------------------
# Parameters (deterministic, synthetic) — weight re-layout hoisted to init
# ----------------------------------------------------------------------------
def _init_conv(key, cout, cin, k):
    kw, kb = jax.random.split(key)
    fan_in = cin * k * k
    w = jax.random.normal(kw, (cout, cin, k, k), jnp.float32) / jnp.sqrt(
        jnp.float32(fan_in))
    b = 0.01 * jax.random.normal(kb, (cout,), jnp.float32)
    return w, b


def init_detection2d_params(key, backbone_channel_list=(64, 128, 256, 512),
                            in_channels=3, out_channels=1024):
    chans = list(backbone_channel_list)
    keys = jax.random.split(key, 1 + 2 * len(chans))
    raw = {"stem": _init_conv(keys[0], chans[0], in_channels, 3)}
    stages, prev = [], chans[0]
    for i, c in enumerate(chans):
        stages.append(_init_conv(keys[1 + i], c, prev, 3))
        prev = c
    raw["stages"] = stages
    raw["laterals"] = [
        _init_conv(keys[1 + len(chans) + i], out_channels, c, 1)
        for i, c in enumerate(chans)
    ]
    return raw


def _pack_conv3x3(w, b):
    cout, cin = w.shape[0], w.shape[1]
    wm = jnp.transpose(w, (2, 3, 1, 0)).reshape(9 * cin, cout).astype(jnp.bfloat16)
    return wm, b.reshape(1, cout).astype(jnp.float32)


def _pack_conv1x1(w, b):
    cout, cin = w.shape[0], w.shape[1]
    wm = jnp.transpose(w.reshape(cout, cin), (1, 0)).astype(jnp.bfloat16)
    return wm, b.reshape(1, cout).astype(jnp.float32)


def pack_detection2d_params(raw):
    return {
        "stem": _pack_conv3x3(*raw["stem"]),
        "stages": [_pack_conv3x3(w, b) for w, b in raw["stages"]],
        "laterals": [_pack_conv1x1(w, b) for w, b in raw["laterals"]],
    }


# ----------------------------------------------------------------------------
# Detection2d forward
# ----------------------------------------------------------------------------
def detection2d_forward(params, x_nchw):
    # NCHW -> NHWC (channels on the 128-lane axis); single bf16 cast of input.
    x = jnp.transpose(x_nchw, (0, 2, 3, 1)).astype(jnp.bfloat16)

    # --- ResNet2D trunk (simplified): stem + 4 stride-2 conv stages, ReLU ---
    wm, b2 = params["stem"]
    x = conv3x3(x, wm, b2, stride=2, relu=True)
    feats = []
    for wm, b2 in params["stages"]:
        x = conv3x3(x, wm, b2, stride=2, relu=True)
        feats.append(x)

    # --- FpnNeck2D: fused lateral 1x1 conv + nearest-2x top-down add ---
    n_lvl = len(feats)
    outs = [None] * n_lvl
    wm, b2 = params["laterals"][-1]
    outs[-1] = fpn_level(feats[-1], wm, b2)
    # TODO(synk): the three coarse levels (M=32/8/2 rows) could be folded into
    # a single pallas_call with block-diagonal weights to cut launch count.
    for i in range(n_lvl - 2, -1, -1):
        wm, b2 = params["laterals"][i]
        outs[i] = fpn_level(feats[i], wm, b2, td_out=outs[i + 1])

    # --- ImageEncoder2D output: FPN pyramid, back to NCHW (finest first) ---
    return [jnp.transpose(o, (0, 3, 1, 2)) for o in outs]


# ----------------------------------------------------------------------------
# Pure-XLA reference (same bf16-in / f32-accumulate pipeline) for unit check
# ----------------------------------------------------------------------------
def _ref_forward(raw, x_nchw):
    def conv(x, w, b, stride, relu):
        wk = jnp.transpose(w, (2, 3, 1, 0)).astype(jnp.bfloat16)
        y = lax.conv_general_dilated(
            x, wk, window_strides=(stride, stride), padding=((1, 1), (1, 1)),
            dimension_numbers=("NHWC", "HWIO", "NHWC"),
            preferred_element_type=jnp.float32)
        y = y + b
        if relu:
            y = jnp.maximum(y, 0.0)
        return y.astype(jnp.bfloat16)

    def lateral(f, w, b):
        wk = jnp.transpose(w[:, :, 0, 0], (1, 0)).astype(jnp.bfloat16)
        return jnp.einsum("nhwc,cd->nhwd", f, wk,
                          preferred_element_type=jnp.float32) + b

    x = jnp.transpose(x_nchw, (0, 2, 3, 1)).astype(jnp.bfloat16)
    w, b = raw["stem"]
    x = conv(x, w, b, 2, True)
    feats = []
    for w, b in raw["stages"]:
        x = conv(x, w, b, 2, True)
        feats.append(x)
    outs = [None] * len(feats)
    w, b = raw["laterals"][-1]
    outs[-1] = lateral(feats[-1], w, b)
    for i in range(len(feats) - 2, -1, -1):
        w, b = raw["laterals"][i]
        up = jnp.repeat(jnp.repeat(outs[i + 1], 2, axis=1), 2, axis=2)
        outs[i] = lateral(feats[i], w, b) + up
    return [jnp.transpose(o, (0, 3, 1, 2)) for o in outs]


if __name__ == "__main__":
    key = jax.random.PRNGKey(0)
    k_param, k_input = jax.random.split(key)
    raw = init_detection2d_params(k_param)
    params = pack_detection2d_params(raw)
    x = jax.random.normal(k_input, (2, 3, 32, 32), jnp.float32)  # NCHW

    fwd = jax.jit(detection2d_forward)
    outs = [jax.block_until_ready(o) for o in fwd(params, x)]

    # sanity: pyramid of 4 levels, 1024 channels, spatial 8/4/2/1
    expected = [(2, 1024, 8, 8), (2, 1024, 4, 4), (2, 1024, 2, 2), (2, 1024, 1, 1)]
    assert [tuple(o.shape) for o in outs] == expected
    assert all(bool(jnp.all(jnp.isfinite(o))) for o in outs)

    # unit check against lax.conv_general_dilated reference
    refs = jax.jit(_ref_forward)(raw, x)
    for o, r in zip(outs, refs):
        scale = float(jnp.max(jnp.abs(r))) + 1e-6
        err = float(jnp.max(jnp.abs(o.astype(jnp.float32) - r)))
        assert err <= 1e-2 * scale + 1e-3, (err, scale)

    print("KERNEL_OK")
</pallas_src>

<mosaic_0001>
module attributes {stable_mosaic.version = 11 : i64} {
  func.func @_mm_bias_act_kernel(%arg0: i32, %arg1: memref<512x27xbf16, #tpu.memory_space<vmem>>, %arg2: memref<27x64xbf16, #tpu.memory_space<vmem>>, %arg3: memref<1x64xf32, #tpu.memory_space<vmem>>, %arg4: memref<512x64xbf16, #tpu.memory_space<vmem>>) attributes {dimension_semantics = [#tpu.dimension_semantics<parallel>], iteration_bounds = array<i64: 1>, scalar_prefetch = 0 : i64, scratch_operands = 0 : i64, tpu.core_type = #tpu.core_type<tc>, window_params = [{transform_indices = @transform_0, window_bounds = array<i64: 512, 27>}, {pipeline_mode = #tpu.pipeline_mode<synchronous>, transform_indices = @transform_1, window_bounds = array<i64: 27, 64>}, {pipeline_mode = #tpu.pipeline_mode<synchronous>, transform_indices = @transform_2, window_bounds = array<i64: 1, 64>}, {transform_indices = @transform_3, window_bounds = array<i64: 512, 64>}]} {
    %c0 = arith.constant 0 : index
    %c0_0 = arith.constant 0 : index
    %0 = vector.load %arg1[%c0, %c0_0] : memref<512x27xbf16, #tpu.memory_space<vmem>>, vector<512x27xbf16>
    %c0_1 = arith.constant 0 : index
    %c0_2 = arith.constant 0 : index
    %1 = vector.load %arg2[%c0_1, %c0_2] : memref<27x64xbf16, #tpu.memory_space<vmem>>, vector<27x64xbf16>
    %cst = arith.constant dense<0.000000e+00> : vector<512x64xf32>
    %2 = tpu.matmul %0, %1, %cst {dimension_numbers = #tpu.dot_dimension_numbers<[1], [0], [0], [1], [0, 0, 1, 1], [], []>} : vector<512x27xbf16>, vector<27x64xbf16>, vector<512x64xf32> -> vector<512x64xf32>
    %c0_3 = arith.constant 0 : index
    %c0_4 = arith.constant 0 : index
    %3 = vector.load %arg3[%c0_3, %c0_4] : memref<1x64xf32, #tpu.memory_space<vmem>>, vector<1x64xf32>
    %4 = vector.broadcast %3 : vector<1x64xf32> to vector<512x64xf32>
    %5 = arith.addf %2, %4 : vector<512x64xf32>
    %cst_5 = arith.constant 0.000000e+00 : f32
    %6 = vector.broadcast %cst_5 : f32 to vector<512x64xf32>
    %7 = arith.maximumf %5, %6 : vector<512x64xf32>
    %8 = arith.truncf %7 : vector<512x64xf32> to vector<512x64xbf16>
    %c0_6 = arith.constant 0 : index
    %c0_7 = arith.constant 0 : index
    %9 = vector.load %arg4[%c0_6, %c0_7] : memref<512x64xbf16, #tpu.memory_space<vmem>>, vector<512x64xbf16>
    tpu.vector_store %arg4[%c0_6, %c0_7], %8 {strides = array<i32>} : memref<512x64xbf16, #tpu.memory_space<vmem>>, vector<512x64xbf16>,
    return
  }
  func.func @transform_0(%arg0: i32) -> (i32, i32) {
    %c0_i32 = arith.constant 0 : i32
    %c0_i32_0 = arith.constant 0 : i32
    return %arg0, %c0_i32 : i32, i32
  }
  func.func @transform_1(%arg0: i32) -> (i32, i32) {
    %c0_i32 = arith.constant 0 : i32
    %c0_i32_0 = arith.constant 0 : i32
    %c0_i32_1 = arith.constant 0 : i32
    return %c0_i32, %c0_i32_0 : i32, i32
  }
  func.func @transform_2(%arg0: i32) -> (i32, i32) {
    %c0_i32 = arith.constant 0 : i32
    %c0_i32_0 = arith.constant 0 : i32
    %c0_i32_1 = arith.constant 0 : i32
    return %c0_i32, %c0_i32_0 : i32, i32
  }
  func.func @transform_3(%arg0: i32) -> (i32, i32) {
    %c0_i32 = arith.constant 0 : i32
    %c0_i32_0 = arith.constant 0 : i32
    return %arg0, %c0_i32 : i32, i32
  }
}

module attributes {stable_mosaic.version = 11 : i64} {
  func.func @_mm_bias_act_kernel(%arg0: i32, %arg1: memref<128x576xbf16, #tpu.memory_space<vmem>>, %arg2: memref<576x64xbf16, #tpu.memory_space<vmem>>, %arg3: memref<1x64xf32, #tpu.memory_space<vmem>>, %arg4: memref<128x64xbf16, #tpu.memory_space<vmem>>) attributes {dimension_semantics = [#tpu.dimension_semantics<parallel>], iteration_bounds = array<i64: 1>, scalar_prefetch = 0 : i64, scratch_operands = 0 : i64, tpu.core_type = #tpu.core_type<tc>, window_params = [{transform_indices = @transform_0, window_bounds = array<i64: 128, 576>}, {pipeline_mode = #tpu.pipeline_mode<synchronous>, transform_indices = @transform_1, window_bounds = array<i64: 576, 64>}, {pipeline_mode = #tpu.pipeline_mode<synchronous>, transform_indices = @transform_2, window_bounds = array<i64: 1, 64>}, {transform_indices = @transform_3, window_bounds = array<i64: 128, 64>}]} {
    %c0 = arith.constant 0 : index
    %c0_0 = arith.constant 0 : index
    %0 = vector.load %arg1[%c0, %c0_0] : memref<128x576xbf16, #tpu.memory_space<vmem>>, vector<128x576xbf16>
    %c0_1 = arith.constant 0 : index
    %c0_2 = arith.constant 0 : index
    %1 = vector.load %arg2[%c0_1, %c0_2] : memref<576x64xbf16, #tpu.memory_space<vmem>>, vector<576x64xbf16>
    %cst = arith.constant dense<0.000000e+00> : vector<128x64xf32>
    %2 = tpu.matmul %0, %1, %cst {dimension_numbers = #tpu.dot_dimension_numbers<[1], [0], [0], [1], [0, 0, 1, 1], [], []>} : vector<128x576xbf16>, vector<576x64xbf16>, vector<128x64xf32> -> vector<128x64xf32>
    %c0_3 = arith.constant 0 : index
    %c0_4 = arith.constant 0 : index
    %3 = vector.load %arg3[%c0_3, %c0_4] : memref<1x64xf32, #tpu.memory_space<vmem>>, vector<1x64xf32>
    %4 = vector.broadcast %3 : vector<1x64xf32> to vector<128x64xf32>
    %5 = arith.addf %2, %4 : vector<128x64xf32>
    %cst_5 = arith.constant 0.000000e+00 : f32
    %6 = vector.broadcast %cst_5 : f32 to vector<128x64xf32>
    %7 = arith.maximumf %5, %6 : vector<128x64xf32>
    %8 = arith.truncf %7 : vector<128x64xf32> to vector<128x64xbf16>
    %c0_6 = arith.constant 0 : index
    %c0_7 = arith.constant 0 : index
    %9 = vector.load %arg4[%c0_6, %c0_7] : memref<128x64xbf16, #tpu.memory_space<vmem>>, vector<128x64xbf16>
    tpu.vector_store %arg4[%c0_6, %c0_7], %8 {strides = array<i32>} : memref<128x64xbf16, #tpu.memory_space<vmem>>, vector<128x64xbf16>,
    return
  }
  func.func @transform_0(%arg0: i32) -> (i32, i32) {
    %c0_i32 = arith.constant 0 : i32
    %c0_i32_0 = arith.constant 0 : i32
    return %arg0, %c0_i32 : i32, i32
  }
  func.func @transform_1(%arg0: i32) -> (i32, i32) {
    %c0_i32 = arith.constant 0 : i32
    %c0_i32_0 = arith.constant 0 : i32
    %c0_i32_1 = arith.constant 0 : i32
    return %c0_i32, %c0_i32_0 : i32, i32
  }
  func.func @transform_2(%arg0: i32) -> (i32, i32) {
    %c0_i32 = arith.constant 0 : i32
    %c0_i32_0 = arith.constant 0 : i32
    %c0_i32_1 = arith.constant 0 : i32
    return %c0_i32, %c0_i32_0 : i32, i32
  }
  func.func @transform_3(%arg0: i32) -> (i32, i32) {
    %c0_i32 = arith.constant 0 : i32
    %c0_i32_0 = arith.constant 0 : i32
    return %arg0, %c0_i32 : i32, i32
  }
}

module attributes {stable_mosaic.version = 11 : i64} {
  func.func @_mm_bias_act_kernel(%arg0: i32, %arg1: memref<32x576xbf16, #tpu.memory_space<vmem>>, %arg2: memref<576x128xbf16, #tpu.memory_space<vmem>>, %arg3: memref<1x128xf32, #tpu.memory_space<vmem>>, %arg4: memref<32x128xbf16, #tpu.memory_space<vmem>>) attributes {dimension_semantics = [#tpu.dimension_semantics<parallel>], iteration_bounds = array<i64: 1>, scalar_prefetch = 0 : i64, scratch_operands = 0 : i64, tpu.core_type = #tpu.core_type<tc>, window_params = [{transform_indices = @transform_0, window_bounds = array<i64: 32, 576>}, {pipeline_mode = #tpu.pipeline_mode<synchronous>, transform_indices = @transform_1, window_bounds = array<i64: 576, 128>}, {pipeline_mode = #tpu.pipeline_mode<synchronous>, transform_indices = @transform_2, window_bounds = array<i64: 1, 128>}, {transform_indices = @transform_3, window_bounds = array<i64: 32, 128>}]} {
    %c0 = arith.constant 0 : index
    %c0_0 = arith.constant 0 : index
    %0 = vector.load %arg1[%c0, %c0_0] : memref<32x576xbf16, #tpu.memory_space<vmem>>, vector<32x576xbf16>
    %c0_1 = arith.constant 0 : index
    %c0_2 = arith.constant 0 : index
    %1 = vector.load %arg2[%c0_1, %c0_2] : memref<576x128xbf16, #tpu.memory_space<vmem>>, vector<576x128xbf16>
    %cst = arith.constant dense<0.000000e+00> : vector<32x128xf32>
    %2 = tpu.matmul %0, %1, %cst {dimension_numbers = #tpu.dot_dimension_numbers<[1], [0], [0], [1], [0, 0, 1, 1], [], []>} : vector<32x576xbf16>, vector<576x128xbf16>, vector<32x128xf32> -> vector<32x128xf32>
    %c0_3 = arith.constant 0 : index
    %c0_4 = arith.constant 0 : index
    %3 = vector.load %arg3[%c0_3, %c0_4] : memref<1x128xf32, #tpu.memory_space<vmem>>, vector<1x128xf32>
    %4 = vector.broadcast %3 : vector<1x128xf32> to vector<32x128xf32>
    %5 = arith.addf %2, %4 : vector<32x128xf32>
    %cst_5 = arith.constant 0.000000e+00 : f32
    %6 = vector.broadcast %cst_5 : f32 to vector<32x128xf32>
    %7 = arith.maximumf %5, %6 : vector<32x128xf32>
    %8 = arith.truncf %7 : vector<32x128xf32> to vector<32x128xbf16>
    %c0_6 = arith.constant 0 : index
    %c0_7 = arith.constant 0 : index
    %9 = vector.load %arg4[%c0_6, %c0_7] : memref<32x128xbf16, #tpu.memory_space<vmem>>, vector<32x128xbf16>
    tpu.vector_store %arg4[%c0_6, %c0_7], %8 {strides = array<i32>} : memref<32x128xbf16, #tpu.memory_space<vmem>>, vector<32x128xbf16>,
    return
  }
  func.func @transform_0(%arg0: i32) -> (i32, i32) {
    %c0_i32 = arith.constant 0 : i32
    %c0_i32_0 = arith.constant 0 : i32
    return %arg0, %c0_i32 : i32, i32
  }
  func.func @transform_1(%arg0: i32) -> (i32, i32) {
    %c0_i32 = arith.constant 0 : i32
    %c0_i32_0 = arith.constant 0 : i32
    %c0_i32_1 = arith.constant 0 : i32
    return %c0_i32, %c0_i32_0 : i32, i32
  }
  func.func @transform_2(%arg0: i32) -> (i32, i32) {
    %c0_i32 = arith.constant 0 : i32
    %c0_i32_0 = arith.constant 0 : i32
    %c0_i32_1 = arith.constant 0 : i32
    return %c0_i32, %c0_i32_0 : i32, i32
  }
  func.func @transform_3(%arg0: i32) -> (i32, i32) {
    %c0_i32 = arith.constant 0 : i32
    %c0_i32_0 = arith.constant 0 : i32
    return %arg0, %c0_i32 : i32, i32
  }
}

module attributes {stable_mosaic.version = 11 : i64} {
  func.func @_mm_bias_act_kernel(%arg0: i32, %arg1: memref<8x1152xbf16, #tpu.memory_space<vmem>>, %arg2: memref<1152x256xbf16, #tpu.memory_space<vmem>>, %arg3: memref<1x256xf32, #tpu.memory_space<vmem>>, %arg4: memref<8x256xbf16, #tpu.memory_space<vmem>>) attributes {dimension_semantics = [#tpu.dimension_semantics<parallel>], iteration_bounds = array<i64: 1>, scalar_prefetch = 0 : i64, scratch_operands = 0 : i64, tpu.core_type = #tpu.core_type<tc>, window_params = [{transform_indices = @transform_0, window_bounds = array<i64: 8, 1152>}, {pipeline_mode = #tpu.pipeline_mode<synchronous>, transform_indices = @transform_1, window_bounds = array<i64: 1152, 256>}, {pipeline_mode = #tpu.pipeline_mode<synchronous>, transform_indices = @transform_2, window_bounds = array<i64: 1, 256>}, {transform_indices = @transform_3, window_bounds = array<i64: 8, 256>}]} {
    %c0 = arith.constant 0 : index
    %c0_0 = arith.constant 0 : index
    %0 = vector.load %arg1[%c0, %c0_0] : memref<8x1152xbf16, #tpu.memory_space<vmem>>, vector<8x1152xbf16>
    %c0_1 = arith.constant 0 : index
    %c0_2 = arith.constant 0 : index
    %1 = vector.load %arg2[%c0_1, %c0_2] : memref<1152x256xbf16, #tpu.memory_space<vmem>>, vector<1152x256xbf16>
    %cst = arith.constant dense<0.000000e+00> : vector<8x256xf32>
    %2 = tpu.matmul %0, %1, %cst {dimension_numbers = #tpu.dot_dimension_numbers<[1], [0], [0], [1], [0, 0, 1, 1], [], []>} : vector<8x1152xbf16>, vector<1152x256xbf16>, vector<8x256xf32> -> vector<8x256xf32>
    %c0_3 = arith.constant 0 : index
    %c0_4 = arith.constant 0 : index
    %3 = vector.load %arg3[%c0_3, %c0_4] : memref<1x256xf32, #tpu.memory_space<vmem>>, vector<1x256xf32>
    %4 = vector.broadcast %3 : vector<1x256xf32> to vector<8x256xf32>
    %5 = arith.addf %2, %4 : vector<8x256xf32>
    %cst_5 = arith.constant 0.000000e+00 : f32
    %6 = vector.broadcast %cst_5 : f32 to vector<8x256xf32>
    %7 = arith.maximumf %5, %6 : vector<8x256xf32>
    %8 = arith.truncf %7 : vector<8x256xf32> to vector<8x256xbf16>
    %c0_6 = arith.constant 0 : index
    %c0_7 = arith.constant 0 : index
    %9 = vector.load %arg4[%c0_6, %c0_7] : memref<8x256xbf16, #tpu.memory_space<vmem>>, vector<8x256xbf16>
    tpu.vector_store %arg4[%c0_6, %c0_7], %8 {strides = array<i32>} : memref<8x256xbf16, #tpu.memory_space<vmem>>, vector<8x256xbf16>,
    return
  }
  func.func @transform_0(%arg0: i32) -> (i32, i32) {
    %c0_i32 = arith.constant 0 : i32
    %c0_i32_0 = arith.constant 0 : i32
    return %arg0, %c0_i32 : i32, i32
  }
  func.func @transform_1(%arg0: i32) -> (i32, i32) {
    %c0_i32 = arith.constant 0 : i32
    %c0_i32_0 = arith.constant 0 : i32
    %c0_i32_1 = arith.constant 0 : i32
    return %c0_i32, %c0_i32_0 : i32, i32
  }
  func.func @transform_2(%arg0: i32) -> (i32, i32) {
    %c0_i32 = arith.constant 0 : i32
    %c0_i32_0 = arith.constant 0 : i32
    %c0_i32_1 = arith.constant 0 : i32
    return %c0_i32, %c0_i32_0 : i32, i32
  }
  func.func @transform_3(%arg0: i32) -> (i32, i32) {
    %c0_i32 = arith.constant 0 : i32
    %c0_i32_0 = arith.constant 0 : i32
    return %arg0, %c0_i32 : i32, i32
  }
}

module attributes {stable_mosaic.version = 11 : i64} {
  func.func @_mm_bias_act_kernel(%arg0: i32, %arg1: memref<2x2304xbf16, #tpu.memory_space<vmem>>, %arg2: memref<2304x512xbf16, #tpu.memory_space<vmem>>, %arg3: memref<1x512xf32, #tpu.memory_space<vmem>>, %arg4: memref<2x512xbf16, #tpu.memory_space<vmem>>) attributes {dimension_semantics = [#tpu.dimension_semantics<parallel>], iteration_bounds = array<i64: 1>, scalar_prefetch = 0 : i64, scratch_operands = 0 : i64, tpu.core_type = #tpu.core_type<tc>, window_params = [{transform_indices = @transform_0, window_bounds = array<i64: 2, 2304>}, {pipeline_mode = #tpu.pipeline_mode<synchronous>, transform_indices = @transform_1, window_bounds = array<i64: 2304, 512>}, {pipeline_mode = #tpu.pipeline_mode<synchronous>, transform_indices = @transform_2, window_bounds = array<i64: 1, 512>}, {transform_indices = @transform_3, window_bounds = array<i64: 2, 512>}]} {
    %c0 = arith.constant 0 : index
    %c0_0 = arith.constant 0 : index
    %0 = vector.load %arg1[%c0, %c0_0] : memref<2x2304xbf16, #tpu.memory_space<vmem>>, vector<2x2304xbf16>
    %c0_1 = arith.constant 0 : index
    %c0_2 = arith.constant 0 : index
    %1 = vector.load %arg2[%c0_1, %c0_2] : memref<2304x512xbf16, #tpu.memory_space<vmem>>, vector<2304x512xbf16>
    %cst = arith.constant dense<0.000000e+00> : vector<2x512xf32>
    %2 = tpu.matmul %0, %1, %cst {dimension_numbers = #tpu.dot_dimension_numbers<[1], [0], [0], [1], [0, 0, 1, 1], [], []>} : vector<2x2304xbf16>, vector<2304x512xbf16>, vector<2x512xf32> -> vector<2x512xf32>
    %c0_3 = arith.constant 0 : index
    %c0_4 = arith.constant 0 : index
    %3 = vector.load %arg3[%c0_3, %c0_4] : memref<1x512xf32, #tpu.memory_space<vmem>>, vector<1x512xf32>
    %4 = vector.broadcast %3 : vector<1x512xf32> to vector<2x512xf32>
    %5 = arith.addf %2, %4 : vector<2x512xf32>
    %cst_5 = arith.constant 0.000000e+00 : f32
    %6 = vector.broadcast %cst_5 : f32 to vector<2x512xf32>
    %7 = arith.maximumf %5, %6 : vector<2x512xf32>
    %8 = arith.truncf %7 : vector<2x512xf32> to vector<2x512xbf16>
    %c0_6 = arith.constant 0 : index
    %c0_7 = arith.constant 0 : index
    %9 = vector.load %arg4[%c0_6, %c0_7] : memref<2x512xbf16, #tpu.memory_space<vmem>>, vector<2x512xbf16>
    tpu.vector_store %arg4[%c0_6, %c0_7], %8 {strides = array<i32>} : memref<2x512xbf16, #tpu.memory_space<vmem>>, vector<2x512xbf16>,
    return
  }
  func.func @transform_0(%arg0: i32) -> (i32, i32) {
    %c0_i32 = arith.constant 0 : i32
    %c0_i32_0 = arith.constant 0 : i32
    return %arg0, %c0_i32 : i32, i32
  }
  func.func @transform_1(%arg0: i32) -> (i32, i32) {
    %c0_i32 = arith.constant 0 : i32
    %c0_i32_0 = arith.constant 0 : i32
    %c0_i32_1 = arith.constant 0 : i32
    return %c0_i32, %c0_i32_0 : i32, i32
  }
  func.func @transform_2(%arg0: i32) -> (i32, i32) {
    %c0_i32 = arith.constant 0 : i32
    %c0_i32_0 = arith.constant 0 : i32
    %c0_i32_1 = arith.constant 0 : i32
    return %c0_i32, %c0_i32_0 : i32, i32
  }
  func.func @transform_3(%arg0: i32) -> (i32, i32) {
    %c0_i32 = arith.constant 0 : i32
    %c0_i32_0 = arith.constant 0 : i32
    return %arg0, %c0_i32 : i32, i32
  }
}

module attributes {stable_mosaic.version = 11 : i64} {
  func.func @_mm_bias_act_kernel(%arg0: i32, %arg1: memref<2x512xbf16, #tpu.memory_space<vmem>>, %arg2: memref<512x1024xbf16, #tpu.memory_space<vmem>>, %arg3: memref<1x1024xf32, #tpu.memory_space<vmem>>, %arg4: memref<2x1024xf32, #tpu.memory_space<vmem>>) attributes {dimension_semantics = [#tpu.dimension_semantics<parallel>], iteration_bounds = array<i64: 1>, scalar_prefetch = 0 : i64, scratch_operands = 0 : i64, tpu.core_type = #tpu.core_type<tc>, window_params = [{transform_indices = @transform_0, window_bounds = array<i64: 2, 512>}, {pipeline_mode = #tpu.pipeline_mode<synchronous>, transform_indices = @transform_1, window_bounds = array<i64: 512, 1024>}, {pipeline_mode = #tpu.pipeline_mode<synchronous>, transform_indices = @transform_2, window_bounds = array<i64: 1, 1024>}, {transform_indices = @transform_3, window_bounds = array<i64: 2, 1024>}]} {
    %c0 = arith.constant 0 : index
    %c0_0 = arith.constant 0 : index
    %0 = vector.load %arg1[%c0, %c0_0] : memref<2x512xbf16, #tpu.memory_space<vmem>>, vector<2x512xbf16>
    %c0_1 = arith.constant 0 : index
    %c0_2 = arith.constant 0 : index
    %1 = vector.load %arg2[%c0_1, %c0_2] : memref<512x1024xbf16, #tpu.memory_space<vmem>>, vector<512x1024xbf16>
    %cst = arith.constant dense<0.000000e+00> : vector<2x1024xf32>
    %2 = tpu.matmul %0, %1, %cst {dimension_numbers = #tpu.dot_dimension_numbers<[1], [0], [0], [1], [0, 0, 1, 1], [], []>} : vector<2x512xbf16>, vector<512x1024xbf16>, vector<2x1024xf32> -> vector<2x1024xf32>
    %c0_3 = arith.constant 0 : index
    %c0_4 = arith.constant 0 : index
    %3 = vector.load %arg3[%c0_3, %c0_4] : memref<1x1024xf32, #tpu.memory_space<vmem>>, vector<1x1024xf32>
    %4 = vector.broadcast %3 : vector<1x1024xf32> to vector<2x1024xf32>
    %5 = arith.addf %2, %4 : vector<2x1024xf32>
    %c0_5 = arith.constant 0 : index
    %c0_6 = arith.constant 0 : index
    %6 = vector.load %arg4[%c0_5, %c0_6] : memref<2x1024xf32, #tpu.memory_space<vmem>>, vector<2x1024xf32>
    tpu.vector_store %arg4[%c0_5, %c0_6], %5 {strides = array<i32>} : memref<2x1024xf32, #tpu.memory_space<vmem>>, vector<2x1024xf32>,
    return
  }
  func.func @transform_0(%arg0: i32) -> (i32, i32) {
    %c0_i32 = arith.constant 0 : i32
    %c0_i32_0 = arith.constant 0 : i32
    return %arg0, %c0_i32 : i32, i32
  }
  func.func @transform_1(%arg0: i32) -> (i32, i32) {
    %c0_i32 = arith.constant 0 : i32
    %c0_i32_0 = arith.constant 0 : i32
    %c0_i32_1 = arith.constant 0 : i32
    return %c0_i32, %c0_i32_0 : i32, i32
  }
  func.func @transform_2(%arg0: i32) -> (i32, i32) {
    %c0_i32 = arith.constant 0 : i32
    %c0_i32_0 = arith.constant 0 : i32
    %c0_i32_1 = arith.constant 0 : i32
    return %c0_i32, %c0_i32_0 : i32, i32
  }
  func.func @transform_3(%arg0: i32) -> (i32, i32) {
    %c0_i32 = arith.constant 0 : i32
    %c0_i32_0 = arith.constant 0 : i32
    return %arg0, %c0_i32 : i32, i32
  }
}

module attributes {stable_mosaic.version = 11 : i64} {
  func.func @_mm_bias_add_kernel(%arg0: i32, %arg1: memref<8x256xbf16, #tpu.memory_space<vmem>>, %arg2: memref<256x1024xbf16, #tpu.memory_space<vmem>>, %arg3: memref<1x1024xf32, #tpu.memory_space<vmem>>, %arg4: memref<8x1024xf32, #tpu.memory_space<vmem>>, %arg5: memref<8x1024xf32, #tpu.memory_space<vmem>>) attributes {dimension_semantics = [#tpu.dimension_semantics<parallel>], iteration_bounds = array<i64: 1>, scalar_prefetch = 0 : i64, scratch_operands = 0 : i64, tpu.core_type = #tpu.core_type<tc>, window_params = [{transform_indices = @transform_0, window_bounds = array<i64: 8, 256>}, {pipeline_mode = #tpu.pipeline_mode<synchronous>, transform_indices = @transform_1, window_bounds = array<i64: 256, 1024>}, {pipeline_mode = #tpu.pipeline_mode<synchronous>, transform_indices = @transform_2, window_bounds = array<i64: 1, 1024>}, {transform_indices = @transform_3, window_bounds = array<i64: 8, 1024>}, {transform_indices = @transform_4, window_bounds = array<i64: 8, 1024>}]} {
    %c0 = arith.constant 0 : index
    %c0_0 = arith.constant 0 : index
    %0 = vector.load %arg1[%c0, %c0_0] : memref<8x256xbf16, #tpu.memory_space<vmem>>, vector<8x256xbf16>
    %c0_1 = arith.constant 0 : index
    %c0_2 = arith.constant 0 : index
    %1 = vector.load %arg2[%c0_1, %c0_2] : memref<256x1024xbf16, #tpu.memory_space<vmem>>, vector<256x1024xbf16>
    %cst = arith.constant dense<0.000000e+00> : vector<8x1024xf32>
    %2 = tpu.matmul %0, %1, %cst {dimension_numbers = #tpu.dot_dimension_numbers<[1], [0], [0], [1], [0, 0, 1, 1], [], []>} : vector<8x256xbf16>, vector<256x1024xbf16>, vector<8x1024xf32> -> vector<8x1024xf32>
    %c0_3 = arith.constant 0 : index
    %c0_4 = arith.constant 0 : index
    %3 = vector.load %arg3[%c0_3, %c0_4] : memref<1x1024xf32, #tpu.memory_space<vmem>>, vector<1x1024xf32>
    %4 = vector.broadcast %3 : vector<1x1024xf32> to vector<8x1024xf32>
    %5 = arith.addf %2, %4 : vector<8x1024xf32>
    %c0_5 = arith.constant 0 : index
    %c0_6 = arith.constant 0 : index
    %6 = vector.load %arg4[%c0_5, %c0_6] : memref<8x1024xf32, #tpu.memory_space<vmem>>, vector<8x1024xf32>
    %7 = arith.addf %5, %6 : vector<8x1024xf32>
    %c0_7 = arith.constant 0 : index
    %c0_8 = arith.constant 0 : index
    %8 = vector.load %arg5[%c0_7, %c0_8] : memref<8x1024xf32, #tpu.memory_space<vmem>>, vector<8x1024xf32>
    tpu.vector_store %arg5[%c0_7, %c0_8], %7 {strides = array<i32>} : memref<8x1024xf32, #tpu.memory_space<vmem>>, vector<8x1024xf32>,
    return
  }
  func.func @transform_0(%arg0: i32) -> (i32, i32) {
    %c0_i32 = arith.constant 0 : i32
    %c0_i32_0 = arith.constant 0 : i32
    return %arg0, %c0_i32 : i32, i32
  }
  func.func @transform_1(%arg0: i32) -> (i32, i32) {
    %c0_i32 = arith.constant 0 : i32
    %c0_i32_0 = arith.constant 0 : i32
    %c0_i32_1 = arith.constant 0 : i32
    return %c0_i32, %c0_i32_0 : i32, i32
  }
  func.func @transform_2(%arg0: i32) -> (i32, i32) {
    %c0_i32 = arith.constant 0 : i32
    %c0_i32_0 = arith.constant 0 : i32
    %c0_i32_1 = arith.constant 0 : i32
    return %c0_i32, %c0_i32_0 : i32, i32
  }
  func.func @transform_3(%arg0: i32) -> (i32, i32) {
    %c0_i32 = arith.constant 0 : i32
    %c0_i32_0 = arith.constant 0 : i32
    return %arg0, %c0_i32 : i32, i32
  }
  func.func @transform_4(%arg0: i32) -> (i32, i32) {
    %c0_i32 = arith.constant 0 : i32
    %c0_i32_0 = arith.constant 0 : i32
    return %arg0, %c0_i32 : i32, i32
  }
}

module attributes {stable_mosaic.version = 11 : i64} {
  func.func @_mm_bias_add_kernel(%arg0: i32, %arg1: memref<32x128xbf16, #tpu.memory_space<vmem>>, %arg2: memref<128x1024xbf16, #tpu.memory_space<vmem>>, %arg3: memref<1x1024xf32, #tpu.memory_space<vmem>>, %arg4: memref<32x1024xf32, #tpu.memory_space<vmem>>, %arg5: memref<32x1024xf32, #tpu.memory_space<vmem>>) attributes {dimension_semantics = [#tpu.dimension_semantics<parallel>], iteration_bounds = array<i64: 1>, scalar_prefetch = 0 : i64, scratch_operands = 0 : i64, tpu.core_type = #tpu.core_type<tc>, window_params = [{transform_indices = @transform_0, window_bounds = array<i64: 32, 128>}, {pipeline_mode = #tpu.pipeline_mode<synchronous>, transform_indices = @transform_1, window_bounds = array<i64: 128, 1024>}, {pipeline_mode = #tpu.pipeline_mode<synchronous>, transform_indices = @transform_2, window_bounds = array<i64: 1, 1024>}, {transform_indices = @transform_3, window_bounds = array<i64: 32, 1024>}, {transform_indices = @transform_4, window_bounds = array<i64: 32, 1024>}]} {
    %c0 = arith.constant 0 : index
    %c0_0 = arith.constant 0 : index
    %0 = vector.load %arg1[%c0, %c0_0] : memref<32x128xbf16, #tpu.memory_space<vmem>>, vector<32x128xbf16>
    %c0_1 = arith.constant 0 : index
    %c0_2 = arith.constant 0 : index
    %1 = vector.load %arg2[%c0_1, %c0_2] : memref<128x1024xbf16, #tpu.memory_space<vmem>>, vector<128x1024xbf16>
    %cst = arith.constant dense<0.000000e+00> : vector<32x1024xf32>
    %2 = tpu.matmul %0, %1, %cst {dimension_numbers = #tpu.dot_dimension_numbers<[1], [0], [0], [1], [0, 0, 1, 1], [], []>} : vector<32x128xbf16>, vector<128x1024xbf16>, vector<32x1024xf32> -> vector<32x1024xf32>
    %c0_3 = arith.constant 0 : index
    %c0_4 = arith.constant 0 : index
    %3 = vector.load %arg3[%c0_3, %c0_4] : memref<1x1024xf32, #tpu.memory_space<vmem>>, vector<1x1024xf32>
    %4 = vector.broadcast %3 : vector<1x1024xf32> to vector<32x1024xf32>
    %5 = arith.addf %2, %4 : vector<32x1024xf32>
    %c0_5 = arith.constant 0 : index
    %c0_6 = arith.constant 0 : index
    %6 = vector.load %arg4[%c0_5, %c0_6] : memref<32x1024xf32, #tpu.memory_space<vmem>>, vector<32x1024xf32>
    %7 = arith.addf %5, %6 : vector<32x1024xf32>
    %c0_7 = arith.constant 0 : index
    %c0_8 = arith.constant 0 : index
    %8 = vector.load %arg5[%c0_7, %c0_8] : memref<32x1024xf32, #tpu.memory_space<vmem>>, vector<32x1024xf32>
    tpu.vector_store %arg5[%c0_7, %c0_8], %7 {strides = array<i32>} : memref<32x1024xf32, #tpu.memory_space<vmem>>, vector<32x1024xf32>,
    return
  }
  func.func @transform_0(%arg0: i32) -> (i32, i32) {
    %c0_i32 = arith.constant 0 : i32
    %c0_i32_0 = arith.constant 0 : i32
    return %arg0, %c0_i32 : i32, i32
  }
  func.func @transform_1(%arg0: i32) -> (i32, i32) {
    %c0_i32 = arith.constant 0 : i32
    %c0_i32_0 = arith.constant 0 : i32
    %c0_i32_1 = arith.constant 0 : i32
    return %c0_i32, %c0_i32_0 : i32, i32
  }
  func.func @transform_2(%arg0: i32) -> (i32, i32) {
    %c0_i32 = arith.constant 0 : i32
    %c0_i32_0 = arith.constant 0 : i32
    %c0_i32_1 = arith.constant 0 : i32
    return %c0_i32, %c0_i32_0 : i32, i32
  }
  func.func @transform_3(%arg0: i32) -> (i32, i32) {
    %c0_i32 = arith.constant 0 : i32
    %c0_i32_0 = arith.constant 0 : i32
    return %arg0, %c0_i32 : i32, i32
  }
  func.func @transform_4(%arg0: i32) -> (i32, i32) {
    %c0_i32 = arith.constant 0 : i32
    %c0_i32_0 = arith.constant 0 : i32
    return %arg0, %c0_i32 : i32, i32
  }
}

module attributes {stable_mosaic.version = 11 : i64} {
  func.func @_mm_bias_add_kernel(%arg0: i32, %arg1: memref<128x64xbf16, #tpu.memory_space<vmem>>, %arg2: memref<64x1024xbf16, #tpu.memory_space<vmem>>, %arg3: memref<1x1024xf32, #tpu.memory_space<vmem>>, %arg4: memref<128x1024xf32, #tpu.memory_space<vmem>>, %arg5: memref<128x1024xf32, #tpu.memory_space<vmem>>) attributes {dimension_semantics = [#tpu.dimension_semantics<parallel>], iteration_bounds = array<i64: 1>, scalar_prefetch = 0 : i64, scratch_operands = 0 : i64, tpu.core_type = #tpu.core_type<tc>, window_params = [{transform_indices = @transform_0, window_bounds = array<i64: 128, 64>}, {pipeline_mode = #tpu.pipeline_mode<synchronous>, transform_indices = @transform_1, window_bounds = array<i64: 64, 1024>}, {pipeline_mode = #tpu.pipeline_mode<synchronous>, transform_indices = @transform_2, window_bounds = array<i64: 1, 1024>}, {transform_indices = @transform_3, window_bounds = array<i64: 128, 1024>}, {transform_indices = @transform_4, window_bounds = array<i64: 128, 1024>}]} {
    %c0 = arith.constant 0 : index
    %c0_0 = arith.constant 0 : index
    %0 = vector.load %arg1[%c0, %c0_0] : memref<128x64xbf16, #tpu.memory_space<vmem>>, vector<128x64xbf16>
    %c0_1 = arith.constant 0 : index
    %c0_2 = arith.constant 0 : index
    %1 = vector.load %arg2[%c0_1, %c0_2] : memref<64x1024xbf16, #tpu.memory_space<vmem>>, vector<64x1024xbf16>
    %cst = arith.constant dense<0.000000e+00> : vector<128x1024xf32>
    %2 = tpu.matmul %0, %1, %cst {dimension_numbers = #tpu.dot_dimension_numbers<[1], [0], [0], [1], [0, 0, 1, 1], [], []>} : vector<128x64xbf16>, vector<64x1024xbf16>, vector<128x1024xf32> -> vector<128x1024xf32>
    %c0_3 = arith.constant 0 : index
    %c0_4 = arith.constant 0 : index
    %3 = vector.load %arg3[%c0_3, %c0_4] : memref<1x1024xf32, #tpu.memory_space<vmem>>, vector<1x1024xf32>
    %4 = vector.broadcast %3 : vector<1x1024xf32> to vector<128x1024xf32>
    %5 = arith.addf %2, %4 : vector<128x1024xf32>
    %c0_5 = arith.constant 0 : index
    %c0_6 = arith.constant 0 : index
    %6 = vector.load %arg4[%c0_5, %c0_6] : memref<128x1024xf32, #tpu.memory_space<vmem>>, vector<128x1024xf32>
    %7 = arith.addf %5, %6 : vector<128x1024xf32>
    %c0_7 = arith.constant 0 : index
    %c0_8 = arith.constant 0 : index
    %8 = vector.load %arg5[%c0_7, %c0_8] : memref<128x1024xf32, #tpu.memory_space<vmem>>, vector<128x1024xf32>
    tpu.vector_store %arg5[%c0_7, %c0_8], %7 {strides = array<i32>} : memref<128x1024xf32, #tpu.memory_space<vmem>>, vector<128x1024xf32>,
    return
  }
  func.func @transform_0(%arg0: i32) -> (i32, i32) {
    %c0_i32 = arith.constant 0 : i32
    %c0_i32_0 = arith.constant 0 : i32
    return %arg0, %c0_i32 : i32, i32
  }
  func.func @transform_1(%arg0: i32) -> (i32, i32) {
    %c0_i32 = arith.constant 0 : i32
    %c0_i32_0 = arith.constant 0 : i32
    %c0_i32_1 = arith.constant 0 : i32
    return %c0_i32, %c0_i32_0 : i32, i32
  }
  func.func @transform_2(%arg0: i32) -> (i32, i32) {
    %c0_i32 = arith.constant 0 : i32
    %c0_i32_0 = arith.constant 0 : i32
    %c0_i32_1 = arith.constant 0 : i32
    return %c0_i32, %c0_i32_0 : i32, i32
  }
  func.func @transform_3(%arg0: i32) -> (i32, i32) {
    %c0_i32 = arith.constant 0 : i32
    %c0_i32_0 = arith.constant 0 : i32
    return %arg0, %c0_i32 : i32, i32
  }
  func.func @transform_4(%arg0: i32) -> (i32, i32) {
    %c0_i32 = arith.constant 0 : i32
    %c0_i32_0 = arith.constant 0 : i32
    return %arg0, %c0_i32 : i32, i32
  }
}

</mosaic_0001>

<llo_original>
// kernel: detection2d_forward.9
$region0: #{detection2d_forward.9}
  #allocation0 [shape = 'u32[]', space=smem, size = 0x4, offset = 0x4, fixed_abs, tag = 'smem constant byte address 0x4 - core index']
  #allocation1 [shape = 'u32[144,128]{1,0:T(1,128)}', space=vmem, size = 0x12000, scoped, tag = 'internal scratch']
  %s0 = inlined_call_operand.vmem [shape: bf16[512,27], index: 0, kind: input, shape index: {}]
  %s1 = inlined_call_operand.hbm [shape: bf16[27,64], index: 1, kind: input, shape index: {}]
  %s2 = inlined_call_operand.hbm [shape: f32[1,64], index: 2, kind: input, shape index: {}]
  %s3 = inlined_call_operand.vmem [shape: bf16[512,64], index: 3, kind: output, shape index: {}]
  %s4 = sld [smem:[#allocation0]]
  $region30: #{detection2d_forward.9} parent=0
    _
  %s6 = ssub.s32 1, %s4
  %s7 = scalar_select 0, %s6, %s4
  $region1: #{detection2d_forward.9} parent=0
    #allocation2 [shape = 'u8[8192]{0}', space=vmem, size = 0x2000, scoped, tag = 'input window, operand 1, single buffered']
    #allocation3 [shape = 's32[1]{0}', space=sflag, size = 0x4, scoped, tag = 'scoped memory for detection2d_forward.9']
    #allocation4 [shape = 'u8[512]{0}', space=vmem, size = 0x400, scoped, tag = 'input window, operand 2, single buffered']
    #allocation5 [shape = 's32[1]{0}', space=sflag, size = 0x4, scoped, tag = 'scoped memory for detection2d_forward.9']
    %8 = vsyncpa [#allocation3], 0
    %9 = vsyncpa [#allocation5], 0
    // Predicated region
    $region2: #{detection2d_forward.9} parent=1 // pred_check
      _
    $region3: #{detection2d_forward.9} parent=1 // pred_check_branch
      %11 = sbr.rel (0) target = $region5
    $region4: #{detection2d_forward.9} parent=1 // pred_region
      _
    $region5: #{detection2d_forward.9} parent=1 // pred_fallthru
      _
    // Predicated region
    $region6: #{detection2d_forward.9} parent=1 // pred_check
      _
    $region7: #{detection2d_forward.9} parent=1 // pred_check_branch
      %13 = sbr.rel (0) target = $region9
    $region8: #{detection2d_forward.9} parent=1 // pred_region
      %s15 = ssub.s32 256, 256
      %16 = vsyncadd [#allocation3], %s15
      %s17 = sshll.u32 [#allocation2], 4
      %s18 = int_to_ptr.vmem [resolvable:$true] %s17
      %23 = dma.hbm_to_vmem [thread:$0]  %s1, 256, %s18, [#allocation3], 64, 64, 4
    $region9: #{detection2d_forward.9} parent=1 // pred_fallthru
      _
    // Predicated region
    $region10: #{detection2d_forward.9} parent=1 // pred_check
      _
    $region11: #{detection2d_forward.9} parent=1 // pred_check_branch
      %25 = sbr.rel (0) target = $region13
    $region12: #{detection2d_forward.9} parent=1 // pred_region
      %s27 = ssub.s32 16, 16
      %28 = vsyncadd [#allocation5], %s27
      %s30 = sshll.u32 [#allocation4], 4
      %s31 = int_to_ptr.vmem [resolvable:$true] %s30
      %33 = dma.hbm_to_vmem [thread:$0]  %s2, 16, %s31, [#allocation5]
    $region13: #{detection2d_forward.9} parent=1 // pred_fallthru
      _
    // Predicated region
    $region14: #{detection2d_forward.9} parent=1 // pred_check
      _
    $region15: #{detection2d_forward.9} parent=1 // pred_check_branch
      %35 = sbr.rel (0) target = $region17
    $region16: #{detection2d_forward.9} parent=1 // pred_region
      %36 = dma.done [#allocation3], 256
    $region17: #{detection2d_forward.9} parent=1 // pred_fallthru
      _
    // Predicated region
    $region18: #{detection2d_forward.9} parent=1 // pred_check
      _
    $region19: #{detection2d_forward.9} parent=1 // pred_check_branch
      %38 = sbr.rel (0) target = $region21
    $region20: #{detection2d_forward.9} parent=1 // pred_region
      %39 = dma.done [#allocation5], 16
    $region21: #{detection2d_forward.9} parent=1 // pred_fallthru
      _
    %v41 = vld [vmem:[%s0] sm:$0xf]
    %v42 = vld [vmem:[%s0 + $0x4] sm:$0xf]
    %v43 = vld [vmem:[%s0 + $0x8] sm:$0xf]
    %v44 = vld [vmem:[%s0 + $0xc] sm:$0xf]
    %v45 = vld [vmem:[%s0 + $0x10] sm:$0xf]
    %v46 = vld [vmem:[%s0 + $0x14] sm:$0xf]
    %v47 = vld [vmem:[%s0 + $0x18] sm:$0xf]
    %v48 = vld [vmem:[%s0 + $0x1c] sm:$0xf]
    %v49 = vld [vmem:[%s0 + $0x20] sm:$0xf]
    %v50 = vld [vmem:[%s0 + $0x24] sm:$0xf]
    %v51 = vld [vmem:[%s0 + $0x28] sm:$0xf]
    %v52 = vld [vmem:[%s0 + $0x2c] sm:$0xf]
    %v53 = vld [vmem:[%s0 + $0x30] sm:$0xf]
    %v54 = vld [vmem:[%s0 + $0x34] sm:$0xf]
    %v55 = vld [vmem:[%s0 + $0x38] sm:$0xf]
    %v56 = vld [vmem:[%s0 + $0x3c] sm:$0xf]
    %v57 = vld [vmem:[%s0 + $0x40] sm:$0xf]
    %v58 = vld [vmem:[%s0 + $0x44] sm:$0xf]
    %v59 = vld [vmem:[%s0 + $0x48] sm:$0xf]
    %v60 = vld [vmem:[%s0 + $0x4c] sm:$0xf]
    %v61 = vld [vmem:[%s0 + $0x50] sm:$0xf]
    %v62 = vld [vmem:[%s0 + $0x54] sm:$0xf]
    %v63 = vld [vmem:[%s0 + $0x58] sm:$0xf]
    %v64 = vld [vmem:[%s0 + $0x5c] sm:$0xf]
    %v65 = vld [vmem:[%s0 + $0x60] sm:$0xf]
    %v66 = vld [vmem:[%s0 + $0x64] sm:$0xf]
    %v67 = vld [vmem:[%s0 + $0x68] sm:$0xf]
    %v68 = vld [vmem:[%s0 + $0x6c] sm:$0xf]
    %v69 = vld [vmem:[%s0 + $0x70] sm:$0xf]
    %v70 = vld [vmem:[%s0 + $0x74] sm:$0xf]
    %v71 = vld [vmem:[%s0 + $0x78] sm:$0xf]
    %v72 = vld [vmem:[%s0 + $0x7c] sm:$0xf]
    %v73 = vld [vmem:[%s0 + $0x80] sm:$0xf]
    %v74 = vld [vmem:[%s0 + $0x84] sm:$0xf]
    %v75 = vld [vmem:[%s0 + $0x88] sm:$0xf]
    %v76 = vld [vmem:[%s0 + $0x8c] sm:$0xf]
    %v77 = vld [vmem:[%s0 + $0x90] sm:$0xf]
    %v78 = vld [vmem:[%s0 + $0x94] sm:$0xf]
    %v79 = vld [vmem:[%s0 + $0x98] sm:$0xf]
    %v80 = vld [vmem:[%s0 + $0x9c] sm:$0xf]
    %v81 = vld [vmem:[%s0 + $0xa0] sm:$0xf]
    %v82 = vld [vmem:[%s0 + $0xa4] sm:$0xf]
    %v83 = vld [vmem:[%s0 + $0xa8] sm:$0xf]
    %v84 = vld [vmem:[%s0 + $0xac] sm:$0xf]
    %v85 = vld [vmem:[%s0 + $0xb0] sm:$0xf]
    %v86 = vld [vmem:[%s0 + $0xb4] sm:$0xf]
    %v87 = vld [vmem:[%s0 + $0xb8] sm:$0xf]
    %v88 = vld [vmem:[%s0 + $0xbc] sm:$0xf]
    %v89 = vld [vmem:[%s0 + $0xc0] sm:$0xf]
    %v90 = vld [vmem:[%s0 + $0xc4] sm:$0xf]
    %v91 = vld [vmem:[%s0 + $0xc8] sm:$0xf]
    %v92 = vld [vmem:[%s0 + $0xcc] sm:$0xf]
    %v93 = vld [vmem:[%s0 + $0xd0] sm:$0xf]
    %v94 = vld [vmem:[%s0 + $0xd4] sm:$0xf]
    %v95 = vld [vmem:[%s0 + $0xd8] sm:$0xf]
    %v96 = vld [vmem:[%s0 + $0xdc] sm:$0xf]
    %v97 = vld [vmem:[%s0 + $0xe0] sm:$0xf]
    %v98 = vld [vmem:[%s0 + $0xe4] sm:$0xf]
    %v99 = vld [vmem:[%s0 + $0xe8] sm:$0xf]
    %v100 = vld [vmem:[%s0 + $0xec] sm:$0xf]
    %v101 = vld [vmem:[%s0 + $0xf0] sm:$0xf]
    %v102 = vld [vmem:[%s0 + $0xf4] sm:$0xf]
    %v103 = vld [vmem:[%s0 + $0xf8] sm:$0xf]
    %v104 = vld [vmem:[%s0 + $0xfc] sm:$0xf]
    %v105 = vld [vmem:[#allocation2] sm:$0xf]
    %v106 = vld [vmem:[#allocation2 + $0x4] sm:$0xf]
    %v107 = vld [vmem:[#allocation2 + $0x8] sm:$0xf]
    %v108 = vld [vmem:[#allocation2 + $0xc] sm:$0x3]
    %v109 = vld [vmem:[#allocation4] sm:$0x1]
    %v111 = vlaneseq
    %v112 = vshrl.u32 %v111, 7
    %v113 = vsub.s32 0, %v112
    %v114 = vrot.slane %v109, %v113
    %v180 = vunpack.c.l.b16 %v41
    %v181 = vunpack.c.l.b16 %v42
    %v182 = vunpack.c.l.b16 %v43
    %v183 = vunpack.c.l.b16 %v44
    %v184 = vunpack.c.l.b16 %v45
    %v185 = vunpack.c.l.b16 %v46
    %v186 = vunpack.c.l.b16 %v47
    %v187 = vunpack.c.l.b16 %v48
    %v188 = vunpack.c.l.b16 %v49
    %v189 = vunpack.c.l.b16 %v50
    %v190 = vunpack.c.l.b16 %v51
    %v191 = vunpack.c.l.b16 %v52
    %v192 = vunpack.c.l.b16 %v53
    %v193 = vunpack.c.l.b16 %v54
    %v194 = vunpack.c.l.b16 %v55
    %v195 = vunpack.c.l.b16 %v56
    %v196 = vunpack.c.l.b16 %v57
    %v197 = vunpack.c.l.b16 %v58
    %v198 = vunpack.c.l.b16 %v59
    %v199 = vunpack.c.l.b16 %v60
    %v200 = vunpack.c.l.b16 %v61
    %v201 = vunpack.c.l.b16 %v62
    %v202 = vunpack.c.l.b16 %v63
    %v203 = vunpack.c.l.b16 %v64
    %v204 = vunpack.c.l.b16 %v65
    %v205 = vunpack.c.l.b16 %v66
    %v206 = vunpack.c.l.b16 %v67
    %v207 = vunpack.c.l.b16 %v68
    %v208 = vunpack.c.l.b16 %v69
    %v209 = vunpack.c.l.b16 %v70
    %v210 = vunpack.c.l.b16 %v71
    %v211 = vunpack.c.l.b16 %v72
    %v212 = vunpack.c.l.b16 %v73
    %v213 = vunpack.c.l.b16 %v74
    %v214 = vunpack.c.l.b16 %v75
    %v215 = vunpack.c.l.b16 %v76
    %v216 = vunpack.c.l.b16 %v77
    %v217 = vunpack.c.l.b16 %v78
    %v218 = vunpack.c.l.b16 %v79
    %v219 = vunpack.c.l.b16 %v80
    %v220 = vunpack.c.l.b16 %v81
    %v221 = vunpack.c.l.b16 %v82
    %v222 = vunpack.c.l.b16 %v83
    %v223 = vunpack.c.l.b16 %v84
    %v224 = vunpack.c.l.b16 %v85
    %v225 = vunpack.c.l.b16 %v86
    %v226 = vunpack.c.l.b16 %v87
    %v227 = vunpack.c.l.b16 %v88
    %v228 = vunpack.c.l.b16 %v89
    %v229 = vunpack.c.l.b16 %v90
    %v230 = vunpack.c.l.b16 %v91
    %v231 = vunpack.c.l.b16 %v92
    %v232 = vunpack.c.l.b16 %v93
    %v233 = vunpack.c.l.b16 %v94
    %v234 = vunpack.c.l.b16 %v95
    %v235 = vunpack.c.l.b16 %v96
    %v236 = vunpack.c.l.b16 %v97
    %v237 = vunpack.c.l.b16 %v98
    %v238 = vunpack.c.l.b16 %v99
    %v239 = vunpack.c.l.b16 %v100
    %v240 = vunpack.c.l.b16 %v101
    %v241 = vunpack.c.l.b16 %v102
    %v242 = vunpack.c.l.b16 %v103
    %v243 = vunpack.c.l.b16 %v104
    %v244 = vpack.c.b16 %v181, %v180
    %v245 = vpack.c.b16 %v183, %v182
    %v246 = vpack.c.b16 %v185, %v184
    %v247 = vpack.c.b16 %v187, %v186
    %v248 = vpack.c.b16 %v189, %v188
    %v249 = vpack.c.b16 %v191, %v190
    %v250 = vpack.c.b16 %v193, %v192
    %v251 = vpack.c.b16 %v195, %v194
    %v252 = vpack.c.b16 %v197, %v196
    %v253 = vpack.c.b16 %v199, %v198
    %v254 = vpack.c.b16 %v201, %v200
    %v255 = vpack.c.b16 %v203, %v202
    %v256 = vpack.c.b16 %v205, %v204
    %v257 = vpack.c.b16 %v207, %v206
    %v258 = vpack.c.b16 %v209, %v208
    %v259 = vpack.c.b16 %v211, %v210
    %v260 = vpack.c.b16 %v213, %v212
    %v261 = vpack.c.b16 %v215, %v214
    %v262 = vpack.c.b16 %v217, %v216
    %v263 = vpack.c.b16 %v219, %v218
    %v264 = vpack.c.b16 %v221, %v220
    %v265 = vpack.c.b16 %v223, %v222
    %v266 = vpack.c.b16 %v225, %v224
    %v267 = vpack.c.b16 %v227, %v226
    %v268 = vpack.c.b16 %v229, %v228
    %v269 = vpack.c.b16 %v231, %v230
    %v270 = vpack.c.b16 %v233, %v232
    %v271 = vpack.c.b16 %v235, %v234
    %v272 = vpack.c.b16 %v237, %v236
    %v273 = vpack.c.b16 %v239, %v238
    %v274 = vpack.c.b16 %v241, %v240
    %v275 = vpack.c.b16 %v243, %v242
    %v280 = vunpack.c.l.b16 %v105
    %v281 = vunpack.c.l.b16 %v106
    %v282 = vunpack.c.l.b16 %v107
    %v283 = vunpack.c.l.b16 %v108
    %v284 = vpack.c.b16 %v281, %v280
    %v285 = vpack.c.b16 %v283, %v282
    %vm287 = vcmask 220160
    %v289 = vsel %vm287, %v244, 0
    %v292 = vsel %vm287, %v245, 0
    %v295 = vsel %vm287, %v246, 0
    %v298 = vsel %vm287, %v247, 0
    %v301 = vsel %vm287, %v248, 0
    %v304 = vsel %vm287, %v249, 0
    %v307 = vsel %vm287, %v250, 0
    %v310 = vsel %vm287, %v251, 0
    %v313 = vsel %vm287, %v252, 0
    %v316 = vsel %vm287, %v253, 0
    %v319 = vsel %vm287, %v254, 0
    %v322 = vsel %vm287, %v255, 0
    %v325 = vsel %vm287, %v256, 0
    %v328 = vsel %vm287, %v257, 0
    %v331 = vsel %vm287, %v258, 0
    %v334 = vsel %vm287, %v259, 0
    %v337 = vsel %vm287, %v260, 0
    %v340 = vsel %vm287, %v261, 0
    %v343 = vsel %vm287, %v262, 0
    %v346 = vsel %vm287, %v263, 0
    %v349 = vsel %vm287, %v264, 0
    %v352 = vsel %vm287, %v265, 0
    %v355 = vsel %vm287, %v266, 0
    %v358 = vsel %vm287, %v267, 0
    %v361 = vsel %vm287, %v268, 0
    %v364 = vsel %vm287, %v269, 0
    %v367 = vsel %vm287, %v270, 0
    %v370 = vsel %vm287, %v271, 0
    %v373 = vsel %vm287, %v272, 0
    %v376 = vsel %vm287, %v273, 0
    %v379 = vsel %vm287, %v274, 0
    %v382 = vsel %vm287, %v275, 0
    %vm384 = vcmask 1044480
    %vm385 = vcmask 1045504
    %v386 = vsel %vm384, 4294967295, 65535
    %v387 = vsel %vm385, %v386, 0
    %v389 = vand.u32 %v285, %v387
    %391 = vmatprep.subr.bf16.mxu0 0
    %392 = vmatpush1.bf16.msra.mxu0 %v284
    %393 = vmatprep.subr.bf16.mxu0 0
    %394 = vmatpush1.bf16.msra.mxu0 %v389
    %395 = vmatprep.subr.bf16.mxu0 0
    %396 = vmatpush1.bf16.msra.mxu0 0
    %397 = vmatprep.subr.bf16.mxu0 0
    %398 = vmatpush1.bf16.msra.mxu0 0
    %399 = vmatprep.subr.bf16.mxu0 0
    %400 = vmatpush1.bf16.msra.mxu0 0
    %401 = vmatprep.subr.bf16.mxu0 0
    %402 = vmatpush1.bf16.msra.mxu0 0
    %403 = vmatprep.subr.bf16.mxu0 0
    %404 = vmatpush1.bf16.msra.mxu0 0
    %405 = vmatprep.subr.bf16.mxu0 0
    %406 = vmatpush1.bf16.msra.mxu0 0
    %407 = vmatprep.subr.bf16.mxu0 0
    %408 = vmatpush1.bf16.msra.mxu0 0
    %409 = vmatprep.subr.bf16.mxu0 0
    %410 = vmatpush1.bf16.msra.mxu0 0
    %411 = vmatprep.subr.bf16.mxu0 0
    %412 = vmatpush1.bf16.msra.mxu0 0
    %413 = vmatprep.subr.bf16.mxu0 0
    %414 = vmatpush1.bf16.msra.mxu0 0
    %415 = vmatprep.subr.bf16.mxu0 0
    %416 = vmatpush1.bf16.msra.mxu0 0
    %417 = vmatprep.subr.bf16.mxu0 0
    %418 = vmatpush1.bf16.msra.mxu0 0
    %419 = vmatprep.subr.bf16.mxu0 0
    %420 = vmatpush1.bf16.msra.mxu0 0
    %421 = vmatprep.subr.bf16.mxu0 0
    %422 = vmatpush1.bf16.msra.mxu0 0
    %423 = vmatprep.mubr.bf16.mxu0 0
    %424 = vmatmul.mubr.bf16.gmra.mrb[0].mxu0 %v289
    %v425 = vpop.f32.mrb[0].mxu0
    %v426 = vadd.f32 %v114, %v425
    %v427 = vpop.f32.mrb[0].mxu0
    %v428 = vpop.f32.mrb[0].mxu0
    %v429 = vadd.f32 %v114, %v428
    %v430 = vpop.f32.mrb[0].mxu0
    %431 = vmatprep.mubr.bf16.mxu0 0
    %432 = vmatmul.mubr.bf16.gmra.mrb[0].mxu0 %v292
    %v433 = vpop.f32.mrb[0].mxu0
    %v434 = vadd.f32 %v114, %v433
    %v435 = vpop.f32.mrb[0].mxu0
    %v436 = vpop.f32.mrb[0].mxu0
    %v437 = vadd.f32 %v114, %v436
    %v438 = vpop.f32.mrb[0].mxu0
    %439 = vmatprep.mubr.bf16.mxu0 0
    %440 = vmatmul.mubr.bf16.gmra.mrb[0].mxu0 %v295
    %v441 = vpop.f32.mrb[0].mxu0
    %v442 = vadd.f32 %v114, %v441
    %v443 = vpop.f32.mrb[0].mxu0
    %v444 = vpop.f32.mrb[0].mxu0
    %v445 = vadd.f32 %v114, %v444
    %v446 = vpop.f32.mrb[0].mxu0
    %447 = vmatprep.mubr.bf16.mxu0 0
    %448 = vmatmul.mubr.bf16.gmra.mrb[0].mxu0 %v298
    %v449 = vpop.f32.mrb[0].mxu0
    %v450 = vadd.f32 %v114, %v449
    %v451 = vpop.f32.mrb[0].mxu0
    %v452 = vpop.f32.mrb[0].mxu0
    %v453 = vadd.f32 %v114, %v452
    %v454 = vpop.f32.mrb[0].mxu0
    %455 = vmatprep.mubr.bf16.mxu0 0
    %456 = vmatmul.mubr.bf16.gmra.mrb[0].mxu0 %v301
    %v457 = vpop.f32.mrb[0].mxu0
    %v458 = vadd.f32 %v114, %v457
    %v459 = vpop.f32.mrb[0].mxu0
    %v460 = vpop.f32.mrb[0].mxu0
    %v461 = vadd.f32 %v114, %v460
    %v462 = vpop.f32.mrb[0].mxu0
    %463 = vmatprep.mubr.bf16.mxu0 0
    %464 = vmatmul.mubr.bf16.gmra.mrb[0].mxu0 %v304
    %v465 = vpop.f32.mrb[0].mxu0
    %v466 = vadd.f32 %v114, %v465
    %v467 = vpop.f32.mrb[0].mxu0
    %v468 = vpop.f32.mrb[0].mxu0
    %v469 = vadd.f32 %v114, %v468
    %v470 = vpop.f32.mrb[0].mxu0
    %471 = vmatprep.mubr.bf16.mxu0 0
    %472 = vmatmul.mubr.bf16.gmra.mrb[0].mxu0 %v307
    %v473 = vpop.f32.mrb[0].mxu0
    %v474 = vadd.f32 %v114, %v473
    %v475 = vpop.f32.mrb[0].mxu0
    %v476 = vpop.f32.mrb[0].mxu0
    %v477 = vadd.f32 %v114, %v476
    %v478 = vpop.f32.mrb[0].mxu0
    %479 = vmatprep.mubr.bf16.mxu0 0
    %480 = vmatmul.mubr.bf16.gmra.mrb[0].mxu0 %v310
    %v481 = vpop.f32.mrb[0].mxu0
    %v482 = vadd.f32 %v114, %v481
    %v483 = vpop.f32.mrb[0].mxu0
    %v484 = vpop.f32.mrb[0].mxu0
    %v485 = vadd.f32 %v114, %v484
    %v486 = vpop.f32.mrb[0].mxu0
    %487 = vmatprep.mubr.bf16.mxu0 0
    %488 = vmatmul.mubr.bf16.gmra.mrb[0].mxu0 %v313
    %v489 = vpop.f32.mrb[0].mxu0
    %v490 = vadd.f32 %v114, %v489
    %v491 = vpop.f32.mrb[0].mxu0
    %v492 = vpop.f32.mrb[0].mxu0
    %v493 = vadd.f32 %v114, %v492
    %v494 = vpop.f32.mrb[0].mxu0
    %495 = vmatprep.mubr.bf16.mxu0 0
    %496 = vmatmul.mubr.bf16.gmra.mrb[0].mxu0 %v316
    %v497 = vpop.f32.mrb[0].mxu0
    %v498 = vadd.f32 %v114, %v497
    %v499 = vpop.f32.mrb[0].mxu0
    %v500 = vpop.f32.mrb[0].mxu0
    %v501 = vadd.f32 %v114, %v500
    %v502 = vpop.f32.mrb[0].mxu0
    %503 = vmatprep.mubr.bf16.mxu0 0
    %504 = vmatmul.mubr.bf16.gmra.mrb[0].mxu0 %v319
    %v505 = vpop.f32.mrb[0].mxu0
    %v506 = vadd.f32 %v114, %v505
    %v507 = vpop.f32.mrb[0].mxu0
    %v508 = vpop.f32.mrb[0].mxu0
    %v509 = vadd.f32 %v114, %v508
    %v510 = vpop.f32.mrb[0].mxu0
    %511 = vmatprep.mubr.bf16.mxu0 0
    %512 = vmatmul.mubr.bf16.gmra.mrb[0].mxu0 %v322
    %v513 = vpop.f32.mrb[0].mxu0
    %v514 = vadd.f32 %v114, %v513
    %v515 = vpop.f32.mrb[0].mxu0
    %v516 = vpop.f32.mrb[0].mxu0
    %v517 = vadd.f32 %v114, %v516
    %v518 = vpop.f32.mrb[0].mxu0
    %519 = vmatprep.mubr.bf16.mxu0 0
    %520 = vmatmul.mubr.bf16.gmra.mrb[0].mxu0 %v325
    %v521 = vpop.f32.mrb[0].mxu0
    %v522 = vadd.f32 %v114, %v521
    %v523 = vpop.f32.mrb[0].mxu0
    %v524 = vpop.f32.mrb[0].mxu0
    %v525 = vadd.f32 %v114, %v524
    %v526 = vpop.f32.mrb[0].mxu0
    %527 = vmatprep.mubr.bf16.mxu0 0
    %528 = vmatmul.mubr.bf16.gmra.mrb[0].mxu0 %v328
    %v529 = vpop.f32.mrb[0].mxu0
    %v530 = vadd.f32 %v114, %v529
    %v531 = vpop.f32.mrb[0].mxu0
    %v532 = vpop.f32.mrb[0].mxu0
    %v533 = vadd.f32 %v114, %v532
    %v534 = vpop.f32.mrb[0].mxu0
    %535 = vmatprep.mubr.bf16.mxu0 0
    %536 = vmatmul.mubr.bf16.gmra.mrb[0].mxu0 %v331
    %v537 = vpop.f32.mrb[0].mxu0
    %v538 = vadd.f32 %v114, %v537
    %v539 = vpop.f32.mrb[0].mxu0
    %v540 = vpop.f32.mrb[0].mxu0
    %v541 = vadd.f32 %v114, %v540
    %v542 = vpop.f32.mrb[0].mxu0
    %543 = vmatprep.mubr.bf16.mxu0 0
    %544 = vmatmul.mubr.bf16.gmra.mrb[0].mxu0 %v334
    %v545 = vpop.f32.mrb[0].mxu0
    %v546 = vadd.f32 %v114, %v545
    %v547 = vpop.f32.mrb[0].mxu0
    %v548 = vpop.f32.mrb[0].mxu0
    %v549 = vadd.f32 %v114, %v548
    %v550 = vpop.f32.mrb[0].mxu0
    %551 = vmatprep.mubr.bf16.mxu0 0
    %552 = vmatmul.mubr.bf16.gmra.mrb[0].mxu0 %v337
    %v553 = vpop.f32.mrb[0].mxu0
    %v554 = vadd.f32 %v114, %v553
    %v555 = vpop.f32.mrb[0].mxu0
    %v556 = vpop.f32.mrb[0].mxu0
    %v557 = vadd.f32 %v114, %v556
    %v558 = vpop.f32.mrb[0].mxu0
    %559 = vmatprep.mubr.bf16.mxu0 0
    %560 = vmatmul.mubr.bf16.gmra.mrb[0].mxu0 %v340
    %v561 = vpop.f32.mrb[0].mxu0
    %v562 = vadd.f32 %v114, %v561
    %v563 = vpop.f32.mrb[0].mxu0
    %v564 = vpop.f32.mrb[0].mxu0
    %v565 = vadd.f32 %v114, %v564
    %v566 = vpop.f32.mrb[0].mxu0
    %567 = vmatprep.mubr.bf16.mxu0 0
    %568 = vmatmul.mubr.bf16.gmra.mrb[0].mxu0 %v343
    %v569 = vpop.f32.mrb[0].mxu0
    %v570 = vadd.f32 %v114, %v569
    %v571 = vpop.f32.mrb[0].mxu0
    %v572 = vpop.f32.mrb[0].mxu0
    %v573 = vadd.f32 %v114, %v572
    %v574 = vpop.f32.mrb[0].mxu0
    %575 = vmatprep.mubr.bf16.mxu0 0
    %576 = vmatmul.mubr.bf16.gmra.mrb[0].mxu0 %v346
    %v577 = vpop.f32.mrb[0].mxu0
    %v578 = vadd.f32 %v114, %v577
    %v579 = vpop.f32.mrb[0].mxu0
    %v580 = vpop.f32.mrb[0].mxu0
    %v581 = vadd.f32 %v114, %v580
    %v582 = vpop.f32.mrb[0].mxu0
    %583 = vmatprep.mubr.bf16.mxu0 0
    %584 = vmatmul.mubr.bf16.gmra.mrb[0].mxu0 %v349
    %v585 = vpop.f32.mrb[0].mxu0
    %v586 = vadd.f32 %v114, %v585
    %v587 = vpop.f32.mrb[0].mxu0
    %v588 = vpop.f32.mrb[0].mxu0
    %v589 = vadd.f32 %v114, %v588
    %v590 = vpop.f32.mrb[0].mxu0
    %591 = vmatprep.mubr.bf16.mxu0 0
    %592 = vmatmul.mubr.bf16.gmra.mrb[0].mxu0 %v352
    %v593 = vpop.f32.mrb[0].mxu0
    %v594 = vadd.f32 %v114, %v593
    %v595 = vpop.f32.mrb[0].mxu0
    %v596 = vpop.f32.mrb[0].mxu0
    %v597 = vadd.f32 %v114, %v596
    %v598 = vpop.f32.mrb[0].mxu0
    %599 = vmatprep.mubr.bf16.mxu0 0
    %600 = vmatmul.mubr.bf16.gmra.mrb[0].mxu0 %v355
    %v601 = vpop.f32.mrb[0].mxu0
    %v602 = vadd.f32 %v114, %v601
    %v603 = vpop.f32.mrb[0].mxu0
    %v604 = vpop.f32.mrb[0].mxu0
    %v605 = vadd.f32 %v114, %v604
    %v606 = vpop.f32.mrb[0].mxu0
    %607 = vmatprep.mubr.bf16.mxu0 0
    %608 = vmatmul.mubr.bf16.gmra.mrb[0].mxu0 %v358
    %v609 = vpop.f32.mrb[0].mxu0
    %v610 = vadd.f32 %v114, %v609
    %v611 = vpop.f32.mrb[0].mxu0
    %v612 = vpop.f32.mrb[0].mxu0
    %v613 = vadd.f32 %v114, %v612
    %v614 = vpop.f32.mrb[0].mxu0
    %615 = vmatprep.mubr.bf16.mxu0 0
    %616 = vmatmul.mubr.bf16.gmra.mrb[0].mxu0 %v361
    %v617 = vpop.f32.mrb[0].mxu0
    %v618 = vadd.f32 %v114, %v617
    %v619 = vpop.f32.mrb[0].mxu0
    %v620 = vpop.f32.mrb[0].mxu0
    %v621 = vadd.f32 %v114, %v620
    %v622 = vpop.f32.mrb[0].mxu0
    %623 = vmatprep.mubr.bf16.mxu0 0
    %624 = vmatmul.mubr.bf16.gmra.mrb[0].mxu0 %v364
    %v625 = vpop.f32.mrb[0].mxu0
    %v626 = vadd.f32 %v114, %v625
    %v627 = vpop.f32.mrb[0].mxu0
    %v628 = vpop.f32.mrb[0].mxu0
    %v629 = vadd.f32 %v114, %v628
    %v630 = vpop.f32.mrb[0].mxu0
    %631 = vmatprep.mubr.bf16.mxu0 0
    %632 = vmatmul.mubr.bf16.gmra.mrb[0].mxu0 %v367
    %v633 = vpop.f32.mrb[0].mxu0
    %v634 = vadd.f32 %v114, %v633
    %v635 = vpop.f32.mrb[0].mxu0
    %v636 = vpop.f32.mrb[0].mxu0
    %v637 = vadd.f32 %v114, %v636
    %v638 = vpop.f32.mrb[0].mxu0
    %639 = vmatprep.mubr.bf16.mxu0 0
    %640 = vmatmul.mubr.bf16.gmra.mrb[0].mxu0 %v370
    %v641 = vpop.f32.mrb[0].mxu0
    %v642 = vadd.f32 %v114, %v641
    %v643 = vpop.f32.mrb[0].mxu0
    %v644 = vpop.f32.mrb[0].mxu0
    %v645 = vadd.f32 %v114, %v644
    %v646 = vpop.f32.mrb[0].mxu0
    %647 = vmatprep.mubr.bf16.mxu0 0
    %648 = vmatmul.mubr.bf16.gmra.mrb[0].mxu0 %v373
    %v649 = vpop.f32.mrb[0].mxu0
    %v650 = vadd.f32 %v114, %v649
    %v651 = vpop.f32.mrb[0].mxu0
    %v652 = vpop.f32.mrb[0].mxu0
    %v653 = vadd.f32 %v114, %v652
    %v654 = vpop.f32.mrb[0].mxu0
    %655 = vmatprep.mubr.bf16.mxu0 0
    %656 = vmatmul.mubr.bf16.gmra.mrb[0].mxu0 %v376
    %v657 = vpop.f32.mrb[0].mxu0
    %v658 = vadd.f32 %v114, %v657
    %v659 = vpop.f32.mrb[0].mxu0
    %v660 = vpop.f32.mrb[0].mxu0
    %v661 = vadd.f32 %v114, %v660
    %v662 = vpop.f32.mrb[0].mxu0
    %663 = vmatprep.mubr.bf16.mxu0 0
    %664 = vmatmul.mubr.bf16.gmra.mrb[0].mxu0 %v379
    %v665 = vpop.f32.mrb[0].mxu0
    %v666 = vadd.f32 %v114, %v665
    %v667 = vpop.f32.mrb[0].mxu0
    %v668 = vpop.f32.mrb[0].mxu0
    %v669 = vadd.f32 %v114, %v668
    %v670 = vpop.f32.mrb[0].mxu0
    %671 = vmatprep.mubr.bf16.mxu0 0
    %672 = vmatmul.mubr.bf16.gmra.mrb[0].mxu0 %v382
    %v673 = vpop.f32.mrb[0].mxu0
    %v674 = vadd.f32 %v114, %v673
    %v675 = vpop.f32.mrb[0].mxu0
    %v676 = vpop.f32.mrb[0].mxu0
    %v677 = vadd.f32 %v114, %v676
    %v678 = vpop.f32.mrb[0].mxu0
    %679 = vdwg.mxu0
    %v680 = vmax.f32 %v426, 0.0
    %v681 = vmax.f32 %v429, 0.0
    %v682 = vmax.f32 %v434, 0.0
    %v683 = vmax.f32 %v437, 0.0
    %v684 = vmax.f32 %v442, 0.0
    %v685 = vmax.f32 %v445, 0.0
    %v686 = vmax.f32 %v450, 0.0
    %v687 = vmax.f32 %v453, 0.0
    %v688 = vmax.f32 %v458, 0.0
    %v689 = vmax.f32 %v461, 0.0
    %v690 = vmax.f32 %v466, 0.0
    %v691 = vmax.f32 %v469, 0.0
    %v692 = vmax.f32 %v474, 0.0
    %v693 = vmax.f32 %v477, 0.0
    %v694 = vmax.f32 %v482, 0.0
    %v695 = vmax.f32 %v485, 0.0
    %v696 = vmax.f32 %v490, 0.0
    %v697 = vmax.f32 %v493, 0.0
    %v698 = vmax.f32 %v498, 0.0
    %v699 = vmax.f32 %v501, 0.0
    %v700 = vmax.f32 %v506, 0.0
    %v701 = vmax.f32 %v509, 0.0
    %v702 = vmax.f32 %v514, 0.0
    %v703 = vmax.f32 %v517, 0.0
    %v704 = vmax.f32 %v522, 0.0
    %v705 = vmax.f32 %v525, 0.0
    %v706 = vmax.f32 %v530, 0.0
    %v707 = vmax.f32 %v533, 0.0
    %v708 = vmax.f32 %v538, 0.0
    %v709 = vmax.f32 %v541, 0.0
    %v710 = vmax.f32 %v546, 0.0
    %v711 = vmax.f32 %v549, 0.0
    %v712 = vmax.f32 %v554, 0.0
    %v713 = vmax.f32 %v557, 0.0
    %v714 = vmax.f32 %v562, 0.0
    %v715 = vmax.f32 %v565, 0.0
    %v716 = vmax.f32 %v570, 0.0
    %v717 = vmax.f32 %v573, 0.0
    %v718 = vmax.f32 %v578, 0.0
    %v719 = vmax.f32 %v581, 0.0
    %v720 = vmax.f32 %v586, 0.0
    %v721 = vmax.f32 %v589, 0.0
    %v722 = vmax.f32 %v594, 0.0
    %v723 = vmax.f32 %v597, 0.0
    %v724 = vmax.f32 %v602, 0.0
    %v725 = vmax.f32 %v605, 0.0
    %v726 = vmax.f32 %v610, 0.0
    %v727 = vmax.f32 %v613, 0.0
    %v728 = vmax.f32 %v618, 0.0
    %v729 = vmax.f32 %v621, 0.0
    %v730 = vmax.f32 %v626, 0.0
    %v731 = vmax.f32 %v629, 0.0
    %v732 = vmax.f32 %v634, 0.0
    %v733 = vmax.f32 %v637, 0.0
    %v734 = vmax.f32 %v642, 0.0
    %v735 = vmax.f32 %v645, 0.0
    %v736 = vmax.f32 %v650, 0.0
    %v737 = vmax.f32 %v653, 0.0
    %v738 = vmax.f32 %v658, 0.0
    %v739 = vmax.f32 %v661, 0.0
    %v740 = vmax.f32 %v666, 0.0
    %v741 = vmax.f32 %v669, 0.0
    %v742 = vmax.f32 %v674, 0.0
    %v743 = vmax.f32 %v677, 0.0
    %v744 = vpack.c.bf16 %v681, %v680
    %v745 = vpack.c.bf16 %v683, %v682
    %v746 = vpack.c.bf16 %v685, %v684
    %v747 = vpack.c.bf16 %v687, %v686
    %v748 = vpack.c.bf16 %v689, %v688
    %v749 = vpack.c.bf16 %v691, %v690
    %v750 = vpack.c.bf16 %v693, %v692
    %v751 = vpack.c.bf16 %v695, %v694
    %v752 = vpack.c.bf16 %v697, %v696
    %v753 = vpack.c.bf16 %v699, %v698
    %v754 = vpack.c.bf16 %v701, %v700
    %v755 = vpack.c.bf16 %v703, %v702
    %v756 = vpack.c.bf16 %v705, %v704
    %v757 = vpack.c.bf16 %v707, %v706
    %v758 = vpack.c.bf16 %v709, %v708
    %v759 = vpack.c.bf16 %v711, %v710
    %v760 = vpack.c.bf16 %v713, %v712
    %v761 = vpack.c.bf16 %v715, %v714
    %v762 = vpack.c.bf16 %v717, %v716
    %v763 = vpack.c.bf16 %v719, %v718
    %v764 = vpack.c.bf16 %v721, %v720
    %v765 = vpack.c.bf16 %v723, %v722
    %v766 = vpack.c.bf16 %v725, %v724
    %v767 = vpack.c.bf16 %v727, %v726
    %v768 = vpack.c.bf16 %v729, %v728
    %v769 = vpack.c.bf16 %v731, %v730
    %v770 = vpack.c.bf16 %v733, %v732
    %v771 = vpack.c.bf16 %v735, %v734
    %v772 = vpack.c.bf16 %v737, %v736
    %v773 = vpack.c.bf16 %v739, %v738
    %v774 = vpack.c.bf16 %v741, %v740
    %v775 = vpack.c.bf16 %v743, %v742
    %v808 = vunpack.c.l.b16 %v744
    %v809 = vunpack.c.h.b16 %v744
    %v810 = vunpack.c.l.b16 %v745
    %v811 = vunpack.c.h.b16 %v745
    %v812 = vunpack.c.l.b16 %v746
    %v813 = vunpack.c.h.b16 %v746
    %v814 = vunpack.c.l.b16 %v747
    %v815 = vunpack.c.h.b16 %v747
    %v816 = vunpack.c.l.b16 %v748
    %v817 = vunpack.c.h.b16 %v748
    %v818 = vunpack.c.l.b16 %v749
    %v819 = vunpack.c.h.b16 %v749
    %v820 = vunpack.c.l.b16 %v750
    %v821 = vunpack.c.h.b16 %v750
    %v822 = vunpack.c.l.b16 %v751
    %v823 = vunpack.c.h.b16 %v751
    %v824 = vunpack.c.l.b16 %v752
    %v825 = vunpack.c.h.b16 %v752
    %v826 = vunpack.c.l.b16 %v753
    %v827 = vunpack.c.h.b16 %v753
    %v828 = vunpack.c.l.b16 %v754
    %v829 = vunpack.c.h.b16 %v754
    %v830 = vunpack.c.l.b16 %v755
    %v831 = vunpack.c.h.b16 %v755
    %v832 = vunpack.c.l.b16 %v756
    %v833 = vunpack.c.h.b16 %v756
    %v834 = vunpack.c.l.b16 %v757
    %v835 = vunpack.c.h.b16 %v757
    %v836 = vunpack.c.l.b16 %v758
    %v837 = vunpack.c.h.b16 %v758
    %v838 = vunpack.c.l.b16 %v759
    %v839 = vunpack.c.h.b16 %v759
    %v840 = vunpack.c.l.b16 %v760
    %v841 = vunpack.c.h.b16 %v760
    %v842 = vunpack.c.l.b16 %v761
    %v843 = vunpack.c.h.b16 %v761
    %v844 = vunpack.c.l.b16 %v762
    %v845 = vunpack.c.h.b16 %v762
    %v846 = vunpack.c.l.b16 %v763
    %v847 = vunpack.c.h.b16 %v763
    %v848 = vunpack.c.l.b16 %v764
    %v849 = vunpack.c.h.b16 %v764
    %v850 = vunpack.c.l.b16 %v765
    %v851 = vunpack.c.h.b16 %v765
    %v852 = vunpack.c.l.b16 %v766
    %v853 = vunpack.c.h.b16 %v766
    %v854 = vunpack.c.l.b16 %v767
    %v855 = vunpack.c.h.b16 %v767
    %v856 = vunpack.c.l.b16 %v768
    %v857 = vunpack.c.h.b16 %v768
    %v858 = vunpack.c.l.b16 %v769
    %v859 = vunpack.c.h.b16 %v769
    %v860 = vunpack.c.l.b16 %v770
    %v861 = vunpack.c.h.b16 %v770
    %v862 = vunpack.c.l.b16 %v771
    %v863 = vunpack.c.h.b16 %v771
    %v864 = vunpack.c.l.b16 %v772
    %v865 = vunpack.c.h.b16 %v772
    %v866 = vunpack.c.l.b16 %v773
    %v867 = vunpack.c.h.b16 %v773
    %v868 = vunpack.c.l.b16 %v774
    %v869 = vunpack.c.h.b16 %v774
    %v870 = vunpack.c.l.b16 %v775
    %v871 = vunpack.c.h.b16 %v775
    %v872 = vpack.c.b16 %v808, %v808
    %v873 = vpack.c.b16 %v809, %v809
    %v874 = vpack.c.b16 %v810, %v810
    %v875 = vpack.c.b16 %v811, %v811
    %v876 = vpack.c.b16 %v812, %v812
    %v877 = vpack.c.b16 %v813, %v813
    %v878 = vpack.c.b16 %v814, %v814
    %v879 = vpack.c.b16 %v815, %v815
    %v880 = vpack.c.b16 %v816, %v816
    %v881 = vpack.c.b16 %v817, %v817
    %v882 = vpack.c.b16 %v818, %v818
    %v883 = vpack.c.b16 %v819, %v819
    %v884 = vpack.c.b16 %v820, %v820
    %v885 = vpack.c.b16 %v821, %v821
    %v886 = vpack.c.b16 %v822, %v822
    %v887 = vpack.c.b16 %v823, %v823
    %v888 = vpack.c.b16 %v824, %v824
    %v889 = vpack.c.b16 %v825, %v825
    %v890 = vpack.c.b16 %v826, %v826
    %v891 = vpack.c.b16 %v827, %v827
    %v892 = vpack.c.b16 %v828, %v828
    %v893 = vpack.c.b16 %v829, %v829
    %v894 = vpack.c.b16 %v830, %v830
    %v895 = vpack.c.b16 %v831, %v831
    %v896 = vpack.c.b16 %v832, %v832
    %v897 = vpack.c.b16 %v833, %v833
    %v898 = vpack.c.b16 %v834, %v834
    %v899 = vpack.c.b16 %v835, %v835
    %v900 = vpack.c.b16 %v836, %v836
    %v901 = vpack.c.b16 %v837, %v837
    %v902 = vpack.c.b16 %v838, %v838
    %v903 = vpack.c.b16 %v839, %v839
    %v904 = vpack.c.b16 %v840, %v840
    %v905 = vpack.c.b16 %v841, %v841
    %v906 = vpack.c.b16 %v842, %v842
    %v907 = vpack.c.b16 %v843, %v843
    %v908 = vpack.c.b16 %v844, %v844
    %v909 = vpack.c.b16 %v845, %v845
    %v910 = vpack.c.b16 %v846, %v846
    %v911 = vpack.c.b16 %v847, %v847
    %v912 = vpack.c.b16 %v848, %v848
    %v913 = vpack.c.b16 %v849, %v849
    %v914 = vpack.c.b16 %v850, %v850
    %v915 = vpack.c.b16 %v851, %v851
    %v916 = vpack.c.b16 %v852, %v852
    %v917 = vpack.c.b16 %v853, %v853
    %v918 = vpack.c.b16 %v854, %v854
    %v919 = vpack.c.b16 %v855, %v855
    %v920 = vpack.c.b16 %v856, %v856
    %v921 = vpack.c.b16 %v857, %v857
    %v922 = vpack.c.b16 %v858, %v858
    %v923 = vpack.c.b16 %v859, %v859
    %v924 = vpack.c.b16 %v860, %v860
    %v925 = vpack.c.b16 %v861, %v861
    %v926 = vpack.c.b16 %v862, %v862
    %v927 = vpack.c.b16 %v863, %v863
    %v928 = vpack.c.b16 %v864, %v864
    %v929 = vpack.c.b16 %v865, %v865
    %v930 = vpack.c.b16 %v866, %v866
    %v931 = vpack.c.b16 %v867, %v867
    %v932 = vpack.c.b16 %v868, %v868
    %v933 = vpack.c.b16 %v869, %v869
    %v934 = vpack.c.b16 %v870, %v870
    %v935 = vpack.c.b16 %v871, %v871
    %vm1000 = vcmask 519168
    %1001 = vst.msk [vmem:[%s3] sm:$0xf] %vm1000, %v872
    %1002 = vst.msk [vmem:[%s3 + $0x4] sm:$0xf] %vm1000, %v873
    %1003 = vst.msk [vmem:[%s3 + $0x8] sm:$0xf] %vm1000, %v874
    %1004 = vst.msk [vmem:[%s3 + $0xc] sm:$0xf] %vm1000, %v875
    %1005 = vst.msk [vmem:[%s3 + $0x10] sm:$0xf] %vm1000, %v876
    %1006 = vst.msk [vmem:[%s3 + $0x14] sm:$0xf] %vm1000, %v877
    %1007 = vst.msk [vmem:[%s3 + $0x18] sm:$0xf] %vm1000, %v878
    %1008 = vst.msk [vmem:[%s3 + $0x1c] sm:$0xf] %vm1000, %v879
    %1009 = vst.msk [vmem:[%s3 + $0x20] sm:$0xf] %vm1000, %v880
    %1010 = vst.msk [vmem:[%s3 + $0x24] sm:$0xf] %vm1000, %v881
    %1011 = vst.msk [vmem:[%s3 + $0x28] sm:$0xf] %vm1000, %v882
    %1012 = vst.msk [vmem:[%s3 + $0x2c] sm:$0xf] %vm1000, %v883
    %1013 = vst.msk [vmem:[%s3 + $0x30] sm:$0xf] %vm1000, %v884
    %1014 = vst.msk [vmem:[%s3 + $0x34] sm:$0xf] %vm1000, %v885
    %1015 = vst.msk [vmem:[%s3 + $0x38] sm:$0xf] %vm1000, %v886
    %1016 = vst.msk [vmem:[%s3 + $0x3c] sm:$0xf] %vm1000, %v887
    %1017 = vst.msk [vmem:[%s3 + $0x40] sm:$0xf] %vm1000, %v888
    %1018 = vst.msk [vmem:[%s3 + $0x44] sm:$0xf] %vm1000, %v889
    %1019 = vst.msk [vmem:[%s3 + $0x48] sm:$0xf] %vm1000, %v890
    %1020 = vst.msk [vmem:[%s3 + $0x4c] sm:$0xf] %vm1000, %v891
    %1021 = vst.msk [vmem:[%s3 + $0x50] sm:$0xf] %vm1000, %v892
    %1022 = vst.msk [vmem:[%s3 + $0x54] sm:$0xf] %vm1000, %v893
    %1023 = vst.msk [vmem:[%s3 + $0x58] sm:$0xf] %vm1000, %v894
    %1024 = vst.msk [vmem:[%s3 + $0x5c] sm:$0xf] %vm1000, %v895
    %1025 = vst.msk [vmem:[%s3 + $0x60] sm:$0xf] %vm1000, %v896
    %1026 = vst.msk [vmem:[%s3 + $0x64] sm:$0xf] %vm1000, %v897
    %1027 = vst.msk [vmem:[%s3 + $0x68] sm:$0xf] %vm1000, %v898
    %1028 = vst.msk [vmem:[%s3 + $0x6c] sm:$0xf] %vm1000, %v899
    %1029 = vst.msk [vmem:[%s3 + $0x70] sm:$0xf] %vm1000, %v900
    %1030 = vst.msk [vmem:[%s3 + $0x74] sm:$0xf] %vm1000, %v901
    %1031 = vst.msk [vmem:[%s3 + $0x78] sm:$0xf] %vm1000, %v902
    %1032 = vst.msk [vmem:[%s3 + $0x7c] sm:$0xf] %vm1000, %v903
    %1033 = vst.msk [vmem:[%s3 + $0x80] sm:$0xf] %vm1000, %v904
    %1034 = vst.msk [vmem:[%s3 + $0x84] sm:$0xf] %vm1000, %v905
    %1035 = vst.msk [vmem:[%s3 + $0x88] sm:$0xf] %vm1000, %v906
    %1036 = vst.msk [vmem:[%s3 + $0x8c] sm:$0xf] %vm1000, %v907
    %1037 = vst.msk [vmem:[%s3 + $0x90] sm:$0xf] %vm1000, %v908
    %1038 = vst.msk [vmem:[%s3 + $0x94] sm:$0xf] %vm1000, %v909
    %1039 = vst.msk [vmem:[%s3 + $0x98] sm:$0xf] %vm1000, %v910
    %1040 = vst.msk [vmem:[%s3 + $0x9c] sm:$0xf] %vm1000, %v911
    %1041 = vst.msk [vmem:[%s3 + $0xa0] sm:$0xf] %vm1000, %v912
    %1042 = vst.msk [vmem:[%s3 + $0xa4] sm:$0xf] %vm1000, %v913
    %1043 = vst.msk [vmem:[%s3 + $0xa8] sm:$0xf] %vm1000, %v914
    %1044 = vst.msk [vmem:[%s3 + $0xac] sm:$0xf] %vm1000, %v915
    %1045 = vst.msk [vmem:[%s3 + $0xb0] sm:$0xf] %vm1000, %v916
    %1046 = vst.msk [vmem:[%s3 + $0xb4] sm:$0xf] %vm1000, %v917
    %1047 = vst.msk [vmem:[%s3 + $0xb8] sm:$0xf] %vm1000, %v918
    %1048 = vst.msk [vmem:[%s3 + $0xbc] sm:$0xf] %vm1000, %v919
    %1049 = vst.msk [vmem:[%s3 + $0xc0] sm:$0xf] %vm1000, %v920
    %1050 = vst.msk [vmem:[%s3 + $0xc4] sm:$0xf] %vm1000, %v921
    %1051 = vst.msk [vmem:[%s3 + $0xc8] sm:$0xf] %vm1000, %v922
    %1052 = vst.msk [vmem:[%s3 + $0xcc] sm:$0xf] %vm1000, %v923
    %1053 = vst.msk [vmem:[%s3 + $0xd0] sm:$0xf] %vm1000, %v924
    %1054 = vst.msk [vmem:[%s3 + $0xd4] sm:$0xf] %vm1000, %v925
    %1055 = vst.msk [vmem:[%s3 + $0xd8] sm:$0xf] %vm1000, %v926
    %1056 = vst.msk [vmem:[%s3 + $0xdc] sm:$0xf] %vm1000, %v927
    %1057 = vst.msk [vmem:[%s3 + $0xe0] sm:$0xf] %vm1000, %v928
    %1058 = vst.msk [vmem:[%s3 + $0xe4] sm:$0xf] %vm1000, %v929
    %1059 = vst.msk [vmem:[%s3 + $0xe8] sm:$0xf] %vm1000, %v930
    %1060 = vst.msk [vmem:[%s3 + $0xec] sm:$0xf] %vm1000, %v931
    %1061 = vst.msk [vmem:[%s3 + $0xf0] sm:$0xf] %vm1000, %v932
    %1062 = vst.msk [vmem:[%s3 + $0xf4] sm:$0xf] %vm1000, %v933
    %1063 = vst.msk [vmem:[%s3 + $0xf8] sm:$0xf] %vm1000, %v934
    %1064 = vst.msk [vmem:[%s3 + $0xfc] sm:$0xf] %vm1000, %v935
    // Predicated region
    $region22: #{detection2d_forward.9} parent=1 // pred_check
      _
    $region23: #{detection2d_forward.9} parent=1 // pred_check_branch
      %1066 = sbr.rel (0) target = $region25
    $region24: #{detection2d_forward.9} parent=1 // pred_region
      _
    $region25: #{detection2d_forward.9} parent=1 // pred_fallthru
      _
    // Predicated region
    $region26: #{detection2d_forward.9} parent=1 // pred_check
      _
    $region27: #{detection2d_forward.9} parent=1 // pred_check_branch
      %1068 = sbr.rel (0) target = $region29
    $region28: #{detection2d_forward.9} parent=1 // pred_region
      _
    $region29: #{detection2d_forward.9} parent=1 // pred_fallthru
      _
    %1069 = vsyncpa [#allocation3], 1
    %1070 = vsyncpa [#allocation5], 1

// kernel: detection2d_forward.10
$region0: #{detection2d_forward.10}
  #allocation0 [shape = 'u32[]', space=smem, size = 0x4, offset = 0x4, fixed_abs, tag = 'smem constant byte address 0x4 - core index']
  #allocation1 [shape = 'u32[144,128]{1,0:T(1,128)}', space=vmem, size = 0x12000, scoped, tag = 'internal scratch']
  %s0 = inlined_call_operand.vmem [shape: bf16[128,576], index: 0, kind: input, shape index: {}]
  %s1 = inlined_call_operand.vmem [shape: bf16[576,64], index: 1, kind: input, shape index: {}]
  %s2 = inlined_call_operand.vmem [shape: f32[1,64], index: 2, kind: input, shape index: {}]
  %s3 = inlined_call_operand.vmem [shape: bf16[128,64], index: 3, kind: output, shape index: {}]
  %s4 = sld [smem:[#allocation0]]
  $region22: #{detection2d_forward.10} parent=0
    _
  %s6 = ssub.s32 1, %s4
  %s7 = scalar_select 0, %s6, %s4
  // Predicated region
  $region2: #{detection2d_forward.10} parent=0 // pred_check
    _
  $region3: #{detection2d_forward.10} parent=0 // pred_check_branch
    %9 = sbr.rel (0) target = $region5
  $region4: #{detection2d_forward.10} parent=0 // pred_region
    _
  $region5: #{detection2d_forward.10} parent=0 // pred_fallthru
    _
  // Predicated region
  $region6: #{detection2d_forward.10} parent=0 // pred_check
    _
  $region7: #{detection2d_forward.10} parent=0 // pred_check_branch
    %11 = sbr.rel (0) target = $region9
  $region8: #{detection2d_forward.10} parent=0 // pred_region
    _
  $region9: #{detection2d_forward.10} parent=0 // pred_fallthru
    _
  // Predicated region
  $region10: #{detection2d_forward.10} parent=0 // pred_check
    _
  $region11: #{detection2d_forward.10} parent=0 // pred_check_branch
    %13 = sbr.rel (0) target = $region13
  $region12: #{detection2d_forward.10} parent=0 // pred_region
    _
  $region13: #{detection2d_forward.10} parent=0 // pred_fallthru
    _
  %v15 = vld [vmem:[%s0] sm:$0xff]
  %v16 = vld [vmem:[%s0 + $0x8] sm:$0xff]
  %v17 = vld [vmem:[%s0 + $0x10] sm:$0xf]
  %v18 = vld [vmem:[%s0 + $0x14] sm:$0xff]
  %v19 = vld [vmem:[%s0 + $0x1c] sm:$0xff]
  %v20 = vld [vmem:[%s0 + $0x24] sm:$0xf]
  %v21 = vld [vmem:[%s0 + $0x28] sm:$0xff]
  %v22 = vld [vmem:[%s0 + $0x30] sm:$0xff]
  %v23 = vld [vmem:[%s0 + $0x38] sm:$0xf]
  %v24 = vld [vmem:[%s0 + $0x3c] sm:$0xff]
  %v25 = vld [vmem:[%s0 + $0x44] sm:$0xff]
  %v26 = vld [vmem:[%s0 + $0x4c] sm:$0xf]
  %v27 = vld [vmem:[%s0 + $0x50] sm:$0xff]
  %v28 = vld [vmem:[%s0 + $0x58] sm:$0xff]
  %v29 = vld [vmem:[%s0 + $0x60] sm:$0xf]
  %v30 = vld [vmem:[%s0 + $0x64] sm:$0xff]
  %v31 = vld [vmem:[%s0 + $0x6c] sm:$0xff]
  %v32 = vld [vmem:[%s0 + $0x74] sm:$0xf]
  %v33 = vld [vmem:[%s0 + $0x78] sm:$0xff]
  %v34 = vld [vmem:[%s0 + $0x80] sm:$0xff]
  %v35 = vld [vmem:[%s0 + $0x88] sm:$0xf]
  %v36 = vld [vmem:[%s0 + $0x8c] sm:$0xff]
  %v37 = vld [vmem:[%s0 + $0x94] sm:$0xff]
  %v38 = vld [vmem:[%s0 + $0x9c] sm:$0xf]
  %v39 = vld [vmem:[%s0 + $0xa0] sm:$0xff]
  %v40 = vld [vmem:[%s0 + $0xa8] sm:$0xff]
  %v41 = vld [vmem:[%s0 + $0xb0] sm:$0xf]
  %v42 = vld [vmem:[%s0 + $0xb4] sm:$0xff]
  %v43 = vld [vmem:[%s0 + $0xbc] sm:$0xff]
  %v44 = vld [vmem:[%s0 + $0xc4] sm:$0xf]
  %v45 = vld [vmem:[%s0 + $0xc8] sm:$0xff]
  %v46 = vld [vmem:[%s0 + $0xd0] sm:$0xff]
  %v47 = vld [vmem:[%s0 + $0xd8] sm:$0xf]
  %v48 = vld [vmem:[%s0 + $0xdc] sm:$0xff]
  %v49 = vld [vmem:[%s0 + $0xe4] sm:$0xff]
  %v50 = vld [vmem:[%s0 + $0xec] sm:$0xf]
  %v51 = vld [vmem:[%s0 + $0xf0] sm:$0xff]
  %v52 = vld [vmem:[%s0 + $0xf8] sm:$0xff]
  %v53 = vld [vmem:[%s0 + $0x100] sm:$0xf]
  %v54 = vld [vmem:[%s0 + $0x104] sm:$0xff]
  %v55 = vld [vmem:[%s0 + $0x10c] sm:$0xff]
  %v56 = vld [vmem:[%s0 + $0x114] sm:$0xf]
  %v57 = vld [vmem:[%s0 + $0x118] sm:$0xff]
  %v58 = vld [vmem:[%s0 + $0x120] sm:$0xff]
  %v59 = vld [vmem:[%s0 + $0x128] sm:$0xf]
  %v60 = vld [vmem:[%s0 + $0x12c] sm:$0xff]
  %v61 = vld [vmem:[%s0 + $0x134] sm:$0xff]
  %v62 = vld [vmem:[%s0 + $0x13c] sm:$0xf]
  %v63 = vld [vmem:[%s1] sm:$0xf]
  %v64 = vld [vmem:[%s1 + $0x4] sm:$0xf]
  %v65 = vld [vmem:[%s1 + $0x8] sm:$0xf]
  %v66 = vld [vmem:[%s1 + $0xc] sm:$0xf]
  %v67 = vld [vmem:[%s1 + $0x10] sm:$0xf]
  %v68 = vld [vmem:[%s1 + $0x14] sm:$0xf]
  %v69 = vld [vmem:[%s1 + $0x18] sm:$0xf]
  %v70 = vld [vmem:[%s1 + $0x1c] sm:$0xf]
  %v71 = vld [vmem:[%s1 + $0x20] sm:$0xf]
  %v72 = vld [vmem:[%s1 + $0x24] sm:$0xf]
  %v73 = vld [vmem:[%s1 + $0x28] sm:$0xf]
  %v74 = vld [vmem:[%s1 + $0x2c] sm:$0xf]
  %v75 = vld [vmem:[%s1 + $0x30] sm:$0xf]
  %v76 = vld [vmem:[%s1 + $0x34] sm:$0xf]
  %v77 = vld [vmem:[%s1 + $0x38] sm:$0xf]
  %v78 = vld [vmem:[%s1 + $0x3c] sm:$0xf]
  %v79 = vld [vmem:[%s1 + $0x40] sm:$0xf]
  %v80 = vld [vmem:[%s1 + $0x44] sm:$0xf]
  %v81 = vld [vmem:[%s1 + $0x48] sm:$0xf]
  %v82 = vld [vmem:[%s1 + $0x4c] sm:$0xf]
  %v83 = vld [vmem:[%s1 + $0x50] sm:$0xf]
  %v84 = vld [vmem:[%s1 + $0x54] sm:$0xf]
  %v85 = vld [vmem:[%s1 + $0x58] sm:$0xf]
  %v86 = vld [vmem:[%s1 + $0x5c] sm:$0xf]
  %v87 = vld [vmem:[%s1 + $0x60] sm:$0xf]
  %v88 = vld [vmem:[%s1 + $0x64] sm:$0xf]
  %v89 = vld [vmem:[%s1 + $0x68] sm:$0xf]
  %v90 = vld [vmem:[%s1 + $0x6c] sm:$0xf]
  %v91 = vld [vmem:[%s1 + $0x70] sm:$0xf]
  %v92 = vld [vmem:[%s1 + $0x74] sm:$0xf]
  %v93 = vld [vmem:[%s1 + $0x78] sm:$0xf]
  %v94 = vld [vmem:[%s1 + $0x7c] sm:$0xf]
  %v95 = vld [vmem:[%s1 + $0x80] sm:$0xf]
  %v96 = vld [vmem:[%s1 + $0x84] sm:$0xf]
  %v97 = vld [vmem:[%s1 + $0x88] sm:$0xf]
  %v98 = vld [vmem:[%s1 + $0x8c] sm:$0xf]
  %v99 = vld [vmem:[%s1 + $0x90] sm:$0xf]
  %v100 = vld [vmem:[%s1 + $0x94] sm:$0xf]
  %v101 = vld [vmem:[%s1 + $0x98] sm:$0xf]
  %v102 = vld [vmem:[%s1 + $0x9c] sm:$0xf]
  %v103 = vld [vmem:[%s1 + $0xa0] sm:$0xf]
  %v104 = vld [vmem:[%s1 + $0xa4] sm:$0xf]
  %v105 = vld [vmem:[%s1 + $0xa8] sm:$0xf]
  %v106 = vld [vmem:[%s1 + $0xac] sm:$0xf]
  %v107 = vld [vmem:[%s1 + $0xb0] sm:$0xf]
  %v108 = vld [vmem:[%s1 + $0xb4] sm:$0xf]
  %v109 = vld [vmem:[%s1 + $0xb8] sm:$0xf]
  %v110 = vld [vmem:[%s1 + $0xbc] sm:$0xf]
  %v111 = vld [vmem:[%s1 + $0xc0] sm:$0xf]
  %v112 = vld [vmem:[%s1 + $0xc4] sm:$0xf]
  %v113 = vld [vmem:[%s1 + $0xc8] sm:$0xf]
  %v114 = vld [vmem:[%s1 + $0xcc] sm:$0xf]
  %v115 = vld [vmem:[%s1 + $0xd0] sm:$0xf]
  %v116 = vld [vmem:[%s1 + $0xd4] sm:$0xf]
  %v117 = vld [vmem:[%s1 + $0xd8] sm:$0xf]
  %v118 = vld [vmem:[%s1 + $0xdc] sm:$0xf]
  %v119 = vld [vmem:[%s1 + $0xe0] sm:$0xf]
  %v120 = vld [vmem:[%s1 + $0xe4] sm:$0xf]
  %v121 = vld [vmem:[%s1 + $0xe8] sm:$0xf]
  %v122 = vld [vmem:[%s1 + $0xec] sm:$0xf]
  %v123 = vld [vmem:[%s1 + $0xf0] sm:$0xf]
  %v124 = vld [vmem:[%s1 + $0xf4] sm:$0xf]
  %v125 = vld [vmem:[%s1 + $0xf8] sm:$0xf]
  %v126 = vld [vmem:[%s1 + $0xfc] sm:$0xf]
  %v127 = vld [vmem:[%s1 + $0x100] sm:$0xf]
  %v128 = vld [vmem:[%s1 + $0x104] sm:$0xf]
  %v129 = vld [vmem:[%s1 + $0x108] sm:$0xf]
  %v130 = vld [vmem:[%s1 + $0x10c] sm:$0xf]
  %v131 = vld [vmem:[%s1 + $0x110] sm:$0xf]
  %v132 = vld [vmem:[%s1 + $0x114] sm:$0xf]
  %v133 = vld [vmem:[%s1 + $0x118] sm:$0xf]
  %v134 = vld [vmem:[%s1 + $0x11c] sm:$0xf]
  %v135 = vld [vmem:[%s2] sm:$0x1]
  %v137 = vlaneseq
  %v138 = vshrl.u32 %v137, 7
  %v139 = vsub.s32 0, %v138
  %v140 = vrot.slane %v135, %v139
  %v190 = vunpack.c.l.b16 %v15
  %v191 = vunpack.c.h.b16 %v15
  %v192 = vunpack.c.l.b16 %v16
  %v193 = vunpack.c.h.b16 %v16
  %v194 = vunpack.c.l.b16 %v17
  %v195 = vunpack.c.l.b16 %v18
  %v196 = vunpack.c.h.b16 %v18
  %v197 = vunpack.c.l.b16 %v19
  %v198 = vunpack.c.h.b16 %v19
  %v199 = vunpack.c.l.b16 %v20
  %v200 = vunpack.c.l.b16 %v21
  %v201 = vunpack.c.h.b16 %v21
  %v202 = vunpack.c.l.b16 %v22
  %v203 = vunpack.c.h.b16 %v22
  %v204 = vunpack.c.l.b16 %v23
  %v205 = vunpack.c.l.b16 %v24
  %v206 = vunpack.c.h.b16 %v24
  %v207 = vunpack.c.l.b16 %v25
  %v208 = vunpack.c.h.b16 %v25
  %v209 = vunpack.c.l.b16 %v26
  %v210 = vunpack.c.l.b16 %v27
  %v211 = vunpack.c.h.b16 %v27
  %v212 = vunpack.c.l.b16 %v28
  %v213 = vunpack.c.h.b16 %v28
  %v214 = vunpack.c.l.b16 %v29
  %v215 = vunpack.c.l.b16 %v30
  %v216 = vunpack.c.h.b16 %v30
  %v217 = vunpack.c.l.b16 %v31
  %v218 = vunpack.c.h.b16 %v31
  %v219 = vunpack.c.l.b16 %v32
  %v220 = vunpack.c.l.b16 %v33
  %v221 = vunpack.c.h.b16 %v33
  %v222 = vunpack.c.l.b16 %v34
  %v223 = vunpack.c.h.b16 %v34
  %v224 = vunpack.c.l.b16 %v35
  %v225 = vunpack.c.l.b16 %v36
  %v226 = vunpack.c.h.b16 %v36
  %v227 = vunpack.c.l.b16 %v37
  %v228 = vunpack.c.h.b16 %v37
  %v229 = vunpack.c.l.b16 %v38
  %v230 = vunpack.c.l.b16 %v39
  %v231 = vunpack.c.h.b16 %v39
  %v232 = vunpack.c.l.b16 %v40
  %v233 = vunpack.c.h.b16 %v40
  %v234 = vunpack.c.l.b16 %v41
  %v235 = vunpack.c.l.b16 %v42
  %v236 = vunpack.c.h.b16 %v42
  %v237 = vunpack.c.l.b16 %v43
  %v238 = vunpack.c.h.b16 %v43
  %v239 = vunpack.c.l.b16 %v44
  %v240 = vunpack.c.l.b16 %v45
  %v241 = vunpack.c.h.b16 %v45
  %v242 = vunpack.c.l.b16 %v46
  %v243 = vunpack.c.h.b16 %v46
  %v244 = vunpack.c.l.b16 %v47
  %v245 = vunpack.c.l.b16 %v48
  %v246 = vunpack.c.h.b16 %v48
  %v247 = vunpack.c.l.b16 %v49
  %v248 = vunpack.c.h.b16 %v49
  %v249 = vunpack.c.l.b16 %v50
  %v250 = vunpack.c.l.b16 %v51
  %v251 = vunpack.c.h.b16 %v51
  %v252 = vunpack.c.l.b16 %v52
  %v253 = vunpack.c.h.b16 %v52
  %v254 = vunpack.c.l.b16 %v53
  %v255 = vunpack.c.l.b16 %v54
  %v256 = vunpack.c.h.b16 %v54
  %v257 = vunpack.c.l.b16 %v55
  %v258 = vunpack.c.h.b16 %v55
  %v259 = vunpack.c.l.b16 %v56
  %v260 = vunpack.c.l.b16 %v57
  %v261 = vunpack.c.h.b16 %v57
  %v262 = vunpack.c.l.b16 %v58
  %v263 = vunpack.c.h.b16 %v58
  %v264 = vunpack.c.l.b16 %v59
  %v265 = vunpack.c.l.b16 %v60
  %v266 = vunpack.c.h.b16 %v60
  %v267 = vunpack.c.l.b16 %v61
  %v268 = vunpack.c.h.b16 %v61
  %v269 = vunpack.c.l.b16 %v62
  %v270 = vpack.c.b16 %v195, %v190
  %v271 = vpack.c.b16 %v196, %v191
  %v272 = vpack.c.b16 %v197, %v192
  %v273 = vpack.c.b16 %v198, %v193
  %v274 = vpack.c.b16 %v199, %v194
  %v275 = vpack.c.b16 %v205, %v200
  %v276 = vpack.c.b16 %v206, %v201
  %v277 = vpack.c.b16 %v207, %v202
  %v278 = vpack.c.b16 %v208, %v203
  %v279 = vpack.c.b16 %v209, %v204
  %v280 = vpack.c.b16 %v215, %v210
  %v281 = vpack.c.b16 %v216, %v211
  %v282 = vpack.c.b16 %v217, %v212
  %v283 = vpack.c.b16 %v218, %v213
  %v284 = vpack.c.b16 %v219, %v214
  %v285 = vpack.c.b16 %v225, %v220
  %v286 = vpack.c.b16 %v226, %v221
  %v287 = vpack.c.b16 %v227, %v222
  %v288 = vpack.c.b16 %v228, %v223
  %v289 = vpack.c.b16 %v229, %v224
  %v290 = vpack.c.b16 %v235, %v230
  %v291 = vpack.c.b16 %v236, %v231
  %v292 = vpack.c.b16 %v237, %v232
  %v293 = vpack.c.b16 %v238, %v233
  %v294 = vpack.c.b16 %v239, %v234
  %v295 = vpack.c.b16 %v245, %v240
  %v296 = vpack.c.b16 %v246, %v241
  %v297 = vpack.c.b16 %v247, %v242
  %v298 = vpack.c.b16 %v248, %v243
  %v299 = vpack.c.b16 %v249, %v244
  %v300 = vpack.c.b16 %v255, %v250
  %v301 = vpack.c.b16 %v256, %v251
  %v302 = vpack.c.b16 %v257, %v252
  %v303 = vpack.c.b16 %v258, %v253
  %v304 = vpack.c.b16 %v259, %v254
  %v305 = vpack.c.b16 %v265, %v260
  %v306 = vpack.c.b16 %v266, %v261
  %v307 = vpack.c.b16 %v267, %v262
  %v308 = vpack.c.b16 %v268, %v263
  %v309 = vpack.c.b16 %v269, %v264
  %v414 = vunpack.c.l.b16 %v63
  %v415 = vunpack.c.l.b16 %v64
  %v416 = vunpack.c.l.b16 %v65
  %v417 = vunpack.c.l.b16 %v66
  %v418 = vunpack.c.l.b16 %v67
  %v419 = vunpack.c.l.b16 %v68
  %v420 = vunpack.c.l.b16 %v69
  %v421 = vunpack.c.l.b16 %v70
  %v422 = vunpack.c.l.b16 %v71
  %v423 = vunpack.c.l.b16 %v72
  %v424 = vunpack.c.l.b16 %v73
  %v425 = vunpack.c.l.b16 %v74
  %v426 = vunpack.c.l.b16 %v75
  %v427 = vunpack.c.l.b16 %v76
  %v428 = vunpack.c.l.b16 %v77
  %v429 = vunpack.c.l.b16 %v78
  %v430 = vunpack.c.l.b16 %v79
  %v431 = vunpack.c.l.b16 %v80
  %v432 = vunpack.c.l.b16 %v81
  %v433 = vunpack.c.l.b16 %v82
  %v434 = vunpack.c.l.b16 %v83
  %v435 = vunpack.c.l.b16 %v84
  %v436 = vunpack.c.l.b16 %v85
  %v437 = vunpack.c.l.b16 %v86
  %v438 = vunpack.c.l.b16 %v87
  %v439 = vunpack.c.l.b16 %v88
  %v440 = vunpack.c.l.b16 %v89
  %v441 = vunpack.c.l.b16 %v90
  %v442 = vunpack.c.l.b16 %v91
  %v443 = vunpack.c.l.b16 %v92
  %v444 = vunpack.c.l.b16 %v93
  %v445 = vunpack.c.l.b16 %v94
  %v446 = vunpack.c.l.b16 %v95
  %v447 = vunpack.c.l.b16 %v96
  %v448 = vunpack.c.l.b16 %v97
  %v449 = vunpack.c.l.b16 %v98
  %v450 = vunpack.c.l.b16 %v99
  %v451 = vunpack.c.l.b16 %v100
  %v452 = vunpack.c.l.b16 %v101
  %v453 = vunpack.c.l.b16 %v102
  %v454 = vunpack.c.l.b16 %v103
  %v455 = vunpack.c.l.b16 %v104
  %v456 = vunpack.c.l.b16 %v105
  %v457 = vunpack.c.l.b16 %v106
  %v458 = vunpack.c.l.b16 %v107
  %v459 = vunpack.c.l.b16 %v108
  %v460 = vunpack.c.l.b16 %v109
  %v461 = vunpack.c.l.b16 %v110
  %v462 = vunpack.c.l.b16 %v111
  %v463 = vunpack.c.l.b16 %v112
  %v464 = vunpack.c.l.b16 %v113
  %v465 = vunpack.c.l.b16 %v114
  %v466 = vunpack.c.l.b16 %v115
  %v467 = vunpack.c.l.b16 %v116
  %v468 = vunpack.c.l.b16 %v117
  %v469 = vunpack.c.l.b16 %v118
  %v470 = vunpack.c.l.b16 %v119
  %v471 = vunpack.c.l.b16 %v120
  %v472 = vunpack.c.l.b16 %v121
  %v473 = vunpack.c.l.b16 %v122
  %v474 = vunpack.c.l.b16 %v123
  %v475 = vunpack.c.l.b16 %v124
  %v476 = vunpack.c.l.b16 %v125
  %v477 = vunpack.c.l.b16 %v126
  %v478 = vunpack.c.l.b16 %v127
  %v479 = vunpack.c.l.b16 %v128
  %v480 = vunpack.c.l.b16 %v129
  %v481 = vunpack.c.l.b16 %v130
  %v482 = vunpack.c.l.b16 %v131
  %v483 = vunpack.c.l.b16 %v132
  %v484 = vunpack.c.l.b16 %v133
  %v485 = vunpack.c.l.b16 %v134
  %v486 = vpack.c.b16 %v415, %v414
  %v487 = vpack.c.b16 %v417, %v416
  %v488 = vpack.c.b16 %v419, %v418
  %v489 = vpack.c.b16 %v421, %v420
  %v490 = vpack.c.b16 %v423, %v422
  %v491 = vpack.c.b16 %v425, %v424
  %v492 = vpack.c.b16 %v427, %v426
  %v493 = vpack.c.b16 %v429, %v428
  %v494 = vpack.c.b16 %v431, %v430
  %v495 = vpack.c.b16 %v433, %v432
  %v496 = vpack.c.b16 %v435, %v434
  %v497 = vpack.c.b16 %v437, %v436
  %v498 = vpack.c.b16 %v439, %v438
  %v499 = vpack.c.b16 %v441, %v440
  %v500 = vpack.c.b16 %v443, %v442
  %v501 = vpack.c.b16 %v445, %v444
  %v502 = vpack.c.b16 %v447, %v446
  %v503 = vpack.c.b16 %v449, %v448
  %v504 = vpack.c.b16 %v451, %v450
  %v505 = vpack.c.b16 %v453, %v452
  %v506 = vpack.c.b16 %v455, %v454
  %v507 = vpack.c.b16 %v457, %v456
  %v508 = vpack.c.b16 %v459, %v458
  %v509 = vpack.c.b16 %v461, %v460
  %v510 = vpack.c.b16 %v463, %v462
  %v511 = vpack.c.b16 %v465, %v464
  %v512 = vpack.c.b16 %v467, %v466
  %v513 = vpack.c.b16 %v469, %v468
  %v514 = vpack.c.b16 %v471, %v470
  %v515 = vpack.c.b16 %v473, %v472
  %v516 = vpack.c.b16 %v475, %v474
  %v517 = vpack.c.b16 %v477, %v476
  %v518 = vpack.c.b16 %v479, %v478
  %v519 = vpack.c.b16 %v481, %v480
  %v520 = vpack.c.b16 %v483, %v482
  %v521 = vpack.c.b16 %v485, %v484
  %vm558 = vcmask 523264
  %v560 = vsel %vm558, %v274, 0
  %v563 = vsel %vm558, %v279, 0
  %v566 = vsel %vm558, %v284, 0
  %v569 = vsel %vm558, %v289, 0
  %v572 = vsel %vm558, %v294, 0
  %v575 = vsel %vm558, %v299, 0
  %v578 = vsel %vm558, %v304, 0
  %v581 = vsel %vm558, %v309, 0
  %583 = vmatprep.subr.bf16.mxu0 0
  %584 = vmatpush1.bf16.msra.mxu0 %v486
  %585 = vmatprep.subr.bf16.mxu0 0
  %586 = vmatpush1.bf16.msra.mxu0 %v487
  %587 = vmatprep.subr.bf16.mxu0 0
  %588 = vmatpush1.bf16.msra.mxu0 %v488
  %589 = vmatprep.subr.bf16.mxu0 0
  %590 = vmatpush1.bf16.msra.mxu0 %v489
  %591 = vmatprep.subr.bf16.mxu0 0
  %592 = vmatpush1.bf16.msra.mxu0 %v490
  %593 = vmatprep.subr.bf16.mxu0 0
  %594 = vmatpush1.bf16.msra.mxu0 %v491
  %595 = vmatprep.subr.bf16.mxu0 0
  %596 = vmatpush1.bf16.msra.mxu0 %v492
  %597 = vmatprep.subr.bf16.mxu0 0
  %598 = vmatpush1.bf16.msra.mxu0 %v493
  %599 = vmatprep.subr.bf16.mxu0 0
  %600 = vmatpush1.bf16.msra.mxu0 %v494
  %601 = vmatprep.subr.bf16.mxu0 0
  %602 = vmatpush1.bf16.msra.mxu0 %v495
  %603 = vmatprep.subr.bf16.mxu0 0
  %604 = vmatpush1.bf16.msra.mxu0 %v496
  %605 = vmatprep.subr.bf16.mxu0 0
  %606 = vmatpush1.bf16.msra.mxu0 %v497
  %607 = vmatprep.subr.bf16.mxu0 0
  %608 = vmatpush1.bf16.msra.mxu0 %v498
  %609 = vmatprep.subr.bf16.mxu0 0
  %610 = vmatpush1.bf16.msra.mxu0 %v499
  %611 = vmatprep.subr.bf16.mxu0 0
  %612 = vmatpush1.bf16.msra.mxu0 %v500
  %613 = vmatprep.subr.bf16.mxu0 0
  %614 = vmatpush1.bf16.msra.mxu0 %v501
  %615 = vmatprep.mubr.bf16.mxu0 %v271
  %616 = vmatmul.mubr.bf16.gmra.mrb[0].mxu0 %v270
  %v617 = vpop.f32.mrb[0].mxu0
  %v618 = vadd.f32 %v140, %v617
  %v619 = vpop.f32.mrb[0].mxu0
  %v620 = vpop.f32.mrb[0].mxu0
  %v621 = vadd.f32 %v140, %v620
  %v622 = vpop.f32.mrb[0].mxu0
  %623 = vmatprep.mubr.bf16.mxu0 %v276
  %624 = vmatmul.mubr.bf16.gmra.mrb[0].mxu0 %v275
  %v625 = vpop.f32.mrb[0].mxu0
  %v626 = vadd.f32 %v140, %v625
  %v627 = vpop.f32.mrb[0].mxu0
  %v628 = vpop.f32.mrb[0].mxu0
  %v629 = vadd.f32 %v140, %v628
  %v630 = vpop.f32.mrb[0].mxu0
  %631 = vmatprep.mubr.bf16.mxu0 %v281
  %632 = vmatmul.mubr.bf16.gmra.mrb[0].mxu0 %v280
  %v633 = vpop.f32.mrb[0].mxu0
  %v634 = vadd.f32 %v140, %v633
  %v635 = vpop.f32.mrb[0].mxu0
  %v636 = vpop.f32.mrb[0].mxu0
  %v637 = vadd.f32 %v140, %v636
  %v638 = vpop.f32.mrb[0].mxu0
  %639 = vmatprep.mubr.bf16.mxu0 %v286
  %640 = vmatmul.mubr.bf16.gmra.mrb[0].mxu0 %v285
  %v641 = vpop.f32.mrb[0].mxu0
  %v642 = vadd.f32 %v140, %v641
  %v643 = vpop.f32.mrb[0].mxu0
  %v644 = vpop.f32.mrb[0].mxu0
  %v645 = vadd.f32 %v140, %v644
  %v646 = vpop.f32.mrb[0].mxu0
  %647 = vmatprep.mubr.bf16.mxu0 %v291
  %648 = vmatmul.mubr.bf16.gmra.mrb[0].mxu0 %v290
  %v649 = vpop.f32.mrb[0].mxu0
  %v650 = vadd.f32 %v140, %v649
  %v651 = vpop.f32.mrb[0].mxu0
  %v652 = vpop.f32.mrb[0].mxu0
  %v653 = vadd.f32 %v140, %v652
  %v654 = vpop.f32.mrb[0].mxu0
  %655 = vmatprep.mubr.bf16.mxu0 %v296
  %656 = vmatmul.mubr.bf16.gmra.mrb[0].mxu0 %v295
  %v657 = vpop.f32.mrb[0].mxu0
  %v658 = vadd.f32 %v140, %v657
  %v659 = vpop.f32.mrb[0].mxu0
  %v660 = vpop.f32.mrb[0].mxu0
  %v661 = vadd.f32 %v140, %v660
  %v662 = vpop.f32.mrb[0].mxu0
  %663 = vmatprep.mubr.bf16.mxu0 %v301
  %664 = vmatmul.mubr.bf16.gmra.mrb[0].mxu0 %v300
  %v665 = vpop.f32.mrb[0].mxu0
  %v666 = vadd.f32 %v140, %v665
  %v667 = vpop.f32.mrb[0].mxu0
  %v668 = vpop.f32.mrb[0].mxu0
  %v669 = vadd.f32 %v140, %v668
  %v670 = vpop.f32.mrb[0].mxu0
  %671 = vmatprep.mubr.bf16.mxu0 %v306
  %672 = vmatmul.mubr.bf16.gmra.mrb[0].mxu0 %v305
  %v673 = vpop.f32.mrb[0].mxu0
  %v674 = vadd.f32 %v140, %v673
  %v675 = vpop.f32.mrb[0].mxu0
  %v676 = vpop.f32.mrb[0].mxu0
  %v677 = vadd.f32 %v140, %v676
  %v678 = vpop.f32.mrb[0].mxu0
  %679 = vdwg.mxu0
  %680 = vmatprep.subr.bf16.mxu0 0
  %681 = vmatpush1.bf16.msra.mxu0 %v502
  %682 = vmatprep.subr.bf16.mxu0 0
  %683 = vmatpush1.bf16.msra.mxu0 %v503
  %684 = vmatprep.subr.bf16.mxu0 0
  %685 = vmatpush1.bf16.msra.mxu0 %v504
  %686 = vmatprep.subr.bf16.mxu0 0
  %687 = vmatpush1.bf16.msra.mxu0 %v505
  %688 = vmatprep.subr.bf16.mxu0 0
  %689 = vmatpush1.bf16.msra.mxu0 %v506
  %690 = vmatprep.subr.bf16.mxu0 0
  %691 = vmatpush1.bf16.msra.mxu0 %v507
  %692 = vmatprep.subr.bf16.mxu0 0
  %693 = vmatpush1.bf16.msra.mxu0 %v508
  %694 = vmatprep.subr.bf16.mxu0 0
  %695 = vmatpush1.bf16.msra.mxu0 %v509
  %696 = vmatprep.subr.bf16.mxu0 0
  %697 = vmatpush1.bf16.msra.mxu0 %v510
  %698 = vmatprep.subr.bf16.mxu0 0
  %699 = vmatpush1.bf16.msra.mxu0 %v511
  %700 = vmatprep.subr.bf16.mxu0 0
  %701 = vmatpush1.bf16.msra.mxu0 %v512
  %702 = vmatprep.subr.bf16.mxu0 0
  %703 = vmatpush1.bf16.msra.mxu0 %v513
  %704 = vmatprep.subr.bf16.mxu0 0
  %705 = vmatpush1.bf16.msra.mxu0 %v514
  %706 = vmatprep.subr.bf16.mxu0 0
  %707 = vmatpush1.bf16.msra.mxu0 %v515
  %708 = vmatprep.subr.bf16.mxu0 0
  %709 = vmatpush1.bf16.msra.mxu0 %v516
  %710 = vmatprep.subr.bf16.mxu0 0
  %711 = vmatpush1.bf16.msra.mxu0 %v517
  %712 = vmatprep.mubr.bf16.mxu0 %v273
  %713 = vmatmul.mubr.bf16.gmra.mrb[0].mxu0 %v272
  %v714 = vpop.f32.mrb[0].mxu0
  %v715 = vadd.f32 %v618, %v714
  %v716 = vpop.f32.mrb[0].mxu0
  %v717 = vpop.f32.mrb[0].mxu0
  %v718 = vadd.f32 %v621, %v717
  %v719 = vpop.f32.mrb[0].mxu0
  %720 = vmatprep.mubr.bf16.mxu0 %v278
  %721 = vmatmul.mubr.bf16.gmra.mrb[0].mxu0 %v277
  %v722 = vpop.f32.mrb[0].mxu0
  %v723 = vadd.f32 %v626, %v722
  %v724 = vpop.f32.mrb[0].mxu0
  %v725 = vpop.f32.mrb[0].mxu0
  %v726 = vadd.f32 %v629, %v725
  %v727 = vpop.f32.mrb[0].mxu0
  %728 = vmatprep.mubr.bf16.mxu0 %v283
  %729 = vmatmul.mubr.bf16.gmra.mrb[0].mxu0 %v282
  %v730 = vpop.f32.mrb[0].mxu0
  %v731 = vadd.f32 %v634, %v730
  %v732 = vpop.f32.mrb[0].mxu0
  %v733 = vpop.f32.mrb[0].mxu0
  %v734 = vadd.f32 %v637, %v733
  %v735 = vpop.f32.mrb[0].mxu0
  %736 = vmatprep.mubr.bf16.mxu0 %v288
  %737 = vmatmul.mubr.bf16.gmra.mrb[0].mxu0 %v287
  %v738 = vpop.f32.mrb[0].mxu0
  %v739 = vadd.f32 %v642, %v738
  %v740 = vpop.f32.mrb[0].mxu0
  %v741 = vpop.f32.mrb[0].mxu0
  %v742 = vadd.f32 %v645, %v741
  %v743 = vpop.f32.mrb[0].mxu0
  %744 = vmatprep.mubr.bf16.mxu0 %v293
  %745 = vmatmul.mubr.bf16.gmra.mrb[0].mxu0 %v292
  %v746 = vpop.f32.mrb[0].mxu0
  %v747 = vadd.f32 %v650, %v746
  %v748 = vpop.f32.mrb[0].mxu0
  %v749 = vpop.f32.mrb[0].mxu0
  %v750 = vadd.f32 %v653, %v749
  %v751 = vpop.f32.mrb[0].mxu0
  %752 = vmatprep.mubr.bf16.mxu0 %v298
  %753 = vmatmul.mubr.bf16.gmra.mrb[0].mxu0 %v297
  %v754 = vpop.f32.mrb[0].mxu0
  %v755 = vadd.f32 %v658, %v754
  %v756 = vpop.f32.mrb[0].mxu0
  %v757 = vpop.f32.mrb[0].mxu0
  %v758 = vadd.f32 %v661, %v757
  %v759 = vpop.f32.mrb[0].mxu0
  %760 = vmatprep.mubr.bf16.mxu0 %v303
  %761 = vmatmul.mubr.bf16.gmra.mrb[0].mxu0 %v302
  %v762 = vpop.f32.mrb[0].mxu0
  %v763 = vadd.f32 %v666, %v762
  %v764 = vpop.f32.mrb[0].mxu0
  %v765 = vpop.f32.mrb[0].mxu0
  %v766 = vadd.f32 %v669, %v765
  %v767 = vpop.f32.mrb[0].mxu0
  %768 = vmatprep.mubr.bf16.mxu0 %v308
  %769 = vmatmul.mubr.bf16.gmra.mrb[0].mxu0 %v307
  %v770 = vpop.f32.mrb[0].mxu0
  %v771 = vadd.f32 %v674, %v770
  %v772 = vpop.f32.mrb[0].mxu0
  %v773 = vpop.f32.mrb[0].mxu0
  %v774 = vadd.f32 %v677, %v773
  %v775 = vpop.f32.mrb[0].mxu0
  %776 = vdwg.mxu0
  %777 = vmatprep.subr.bf16.mxu0 0
  %778 = vmatpush1.bf16.msra.mxu0 %v518
  %779 = vmatprep.subr.bf16.mxu0 0
  %780 = vmatpush1.bf16.msra.mxu0 %v519
  %781 = vmatprep.subr.bf16.mxu0 0
  %782 = vmatpush1.bf16.msra.mxu0 %v520
  %783 = vmatprep.subr.bf16.mxu0 0
  %784 = vmatpush1.bf16.msra.mxu0 %v521
  %785 = vmatprep.subr.bf16.mxu0 0
  %786 = vmatpush1.bf16.msra.mxu0 0
  %787 = vmatprep.subr.bf16.mxu0 0
  %788 = vmatpush1.bf16.msra.mxu0 0
  %789 = vmatprep.subr.bf16.mxu0 0
  %790 = vmatpush1.bf16.msra.mxu0 0
  %791 = vmatprep.subr.bf16.mxu0 0
  %792 = vmatpush1.bf16.msra.mxu0 0
  %793 = vmatprep.subr.bf16.mxu0 0
  %794 = vmatpush1.bf16.msra.mxu0 0
  %795 = vmatprep.subr.bf16.mxu0 0
  %796 = vmatpush1.bf16.msra.mxu0 0
  %797 = vmatprep.subr.bf16.mxu0 0
  %798 = vmatpush1.bf16.msra.mxu0 0
  %799 = vmatprep.subr.bf16.mxu0 0
  %800 = vmatpush1.bf16.msra.mxu0 0
  %801 = vmatprep.subr.bf16.mxu0 0
  %802 = vmatpush1.bf16.msra.mxu0 0
  %803 = vmatprep.subr.bf16.mxu0 0
  %804 = vmatpush1.bf16.msra.mxu0 0
  %805 = vmatprep.subr.bf16.mxu0 0
  %806 = vmatpush1.bf16.msra.mxu0 0
  %807 = vmatprep.subr.bf16.mxu0 0
  %808 = vmatpush1.bf16.msra.mxu0 0
  %809 = vmatprep.mubr.bf16.mxu0 0
  %810 = vmatmul.mubr.bf16.gmra.mrb[0].mxu0 %v560
  %v811 = vpop.f32.mrb[0].mxu0
  %v812 = vadd.f32 %v715, %v811
  %v813 = vpop.f32.mrb[0].mxu0
  %v814 = vpop.f32.mrb[0].mxu0
  %v815 = vadd.f32 %v718, %v814
  %v816 = vpop.f32.mrb[0].mxu0
  %817 = vmatprep.mubr.bf16.mxu0 0
  %818 = vmatmul.mubr.bf16.gmra.mrb[0].mxu0 %v563
  %v819 = vpop.f32.mrb[0].mxu0
  %v820 = vadd.f32 %v723, %v819
  %v821 = vpop.f32.mrb[0].mxu0
  %v822 = vpop.f32.mrb[0].mxu0
  %v823 = vadd.f32 %v726, %v822
  %v824 = vpop.f32.mrb[0].mxu0
  %825 = vmatprep.mubr.bf16.mxu0 0
  %826 = vmatmul.mubr.bf16.gmra.mrb[0].mxu0 %v566
  %v827 = vpop.f32.mrb[0].mxu0
  %v828 = vadd.f32 %v731, %v827
  %v829 = vpop.f32.mrb[0].mxu0
  %v830 = vpop.f32.mrb[0].mxu0
  %v831 = vadd.f32 %v734, %v830
  %v832 = vpop.f32.mrb[0].mxu0
  %833 = vmatprep.mubr.bf16.mxu0 0
  %834 = vmatmul.mubr.bf16.gmra.mrb[0].mxu0 %v569
  %v835 = vpop.f32.mrb[0].mxu0
  %v836 = vadd.f32 %v739, %v835
  %v837 = vpop.f32.mrb[0].mxu0
  %v838 = vpop.f32.mrb[0].mxu0
  %v839 = vadd.f32 %v742, %v838
  %v840 = vpop.f32.mrb[0].mxu0
  %841 = vmatprep.mubr.bf16.mxu0 0
  %842 = vmatmul.mubr.bf16.gmra.mrb[0].mxu0 %v572
  %v843 = vpop.f32.mrb[0].mxu0
  %v844 = vadd.f32 %v747, %v843
  %v845 = vpop.f32.mrb[0].mxu0
  %v846 = vpop.f32.mrb[0].mxu0
  %v847 = vadd.f32 %v750, %v846
  %v848 = vpop.f32.mrb[0].mxu0
  %849 = vmatprep.mubr.bf16.mxu0 0
  %850 = vmatmul.mubr.bf16.gmra.mrb[0].mxu0 %v575
  %v851 = vpop.f32.mrb[0].mxu0
  %v852 = vadd.f32 %v755, %v851
  %v853 = vpop.f32.mrb[0].mxu0
  %v854 = vpop.f32.mrb[0].mxu0
  %v855 = vadd.f32 %v758, %v854
  %v856 = vpop.f32.mrb[0].mxu0
  %857 = vmatprep.mubr.bf16.mxu0 0
  %858 = vmatmul.mubr.bf16.gmra.mrb[0].mxu0 %v578
  %v859 = vpop.f32.mrb[0].mxu0
  %v860 = vadd.f32 %v763, %v859
  %v861 = vpop.f32.mrb[0].mxu0
  %v862 = vpop.f32.mrb[0].mxu0
  %v863 = vadd.f32 %v766, %v862
  %v864 = vpop.f32.mrb[0].mxu0
  %865 = vmatprep.mubr.bf16.mxu0 0
  %866 = vmatmul.mubr.bf16.gmra.mrb[0].mxu0 %v581
  %v867 = vpop.f32.mrb[0].mxu0
  %v868 = vadd.f32 %v771, %v867
  %v869 = vpop.f32.mrb[0].mxu0
  %v870 = vpop.f32.mrb[0].mxu0
  %v871 = vadd.f32 %v774, %v870
  %v872 = vpop.f32.mrb[0].mxu0
  %873 = vdwg.mxu0
  %v874 = vmax.f32 %v812, 0.0
  %v875 = vmax.f32 %v815, 0.0
  %v876 = vmax.f32 %v820, 0.0
  %v877 = vmax.f32 %v823, 0.0
  %v878 = vmax.f32 %v828, 0.0
  %v879 = vmax.f32 %v831, 0.0
  %v880 = vmax.f32 %v836, 0.0
  %v881 = vmax.f32 %v839, 0.0
  %v882 = vmax.f32 %v844, 0.0
  %v883 = vmax.f32 %v847, 0.0
  %v884 = vmax.f32 %v852, 0.0
  %v885 = vmax.f32 %v855, 0.0
  %v886 = vmax.f32 %v860, 0.0
  %v887 = vmax.f32 %v863, 0.0
  %v888 = vmax.f32 %v868, 0.0
  %v889 = vmax.f32 %v871, 0.0
  %v890 = vpack.c.bf16 %v875, %v874
  %v891 = vpack.c.bf16 %v877, %v876
  %v892 = vpack.c.bf16 %v879, %v878
  %v893 = vpack.c.bf16 %v881, %v880
  %v894 = vpack.c.bf16 %v883, %v882
  %v895 = vpack.c.bf16 %v885, %v884
  %v896 = vpack.c.bf16 %v887, %v886
  %v897 = vpack.c.bf16 %v889, %v888
  %v906 = vunpack.c.l.b16 %v890
  %v907 = vunpack.c.h.b16 %v890
  %v908 = vunpack.c.l.b16 %v891
  %v909 = vunpack.c.h.b16 %v891
  %v910 = vunpack.c.l.b16 %v892
  %v911 = vunpack.c.h.b16 %v892
  %v912 = vunpack.c.l.b16 %v893
  %v913 = vunpack.c.h.b16 %v893
  %v914 = vunpack.c.l.b16 %v894
  %v915 = vunpack.c.h.b16 %v894
  %v916 = vunpack.c.l.b16 %v895
  %v917 = vunpack.c.h.b16 %v895
  %v918 = vunpack.c.l.b16 %v896
  %v919 = vunpack.c.h.b16 %v896
  %v920 = vunpack.c.l.b16 %v897
  %v921 = vunpack.c.h.b16 %v897
  %v922 = vpack.c.b16 %v906, %v906
  %v923 = vpack.c.b16 %v907, %v907
  %v924 = vpack.c.b16 %v908, %v908
  %v925 = vpack.c.b16 %v909, %v909
  %v926 = vpack.c.b16 %v910, %v910
  %v927 = vpack.c.b16 %v911, %v911
  %v928 = vpack.c.b16 %v912, %v912
  %v929 = vpack.c.b16 %v913, %v913
  %v930 = vpack.c.b16 %v914, %v914
  %v931 = vpack.c.b16 %v915, %v915
  %v932 = vpack.c.b16 %v916, %v916
  %v933 = vpack.c.b16 %v917, %v917
  %v934 = vpack.c.b16 %v918, %v918
  %v935 = vpack.c.b16 %v919, %v919
  %v936 = vpack.c.b16 %v920, %v920
  %v937 = vpack.c.b16 %v921, %v921
  %vm954 = vcmask 519168
  %955 = vst.msk [vmem:[%s3] sm:$0xf] %vm954, %v922
  %956 = vst.msk [vmem:[%s3 + $0x4] sm:$0xf] %vm954, %v923
  %957 = vst.msk [vmem:[%s3 + $0x8] sm:$0xf] %vm954, %v924
  %958 = vst.msk [vmem:[%s3 + $0xc] sm:$0xf] %vm954, %v925
  %959 = vst.msk [vmem:[%s3 + $0x10] sm:$0xf] %vm954, %v926
  %960 = vst.msk [vmem:[%s3 + $0x14] sm:$0xf] %vm954, %v927
  %961 = vst.msk [vmem:[%s3 + $0x18] sm:$0xf] %vm954, %v928
  %962 = vst.msk [vmem:[%s3 + $0x1c] sm:$0xf] %vm954, %v929
  %963 = vst.msk [vmem:[%s3 + $0x20] sm:$0xf] %vm954, %v930
  %964 = vst.msk [vmem:[%s3 + $0x24] sm:$0xf] %vm954, %v931
  %965 = vst.msk [vmem:[%s3 + $0x28] sm:$0xf] %vm954, %v932
  %966 = vst.msk [vmem:[%s3 + $0x2c] sm:$0xf] %vm954, %v933
  %967 = vst.msk [vmem:[%s3 + $0x30] sm:$0xf] %vm954, %v934
  %968 = vst.msk [vmem:[%s3 + $0x34] sm:$0xf] %vm954, %v935
  %969 = vst.msk [vmem:[%s3 + $0x38] sm:$0xf] %vm954, %v936
  %970 = vst.msk [vmem:[%s3 + $0x3c] sm:$0xf] %vm954, %v937
  // Predicated region
  $region14: #{detection2d_forward.10} parent=0 // pred_check
    _
  $region15: #{detection2d_forward.10} parent=0 // pred_check_branch
    %972 = sbr.rel (0) target = $region17
  $region16: #{detection2d_forward.10} parent=0 // pred_region
    _
  $region17: #{detection2d_forward.10} parent=0 // pred_fallthru
    _
  // Predicated region
  $region18: #{detection2d_forward.10} parent=0 // pred_check
    _
  $region19: #{detection2d_forward.10} parent=0 // pred_check_branch
    %974 = sbr.rel (0) target = $region21
  $region20: #{detection2d_forward.10} parent=0 // pred_region
    _
  $region21: #{detection2d_forward.10} parent=0 // pred_fallthru
    _

// kernel: detection2d_forward.11
$region0: #{detection2d_forward.11}
  #allocation0 [shape = 'u32[]', space=smem, size = 0x4, offset = 0x4, fixed_abs, tag = 'smem constant byte address 0x4 - core index']
  #allocation1 [shape = 'u32[144,128]{1,0:T(1,128)}', space=vmem, size = 0x12000, scoped, tag = 'internal scratch']
  %s0 = inlined_call_operand.vmem [shape: bf16[32,576], index: 0, kind: input, shape index: {}]
  %s1 = inlined_call_operand.vmem [shape: bf16[576,128], index: 1, kind: input, shape index: {}]
  %s2 = inlined_call_operand.vmem [shape: f32[1,128], index: 2, kind: input, shape index: {}]
  %s3 = inlined_call_operand.vmem [shape: bf16[32,128], index: 3, kind: output, shape index: {}]
  %s4 = sld [smem:[#allocation0]]
  $region22: #{detection2d_forward.11} parent=0
    _
  %s6 = ssub.s32 1, %s4
  %s7 = scalar_select 0, %s6, %s4
  // Predicated region
  $region2: #{detection2d_forward.11} parent=0 // pred_check
    _
  $region3: #{detection2d_forward.11} parent=0 // pred_check_branch
    %9 = sbr.rel (0) target = $region5
  $region4: #{detection2d_forward.11} parent=0 // pred_region
    _
  $region5: #{detection2d_forward.11} parent=0 // pred_fallthru
    _
  // Predicated region
  $region6: #{detection2d_forward.11} parent=0 // pred_check
    _
  $region7: #{detection2d_forward.11} parent=0 // pred_check_branch
    %11 = sbr.rel (0) target = $region9
  $region8: #{detection2d_forward.11} parent=0 // pred_region
    _
  $region9: #{detection2d_forward.11} parent=0 // pred_fallthru
    _
  // Predicated region
  $region10: #{detection2d_forward.11} parent=0 // pred_check
    _
  $region11: #{detection2d_forward.11} parent=0 // pred_check_branch
    %13 = sbr.rel (0) target = $region13
  $region12: #{detection2d_forward.11} parent=0 // pred_region
    _
  $region13: #{detection2d_forward.11} parent=0 // pred_fallthru
    _
  %v15 = vld [vmem:[%s0] sm:$0xff]
  %v16 = vld [vmem:[%s0 + $0x8] sm:$0xff]
  %v17 = vld [vmem:[%s0 + $0x10] sm:$0xf]
  %v18 = vld [vmem:[%s0 + $0x14] sm:$0xff]
  %v19 = vld [vmem:[%s0 + $0x1c] sm:$0xff]
  %v20 = vld [vmem:[%s0 + $0x24] sm:$0xf]
  %v21 = vld [vmem:[%s0 + $0x28] sm:$0xff]
  %v22 = vld [vmem:[%s0 + $0x30] sm:$0xff]
  %v23 = vld [vmem:[%s0 + $0x38] sm:$0xf]
  %v24 = vld [vmem:[%s0 + $0x3c] sm:$0xff]
  %v25 = vld [vmem:[%s0 + $0x44] sm:$0xff]
  %v26 = vld [vmem:[%s0 + $0x4c] sm:$0xf]
  %v27 = vld [vmem:[%s1] sm:$0xf]
  %v28 = vld [vmem:[%s1 + $0x4] sm:$0xf]
  %v29 = vld [vmem:[%s1 + $0x8] sm:$0xf]
  %v30 = vld [vmem:[%s1 + $0xc] sm:$0xf]
  %v31 = vld [vmem:[%s1 + $0x10] sm:$0xf]
  %v32 = vld [vmem:[%s1 + $0x14] sm:$0xf]
  %v33 = vld [vmem:[%s1 + $0x18] sm:$0xf]
  %v34 = vld [vmem:[%s1 + $0x1c] sm:$0xf]
  %v35 = vld [vmem:[%s1 + $0x20] sm:$0xf]
  %v36 = vld [vmem:[%s1 + $0x24] sm:$0xf]
  %v37 = vld [vmem:[%s1 + $0x28] sm:$0xf]
  %v38 = vld [vmem:[%s1 + $0x2c] sm:$0xf]
  %v39 = vld [vmem:[%s1 + $0x30] sm:$0xf]
  %v40 = vld [vmem:[%s1 + $0x34] sm:$0xf]
  %v41 = vld [vmem:[%s1 + $0x38] sm:$0xf]
  %v42 = vld [vmem:[%s1 + $0x3c] sm:$0xf]
  %v43 = vld [vmem:[%s1 + $0x40] sm:$0xf]
  %v44 = vld [vmem:[%s1 + $0x44] sm:$0xf]
  %v45 = vld [vmem:[%s1 + $0x48] sm:$0xf]
  %v46 = vld [vmem:[%s1 + $0x4c] sm:$0xf]
  %v47 = vld [vmem:[%s1 + $0x50] sm:$0xf]
  %v48 = vld [vmem:[%s1 + $0x54] sm:$0xf]
  %v49 = vld [vmem:[%s1 + $0x58] sm:$0xf]
  %v50 = vld [vmem:[%s1 + $0x5c] sm:$0xf]
  %v51 = vld [vmem:[%s1 + $0x60] sm:$0xf]
  %v52 = vld [vmem:[%s1 + $0x64] sm:$0xf]
  %v53 = vld [vmem:[%s1 + $0x68] sm:$0xf]
  %v54 = vld [vmem:[%s1 + $0x6c] sm:$0xf]
  %v55 = vld [vmem:[%s1 + $0x70] sm:$0xf]
  %v56 = vld [vmem:[%s1 + $0x74] sm:$0xf]
  %v57 = vld [vmem:[%s1 + $0x78] sm:$0xf]
  %v58 = vld [vmem:[%s1 + $0x7c] sm:$0xf]
  %v59 = vld [vmem:[%s1 + $0x80] sm:$0xf]
  %v60 = vld [vmem:[%s1 + $0x84] sm:$0xf]
  %v61 = vld [vmem:[%s1 + $0x88] sm:$0xf]
  %v62 = vld [vmem:[%s1 + $0x8c] sm:$0xf]
  %v63 = vld [vmem:[%s1 + $0x90] sm:$0xf]
  %v64 = vld [vmem:[%s1 + $0x94] sm:$0xf]
  %v65 = vld [vmem:[%s1 + $0x98] sm:$0xf]
  %v66 = vld [vmem:[%s1 + $0x9c] sm:$0xf]
  %v67 = vld [vmem:[%s1 + $0xa0] sm:$0xf]
  %v68 = vld [vmem:[%s1 + $0xa4] sm:$0xf]
  %v69 = vld [vmem:[%s1 + $0xa8] sm:$0xf]
  %v70 = vld [vmem:[%s1 + $0xac] sm:$0xf]
  %v71 = vld [vmem:[%s1 + $0xb0] sm:$0xf]
  %v72 = vld [vmem:[%s1 + $0xb4] sm:$0xf]
  %v73 = vld [vmem:[%s1 + $0xb8] sm:$0xf]
  %v74 = vld [vmem:[%s1 + $0xbc] sm:$0xf]
  %v75 = vld [vmem:[%s1 + $0xc0] sm:$0xf]
  %v76 = vld [vmem:[%s1 + $0xc4] sm:$0xf]
  %v77 = vld [vmem:[%s1 + $0xc8] sm:$0xf]
  %v78 = vld [vmem:[%s1 + $0xcc] sm:$0xf]
  %v79 = vld [vmem:[%s1 + $0xd0] sm:$0xf]
  %v80 = vld [vmem:[%s1 + $0xd4] sm:$0xf]
  %v81 = vld [vmem:[%s1 + $0xd8] sm:$0xf]
  %v82 = vld [vmem:[%s1 + $0xdc] sm:$0xf]
  %v83 = vld [vmem:[%s1 + $0xe0] sm:$0xf]
  %v84 = vld [vmem:[%s1 + $0xe4] sm:$0xf]
  %v85 = vld [vmem:[%s1 + $0xe8] sm:$0xf]
  %v86 = vld [vmem:[%s1 + $0xec] sm:$0xf]
  %v87 = vld [vmem:[%s1 + $0xf0] sm:$0xf]
  %v88 = vld [vmem:[%s1 + $0xf4] sm:$0xf]
  %v89 = vld [vmem:[%s1 + $0xf8] sm:$0xf]
  %v90 = vld [vmem:[%s1 + $0xfc] sm:$0xf]
  %v91 = vld [vmem:[%s1 + $0x100] sm:$0xf]
  %v92 = vld [vmem:[%s1 + $0x104] sm:$0xf]
  %v93 = vld [vmem:[%s1 + $0x108] sm:$0xf]
  %v94 = vld [vmem:[%s1 + $0x10c] sm:$0xf]
  %v95 = vld [vmem:[%s1 + $0x110] sm:$0xf]
  %v96 = vld [vmem:[%s1 + $0x114] sm:$0xf]
  %v97 = vld [vmem:[%s1 + $0x118] sm:$0xf]
  %v98 = vld [vmem:[%s1 + $0x11c] sm:$0xf]
  %v99 = vld [vmem:[%s2] sm:$0x1]
  %v101 = vlaneseq
  %v102 = vshrl.u32 %v101, 7
  %v103 = vsub.s32 0, %v102
  %v104 = vrot.slane %v99, %v103
  %v118 = vunpack.c.l.b16 %v15
  %v119 = vunpack.c.h.b16 %v15
  %v120 = vunpack.c.l.b16 %v16
  %v121 = vunpack.c.h.b16 %v16
  %v122 = vunpack.c.l.b16 %v17
  %v123 = vunpack.c.l.b16 %v18
  %v124 = vunpack.c.h.b16 %v18
  %v125 = vunpack.c.l.b16 %v19
  %v126 = vunpack.c.h.b16 %v19
  %v127 = vunpack.c.l.b16 %v20
  %v128 = vunpack.c.l.b16 %v21
  %v129 = vunpack.c.h.b16 %v21
  %v130 = vunpack.c.l.b16 %v22
  %v131 = vunpack.c.h.b16 %v22
  %v132 = vunpack.c.l.b16 %v23
  %v133 = vunpack.c.l.b16 %v24
  %v134 = vunpack.c.h.b16 %v24
  %v135 = vunpack.c.l.b16 %v25
  %v136 = vunpack.c.h.b16 %v25
  %v137 = vunpack.c.l.b16 %v26
  %v138 = vpack.c.b16 %v123, %v118
  %v139 = vpack.c.b16 %v124, %v119
  %v140 = vpack.c.b16 %v125, %v120
  %v141 = vpack.c.b16 %v126, %v121
  %v142 = vpack.c.b16 %v127, %v122
  %v143 = vpack.c.b16 %v133, %v128
  %v144 = vpack.c.b16 %v134, %v129
  %v145 = vpack.c.b16 %v135, %v130
  %v146 = vpack.c.b16 %v136, %v131
  %v147 = vpack.c.b16 %v137, %v132
  %v228 = vunpack.c.l.b16 %v27
  %v229 = vunpack.c.l.b16 %v28
  %v230 = vunpack.c.l.b16 %v29
  %v231 = vunpack.c.l.b16 %v30
  %v232 = vunpack.c.l.b16 %v31
  %v233 = vunpack.c.l.b16 %v32
  %v234 = vunpack.c.l.b16 %v33
  %v235 = vunpack.c.l.b16 %v34
  %v236 = vunpack.c.l.b16 %v35
  %v237 = vunpack.c.l.b16 %v36
  %v238 = vunpack.c.l.b16 %v37
  %v239 = vunpack.c.l.b16 %v38
  %v240 = vunpack.c.l.b16 %v39
  %v241 = vunpack.c.l.b16 %v40
  %v242 = vunpack.c.l.b16 %v41
  %v243 = vunpack.c.l.b16 %v42
  %v244 = vunpack.c.l.b16 %v43
  %v245 = vunpack.c.l.b16 %v44
  %v246 = vunpack.c.l.b16 %v45
  %v247 = vunpack.c.l.b16 %v46
  %v248 = vunpack.c.l.b16 %v47
  %v249 = vunpack.c.l.b16 %v48
  %v250 = vunpack.c.l.b16 %v49
  %v251 = vunpack.c.l.b16 %v50
  %v252 = vunpack.c.l.b16 %v51
  %v253 = vunpack.c.l.b16 %v52
  %v254 = vunpack.c.l.b16 %v53
  %v255 = vunpack.c.l.b16 %v54
  %v256 = vunpack.c.l.b16 %v55
  %v257 = vunpack.c.l.b16 %v56
  %v258 = vunpack.c.l.b16 %v57
  %v259 = vunpack.c.l.b16 %v58
  %v260 = vunpack.c.l.b16 %v59
  %v261 = vunpack.c.l.b16 %v60
  %v262 = vunpack.c.l.b16 %v61
  %v263 = vunpack.c.l.b16 %v62
  %v264 = vunpack.c.l.b16 %v63
  %v265 = vunpack.c.l.b16 %v64
  %v266 = vunpack.c.l.b16 %v65
  %v267 = vunpack.c.l.b16 %v66
  %v268 = vunpack.c.l.b16 %v67
  %v269 = vunpack.c.l.b16 %v68
  %v270 = vunpack.c.l.b16 %v69
  %v271 = vunpack.c.l.b16 %v70
  %v272 = vunpack.c.l.b16 %v71
  %v273 = vunpack.c.l.b16 %v72
  %v274 = vunpack.c.l.b16 %v73
  %v275 = vunpack.c.l.b16 %v74
  %v276 = vunpack.c.l.b16 %v75
  %v277 = vunpack.c.l.b16 %v76
  %v278 = vunpack.c.l.b16 %v77
  %v279 = vunpack.c.l.b16 %v78
  %v280 = vunpack.c.l.b16 %v79
  %v281 = vunpack.c.l.b16 %v80
  %v282 = vunpack.c.l.b16 %v81
  %v283 = vunpack.c.l.b16 %v82
  %v284 = vunpack.c.l.b16 %v83
  %v285 = vunpack.c.l.b16 %v84
  %v286 = vunpack.c.l.b16 %v85
  %v287 = vunpack.c.l.b16 %v86
  %v288 = vunpack.c.l.b16 %v87
  %v289 = vunpack.c.l.b16 %v88
  %v290 = vunpack.c.l.b16 %v89
  %v291 = vunpack.c.l.b16 %v90
  %v292 = vunpack.c.l.b16 %v91
  %v293 = vunpack.c.l.b16 %v92
  %v294 = vunpack.c.l.b16 %v93
  %v295 = vunpack.c.l.b16 %v94
  %v296 = vunpack.c.l.b16 %v95
  %v297 = vunpack.c.l.b16 %v96
  %v298 = vunpack.c.l.b16 %v97
  %v299 = vunpack.c.l.b16 %v98
  %v300 = vpack.c.b16 %v229, %v228
  %v301 = vpack.c.b16 %v231, %v230
  %v302 = vpack.c.b16 %v233, %v232
  %v303 = vpack.c.b16 %v235, %v234
  %v304 = vpack.c.b16 %v237, %v236
  %v305 = vpack.c.b16 %v239, %v238
  %v306 = vpack.c.b16 %v241, %v240
  %v307 = vpack.c.b16 %v243, %v242
  %v308 = vpack.c.b16 %v245, %v244
  %v309 = vpack.c.b16 %v247, %v246
  %v310 = vpack.c.b16 %v249, %v248
  %v311 = vpack.c.b16 %v251, %v250
  %v312 = vpack.c.b16 %v253, %v252
  %v313 = vpack.c.b16 %v255, %v254
  %v314 = vpack.c.b16 %v257, %v256
  %v315 = vpack.c.b16 %v259, %v258
  %v316 = vpack.c.b16 %v261, %v260
  %v317 = vpack.c.b16 %v263, %v262
  %v318 = vpack.c.b16 %v265, %v264
  %v319 = vpack.c.b16 %v267, %v266
  %v320 = vpack.c.b16 %v269, %v268
  %v321 = vpack.c.b16 %v271, %v270
  %v322 = vpack.c.b16 %v273, %v272
  %v323 = vpack.c.b16 %v275, %v274
  %v324 = vpack.c.b16 %v277, %v276
  %v325 = vpack.c.b16 %v279, %v278
  %v326 = vpack.c.b16 %v281, %v280
  %v327 = vpack.c.b16 %v283, %v282
  %v328 = vpack.c.b16 %v285, %v284
  %v329 = vpack.c.b16 %v287, %v286
  %v330 = vpack.c.b16 %v289, %v288
  %v331 = vpack.c.b16 %v291, %v290
  %v332 = vpack.c.b16 %v293, %v292
  %v333 = vpack.c.b16 %v295, %v294
  %v334 = vpack.c.b16 %v297, %v296
  %v335 = vpack.c.b16 %v299, %v298
  %vm372 = vcmask 523264
  %v374 = vsel %vm372, %v142, 0
  %v377 = vsel %vm372, %v147, 0
  %379 = vmatprep.subr.bf16.mxu0 0
  %380 = vmatpush1.bf16.msra.mxu0 %v300
  %381 = vmatprep.subr.bf16.mxu0 0
  %382 = vmatpush1.bf16.msra.mxu0 %v301
  %383 = vmatprep.subr.bf16.mxu0 0
  %384 = vmatpush1.bf16.msra.mxu0 %v302
  %385 = vmatprep.subr.bf16.mxu0 0
  %386 = vmatpush1.bf16.msra.mxu0 %v303
  %387 = vmatprep.subr.bf16.mxu0 0
  %388 = vmatpush1.bf16.msra.mxu0 %v304
  %389 = vmatprep.subr.bf16.mxu0 0
  %390 = vmatpush1.bf16.msra.mxu0 %v305
  %391 = vmatprep.subr.bf16.mxu0 0
  %392 = vmatpush1.bf16.msra.mxu0 %v306
  %393 = vmatprep.subr.bf16.mxu0 0
  %394 = vmatpush1.bf16.msra.mxu0 %v307
  %395 = vmatprep.subr.bf16.mxu0 0
  %396 = vmatpush1.bf16.msra.mxu0 %v308
  %397 = vmatprep.subr.bf16.mxu0 0
  %398 = vmatpush1.bf16.msra.mxu0 %v309
  %399 = vmatprep.subr.bf16.mxu0 0
  %400 = vmatpush1.bf16.msra.mxu0 %v310
  %401 = vmatprep.subr.bf16.mxu0 0
  %402 = vmatpush1.bf16.msra.mxu0 %v311
  %403 = vmatprep.subr.bf16.mxu0 0
  %404 = vmatpush1.bf16.msra.mxu0 %v312
  %405 = vmatprep.subr.bf16.mxu0 0
  %406 = vmatpush1.bf16.msra.mxu0 %v313
  %407 = vmatprep.subr.bf16.mxu0 0
  %408 = vmatpush1.bf16.msra.mxu0 %v314
  %409 = vmatprep.subr.bf16.mxu0 0
  %410 = vmatpush1.bf16.msra.mxu0 %v315
  %411 = vmatprep.mubr.bf16.mxu0 %v139
  %412 = vmatmul.mubr.bf16.gmra.mrb[0].mxu0 %v138
  %v413 = vpop.f32.mrb[0].mxu0
  %v414 = vadd.f32 %v104, %v413
  %v415 = vpop.f32.mrb[0].mxu0
  %v416 = vpop.f32.mrb[0].mxu0
  %v417 = vadd.f32 %v104, %v416
  %v418 = vpop.f32.mrb[0].mxu0
  %419 = vmatprep.mubr.bf16.mxu0 %v144
  %420 = vmatmul.mubr.bf16.gmra.mrb[0].mxu0 %v143
  %v421 = vpop.f32.mrb[0].mxu0
  %v422 = vadd.f32 %v104, %v421
  %v423 = vpop.f32.mrb[0].mxu0
  %v424 = vpop.f32.mrb[0].mxu0
  %v425 = vadd.f32 %v104, %v424
  %v426 = vpop.f32.mrb[0].mxu0
  %427 = vdwg.mxu0
  %428 = vmatprep.subr.bf16.mxu0 0
  %429 = vmatpush1.bf16.msra.mxu0 %v316
  %430 = vmatprep.subr.bf16.mxu0 0
  %431 = vmatpush1.bf16.msra.mxu0 %v317
  %432 = vmatprep.subr.bf16.mxu0 0
  %433 = vmatpush1.bf16.msra.mxu0 %v318
  %434 = vmatprep.subr.bf16.mxu0 0
  %435 = vmatpush1.bf16.msra.mxu0 %v319
  %436 = vmatprep.subr.bf16.mxu0 0
  %437 = vmatpush1.bf16.msra.mxu0 %v320
  %438 = vmatprep.subr.bf16.mxu0 0
  %439 = vmatpush1.bf16.msra.mxu0 %v321
  %440 = vmatprep.subr.bf16.mxu0 0
  %441 = vmatpush1.bf16.msra.mxu0 %v322
  %442 = vmatprep.subr.bf16.mxu0 0
  %443 = vmatpush1.bf16.msra.mxu0 %v323
  %444 = vmatprep.subr.bf16.mxu0 0
  %445 = vmatpush1.bf16.msra.mxu0 %v324
  %446 = vmatprep.subr.bf16.mxu0 0
  %447 = vmatpush1.bf16.msra.mxu0 %v325
  %448 = vmatprep.subr.bf16.mxu0 0
  %449 = vmatpush1.bf16.msra.mxu0 %v326
  %450 = vmatprep.subr.bf16.mxu0 0
  %451 = vmatpush1.bf16.msra.mxu0 %v327
  %452 = vmatprep.subr.bf16.mxu0 0
  %453 = vmatpush1.bf16.msra.mxu0 %v328
  %454 = vmatprep.subr.bf16.mxu0 0
  %455 = vmatpush1.bf16.msra.mxu0 %v329
  %456 = vmatprep.subr.bf16.mxu0 0
  %457 = vmatpush1.bf16.msra.mxu0 %v330
  %458 = vmatprep.subr.bf16.mxu0 0
  %459 = vmatpush1.bf16.msra.mxu0 %v331
  %460 = vmatprep.mubr.bf16.mxu0 %v141
  %461 = vmatmul.mubr.bf16.gmra.mrb[0].mxu0 %v140
  %v462 = vpop.f32.mrb[0].mxu0
  %v463 = vadd.f32 %v414, %v462
  %v464 = vpop.f32.mrb[0].mxu0
  %v465 = vpop.f32.mrb[0].mxu0
  %v466 = vadd.f32 %v417, %v465
  %v467 = vpop.f32.mrb[0].mxu0
  %468 = vmatprep.mubr.bf16.mxu0 %v146
  %469 = vmatmul.mubr.bf16.gmra.mrb[0].mxu0 %v145
  %v470 = vpop.f32.mrb[0].mxu0
  %v471 = vadd.f32 %v422, %v470
  %v472 = vpop.f32.mrb[0].mxu0
  %v473 = vpop.f32.mrb[0].mxu0
  %v474 = vadd.f32 %v425, %v473
  %v475 = vpop.f32.mrb[0].mxu0
  %476 = vdwg.mxu0
  %477 = vmatprep.subr.bf16.mxu0 0
  %478 = vmatpush1.bf16.msra.mxu0 %v332
  %479 = vmatprep.subr.bf16.mxu0 0
  %480 = vmatpush1.bf16.msra.mxu0 %v333
  %481 = vmatprep.subr.bf16.mxu0 0
  %482 = vmatpush1.bf16.msra.mxu0 %v334
  %483 = vmatprep.subr.bf16.mxu0 0
  %484 = vmatpush1.bf16.msra.mxu0 %v335
  %485 = vmatprep.subr.bf16.mxu0 0
  %486 = vmatpush1.bf16.msra.mxu0 0
  %487 = vmatprep.subr.bf16.mxu0 0
  %488 = vmatpush1.bf16.msra.mxu0 0
  %489 = vmatprep.subr.bf16.mxu0 0
  %490 = vmatpush1.bf16.msra.mxu0 0
  %491 = vmatprep.subr.bf16.mxu0 0
  %492 = vmatpush1.bf16.msra.mxu0 0
  %493 = vmatprep.subr.bf16.mxu0 0
  %494 = vmatpush1.bf16.msra.mxu0 0
  %495 = vmatprep.subr.bf16.mxu0 0
  %496 = vmatpush1.bf16.msra.mxu0 0
  %497 = vmatprep.subr.bf16.mxu0 0
  %498 = vmatpush1.bf16.msra.mxu0 0
  %499 = vmatprep.subr.bf16.mxu0 0
  %500 = vmatpush1.bf16.msra.mxu0 0
  %501 = vmatprep.subr.bf16.mxu0 0
  %502 = vmatpush1.bf16.msra.mxu0 0
  %503 = vmatprep.subr.bf16.mxu0 0
  %504 = vmatpush1.bf16.msra.mxu0 0
  %505 = vmatprep.subr.bf16.mxu0 0
  %506 = vmatpush1.bf16.msra.mxu0 0
  %507 = vmatprep.subr.bf16.mxu0 0
  %508 = vmatpush1.bf16.msra.mxu0 0
  %509 = vmatprep.mubr.bf16.mxu0 0
  %510 = vmatmul.mubr.bf16.gmra.mrb[0].mxu0 %v374
  %v511 = vpop.f32.mrb[0].mxu0
  %v512 = vadd.f32 %v463, %v511
  %v513 = vpop.f32.mrb[0].mxu0
  %v514 = vpop.f32.mrb[0].mxu0
  %v515 = vadd.f32 %v466, %v514
  %v516 = vpop.f32.mrb[0].mxu0
  %517 = vmatprep.mubr.bf16.mxu0 0
  %518 = vmatmul.mubr.bf16.gmra.mrb[0].mxu0 %v377
  %v519 = vpop.f32.mrb[0].mxu0
  %v520 = vadd.f32 %v471, %v519
  %v521 = vpop.f32.mrb[0].mxu0
  %v522 = vpop.f32.mrb[0].mxu0
  %v523 = vadd.f32 %v474, %v522
  %v524 = vpop.f32.mrb[0].mxu0
  %525 = vdwg.mxu0
  %v526 = vmax.f32 %v512, 0.0
  %v527 = vmax.f32 %v515, 0.0
  %v528 = vmax.f32 %v520, 0.0
  %v529 = vmax.f32 %v523, 0.0
  %v530 = vpack.c.bf16 %v527, %v526
  %v531 = vpack.c.bf16 %v529, %v528
  %v534 = vunpack.c.l.b16 %v530
  %v535 = vunpack.c.h.b16 %v530
  %v536 = vunpack.c.l.b16 %v531
  %v537 = vunpack.c.h.b16 %v531
  %v538 = vpack.c.b16 %v534, %v534
  %v539 = vpack.c.b16 %v535, %v535
  %v540 = vpack.c.b16 %v536, %v536
  %v541 = vpack.c.b16 %v537, %v537
  %546 = vst [vmem:[%s3] sm:$0xf] %v538
  %547 = vst [vmem:[%s3 + $0x4] sm:$0xf] %v539
  %548 = vst [vmem:[%s3 + $0x8] sm:$0xf] %v540
  %549 = vst [vmem:[%s3 + $0xc] sm:$0xf] %v541
  // Predicated region
  $region14: #{detection2d_forward.11} parent=0 // pred_check
    _
  $region15: #{detection2d_forward.11} parent=0 // pred_check_branch
    %551 = sbr.rel (0) target = $region17
  $region16: #{detection2d_forward.11} parent=0 // pred_region
    _
  $region17: #{detection2d_forward.11} parent=0 // pred_fallthru
    _
  // Predicated region
  $region18: #{detection2d_forward.11} parent=0 // pred_check
    _
  $region19: #{detection2d_forward.11} parent=0 // pred_check_branch
    %553 = sbr.rel (0) target = $region21
  $region20: #{detection2d_forward.11} parent=0 // pred_region
    _
  $region21: #{detection2d_forward.11} parent=0 // pred_fallthru
    _

// kernel: detection2d_forward.12
$region0: #{detection2d_forward.12}
  #allocation0 [shape = 'u32[]', space=smem, size = 0x4, offset = 0x4, fixed_abs, tag = 'smem constant byte address 0x4 - core index']
  #allocation1 [shape = 'u32[144,128]{1,0:T(1,128)}', space=vmem, size = 0x12000, scoped, tag = 'internal scratch']
  %s0 = inlined_call_operand.vmem [shape: bf16[8,1152], index: 0, kind: input, shape index: {}]
  %s1 = inlined_call_operand.vmem [shape: bf16[1152,256], index: 1, kind: input, shape index: {}]
  %s2 = inlined_call_operand.vmem [shape: f32[1,256], index: 2, kind: input, shape index: {}]
  %s3 = inlined_call_operand.vmem [shape: bf16[8,256], index: 3, kind: output, shape index: {}]
  %s4 = sld [smem:[#allocation0]]
  $region22: #{detection2d_forward.12} parent=0
    _
  %s6 = ssub.s32 1, %s4
  %s7 = scalar_select 0, %s6, %s4
  // Predicated region
  $region2: #{detection2d_forward.12} parent=0 // pred_check
    _
  $region3: #{detection2d_forward.12} parent=0 // pred_check_branch
    %9 = sbr.rel (0) target = $region5
  $region4: #{detection2d_forward.12} parent=0 // pred_region
    _
  $region5: #{detection2d_forward.12} parent=0 // pred_fallthru
    _
  // Predicated region
  $region6: #{detection2d_forward.12} parent=0 // pred_check
    _
  $region7: #{detection2d_forward.12} parent=0 // pred_check_branch
    %11 = sbr.rel (0) target = $region9
  $region8: #{detection2d_forward.12} parent=0 // pred_region
    _
  $region9: #{detection2d_forward.12} parent=0 // pred_fallthru
    _
  // Predicated region
  $region10: #{detection2d_forward.12} parent=0 // pred_check
    _
  $region11: #{detection2d_forward.12} parent=0 // pred_check_branch
    %13 = sbr.rel (0) target = $region13
  $region12: #{detection2d_forward.12} parent=0 // pred_region
    _
  $region13: #{detection2d_forward.12} parent=0 // pred_fallthru
    _
  %v15 = vld [vmem:[%s0] sm:$0xff]
  %v16 = vld [vmem:[%s0 + $0x8] sm:$0xff]
  %v17 = vld [vmem:[%s0 + $0x10] sm:$0xff]
  %v18 = vld [vmem:[%s0 + $0x18] sm:$0xff]
  %v19 = vld [vmem:[%s0 + $0x20] sm:$0xf]
  %v20 = vld [vmem:[%s1] sm:$0xff]
  %v21 = vld [vmem:[%s1 + $0x8] sm:$0xff]
  %v22 = vld [vmem:[%s1 + $0x10] sm:$0xff]
  %v23 = vld [vmem:[%s1 + $0x18] sm:$0xff]
  %v24 = vld [vmem:[%s1 + $0x20] sm:$0xff]
  %v25 = vld [vmem:[%s1 + $0x28] sm:$0xff]
  %v26 = vld [vmem:[%s1 + $0x30] sm:$0xff]
  %v27 = vld [vmem:[%s1 + $0x38] sm:$0xff]
  %v28 = vld [vmem:[%s1 + $0x40] sm:$0xff]
  %v29 = vld [vmem:[%s1 + $0x48] sm:$0xff]
  %v30 = vld [vmem:[%s1 + $0x50] sm:$0xff]
  %v31 = vld [vmem:[%s1 + $0x58] sm:$0xff]
  %v32 = vld [vmem:[%s1 + $0x60] sm:$0xff]
  %v33 = vld [vmem:[%s1 + $0x68] sm:$0xff]
  %v34 = vld [vmem:[%s1 + $0x70] sm:$0xff]
  %v35 = vld [vmem:[%s1 + $0x78] sm:$0xff]
  %v36 = vld [vmem:[%s1 + $0x80] sm:$0xff]
  %v37 = vld [vmem:[%s1 + $0x88] sm:$0xff]
  %v38 = vld [vmem:[%s1 + $0x90] sm:$0xff]
  %v39 = vld [vmem:[%s1 + $0x98] sm:$0xff]
  %v40 = vld [vmem:[%s1 + $0xa0] sm:$0xff]
  %v41 = vld [vmem:[%s1 + $0xa8] sm:$0xff]
  %v42 = vld [vmem:[%s1 + $0xb0] sm:$0xff]
  %v43 = vld [vmem:[%s1 + $0xb8] sm:$0xff]
  %v44 = vld [vmem:[%s1 + $0xc0] sm:$0xff]
  %v45 = vld [vmem:[%s1 + $0xc8] sm:$0xff]
  %v46 = vld [vmem:[%s1 + $0xd0] sm:$0xff]
  %v47 = vld [vmem:[%s1 + $0xd8] sm:$0xff]
  %v48 = vld [vmem:[%s1 + $0xe0] sm:$0xff]
  %v49 = vld [vmem:[%s1 + $0xe8] sm:$0xff]
  %v50 = vld [vmem:[%s1 + $0xf0] sm:$0xff]
  %v51 = vld [vmem:[%s1 + $0xf8] sm:$0xff]
  %v52 = vld [vmem:[%s1 + $0x100] sm:$0xff]
  %v53 = vld [vmem:[%s1 + $0x108] sm:$0xff]
  %v54 = vld [vmem:[%s1 + $0x110] sm:$0xff]
  %v55 = vld [vmem:[%s1 + $0x118] sm:$0xff]
  %v56 = vld [vmem:[%s1 + $0x120] sm:$0xff]
  %v57 = vld [vmem:[%s1 + $0x128] sm:$0xff]
  %v58 = vld [vmem:[%s1 + $0x130] sm:$0xff]
  %v59 = vld [vmem:[%s1 + $0x138] sm:$0xff]
  %v60 = vld [vmem:[%s1 + $0x140] sm:$0xff]
  %v61 = vld [vmem:[%s1 + $0x148] sm:$0xff]
  %v62 = vld [vmem:[%s1 + $0x150] sm:$0xff]
  %v63 = vld [vmem:[%s1 + $0x158] sm:$0xff]
  %v64 = vld [vmem:[%s1 + $0x160] sm:$0xff]
  %v65 = vld [vmem:[%s1 + $0x168] sm:$0xff]
  %v66 = vld [vmem:[%s1 + $0x170] sm:$0xff]
  %v67 = vld [vmem:[%s1 + $0x178] sm:$0xff]
  %v68 = vld [vmem:[%s1 + $0x180] sm:$0xff]
  %v69 = vld [vmem:[%s1 + $0x188] sm:$0xff]
  %v70 = vld [vmem:[%s1 + $0x190] sm:$0xff]
  %v71 = vld [vmem:[%s1 + $0x198] sm:$0xff]
  %v72 = vld [vmem:[%s1 + $0x1a0] sm:$0xff]
  %v73 = vld [vmem:[%s1 + $0x1a8] sm:$0xff]
  %v74 = vld [vmem:[%s1 + $0x1b0] sm:$0xff]
  %v75 = vld [vmem:[%s1 + $0x1b8] sm:$0xff]
  %v76 = vld [vmem:[%s1 + $0x1c0] sm:$0xff]
  %v77 = vld [vmem:[%s1 + $0x1c8] sm:$0xff]
  %v78 = vld [vmem:[%s1 + $0x1d0] sm:$0xff]
  %v79 = vld [vmem:[%s1 + $0x1d8] sm:$0xff]
  %v80 = vld [vmem:[%s1 + $0x1e0] sm:$0xff]
  %v81 = vld [vmem:[%s1 + $0x1e8] sm:$0xff]
  %v82 = vld [vmem:[%s1 + $0x1f0] sm:$0xff]
  %v83 = vld [vmem:[%s1 + $0x1f8] sm:$0xff]
  %v84 = vld [vmem:[%s1 + $0x200] sm:$0xff]
  %v85 = vld [vmem:[%s1 + $0x208] sm:$0xff]
  %v86 = vld [vmem:[%s1 + $0x210] sm:$0xff]
  %v87 = vld [vmem:[%s1 + $0x218] sm:$0xff]
  %v88 = vld [vmem:[%s1 + $0x220] sm:$0xff]
  %v89 = vld [vmem:[%s1 + $0x228] sm:$0xff]
  %v90 = vld [vmem:[%s1 + $0x230] sm:$0xff]
  %v91 = vld [vmem:[%s1 + $0x238] sm:$0xff]
  %v92 = vld [vmem:[%s1 + $0x240] sm:$0xff]
  %v93 = vld [vmem:[%s1 + $0x248] sm:$0xff]
  %v94 = vld [vmem:[%s1 + $0x250] sm:$0xff]
  %v95 = vld [vmem:[%s1 + $0x258] sm:$0xff]
  %v96 = vld [vmem:[%s1 + $0x260] sm:$0xff]
  %v97 = vld [vmem:[%s1 + $0x268] sm:$0xff]
  %v98 = vld [vmem:[%s1 + $0x270] sm:$0xff]
  %v99 = vld [vmem:[%s1 + $0x278] sm:$0xff]
  %v100 = vld [vmem:[%s1 + $0x280] sm:$0xff]
  %v101 = vld [vmem:[%s1 + $0x288] sm:$0xff]
  %v102 = vld [vmem:[%s1 + $0x290] sm:$0xff]
  %v103 = vld [vmem:[%s1 + $0x298] sm:$0xff]
  %v104 = vld [vmem:[%s1 + $0x2a0] sm:$0xff]
  %v105 = vld [vmem:[%s1 + $0x2a8] sm:$0xff]
  %v106 = vld [vmem:[%s1 + $0x2b0] sm:$0xff]
  %v107 = vld [vmem:[%s1 + $0x2b8] sm:$0xff]
  %v108 = vld [vmem:[%s1 + $0x2c0] sm:$0xff]
  %v109 = vld [vmem:[%s1 + $0x2c8] sm:$0xff]
  %v110 = vld [vmem:[%s1 + $0x2d0] sm:$0xff]
  %v111 = vld [vmem:[%s1 + $0x2d8] sm:$0xff]
  %v112 = vld [vmem:[%s1 + $0x2e0] sm:$0xff]
  %v113 = vld [vmem:[%s1 + $0x2e8] sm:$0xff]
  %v114 = vld [vmem:[%s1 + $0x2f0] sm:$0xff]
  %v115 = vld [vmem:[%s1 + $0x2f8] sm:$0xff]
  %v116 = vld [vmem:[%s1 + $0x300] sm:$0xff]
  %v117 = vld [vmem:[%s1 + $0x308] sm:$0xff]
  %v118 = vld [vmem:[%s1 + $0x310] sm:$0xff]
  %v119 = vld [vmem:[%s1 + $0x318] sm:$0xff]
  %v120 = vld [vmem:[%s1 + $0x320] sm:$0xff]
  %v121 = vld [vmem:[%s1 + $0x328] sm:$0xff]
  %v122 = vld [vmem:[%s1 + $0x330] sm:$0xff]
  %v123 = vld [vmem:[%s1 + $0x338] sm:$0xff]
  %v124 = vld [vmem:[%s1 + $0x340] sm:$0xff]
  %v125 = vld [vmem:[%s1 + $0x348] sm:$0xff]
  %v126 = vld [vmem:[%s1 + $0x350] sm:$0xff]
  %v127 = vld [vmem:[%s1 + $0x358] sm:$0xff]
  %v128 = vld [vmem:[%s1 + $0x360] sm:$0xff]
  %v129 = vld [vmem:[%s1 + $0x368] sm:$0xff]
  %v130 = vld [vmem:[%s1 + $0x370] sm:$0xff]
  %v131 = vld [vmem:[%s1 + $0x378] sm:$0xff]
  %v132 = vld [vmem:[%s1 + $0x380] sm:$0xff]
  %v133 = vld [vmem:[%s1 + $0x388] sm:$0xff]
  %v134 = vld [vmem:[%s1 + $0x390] sm:$0xff]
  %v135 = vld [vmem:[%s1 + $0x398] sm:$0xff]
  %v136 = vld [vmem:[%s1 + $0x3a0] sm:$0xff]
  %v137 = vld [vmem:[%s1 + $0x3a8] sm:$0xff]
  %v138 = vld [vmem:[%s1 + $0x3b0] sm:$0xff]
  %v139 = vld [vmem:[%s1 + $0x3b8] sm:$0xff]
  %v140 = vld [vmem:[%s1 + $0x3c0] sm:$0xff]
  %v141 = vld [vmem:[%s1 + $0x3c8] sm:$0xff]
  %v142 = vld [vmem:[%s1 + $0x3d0] sm:$0xff]
  %v143 = vld [vmem:[%s1 + $0x3d8] sm:$0xff]
  %v144 = vld [vmem:[%s1 + $0x3e0] sm:$0xff]
  %v145 = vld [vmem:[%s1 + $0x3e8] sm:$0xff]
  %v146 = vld [vmem:[%s1 + $0x3f0] sm:$0xff]
  %v147 = vld [vmem:[%s1 + $0x3f8] sm:$0xff]
  %v148 = vld [vmem:[%s1 + $0x400] sm:$0xff]
  %v149 = vld [vmem:[%s1 + $0x408] sm:$0xff]
  %v150 = vld [vmem:[%s1 + $0x410] sm:$0xff]
  %v151 = vld [vmem:[%s1 + $0x418] sm:$0xff]
  %v152 = vld [vmem:[%s1 + $0x420] sm:$0xff]
  %v153 = vld [vmem:[%s1 + $0x428] sm:$0xff]
  %v154 = vld [vmem:[%s1 + $0x430] sm:$0xff]
  %v155 = vld [vmem:[%s1 + $0x438] sm:$0xff]
  %v156 = vld [vmem:[%s1 + $0x440] sm:$0xff]
  %v157 = vld [vmem:[%s1 + $0x448] sm:$0xff]
  %v158 = vld [vmem:[%s1 + $0x450] sm:$0xff]
  %v159 = vld [vmem:[%s1 + $0x458] sm:$0xff]
  %v160 = vld [vmem:[%s1 + $0x460] sm:$0xff]
  %v161 = vld [vmem:[%s1 + $0x468] sm:$0xff]
  %v162 = vld [vmem:[%s1 + $0x470] sm:$0xff]
  %v163 = vld [vmem:[%s1 + $0x478] sm:$0xff]
  %v164 = vld [vmem:[%s2] sm:$0x3]
  %v166 = vlaneseq
  %v167 = vshrl.u32 %v166, 7
  %v168 = vsub.s32 0, %v167
  %v169 = vrot.slane %v164, %v168
  %v170 = vlaneseq
  %v171 = vshrl.u32 %v170, 7
  %v172 = vsub.s32 1, %v171
  %v173 = vrot.slane %v164, %v172
  %v181 = vunpack.c.l.b16 %v15
  %v182 = vunpack.c.h.b16 %v15
  %v183 = vunpack.c.l.b16 %v16
  %v184 = vunpack.c.h.b16 %v16
  %v185 = vunpack.c.l.b16 %v17
  %v186 = vunpack.c.h.b16 %v17
  %v187 = vunpack.c.l.b16 %v18
  %v188 = vunpack.c.h.b16 %v18
  %v189 = vunpack.c.l.b16 %v19
  %v190 = vpack.c.b16 %v181, %v181
  %v191 = vpack.c.b16 %v182, %v182
  %v192 = vpack.c.b16 %v183, %v183
  %v193 = vpack.c.b16 %v184, %v184
  %v194 = vpack.c.b16 %v185, %v185
  %v195 = vpack.c.b16 %v186, %v186
  %v196 = vpack.c.b16 %v187, %v187
  %v197 = vpack.c.b16 %v188, %v188
  %v198 = vpack.c.b16 %v189, %v189
  %v352 = vunpack.c.l.b16 %v20
  %v353 = vunpack.c.h.b16 %v20
  %v354 = vunpack.c.l.b16 %v21
  %v355 = vunpack.c.h.b16 %v21
  %v356 = vunpack.c.l.b16 %v22
  %v357 = vunpack.c.h.b16 %v22
  %v358 = vunpack.c.l.b16 %v23
  %v359 = vunpack.c.h.b16 %v23
  %v360 = vunpack.c.l.b16 %v24
  %v361 = vunpack.c.h.b16 %v24
  %v362 = vunpack.c.l.b16 %v25
  %v363 = vunpack.c.h.b16 %v25
  %v364 = vunpack.c.l.b16 %v26
  %v365 = vunpack.c.h.b16 %v26
  %v366 = vunpack.c.l.b16 %v27
  %v367 = vunpack.c.h.b16 %v27
  %v368 = vunpack.c.l.b16 %v28
  %v369 = vunpack.c.h.b16 %v28
  %v370 = vunpack.c.l.b16 %v29
  %v371 = vunpack.c.h.b16 %v29
  %v372 = vunpack.c.l.b16 %v30
  %v373 = vunpack.c.h.b16 %v30
  %v374 = vunpack.c.l.b16 %v31
  %v375 = vunpack.c.h.b16 %v31
  %v376 = vunpack.c.l.b16 %v32
  %v377 = vunpack.c.h.b16 %v32
  %v378 = vunpack.c.l.b16 %v33
  %v379 = vunpack.c.h.b16 %v33
  %v380 = vunpack.c.l.b16 %v34
  %v381 = vunpack.c.h.b16 %v34
  %v382 = vunpack.c.l.b16 %v35
  %v383 = vunpack.c.h.b16 %v35
  %v384 = vunpack.c.l.b16 %v36
  %v385 = vunpack.c.h.b16 %v36
  %v386 = vunpack.c.l.b16 %v37
  %v387 = vunpack.c.h.b16 %v37
  %v388 = vunpack.c.l.b16 %v38
  %v389 = vunpack.c.h.b16 %v38
  %v390 = vunpack.c.l.b16 %v39
  %v391 = vunpack.c.h.b16 %v39
  %v392 = vunpack.c.l.b16 %v40
  %v393 = vunpack.c.h.b16 %v40
  %v394 = vunpack.c.l.b16 %v41
  %v395 = vunpack.c.h.b16 %v41
  %v396 = vunpack.c.l.b16 %v42
  %v397 = vunpack.c.h.b16 %v42
  %v398 = vunpack.c.l.b16 %v43
  %v399 = vunpack.c.h.b16 %v43
  %v400 = vunpack.c.l.b16 %v44
  %v401 = vunpack.c.h.b16 %v44
  %v402 = vunpack.c.l.b16 %v45
  %v403 = vunpack.c.h.b16 %v45
  %v404 = vunpack.c.l.b16 %v46
  %v405 = vunpack.c.h.b16 %v46
  %v406 = vunpack.c.l.b16 %v47
  %v407 = vunpack.c.h.b16 %v47
  %v408 = vunpack.c.l.b16 %v48
  %v409 = vunpack.c.h.b16 %v48
  %v410 = vunpack.c.l.b16 %v49
  %v411 = vunpack.c.h.b16 %v49
  %v412 = vunpack.c.l.b16 %v50
  %v413 = vunpack.c.h.b16 %v50
  %v414 = vunpack.c.l.b16 %v51
  %v415 = vunpack.c.h.b16 %v51
  %v416 = vunpack.c.l.b16 %v52
  %v417 = vunpack.c.h.b16 %v52
  %v418 = vunpack.c.l.b16 %v53
  %v419 = vunpack.c.h.b16 %v53
  %v420 = vunpack.c.l.b16 %v54
  %v421 = vunpack.c.h.b16 %v54
  %v422 = vunpack.c.l.b16 %v55
  %v423 = vunpack.c.h.b16 %v55
  %v424 = vunpack.c.l.b16 %v56
  %v425 = vunpack.c.h.b16 %v56
  %v426 = vunpack.c.l.b16 %v57
  %v427 = vunpack.c.h.b16 %v57
  %v428 = vunpack.c.l.b16 %v58
  %v429 = vunpack.c.h.b16 %v58
  %v430 = vunpack.c.l.b16 %v59
  %v431 = vunpack.c.h.b16 %v59
  %v432 = vunpack.c.l.b16 %v60
  %v433 = vunpack.c.h.b16 %v60
  %v434 = vunpack.c.l.b16 %v61
  %v435 = vunpack.c.h.b16 %v61
  %v436 = vunpack.c.l.b16 %v62
  %v437 = vunpack.c.h.b16 %v62
  %v438 = vunpack.c.l.b16 %v63
  %v439 = vunpack.c.h.b16 %v63
  %v440 = vunpack.c.l.b16 %v64
  %v441 = vunpack.c.h.b16 %v64
  %v442 = vunpack.c.l.b16 %v65
  %v443 = vunpack.c.h.b16 %v65
  %v444 = vunpack.c.l.b16 %v66
  %v445 = vunpack.c.h.b16 %v66
  %v446 = vunpack.c.l.b16 %v67
  %v447 = vunpack.c.h.b16 %v67
  %v448 = vunpack.c.l.b16 %v68
  %v449 = vunpack.c.h.b16 %v68
  %v450 = vunpack.c.l.b16 %v69
  %v451 = vunpack.c.h.b16 %v69
  %v452 = vunpack.c.l.b16 %v70
  %v453 = vunpack.c.h.b16 %v70
  %v454 = vunpack.c.l.b16 %v71
  %v455 = vunpack.c.h.b16 %v71
  %v456 = vunpack.c.l.b16 %v72
  %v457 = vunpack.c.h.b16 %v72
  %v458 = vunpack.c.l.b16 %v73
  %v459 = vunpack.c.h.b16 %v73
  %v460 = vunpack.c.l.b16 %v74
  %v461 = vunpack.c.h.b16 %v74
  %v462 = vunpack.c.l.b16 %v75
  %v463 = vunpack.c.h.b16 %v75
  %v464 = vunpack.c.l.b16 %v76
  %v465 = vunpack.c.h.b16 %v76
  %v466 = vunpack.c.l.b16 %v77
  %v467 = vunpack.c.h.b16 %v77
  %v468 = vunpack.c.l.b16 %v78
  %v469 = vunpack.c.h.b16 %v78
  %v470 = vunpack.c.l.b16 %v79
  %v471 = vunpack.c.h.b16 %v79
  %v472 = vunpack.c.l.b16 %v80
  %v473 = vunpack.c.h.b16 %v80
  %v474 = vunpack.c.l.b16 %v81
  %v475 = vunpack.c.h.b16 %v81
  %v476 = vunpack.c.l.b16 %v82
  %v477 = vunpack.c.h.b16 %v82
  %v478 = vunpack.c.l.b16 %v83
  %v479 = vunpack.c.h.b16 %v83
  %v480 = vunpack.c.l.b16 %v84
  %v481 = vunpack.c.h.b16 %v84
  %v482 = vunpack.c.l.b16 %v85
  %v483 = vunpack.c.h.b16 %v85
  %v484 = vunpack.c.l.b16 %v86
  %v485 = vunpack.c.h.b16 %v86
  %v486 = vunpack.c.l.b16 %v87
  %v487 = vunpack.c.h.b16 %v87
  %v488 = vunpack.c.l.b16 %v88
  %v489 = vunpack.c.h.b16 %v88
  %v490 = vunpack.c.l.b16 %v89
  %v491 = vunpack.c.h.b16 %v89
  %v492 = vunpack.c.l.b16 %v90
  %v493 = vunpack.c.h.b16 %v90
  %v494 = vunpack.c.l.b16 %v91
  %v495 = vunpack.c.h.b16 %v91
  %v496 = vunpack.c.l.b16 %v92
  %v497 = vunpack.c.h.b16 %v92
  %v498 = vunpack.c.l.b16 %v93
  %v499 = vunpack.c.h.b16 %v93
  %v500 = vunpack.c.l.b16 %v94
  %v501 = vunpack.c.h.b16 %v94
  %v502 = vunpack.c.l.b16 %v95
  %v503 = vunpack.c.h.b16 %v95
  %v504 = vunpack.c.l.b16 %v96
  %v505 = vunpack.c.h.b16 %v96
  %v506 = vunpack.c.l.b16 %v97
  %v507 = vunpack.c.h.b16 %v97
  %v508 = vunpack.c.l.b16 %v98
  %v509 = vunpack.c.h.b16 %v98
  %v510 = vunpack.c.l.b16 %v99
  %v511 = vunpack.c.h.b16 %v99
  %v512 = vunpack.c.l.b16 %v100
  %v513 = vunpack.c.h.b16 %v100
  %v514 = vunpack.c.l.b16 %v101
  %v515 = vunpack.c.h.b16 %v101
  %v516 = vunpack.c.l.b16 %v102
  %v517 = vunpack.c.h.b16 %v102
  %v518 = vunpack.c.l.b16 %v103
  %v519 = vunpack.c.h.b16 %v103
  %v520 = vunpack.c.l.b16 %v104
  %v521 = vunpack.c.h.b16 %v104
  %v522 = vunpack.c.l.b16 %v105
  %v523 = vunpack.c.h.b16 %v105
  %v524 = vunpack.c.l.b16 %v106
  %v525 = vunpack.c.h.b16 %v106
  %v526 = vunpack.c.l.b16 %v107
  %v527 = vunpack.c.h.b16 %v107
  %v528 = vunpack.c.l.b16 %v108
  %v529 = vunpack.c.h.b16 %v108
  %v530 = vunpack.c.l.b16 %v109
  %v531 = vunpack.c.h.b16 %v109
  %v532 = vunpack.c.l.b16 %v110
  %v533 = vunpack.c.h.b16 %v110
  %v534 = vunpack.c.l.b16 %v111
  %v535 = vunpack.c.h.b16 %v111
  %v536 = vunpack.c.l.b16 %v112
  %v537 = vunpack.c.h.b16 %v112
  %v538 = vunpack.c.l.b16 %v113
  %v539 = vunpack.c.h.b16 %v113
  %v540 = vunpack.c.l.b16 %v114
  %v541 = vunpack.c.h.b16 %v114
  %v542 = vunpack.c.l.b16 %v115
  %v543 = vunpack.c.h.b16 %v115
  %v544 = vunpack.c.l.b16 %v116
  %v545 = vunpack.c.h.b16 %v116
  %v546 = vunpack.c.l.b16 %v117
  %v547 = vunpack.c.h.b16 %v117
  %v548 = vunpack.c.l.b16 %v118
  %v549 = vunpack.c.h.b16 %v118
  %v550 = vunpack.c.l.b16 %v119
  %v551 = vunpack.c.h.b16 %v119
  %v552 = vunpack.c.l.b16 %v120
  %v553 = vunpack.c.h.b16 %v120
  %v554 = vunpack.c.l.b16 %v121
  %v555 = vunpack.c.h.b16 %v121
  %v556 = vunpack.c.l.b16 %v122
  %v557 = vunpack.c.h.b16 %v122
  %v558 = vunpack.c.l.b16 %v123
  %v559 = vunpack.c.h.b16 %v123
  %v560 = vunpack.c.l.b16 %v124
  %v561 = vunpack.c.h.b16 %v124
  %v562 = vunpack.c.l.b16 %v125
  %v563 = vunpack.c.h.b16 %v125
  %v564 = vunpack.c.l.b16 %v126
  %v565 = vunpack.c.h.b16 %v126
  %v566 = vunpack.c.l.b16 %v127
  %v567 = vunpack.c.h.b16 %v127
  %v568 = vunpack.c.l.b16 %v128
  %v569 = vunpack.c.h.b16 %v128
  %v570 = vunpack.c.l.b16 %v129
  %v571 = vunpack.c.h.b16 %v129
  %v572 = vunpack.c.l.b16 %v130
  %v573 = vunpack.c.h.b16 %v130
  %v574 = vunpack.c.l.b16 %v131
  %v575 = vunpack.c.h.b16 %v131
  %v576 = vunpack.c.l.b16 %v132
  %v577 = vunpack.c.h.b16 %v132
  %v578 = vunpack.c.l.b16 %v133
  %v579 = vunpack.c.h.b16 %v133
  %v580 = vunpack.c.l.b16 %v134
  %v581 = vunpack.c.h.b16 %v134
  %v582 = vunpack.c.l.b16 %v135
  %v583 = vunpack.c.h.b16 %v135
  %v584 = vunpack.c.l.b16 %v136
  %v585 = vunpack.c.h.b16 %v136
  %v586 = vunpack.c.l.b16 %v137
  %v587 = vunpack.c.h.b16 %v137
  %v588 = vunpack.c.l.b16 %v138
  %v589 = vunpack.c.h.b16 %v138
  %v590 = vunpack.c.l.b16 %v139
  %v591 = vunpack.c.h.b16 %v139
  %v592 = vunpack.c.l.b16 %v140
  %v593 = vunpack.c.h.b16 %v140
  %v594 = vunpack.c.l.b16 %v141
  %v595 = vunpack.c.h.b16 %v141
  %v596 = vunpack.c.l.b16 %v142
  %v597 = vunpack.c.h.b16 %v142
  %v598 = vunpack.c.l.b16 %v143
  %v599 = vunpack.c.h.b16 %v143
  %v600 = vunpack.c.l.b16 %v144
  %v601 = vunpack.c.h.b16 %v144
  %v602 = vunpack.c.l.b16 %v145
  %v603 = vunpack.c.h.b16 %v145
  %v604 = vunpack.c.l.b16 %v146
  %v605 = vunpack.c.h.b16 %v146
  %v606 = vunpack.c.l.b16 %v147
  %v607 = vunpack.c.h.b16 %v147
  %v608 = vunpack.c.l.b16 %v148
  %v609 = vunpack.c.h.b16 %v148
  %v610 = vunpack.c.l.b16 %v149
  %v611 = vunpack.c.h.b16 %v149
  %v612 = vunpack.c.l.b16 %v150
  %v613 = vunpack.c.h.b16 %v150
  %v614 = vunpack.c.l.b16 %v151
  %v615 = vunpack.c.h.b16 %v151
  %v616 = vunpack.c.l.b16 %v152
  %v617 = vunpack.c.h.b16 %v152
  %v618 = vunpack.c.l.b16 %v153
  %v619 = vunpack.c.h.b16 %v153
  %v620 = vunpack.c.l.b16 %v154
  %v621 = vunpack.c.h.b16 %v154
  %v622 = vunpack.c.l.b16 %v155
  %v623 = vunpack.c.h.b16 %v155
  %v624 = vunpack.c.l.b16 %v156
  %v625 = vunpack.c.h.b16 %v156
  %v626 = vunpack.c.l.b16 %v157
  %v627 = vunpack.c.h.b16 %v157
  %v628 = vunpack.c.l.b16 %v158
  %v629 = vunpack.c.h.b16 %v158
  %v630 = vunpack.c.l.b16 %v159
  %v631 = vunpack.c.h.b16 %v159
  %v632 = vunpack.c.l.b16 %v160
  %v633 = vunpack.c.h.b16 %v160
  %v634 = vunpack.c.l.b16 %v161
  %v635 = vunpack.c.h.b16 %v161
  %v636 = vunpack.c.l.b16 %v162
  %v637 = vunpack.c.h.b16 %v162
  %v638 = vunpack.c.l.b16 %v163
  %v639 = vunpack.c.h.b16 %v163
  %v640 = vpack.c.b16 %v354, %v352
  %v641 = vpack.c.b16 %v355, %v353
  %v642 = vpack.c.b16 %v358, %v356
  %v643 = vpack.c.b16 %v359, %v357
  %v644 = vpack.c.b16 %v362, %v360
  %v645 = vpack.c.b16 %v363, %v361
  %v646 = vpack.c.b16 %v366, %v364
  %v647 = vpack.c.b16 %v367, %v365
  %v648 = vpack.c.b16 %v370, %v368
  %v649 = vpack.c.b16 %v371, %v369
  %v650 = vpack.c.b16 %v374, %v372
  %v651 = vpack.c.b16 %v375, %v373
  %v652 = vpack.c.b16 %v378, %v376
  %v653 = vpack.c.b16 %v379, %v377
  %v654 = vpack.c.b16 %v382, %v380
  %v655 = vpack.c.b16 %v383, %v381
  %v656 = vpack.c.b16 %v386, %v384
  %v657 = vpack.c.b16 %v387, %v385
  %v658 = vpack.c.b16 %v390, %v388
  %v659 = vpack.c.b16 %v391, %v389
  %v660 = vpack.c.b16 %v394, %v392
  %v661 = vpack.c.b16 %v395, %v393
  %v662 = vpack.c.b16 %v398, %v396
  %v663 = vpack.c.b16 %v399, %v397
  %v664 = vpack.c.b16 %v402, %v400
  %v665 = vpack.c.b16 %v403, %v401
  %v666 = vpack.c.b16 %v406, %v404
  %v667 = vpack.c.b16 %v407, %v405
  %v668 = vpack.c.b16 %v410, %v408
  %v669 = vpack.c.b16 %v411, %v409
  %v670 = vpack.c.b16 %v414, %v412
  %v671 = vpack.c.b16 %v415, %v413
  %v672 = vpack.c.b16 %v418, %v416
  %v673 = vpack.c.b16 %v419, %v417
  %v674 = vpack.c.b16 %v422, %v420
  %v675 = vpack.c.b16 %v423, %v421
  %v676 = vpack.c.b16 %v426, %v424
  %v677 = vpack.c.b16 %v427, %v425
  %v678 = vpack.c.b16 %v430, %v428
  %v679 = vpack.c.b16 %v431, %v429
  %v680 = vpack.c.b16 %v434, %v432
  %v681 = vpack.c.b16 %v435, %v433
  %v682 = vpack.c.b16 %v438, %v436
  %v683 = vpack.c.b16 %v439, %v437
  %v684 = vpack.c.b16 %v442, %v440
  %v685 = vpack.c.b16 %v443, %v441
  %v686 = vpack.c.b16 %v446, %v444
  %v687 = vpack.c.b16 %v447, %v445
  %v688 = vpack.c.b16 %v450, %v448
  %v689 = vpack.c.b16 %v451, %v449
  %v690 = vpack.c.b16 %v454, %v452
  %v691 = vpack.c.b16 %v455, %v453
  %v692 = vpack.c.b16 %v458, %v456
  %v693 = vpack.c.b16 %v459, %v457
  %v694 = vpack.c.b16 %v462, %v460
  %v695 = vpack.c.b16 %v463, %v461
  %v696 = vpack.c.b16 %v466, %v464
  %v697 = vpack.c.b16 %v467, %v465
  %v698 = vpack.c.b16 %v470, %v468
  %v699 = vpack.c.b16 %v471, %v469
  %v700 = vpack.c.b16 %v474, %v472
  %v701 = vpack.c.b16 %v475, %v473
  %v702 = vpack.c.b16 %v478, %v476
  %v703 = vpack.c.b16 %v479, %v477
  %v704 = vpack.c.b16 %v482, %v480
  %v705 = vpack.c.b16 %v483, %v481
  %v706 = vpack.c.b16 %v486, %v484
  %v707 = vpack.c.b16 %v487, %v485
  %v708 = vpack.c.b16 %v490, %v488
  %v709 = vpack.c.b16 %v491, %v489
  %v710 = vpack.c.b16 %v494, %v492
  %v711 = vpack.c.b16 %v495, %v493
  %v712 = vpack.c.b16 %v498, %v496
  %v713 = vpack.c.b16 %v499, %v497
  %v714 = vpack.c.b16 %v502, %v500
  %v715 = vpack.c.b16 %v503, %v501
  %v716 = vpack.c.b16 %v506, %v504
  %v717 = vpack.c.b16 %v507, %v505
  %v718 = vpack.c.b16 %v510, %v508
  %v719 = vpack.c.b16 %v511, %v509
  %v720 = vpack.c.b16 %v514, %v512
  %v721 = vpack.c.b16 %v515, %v513
  %v722 = vpack.c.b16 %v518, %v516
  %v723 = vpack.c.b16 %v519, %v517
  %v724 = vpack.c.b16 %v522, %v520
  %v725 = vpack.c.b16 %v523, %v521
  %v726 = vpack.c.b16 %v526, %v524
  %v727 = vpack.c.b16 %v527, %v525
  %v728 = vpack.c.b16 %v530, %v528
  %v729 = vpack.c.b16 %v531, %v529
  %v730 = vpack.c.b16 %v534, %v532
  %v731 = vpack.c.b16 %v535, %v533
  %v732 = vpack.c.b16 %v538, %v536
  %v733 = vpack.c.b16 %v539, %v537
  %v734 = vpack.c.b16 %v542, %v540
  %v735 = vpack.c.b16 %v543, %v541
  %v736 = vpack.c.b16 %v546, %v544
  %v737 = vpack.c.b16 %v547, %v545
  %v738 = vpack.c.b16 %v550, %v548
  %v739 = vpack.c.b16 %v551, %v549
  %v740 = vpack.c.b16 %v554, %v552
  %v741 = vpack.c.b16 %v555, %v553
  %v742 = vpack.c.b16 %v558, %v556
  %v743 = vpack.c.b16 %v559, %v557
  %v744 = vpack.c.b16 %v562, %v560
  %v745 = vpack.c.b16 %v563, %v561
  %v746 = vpack.c.b16 %v566, %v564
  %v747 = vpack.c.b16 %v567, %v565
  %v748 = vpack.c.b16 %v570, %v568
  %v749 = vpack.c.b16 %v571, %v569
  %v750 = vpack.c.b16 %v574, %v572
  %v751 = vpack.c.b16 %v575, %v573
  %v752 = vpack.c.b16 %v578, %v576
  %v753 = vpack.c.b16 %v579, %v577
  %v754 = vpack.c.b16 %v582, %v580
  %v755 = vpack.c.b16 %v583, %v581
  %v756 = vpack.c.b16 %v586, %v584
  %v757 = vpack.c.b16 %v587, %v585
  %v758 = vpack.c.b16 %v590, %v588
  %v759 = vpack.c.b16 %v591, %v589
  %v760 = vpack.c.b16 %v594, %v592
  %v761 = vpack.c.b16 %v595, %v593
  %v762 = vpack.c.b16 %v598, %v596
  %v763 = vpack.c.b16 %v599, %v597
  %v764 = vpack.c.b16 %v602, %v600
  %v765 = vpack.c.b16 %v603, %v601
  %v766 = vpack.c.b16 %v606, %v604
  %v767 = vpack.c.b16 %v607, %v605
  %v768 = vpack.c.b16 %v610, %v608
  %v769 = vpack.c.b16 %v611, %v609
  %v770 = vpack.c.b16 %v614, %v612
  %v771 = vpack.c.b16 %v615, %v613
  %v772 = vpack.c.b16 %v618, %v616
  %v773 = vpack.c.b16 %v619, %v617
  %v774 = vpack.c.b16 %v622, %v620
  %v775 = vpack.c.b16 %v623, %v621
  %v776 = vpack.c.b16 %v626, %v624
  %v777 = vpack.c.b16 %v627, %v625
  %v778 = vpack.c.b16 %v630, %v628
  %v779 = vpack.c.b16 %v631, %v629
  %v780 = vpack.c.b16 %v634, %v632
  %v781 = vpack.c.b16 %v635, %v633
  %v782 = vpack.c.b16 %v638, %v636
  %v783 = vpack.c.b16 %v639, %v637
  %928 = vmatprep.subr.bf16.mxu0 %v641
  %929 = vmatpush1.bf16.msra.mxu0 %v640
  %930 = vmatprep.subr.bf16.mxu0 %v643
  %931 = vmatpush1.bf16.msra.mxu0 %v642
  %932 = vmatprep.subr.bf16.mxu0 %v645
  %933 = vmatpush1.bf16.msra.mxu0 %v644
  %934 = vmatprep.subr.bf16.mxu0 %v647
  %935 = vmatpush1.bf16.msra.mxu0 %v646
  %936 = vmatprep.subr.bf16.mxu0 %v649
  %937 = vmatpush1.bf16.msra.mxu0 %v648
  %938 = vmatprep.subr.bf16.mxu0 %v651
  %939 = vmatpush1.bf16.msra.mxu0 %v650
  %940 = vmatprep.subr.bf16.mxu0 %v653
  %941 = vmatpush1.bf16.msra.mxu0 %v652
  %942 = vmatprep.subr.bf16.mxu0 %v655
  %943 = vmatpush1.bf16.msra.mxu0 %v654
  %944 = vmatprep.subr.bf16.mxu0 %v657
  %945 = vmatpush1.bf16.msra.mxu0 %v656
  %946 = vmatprep.subr.bf16.mxu0 %v659
  %947 = vmatpush1.bf16.msra.mxu0 %v658
  %948 = vmatprep.subr.bf16.mxu0 %v661
  %949 = vmatpush1.bf16.msra.mxu0 %v660
  %950 = vmatprep.subr.bf16.mxu0 %v663
  %951 = vmatpush1.bf16.msra.mxu0 %v662
  %952 = vmatprep.subr.bf16.mxu0 %v665
  %953 = vmatpush1.bf16.msra.mxu0 %v664
  %954 = vmatprep.subr.bf16.mxu0 %v667
  %955 = vmatpush1.bf16.msra.mxu0 %v666
  %956 = vmatprep.subr.bf16.mxu0 %v669
  %957 = vmatpush1.bf16.msra.mxu0 %v668
  %958 = vmatprep.subr.bf16.mxu0 %v671
  %959 = vmatpush1.bf16.msra.mxu0 %v670
  %960 = vmatprep.mubr.bf16.mxu0 %v191
  %961 = vmatmul.mubr.bf16.gmra.mrb[0].mxu0 %v190
  %v962 = vpop.f32.mrb[0].mxu0
  %v963 = vadd.f32 %v169, %v962
  %v964 = vpop.f32.mrb[0].mxu0
  %v965 = vadd.f32 %v173, %v964
  %v966 = vpop.f32.mrb[0].mxu0
  %v967 = vpop.f32.mrb[0].mxu0
  %968 = vdwg.mxu0
  %969 = vmatprep.subr.bf16.mxu0 %v673
  %970 = vmatpush1.bf16.msra.mxu0 %v672
  %971 = vmatprep.subr.bf16.mxu0 %v675
  %972 = vmatpush1.bf16.msra.mxu0 %v674
  %973 = vmatprep.subr.bf16.mxu0 %v677
  %974 = vmatpush1.bf16.msra.mxu0 %v676
  %975 = vmatprep.subr.bf16.mxu0 %v679
  %976 = vmatpush1.bf16.msra.mxu0 %v678
  %977 = vmatprep.subr.bf16.mxu0 %v681
  %978 = vmatpush1.bf16.msra.mxu0 %v680
  %979 = vmatprep.subr.bf16.mxu0 %v683
  %980 = vmatpush1.bf16.msra.mxu0 %v682
  %981 = vmatprep.subr.bf16.mxu0 %v685
  %982 = vmatpush1.bf16.msra.mxu0 %v684
  %983 = vmatprep.subr.bf16.mxu0 %v687
  %984 = vmatpush1.bf16.msra.mxu0 %v686
  %985 = vmatprep.subr.bf16.mxu0 %v689
  %986 = vmatpush1.bf16.msra.mxu0 %v688
  %987 = vmatprep.subr.bf16.mxu0 %v691
  %988 = vmatpush1.bf16.msra.mxu0 %v690
  %989 = vmatprep.subr.bf16.mxu0 %v693
  %990 = vmatpush1.bf16.msra.mxu0 %v692
  %991 = vmatprep.subr.bf16.mxu0 %v695
  %992 = vmatpush1.bf16.msra.mxu0 %v694
  %993 = vmatprep.subr.bf16.mxu0 %v697
  %994 = vmatpush1.bf16.msra.mxu0 %v696
  %995 = vmatprep.subr.bf16.mxu0 %v699
  %996 = vmatpush1.bf16.msra.mxu0 %v698
  %997 = vmatprep.subr.bf16.mxu0 %v701
  %998 = vmatpush1.bf16.msra.mxu0 %v700
  %999 = vmatprep.subr.bf16.mxu0 %v703
  %1000 = vmatpush1.bf16.msra.mxu0 %v702
  %1001 = vmatprep.mubr.bf16.mxu0 %v193
  %1002 = vmatmul.mubr.bf16.gmra.mrb[0].mxu0 %v192
  %v1003 = vpop.f32.mrb[0].mxu0
  %v1004 = vadd.f32 %v963, %v1003
  %v1005 = vpop.f32.mrb[0].mxu0
  %v1006 = vadd.f32 %v965, %v1005
  %v1007 = vpop.f32.mrb[0].mxu0
  %v1008 = vpop.f32.mrb[0].mxu0
  %1009 = vdwg.mxu0
  %1010 = vmatprep.subr.bf16.mxu0 %v705
  %1011 = vmatpush1.bf16.msra.mxu0 %v704
  %1012 = vmatprep.subr.bf16.mxu0 %v707
  %1013 = vmatpush1.bf16.msra.mxu0 %v706
  %1014 = vmatprep.subr.bf16.mxu0 %v709
  %1015 = vmatpush1.bf16.msra.mxu0 %v708
  %1016 = vmatprep.subr.bf16.mxu0 %v711
  %1017 = vmatpush1.bf16.msra.mxu0 %v710
  %1018 = vmatprep.subr.bf16.mxu0 %v713
  %1019 = vmatpush1.bf16.msra.mxu0 %v712
  %1020 = vmatprep.subr.bf16.mxu0 %v715
  %1021 = vmatpush1.bf16.msra.mxu0 %v714
  %1022 = vmatprep.subr.bf16.mxu0 %v717
  %1023 = vmatpush1.bf16.msra.mxu0 %v716
  %1024 = vmatprep.subr.bf16.mxu0 %v719
  %1025 = vmatpush1.bf16.msra.mxu0 %v718
  %1026 = vmatprep.subr.bf16.mxu0 %v721
  %1027 = vmatpush1.bf16.msra.mxu0 %v720
  %1028 = vmatprep.subr.bf16.mxu0 %v723
  %1029 = vmatpush1.bf16.msra.mxu0 %v722
  %1030 = vmatprep.subr.bf16.mxu0 %v725
  %1031 = vmatpush1.bf16.msra.mxu0 %v724
  %1032 = vmatprep.subr.bf16.mxu0 %v727
  %1033 = vmatpush1.bf16.msra.mxu0 %v726
  %1034 = vmatprep.subr.bf16.mxu0 %v729
  %1035 = vmatpush1.bf16.msra.mxu0 %v728
  %1036 = vmatprep.subr.bf16.mxu0 %v731
  %1037 = vmatpush1.bf16.msra.mxu0 %v730
  %1038 = vmatprep.subr.bf16.mxu0 %v733
  %1039 = vmatpush1.bf16.msra.mxu0 %v732
  %1040 = vmatprep.subr.bf16.mxu0 %v735
  %1041 = vmatpush1.bf16.msra.mxu0 %v734
  %1042 = vmatprep.mubr.bf16.mxu0 %v195
  %1043 = vmatmul.mubr.bf16.gmra.mrb[0].mxu0 %v194
  %v1044 = vpop.f32.mrb[0].mxu0
  %v1045 = vadd.f32 %v1004, %v1044
  %v1046 = vpop.f32.mrb[0].mxu0
  %v1047 = vadd.f32 %v1006, %v1046
  %v1048 = vpop.f32.mrb[0].mxu0
  %v1049 = vpop.f32.mrb[0].mxu0
  %1050 = vdwg.mxu0
  %1051 = vmatprep.subr.bf16.mxu0 %v737
  %1052 = vmatpush1.bf16.msra.mxu0 %v736
  %1053 = vmatprep.subr.bf16.mxu0 %v739
  %1054 = vmatpush1.bf16.msra.mxu0 %v738
  %1055 = vmatprep.subr.bf16.mxu0 %v741
  %1056 = vmatpush1.bf16.msra.mxu0 %v740
  %1057 = vmatprep.subr.bf16.mxu0 %v743
  %1058 = vmatpush1.bf16.msra.mxu0 %v742
  %1059 = vmatprep.subr.bf16.mxu0 %v745
  %1060 = vmatpush1.bf16.msra.mxu0 %v744
  %1061 = vmatprep.subr.bf16.mxu0 %v747
  %1062 = vmatpush1.bf16.msra.mxu0 %v746
  %1063 = vmatprep.subr.bf16.mxu0 %v749
  %1064 = vmatpush1.bf16.msra.mxu0 %v748
  %1065 = vmatprep.subr.bf16.mxu0 %v751
  %1066 = vmatpush1.bf16.msra.mxu0 %v750
  %1067 = vmatprep.subr.bf16.mxu0 %v753
  %1068 = vmatpush1.bf16.msra.mxu0 %v752
  %1069 = vmatprep.subr.bf16.mxu0 %v755
  %1070 = vmatpush1.bf16.msra.mxu0 %v754
  %1071 = vmatprep.subr.bf16.mxu0 %v757
  %1072 = vmatpush1.bf16.msra.mxu0 %v756
  %1073 = vmatprep.subr.bf16.mxu0 %v759
  %1074 = vmatpush1.bf16.msra.mxu0 %v758
  %1075 = vmatprep.subr.bf16.mxu0 %v761
  %1076 = vmatpush1.bf16.msra.mxu0 %v760
  %1077 = vmatprep.subr.bf16.mxu0 %v763
  %1078 = vmatpush1.bf16.msra.mxu0 %v762
  %1079 = vmatprep.subr.bf16.mxu0 %v765
  %1080 = vmatpush1.bf16.msra.mxu0 %v764
  %1081 = vmatprep.subr.bf16.mxu0 %v767
  %1082 = vmatpush1.bf16.msra.mxu0 %v766
  %1083 = vmatprep.mubr.bf16.mxu0 %v197
  %1084 = vmatmul.mubr.bf16.gmra.mrb[0].mxu0 %v196
  %v1085 = vpop.f32.mrb[0].mxu0
  %v1086 = vadd.f32 %v1045, %v1085
  %v1087 = vpop.f32.mrb[0].mxu0
  %v1088 = vadd.f32 %v1047, %v1087
  %v1089 = vpop.f32.mrb[0].mxu0
  %v1090 = vpop.f32.mrb[0].mxu0
  %1091 = vdwg.mxu0
  %1092 = vmatprep.subr.bf16.mxu0 %v769
  %1093 = vmatpush1.bf16.msra.mxu0 %v768
  %1094 = vmatprep.subr.bf16.mxu0 %v771
  %1095 = vmatpush1.bf16.msra.mxu0 %v770
  %1096 = vmatprep.subr.bf16.mxu0 %v773
  %1097 = vmatpush1.bf16.msra.mxu0 %v772
  %1098 = vmatprep.subr.bf16.mxu0 %v775
  %1099 = vmatpush1.bf16.msra.mxu0 %v774
  %1100 = vmatprep.subr.bf16.mxu0 %v777
  %1101 = vmatpush1.bf16.msra.mxu0 %v776
  %1102 = vmatprep.subr.bf16.mxu0 %v779
  %1103 = vmatpush1.bf16.msra.mxu0 %v778
  %1104 = vmatprep.subr.bf16.mxu0 %v781
  %1105 = vmatpush1.bf16.msra.mxu0 %v780
  %1106 = vmatprep.subr.bf16.mxu0 %v783
  %1107 = vmatpush1.bf16.msra.mxu0 %v782
  %1108 = vmatprep.subr.bf16.mxu0 0
  %1109 = vmatpush1.bf16.msra.mxu0 0
  %1110 = vmatprep.subr.bf16.mxu0 0
  %1111 = vmatpush1.bf16.msra.mxu0 0
  %1112 = vmatprep.subr.bf16.mxu0 0
  %1113 = vmatpush1.bf16.msra.mxu0 0
  %1114 = vmatprep.subr.bf16.mxu0 0
  %1115 = vmatpush1.bf16.msra.mxu0 0
  %1116 = vmatprep.subr.bf16.mxu0 0
  %1117 = vmatpush1.bf16.msra.mxu0 0
  %1118 = vmatprep.subr.bf16.mxu0 0
  %1119 = vmatpush1.bf16.msra.mxu0 0
  %1120 = vmatprep.subr.bf16.mxu0 0
  %1121 = vmatpush1.bf16.msra.mxu0 0
  %1122 = vmatprep.subr.bf16.mxu0 0
  %1123 = vmatpush1.bf16.msra.mxu0 0
  %1124 = vmatprep.mubr.bf16.mxu0 0
  %1125 = vmatmul.mubr.bf16.gmra.mrb[0].mxu0 %v198
  %v1126 = vpop.f32.mrb[0].mxu0
  %v1127 = vadd.f32 %v1086, %v1126
  %v1128 = vpop.f32.mrb[0].mxu0
  %v1129 = vadd.f32 %v1088, %v1128
  %v1130 = vpop.f32.mrb[0].mxu0
  %v1131 = vpop.f32.mrb[0].mxu0
  %1132 = vdwg.mxu0
  %v1133 = vmax.f32 %v1127, 0.0
  %v1134 = vmax.f32 %v1129, 0.0
  %v1135 = vpack.c.bf16 %v1133, %v1133
  %v1136 = vpack.c.bf16 %v1134, %v1134
  %v1139 = vunpack.c.l.b16 %v1135
  %v1140 = vunpack.c.l.b16 %v1136
  %v1141 = vpack.c.b16 %v1140, %v1139
  %1143 = vst [vmem:[%s3] sm:$0xff] %v1141
  // Predicated region
  $region14: #{detection2d_forward.12} parent=0 // pred_check
    _
  $region15: #{detection2d_forward.12} parent=0 // pred_check_branch
    %1145 = sbr.rel (0) target = $region17
  $region16: #{detection2d_forward.12} parent=0 // pred_region
    _
  $region17: #{detection2d_forward.12} parent=0 // pred_fallthru
    _
  // Predicated region
  $region18: #{detection2d_forward.12} parent=0 // pred_check
    _
  $region19: #{detection2d_forward.12} parent=0 // pred_check_branch
    %1147 = sbr.rel (0) target = $region21
  $region20: #{detection2d_forward.12} parent=0 // pred_region
    _
  $region21: #{detection2d_forward.12} parent=0 // pred_fallthru
    _

// kernel: detection2d_forward.15
$region0: #{detection2d_forward.15}
  #allocation0 [shape = 'u32[]', space=smem, size = 0x4, offset = 0x4, fixed_abs, tag = 'smem constant byte address 0x4 - core index']
  #allocation1 [shape = 'u32[144,128]{1,0:T(1,128)}', space=vmem, size = 0x12000, scoped, tag = 'internal scratch']
  %s0 = inlined_call_operand.vmem [shape: bf16[8,256], index: 0, kind: input, shape index: {}]
  %s1 = inlined_call_operand.vmem [shape: bf16[256,1024], index: 1, kind: input, shape index: {}]
  %s2 = inlined_call_operand.vmem [shape: f32[1,1024], index: 2, kind: input, shape index: {}]
  %s3 = inlined_call_operand.vmem [shape: f32[8,1024], index: 3, kind: input, shape index: {}]
  %s4 = inlined_call_operand.vmem [shape: f32[8,1024], index: 4, kind: output, shape index: {}]
  %s5 = sld [smem:[#allocation0]]
  $region26: #{detection2d_forward.15} parent=0
    _
  %s7 = ssub.s32 1, %s5
  %s8 = scalar_select 0, %s7, %s5
  // Predicated region
  $region2: #{detection2d_forward.15} parent=0 // pred_check
    _
  $region3: #{detection2d_forward.15} parent=0 // pred_check_branch
    %10 = sbr.rel (0) target = $region5
  $region4: #{detection2d_forward.15} parent=0 // pred_region
    _
  $region5: #{detection2d_forward.15} parent=0 // pred_fallthru
    _
  // Predicated region
  $region6: #{detection2d_forward.15} parent=0 // pred_check
    _
  $region7: #{detection2d_forward.15} parent=0 // pred_check_branch
    %12 = sbr.rel (0) target = $region9
  $region8: #{detection2d_forward.15} parent=0 // pred_region
    _
  $region9: #{detection2d_forward.15} parent=0 // pred_fallthru
    _
  // Predicated region
  $region10: #{detection2d_forward.15} parent=0 // pred_check
    _
  $region11: #{detection2d_forward.15} parent=0 // pred_check_branch
    %14 = sbr.rel (0) target = $region13
  $region12: #{detection2d_forward.15} parent=0 // pred_region
    _
  $region13: #{detection2d_forward.15} parent=0 // pred_fallthru
    _
  // Predicated region
  $region14: #{detection2d_forward.15} parent=0 // pred_check
    _
  $region15: #{detection2d_forward.15} parent=0 // pred_check_branch
    %16 = sbr.rel (0) target = $region17
  $region16: #{detection2d_forward.15} parent=0 // pred_region
    _
  $region17: #{detection2d_forward.15} parent=0 // pred_fallthru
    _
  %v17 = vld [vmem:[%s0] sm:$0xff]
  %v18 = vld [vmem:[%s1] sm:$0xff]
  %v19 = vld [vmem:[%s1 + $0x8] sm:$0xff]
  %v20 = vld [vmem:[%s1 + $0x10] sm:$0xff]
  %v21 = vld [vmem:[%s1 + $0x18] sm:$0xff]
  %v22 = vld [vmem:[%s1 + $0x20] sm:$0xff]
  %v23 = vld [vmem:[%s1 + $0x28] sm:$0xff]
  %v24 = vld [vmem:[%s1 + $0x30] sm:$0xff]
  %v25 = vld [vmem:[%s1 + $0x38] sm:$0xff]
  %v26 = vld [vmem:[%s1 + $0x40] sm:$0xff]
  %v27 = vld [vmem:[%s1 + $0x48] sm:$0xff]
  %v28 = vld [vmem:[%s1 + $0x50] sm:$0xff]
  %v29 = vld [vmem:[%s1 + $0x58] sm:$0xff]
  %v30 = vld [vmem:[%s1 + $0x60] sm:$0xff]
  %v31 = vld [vmem:[%s1 + $0x68] sm:$0xff]
  %v32 = vld [vmem:[%s1 + $0x70] sm:$0xff]
  %v33 = vld [vmem:[%s1 + $0x78] sm:$0xff]
  %v34 = vld [vmem:[%s1 + $0x80] sm:$0xff]
  %v35 = vld [vmem:[%s1 + $0x88] sm:$0xff]
  %v36 = vld [vmem:[%s1 + $0x90] sm:$0xff]
  %v37 = vld [vmem:[%s1 + $0x98] sm:$0xff]
  %v38 = vld [vmem:[%s1 + $0xa0] sm:$0xff]
  %v39 = vld [vmem:[%s1 + $0xa8] sm:$0xff]
  %v40 = vld [vmem:[%s1 + $0xb0] sm:$0xff]
  %v41 = vld [vmem:[%s1 + $0xb8] sm:$0xff]
  %v42 = vld [vmem:[%s1 + $0xc0] sm:$0xff]
  %v43 = vld [vmem:[%s1 + $0xc8] sm:$0xff]
  %v44 = vld [vmem:[%s1 + $0xd0] sm:$0xff]
  %v45 = vld [vmem:[%s1 + $0xd8] sm:$0xff]
  %v46 = vld [vmem:[%s1 + $0xe0] sm:$0xff]
  %v47 = vld [vmem:[%s1 + $0xe8] sm:$0xff]
  %v48 = vld [vmem:[%s1 + $0xf0] sm:$0xff]
  %v49 = vld [vmem:[%s1 + $0xf8] sm:$0xff]
  %v50 = vld [vmem:[%s1 + $0x100] sm:$0xff]
  %v51 = vld [vmem:[%s1 + $0x108] sm:$0xff]
  %v52 = vld [vmem:[%s1 + $0x110] sm:$0xff]
  %v53 = vld [vmem:[%s1 + $0x118] sm:$0xff]
  %v54 = vld [vmem:[%s1 + $0x120] sm:$0xff]
  %v55 = vld [vmem:[%s1 + $0x128] sm:$0xff]
  %v56 = vld [vmem:[%s1 + $0x130] sm:$0xff]
  %v57 = vld [vmem:[%s1 + $0x138] sm:$0xff]
  %v58 = vld [vmem:[%s1 + $0x140] sm:$0xff]
  %v59 = vld [vmem:[%s1 + $0x148] sm:$0xff]
  %v60 = vld [vmem:[%s1 + $0x150] sm:$0xff]
  %v61 = vld [vmem:[%s1 + $0x158] sm:$0xff]
  %v62 = vld [vmem:[%s1 + $0x160] sm:$0xff]
  %v63 = vld [vmem:[%s1 + $0x168] sm:$0xff]
  %v64 = vld [vmem:[%s1 + $0x170] sm:$0xff]
  %v65 = vld [vmem:[%s1 + $0x178] sm:$0xff]
  %v66 = vld [vmem:[%s1 + $0x180] sm:$0xff]
  %v67 = vld [vmem:[%s1 + $0x188] sm:$0xff]
  %v68 = vld [vmem:[%s1 + $0x190] sm:$0xff]
  %v69 = vld [vmem:[%s1 + $0x198] sm:$0xff]
  %v70 = vld [vmem:[%s1 + $0x1a0] sm:$0xff]
  %v71 = vld [vmem:[%s1 + $0x1a8] sm:$0xff]
  %v72 = vld [vmem:[%s1 + $0x1b0] sm:$0xff]
  %v73 = vld [vmem:[%s1 + $0x1b8] sm:$0xff]
  %v74 = vld [vmem:[%s1 + $0x1c0] sm:$0xff]
  %v75 = vld [vmem:[%s1 + $0x1c8] sm:$0xff]
  %v76 = vld [vmem:[%s1 + $0x1d0] sm:$0xff]
  %v77 = vld [vmem:[%s1 + $0x1d8] sm:$0xff]
  %v78 = vld [vmem:[%s1 + $0x1e0] sm:$0xff]
  %v79 = vld [vmem:[%s1 + $0x1e8] sm:$0xff]
  %v80 = vld [vmem:[%s1 + $0x1f0] sm:$0xff]
  %v81 = vld [vmem:[%s1 + $0x1f8] sm:$0xff]
  %v82 = vld [vmem:[%s1 + $0x200] sm:$0xff]
  %v83 = vld [vmem:[%s1 + $0x208] sm:$0xff]
  %v84 = vld [vmem:[%s1 + $0x210] sm:$0xff]
  %v85 = vld [vmem:[%s1 + $0x218] sm:$0xff]
  %v86 = vld [vmem:[%s1 + $0x220] sm:$0xff]
  %v87 = vld [vmem:[%s1 + $0x228] sm:$0xff]
  %v88 = vld [vmem:[%s1 + $0x230] sm:$0xff]
  %v89 = vld [vmem:[%s1 + $0x238] sm:$0xff]
  %v90 = vld [vmem:[%s1 + $0x240] sm:$0xff]
  %v91 = vld [vmem:[%s1 + $0x248] sm:$0xff]
  %v92 = vld [vmem:[%s1 + $0x250] sm:$0xff]
  %v93 = vld [vmem:[%s1 + $0x258] sm:$0xff]
  %v94 = vld [vmem:[%s1 + $0x260] sm:$0xff]
  %v95 = vld [vmem:[%s1 + $0x268] sm:$0xff]
  %v96 = vld [vmem:[%s1 + $0x270] sm:$0xff]
  %v97 = vld [vmem:[%s1 + $0x278] sm:$0xff]
  %v98 = vld [vmem:[%s1 + $0x280] sm:$0xff]
  %v99 = vld [vmem:[%s1 + $0x288] sm:$0xff]
  %v100 = vld [vmem:[%s1 + $0x290] sm:$0xff]
  %v101 = vld [vmem:[%s1 + $0x298] sm:$0xff]
  %v102 = vld [vmem:[%s1 + $0x2a0] sm:$0xff]
  %v103 = vld [vmem:[%s1 + $0x2a8] sm:$0xff]
  %v104 = vld [vmem:[%s1 + $0x2b0] sm:$0xff]
  %v105 = vld [vmem:[%s1 + $0x2b8] sm:$0xff]
  %v106 = vld [vmem:[%s1 + $0x2c0] sm:$0xff]
  %v107 = vld [vmem:[%s1 + $0x2c8] sm:$0xff]
  %v108 = vld [vmem:[%s1 + $0x2d0] sm:$0xff]
  %v109 = vld [vmem:[%s1 + $0x2d8] sm:$0xff]
  %v110 = vld [vmem:[%s1 + $0x2e0] sm:$0xff]
  %v111 = vld [vmem:[%s1 + $0x2e8] sm:$0xff]
  %v112 = vld [vmem:[%s1 + $0x2f0] sm:$0xff]
  %v113 = vld [vmem:[%s1 + $0x2f8] sm:$0xff]
  %v114 = vld [vmem:[%s1 + $0x300] sm:$0xff]
  %v115 = vld [vmem:[%s1 + $0x308] sm:$0xff]
  %v116 = vld [vmem:[%s1 + $0x310] sm:$0xff]
  %v117 = vld [vmem:[%s1 + $0x318] sm:$0xff]
  %v118 = vld [vmem:[%s1 + $0x320] sm:$0xff]
  %v119 = vld [vmem:[%s1 + $0x328] sm:$0xff]
  %v120 = vld [vmem:[%s1 + $0x330] sm:$0xff]
  %v121 = vld [vmem:[%s1 + $0x338] sm:$0xff]
  %v122 = vld [vmem:[%s1 + $0x340] sm:$0xff]
  %v123 = vld [vmem:[%s1 + $0x348] sm:$0xff]
  %v124 = vld [vmem:[%s1 + $0x350] sm:$0xff]
  %v125 = vld [vmem:[%s1 + $0x358] sm:$0xff]
  %v126 = vld [vmem:[%s1 + $0x360] sm:$0xff]
  %v127 = vld [vmem:[%s1 + $0x368] sm:$0xff]
  %v128 = vld [vmem:[%s1 + $0x370] sm:$0xff]
  %v129 = vld [vmem:[%s1 + $0x378] sm:$0xff]
  %v130 = vld [vmem:[%s1 + $0x380] sm:$0xff]
  %v131 = vld [vmem:[%s1 + $0x388] sm:$0xff]
  %v132 = vld [vmem:[%s1 + $0x390] sm:$0xff]
  %v133 = vld [vmem:[%s1 + $0x398] sm:$0xff]
  %v134 = vld [vmem:[%s1 + $0x3a0] sm:$0xff]
  %v135 = vld [vmem:[%s1 + $0x3a8] sm:$0xff]
  %v136 = vld [vmem:[%s1 + $0x3b0] sm:$0xff]
  %v137 = vld [vmem:[%s1 + $0x3b8] sm:$0xff]
  %v138 = vld [vmem:[%s1 + $0x3c0] sm:$0xff]
  %v139 = vld [vmem:[%s1 + $0x3c8] sm:$0xff]
  %v140 = vld [vmem:[%s1 + $0x3d0] sm:$0xff]
  %v141 = vld [vmem:[%s1 + $0x3d8] sm:$0xff]
  %v142 = vld [vmem:[%s1 + $0x3e0] sm:$0xff]
  %v143 = vld [vmem:[%s1 + $0x3e8] sm:$0xff]
  %v144 = vld [vmem:[%s1 + $0x3f0] sm:$0xff]
  %v145 = vld [vmem:[%s1 + $0x3f8] sm:$0xff]
  %v146 = vld [vmem:[%s2] sm:$0xff]
  %v148 = vlaneseq
  %v149 = vshrl.u32 %v148, 7
  %v150 = vsub.s32 0, %v149
  %v151 = vrot.slane %v146, %v150
  %v152 = vlaneseq
  %v153 = vshrl.u32 %v152, 7
  %v154 = vsub.s32 1, %v153
  %v155 = vrot.slane %v146, %v154
  %v156 = vlaneseq
  %v157 = vshrl.u32 %v156, 7
  %v158 = vsub.s32 2, %v157
  %v159 = vrot.slane %v146, %v158
  %v160 = vlaneseq
  %v161 = vshrl.u32 %v160, 7
  %v162 = vsub.s32 3, %v161
  %v163 = vrot.slane %v146, %v162
  %v164 = vlaneseq
  %v165 = vshrl.u32 %v164, 7
  %v166 = vsub.s32 4, %v165
  %v167 = vrot.slane %v146, %v166
  %v168 = vlaneseq
  %v169 = vshrl.u32 %v168, 7
  %v170 = vsub.s32 5, %v169
  %v171 = vrot.slane %v146, %v170
  %v172 = vlaneseq
  %v173 = vshrl.u32 %v172, 7
  %v174 = vsub.s32 6, %v173
  %v175 = vrot.slane %v146, %v174
  %v176 = vlaneseq
  %v177 = vshrl.u32 %v176, 7
  %v178 = vsub.s32 7, %v177
  %v179 = vrot.slane %v146, %v178
  %v189 = vunpack.c.l.b16 %v17
  %v190 = vunpack.c.h.b16 %v17
  %v191 = vpack.c.b16 %v189, %v189
  %v192 = vpack.c.b16 %v190, %v190
  %v323 = vunpack.c.l.b16 %v18
  %v324 = vunpack.c.h.b16 %v18
  %v325 = vunpack.c.l.b16 %v19
  %v326 = vunpack.c.h.b16 %v19
  %v327 = vunpack.c.l.b16 %v20
  %v328 = vunpack.c.h.b16 %v20
  %v329 = vunpack.c.l.b16 %v21
  %v330 = vunpack.c.h.b16 %v21
  %v331 = vunpack.c.l.b16 %v22
  %v332 = vunpack.c.h.b16 %v22
  %v333 = vunpack.c.l.b16 %v23
  %v334 = vunpack.c.h.b16 %v23
  %v335 = vunpack.c.l.b16 %v24
  %v336 = vunpack.c.h.b16 %v24
  %v337 = vunpack.c.l.b16 %v25
  %v338 = vunpack.c.h.b16 %v25
  %v339 = vunpack.c.l.b16 %v26
  %v340 = vunpack.c.h.b16 %v26
  %v341 = vunpack.c.l.b16 %v27
  %v342 = vunpack.c.h.b16 %v27
  %v343 = vunpack.c.l.b16 %v28
  %v344 = vunpack.c.h.b16 %v28
  %v345 = vunpack.c.l.b16 %v29
  %v346 = vunpack.c.h.b16 %v29
  %v347 = vunpack.c.l.b16 %v30
  %v348 = vunpack.c.h.b16 %v30
  %v349 = vunpack.c.l.b16 %v31
  %v350 = vunpack.c.h.b16 %v31
  %v351 = vunpack.c.l.b16 %v32
  %v352 = vunpack.c.h.b16 %v32
  %v353 = vunpack.c.l.b16 %v33
  %v354 = vunpack.c.h.b16 %v33
  %v355 = vunpack.c.l.b16 %v34
  %v356 = vunpack.c.h.b16 %v34
  %v357 = vunpack.c.l.b16 %v35
  %v358 = vunpack.c.h.b16 %v35
  %v359 = vunpack.c.l.b16 %v36
  %v360 = vunpack.c.h.b16 %v36
  %v361 = vunpack.c.l.b16 %v37
  %v362 = vunpack.c.h.b16 %v37
  %v363 = vunpack.c.l.b16 %v38
  %v364 = vunpack.c.h.b16 %v38
  %v365 = vunpack.c.l.b16 %v39
  %v366 = vunpack.c.h.b16 %v39
  %v367 = vunpack.c.l.b16 %v40
  %v368 = vunpack.c.h.b16 %v40
  %v369 = vunpack.c.l.b16 %v41
  %v370 = vunpack.c.h.b16 %v41
  %v371 = vunpack.c.l.b16 %v42
  %v372 = vunpack.c.h.b16 %v42
  %v373 = vunpack.c.l.b16 %v43
  %v374 = vunpack.c.h.b16 %v43
  %v375 = vunpack.c.l.b16 %v44
  %v376 = vunpack.c.h.b16 %v44
  %v377 = vunpack.c.l.b16 %v45
  %v378 = vunpack.c.h.b16 %v45
  %v379 = vunpack.c.l.b16 %v46
  %v380 = vunpack.c.h.b16 %v46
  %v381 = vunpack.c.l.b16 %v47
  %v382 = vunpack.c.h.b16 %v47
  %v383 = vunpack.c.l.b16 %v48
  %v384 = vunpack.c.h.b16 %v48
  %v385 = vunpack.c.l.b16 %v49
  %v386 = vunpack.c.h.b16 %v49
  %v387 = vunpack.c.l.b16 %v50
  %v388 = vunpack.c.h.b16 %v50
  %v389 = vunpack.c.l.b16 %v51
  %v390 = vunpack.c.h.b16 %v51
  %v391 = vunpack.c.l.b16 %v52
  %v392 = vunpack.c.h.b16 %v52
  %v393 = vunpack.c.l.b16 %v53
  %v394 = vunpack.c.h.b16 %v53
  %v395 = vunpack.c.l.b16 %v54
  %v396 = vunpack.c.h.b16 %v54
  %v397 = vunpack.c.l.b16 %v55
  %v398 = vunpack.c.h.b16 %v55
  %v399 = vunpack.c.l.b16 %v56
  %v400 = vunpack.c.h.b16 %v56
  %v401 = vunpack.c.l.b16 %v57
  %v402 = vunpack.c.h.b16 %v57
  %v403 = vunpack.c.l.b16 %v58
  %v404 = vunpack.c.h.b16 %v58
  %v405 = vunpack.c.l.b16 %v59
  %v406 = vunpack.c.h.b16 %v59
  %v407 = vunpack.c.l.b16 %v60
  %v408 = vunpack.c.h.b16 %v60
  %v409 = vunpack.c.l.b16 %v61
  %v410 = vunpack.c.h.b16 %v61
  %v411 = vunpack.c.l.b16 %v62
  %v412 = vunpack.c.h.b16 %v62
  %v413 = vunpack.c.l.b16 %v63
  %v414 = vunpack.c.h.b16 %v63
  %v415 = vunpack.c.l.b16 %v64
  %v416 = vunpack.c.h.b16 %v64
  %v417 = vunpack.c.l.b16 %v65
  %v418 = vunpack.c.h.b16 %v65
  %v419 = vunpack.c.l.b16 %v66
  %v420 = vunpack.c.h.b16 %v66
  %v421 = vunpack.c.l.b16 %v67
  %v422 = vunpack.c.h.b16 %v67
  %v423 = vunpack.c.l.b16 %v68
  %v424 = vunpack.c.h.b16 %v68
  %v425 = vunpack.c.l.b16 %v69
  %v426 = vunpack.c.h.b16 %v69
  %v427 = vunpack.c.l.b16 %v70
  %v428 = vunpack.c.h.b16 %v70
  %v429 = vunpack.c.l.b16 %v71
  %v430 = vunpack.c.h.b16 %v71
  %v431 = vunpack.c.l.b16 %v72
  %v432 = vunpack.c.h.b16 %v72
  %v433 = vunpack.c.l.b16 %v73
  %v434 = vunpack.c.h.b16 %v73
  %v435 = vunpack.c.l.b16 %v74
  %v436 = vunpack.c.h.b16 %v74
  %v437 = vunpack.c.l.b16 %v75
  %v438 = vunpack.c.h.b16 %v75
  %v439 = vunpack.c.l.b16 %v76
  %v440 = vunpack.c.h.b16 %v76
  %v441 = vunpack.c.l.b16 %v77
  %v442 = vunpack.c.h.b16 %v77
  %v443 = vunpack.c.l.b16 %v78
  %v444 = vunpack.c.h.b16 %v78
  %v445 = vunpack.c.l.b16 %v79
  %v446 = vunpack.c.h.b16 %v79
  %v447 = vunpack.c.l.b16 %v80
  %v448 = vunpack.c.h.b16 %v80
  %v449 = vunpack.c.l.b16 %v81
  %v450 = vunpack.c.h.b16 %v81
  %v451 = vunpack.c.l.b16 %v82
  %v452 = vunpack.c.h.b16 %v82
  %v453 = vunpack.c.l.b16 %v83
  %v454 = vunpack.c.h.b16 %v83
  %v455 = vunpack.c.l.b16 %v84
  %v456 = vunpack.c.h.b16 %v84
  %v457 = vunpack.c.l.b16 %v85
  %v458 = vunpack.c.h.b16 %v85
  %v459 = vunpack.c.l.b16 %v86
  %v460 = vunpack.c.h.b16 %v86
  %v461 = vunpack.c.l.b16 %v87
  %v462 = vunpack.c.h.b16 %v87
  %v463 = vunpack.c.l.b16 %v88
  %v464 = vunpack.c.h.b16 %v88
  %v465 = vunpack.c.l.b16 %v89
  %v466 = vunpack.c.h.b16 %v89
  %v467 = vunpack.c.l.b16 %v90
  %v468 = vunpack.c.h.b16 %v90
  %v469 = vunpack.c.l.b16 %v91
  %v470 = vunpack.c.h.b16 %v91
  %v471 = vunpack.c.l.b16 %v92
  %v472 = vunpack.c.h.b16 %v92
  %v473 = vunpack.c.l.b16 %v93
  %v474 = vunpack.c.h.b16 %v93
  %v475 = vunpack.c.l.b16 %v94
  %v476 = vunpack.c.h.b16 %v94
  %v477 = vunpack.c.l.b16 %v95
  %v478 = vunpack.c.h.b16 %v95
  %v479 = vunpack.c.l.b16 %v96
  %v480 = vunpack.c.h.b16 %v96
  %v481 = vunpack.c.l.b16 %v97
  %v482 = vunpack.c.h.b16 %v97
  %v483 = vunpack.c.l.b16 %v98
  %v484 = vunpack.c.h.b16 %v98
  %v485 = vunpack.c.l.b16 %v99
  %v486 = vunpack.c.h.b16 %v99
  %v487 = vunpack.c.l.b16 %v100
  %v488 = vunpack.c.h.b16 %v100
  %v489 = vunpack.c.l.b16 %v101
  %v490 = vunpack.c.h.b16 %v101
  %v491 = vunpack.c.l.b16 %v102
  %v492 = vunpack.c.h.b16 %v102
  %v493 = vunpack.c.l.b16 %v103
  %v494 = vunpack.c.h.b16 %v103
  %v495 = vunpack.c.l.b16 %v104
  %v496 = vunpack.c.h.b16 %v104
  %v497 = vunpack.c.l.b16 %v105
  %v498 = vunpack.c.h.b16 %v105
  %v499 = vunpack.c.l.b16 %v106
  %v500 = vunpack.c.h.b16 %v106
  %v501 = vunpack.c.l.b16 %v107
  %v502 = vunpack.c.h.b16 %v107
  %v503 = vunpack.c.l.b16 %v108
  %v504 = vunpack.c.h.b16 %v108
  %v505 = vunpack.c.l.b16 %v109
  %v506 = vunpack.c.h.b16 %v109
  %v507 = vunpack.c.l.b16 %v110
  %v508 = vunpack.c.h.b16 %v110
  %v509 = vunpack.c.l.b16 %v111
  %v510 = vunpack.c.h.b16 %v111
  %v511 = vunpack.c.l.b16 %v112
  %v512 = vunpack.c.h.b16 %v112
  %v513 = vunpack.c.l.b16 %v113
  %v514 = vunpack.c.h.b16 %v113
  %v515 = vunpack.c.l.b16 %v114
  %v516 = vunpack.c.h.b16 %v114
  %v517 = vunpack.c.l.b16 %v115
  %v518 = vunpack.c.h.b16 %v115
  %v519 = vunpack.c.l.b16 %v116
  %v520 = vunpack.c.h.b16 %v116
  %v521 = vunpack.c.l.b16 %v117
  %v522 = vunpack.c.h.b16 %v117
  %v523 = vunpack.c.l.b16 %v118
  %v524 = vunpack.c.h.b16 %v118
  %v525 = vunpack.c.l.b16 %v119
  %v526 = vunpack.c.h.b16 %v119
  %v527 = vunpack.c.l.b16 %v120
  %v528 = vunpack.c.h.b16 %v120
  %v529 = vunpack.c.l.b16 %v121
  %v530 = vunpack.c.h.b16 %v121
  %v531 = vunpack.c.l.b16 %v122
  %v532 = vunpack.c.h.b16 %v122
  %v533 = vunpack.c.l.b16 %v123
  %v534 = vunpack.c.h.b16 %v123
  %v535 = vunpack.c.l.b16 %v124
  %v536 = vunpack.c.h.b16 %v124
  %v537 = vunpack.c.l.b16 %v125
  %v538 = vunpack.c.h.b16 %v125
  %v539 = vunpack.c.l.b16 %v126
  %v540 = vunpack.c.h.b16 %v126
  %v541 = vunpack.c.l.b16 %v127
  %v542 = vunpack.c.h.b16 %v127
  %v543 = vunpack.c.l.b16 %v128
  %v544 = vunpack.c.h.b16 %v128
  %v545 = vunpack.c.l.b16 %v129
  %v546 = vunpack.c.h.b16 %v129
  %v547 = vunpack.c.l.b16 %v130
  %v548 = vunpack.c.h.b16 %v130
  %v549 = vunpack.c.l.b16 %v131
  %v550 = vunpack.c.h.b16 %v131
  %v551 = vunpack.c.l.b16 %v132
  %v552 = vunpack.c.h.b16 %v132
  %v553 = vunpack.c.l.b16 %v133
  %v554 = vunpack.c.h.b16 %v133
  %v555 = vunpack.c.l.b16 %v134
  %v556 = vunpack.c.h.b16 %v134
  %v557 = vunpack.c.l.b16 %v135
  %v558 = vunpack.c.h.b16 %v135
  %v559 = vunpack.c.l.b16 %v136
  %v560 = vunpack.c.h.b16 %v136
  %v561 = vunpack.c.l.b16 %v137
  %v562 = vunpack.c.h.b16 %v137
  %v563 = vunpack.c.l.b16 %v138
  %v564 = vunpack.c.h.b16 %v138
  %v565 = vunpack.c.l.b16 %v139
  %v566 = vunpack.c.h.b16 %v139
  %v567 = vunpack.c.l.b16 %v140
  %v568 = vunpack.c.h.b16 %v140
  %v569 = vunpack.c.l.b16 %v141
  %v570 = vunpack.c.h.b16 %v141
  %v571 = vunpack.c.l.b16 %v142
  %v572 = vunpack.c.h.b16 %v142
  %v573 = vunpack.c.l.b16 %v143
  %v574 = vunpack.c.h.b16 %v143
  %v575 = vunpack.c.l.b16 %v144
  %v576 = vunpack.c.h.b16 %v144
  %v577 = vunpack.c.l.b16 %v145
  %v578 = vunpack.c.h.b16 %v145
  %v579 = vpack.c.b16 %v331, %v323
  %v580 = vpack.c.b16 %v332, %v324
  %v581 = vpack.c.b16 %v333, %v325
  %v582 = vpack.c.b16 %v334, %v326
  %v583 = vpack.c.b16 %v335, %v327
  %v584 = vpack.c.b16 %v336, %v328
  %v585 = vpack.c.b16 %v337, %v329
  %v586 = vpack.c.b16 %v338, %v330
  %v587 = vpack.c.b16 %v347, %v339
  %v588 = vpack.c.b16 %v348, %v340
  %v589 = vpack.c.b16 %v349, %v341
  %v590 = vpack.c.b16 %v350, %v342
  %v591 = vpack.c.b16 %v351, %v343
  %v592 = vpack.c.b16 %v352, %v344
  %v593 = vpack.c.b16 %v353, %v345
  %v594 = vpack.c.b16 %v354, %v346
  %v595 = vpack.c.b16 %v363, %v355
  %v596 = vpack.c.b16 %v364, %v356
  %v597 = vpack.c.b16 %v365, %v357
  %v598 = vpack.c.b16 %v366, %v358
  %v599 = vpack.c.b16 %v367, %v359
  %v600 = vpack.c.b16 %v368, %v360
  %v601 = vpack.c.b16 %v369, %v361
  %v602 = vpack.c.b16 %v370, %v362
  %v603 = vpack.c.b16 %v379, %v371
  %v604 = vpack.c.b16 %v380, %v372
  %v605 = vpack.c.b16 %v381, %v373
  %v606 = vpack.c.b16 %v382, %v374
  %v607 = vpack.c.b16 %v383, %v375
  %v608 = vpack.c.b16 %v384, %v376
  %v609 = vpack.c.b16 %v385, %v377
  %v610 = vpack.c.b16 %v386, %v378
  %v611 = vpack.c.b16 %v395, %v387
  %v612 = vpack.c.b16 %v396, %v388
  %v613 = vpack.c.b16 %v397, %v389
  %v614 = vpack.c.b16 %v398, %v390
  %v615 = vpack.c.b16 %v399, %v391
  %v616 = vpack.c.b16 %v400, %v392
  %v617 = vpack.c.b16 %v401, %v393
  %v618 = vpack.c.b16 %v402, %v394
  %v619 = vpack.c.b16 %v411, %v403
  %v620 = vpack.c.b16 %v412, %v404
  %v621 = vpack.c.b16 %v413, %v405
  %v622 = vpack.c.b16 %v414, %v406
  %v623 = vpack.c.b16 %v415, %v407
  %v624 = vpack.c.b16 %v416, %v408
  %v625 = vpack.c.b16 %v417, %v409
  %v626 = vpack.c.b16 %v418, %v410
  %v627 = vpack.c.b16 %v427, %v419
  %v628 = vpack.c.b16 %v428, %v420
  %v629 = vpack.c.b16 %v429, %v421
  %v630 = vpack.c.b16 %v430, %v422
  %v631 = vpack.c.b16 %v431, %v423
  %v632 = vpack.c.b16 %v432, %v424
  %v633 = vpack.c.b16 %v433, %v425
  %v634 = vpack.c.b16 %v434, %v426
  %v635 = vpack.c.b16 %v443, %v435
  %v636 = vpack.c.b16 %v444, %v436
  %v637 = vpack.c.b16 %v445, %v437
  %v638 = vpack.c.b16 %v446, %v438
  %v639 = vpack.c.b16 %v447, %v439
  %v640 = vpack.c.b16 %v448, %v440
  %v641 = vpack.c.b16 %v449, %v441
  %v642 = vpack.c.b16 %v450, %v442
  %v643 = vpack.c.b16 %v459, %v451
  %v644 = vpack.c.b16 %v460, %v452
  %v645 = vpack.c.b16 %v461, %v453
  %v646 = vpack.c.b16 %v462, %v454
  %v647 = vpack.c.b16 %v463, %v455
  %v648 = vpack.c.b16 %v464, %v456
  %v649 = vpack.c.b16 %v465, %v457
  %v650 = vpack.c.b16 %v466, %v458
  %v651 = vpack.c.b16 %v475, %v467
  %v652 = vpack.c.b16 %v476, %v468
  %v653 = vpack.c.b16 %v477, %v469
  %v654 = vpack.c.b16 %v478, %v470
  %v655 = vpack.c.b16 %v479, %v471
  %v656 = vpack.c.b16 %v480, %v472
  %v657 = vpack.c.b16 %v481, %v473
  %v658 = vpack.c.b16 %v482, %v474
  %v659 = vpack.c.b16 %v491, %v483
  %v660 = vpack.c.b16 %v492, %v484
  %v661 = vpack.c.b16 %v493, %v485
  %v662 = vpack.c.b16 %v494, %v486
  %v663 = vpack.c.b16 %v495, %v487
  %v664 = vpack.c.b16 %v496, %v488
  %v665 = vpack.c.b16 %v497, %v489
  %v666 = vpack.c.b16 %v498, %v490
  %v667 = vpack.c.b16 %v507, %v499
  %v668 = vpack.c.b16 %v508, %v500
  %v669 = vpack.c.b16 %v509, %v501
  %v670 = vpack.c.b16 %v510, %v502
  %v671 = vpack.c.b16 %v511, %v503
  %v672 = vpack.c.b16 %v512, %v504
  %v673 = vpack.c.b16 %v513, %v505
  %v674 = vpack.c.b16 %v514, %v506
  %v675 = vpack.c.b16 %v523, %v515
  %v676 = vpack.c.b16 %v524, %v516
  %v677 = vpack.c.b16 %v525, %v517
  %v678 = vpack.c.b16 %v526, %v518
  %v679 = vpack.c.b16 %v527, %v519
  %v680 = vpack.c.b16 %v528, %v520
  %v681 = vpack.c.b16 %v529, %v521
  %v682 = vpack.c.b16 %v530, %v522
  %v683 = vpack.c.b16 %v539, %v531
  %v684 = vpack.c.b16 %v540, %v532
  %v685 = vpack.c.b16 %v541, %v533
  %v686 = vpack.c.b16 %v542, %v534
  %v687 = vpack.c.b16 %v543, %v535
  %v688 = vpack.c.b16 %v544, %v536
  %v689 = vpack.c.b16 %v545, %v537
  %v690 = vpack.c.b16 %v546, %v538
  %v691 = vpack.c.b16 %v555, %v547
  %v692 = vpack.c.b16 %v556, %v548
  %v693 = vpack.c.b16 %v557, %v549
  %v694 = vpack.c.b16 %v558, %v550
  %v695 = vpack.c.b16 %v559, %v551
  %v696 = vpack.c.b16 %v560, %v552
  %v697 = vpack.c.b16 %v561, %v553
  %v698 = vpack.c.b16 %v562, %v554
  %v699 = vpack.c.b16 %v571, %v563
  %v700 = vpack.c.b16 %v572, %v564
  %v701 = vpack.c.b16 %v573, %v565
  %v702 = vpack.c.b16 %v574, %v566
  %v703 = vpack.c.b16 %v575, %v567
  %v704 = vpack.c.b16 %v576, %v568
  %v705 = vpack.c.b16 %v577, %v569
  %v706 = vpack.c.b16 %v578, %v570
  %835 = vmatprep.subr.bf16.mxu0 %v580
  %836 = vmatpush1.bf16.msra.mxu0 %v579
  %837 = vmatprep.subr.bf16.mxu0 %v588
  %838 = vmatpush1.bf16.msra.mxu0 %v587
  %839 = vmatprep.subr.bf16.mxu0 %v596
  %840 = vmatpush1.bf16.msra.mxu0 %v595
  %841 = vmatprep.subr.bf16.mxu0 %v604
  %842 = vmatpush1.bf16.msra.mxu0 %v603
  %843 = vmatprep.subr.bf16.mxu0 %v612
  %844 = vmatpush1.bf16.msra.mxu0 %v611
  %845 = vmatprep.subr.bf16.mxu0 %v620
  %846 = vmatpush1.bf16.msra.mxu0 %v619
  %847 = vmatprep.subr.bf16.mxu0 %v628
  %848 = vmatpush1.bf16.msra.mxu0 %v627
  %849 = vmatprep.subr.bf16.mxu0 %v636
  %850 = vmatpush1.bf16.msra.mxu0 %v635
  %851 = vmatprep.subr.bf16.mxu0 %v644
  %852 = vmatpush1.bf16.msra.mxu0 %v643
  %853 = vmatprep.subr.bf16.mxu0 %v652
  %854 = vmatpush1.bf16.msra.mxu0 %v651
  %855 = vmatprep.subr.bf16.mxu0 %v660
  %856 = vmatpush1.bf16.msra.mxu0 %v659
  %857 = vmatprep.subr.bf16.mxu0 %v668
  %858 = vmatpush1.bf16.msra.mxu0 %v667
  %859 = vmatprep.subr.bf16.mxu0 %v676
  %860 = vmatpush1.bf16.msra.mxu0 %v675
  %861 = vmatprep.subr.bf16.mxu0 %v684
  %862 = vmatpush1.bf16.msra.mxu0 %v683
  %863 = vmatprep.subr.bf16.mxu0 %v692
  %864 = vmatpush1.bf16.msra.mxu0 %v691
  %865 = vmatprep.subr.bf16.mxu0 %v700
  %866 = vmatpush1.bf16.msra.mxu0 %v699
  %867 = vmatprep.mubr.bf16.mxu0 %v192
  %868 = vmatmul.mubr.bf16.gmra.mrb[0].mxu0 %v191
  %v869 = vpop.f32.mrb[0].mxu0
  %v870 = vadd.f32 %v151, %v869
  %v871 = vpop.f32.mrb[0].mxu0
  %v872 = vadd.f32 %v155, %v871
  %v873 = vpop.f32.mrb[0].mxu0
  %v874 = vpop.f32.mrb[0].mxu0
  %875 = vdwg.mxu0
  %876 = vmatprep.subr.bf16.mxu0 %v582
  %877 = vmatpush1.bf16.msra.mxu0 %v581
  %878 = vmatprep.subr.bf16.mxu0 %v590
  %879 = vmatpush1.bf16.msra.mxu0 %v589
  %880 = vmatprep.subr.bf16.mxu0 %v598
  %881 = vmatpush1.bf16.msra.mxu0 %v597
  %882 = vmatprep.subr.bf16.mxu0 %v606
  %883 = vmatpush1.bf16.msra.mxu0 %v605
  %884 = vmatprep.subr.bf16.mxu0 %v614
  %885 = vmatpush1.bf16.msra.mxu0 %v613
  %886 = vmatprep.subr.bf16.mxu0 %v622
  %887 = vmatpush1.bf16.msra.mxu0 %v621
  %888 = vmatprep.subr.bf16.mxu0 %v630
  %889 = vmatpush1.bf16.msra.mxu0 %v629
  %890 = vmatprep.subr.bf16.mxu0 %v638
  %891 = vmatpush1.bf16.msra.mxu0 %v637
  %892 = vmatprep.subr.bf16.mxu0 %v646
  %893 = vmatpush1.bf16.msra.mxu0 %v645
  %894 = vmatprep.subr.bf16.mxu0 %v654
  %895 = vmatpush1.bf16.msra.mxu0 %v653
  %896 = vmatprep.subr.bf16.mxu0 %v662
  %897 = vmatpush1.bf16.msra.mxu0 %v661
  %898 = vmatprep.subr.bf16.mxu0 %v670
  %899 = vmatpush1.bf16.msra.mxu0 %v669
  %900 = vmatprep.subr.bf16.mxu0 %v678
  %901 = vmatpush1.bf16.msra.mxu0 %v677
  %902 = vmatprep.subr.bf16.mxu0 %v686
  %903 = vmatpush1.bf16.msra.mxu0 %v685
  %904 = vmatprep.subr.bf16.mxu0 %v694
  %905 = vmatpush1.bf16.msra.mxu0 %v693
  %906 = vmatprep.subr.bf16.mxu0 %v702
  %907 = vmatpush1.bf16.msra.mxu0 %v701
  %908 = vmatprep.mubr.bf16.mxu0 %v192
  %909 = vmatmul.mubr.bf16.gmra.mrb[0].mxu0 %v191
  %v910 = vpop.f32.mrb[0].mxu0
  %v911 = vadd.f32 %v159, %v910
  %v912 = vpop.f32.mrb[0].mxu0
  %v913 = vadd.f32 %v163, %v912
  %v914 = vpop.f32.mrb[0].mxu0
  %v915 = vpop.f32.mrb[0].mxu0
  %916 = vdwg.mxu0
  %917 = vmatprep.subr.bf16.mxu0 %v584
  %918 = vmatpush1.bf16.msra.mxu0 %v583
  %919 = vmatprep.subr.bf16.mxu0 %v592
  %920 = vmatpush1.bf16.msra.mxu0 %v591
  %921 = vmatprep.subr.bf16.mxu0 %v600
  %922 = vmatpush1.bf16.msra.mxu0 %v599
  %923 = vmatprep.subr.bf16.mxu0 %v608
  %924 = vmatpush1.bf16.msra.mxu0 %v607
  %925 = vmatprep.subr.bf16.mxu0 %v616
  %926 = vmatpush1.bf16.msra.mxu0 %v615
  %927 = vmatprep.subr.bf16.mxu0 %v624
  %928 = vmatpush1.bf16.msra.mxu0 %v623
  %929 = vmatprep.subr.bf16.mxu0 %v632
  %930 = vmatpush1.bf16.msra.mxu0 %v631
  %931 = vmatprep.subr.bf16.mxu0 %v640
  %932 = vmatpush1.bf16.msra.mxu0 %v639
  %933 = vmatprep.subr.bf16.mxu0 %v648
  %934 = vmatpush1.bf16.msra.mxu0 %v647
  %935 = vmatprep.subr.bf16.mxu0 %v656
  %936 = vmatpush1.bf16.msra.mxu0 %v655
  %937 = vmatprep.subr.bf16.mxu0 %v664
  %938 = vmatpush1.bf16.msra.mxu0 %v663
  %939 = vmatprep.subr.bf16.mxu0 %v672
  %940 = vmatpush1.bf16.msra.mxu0 %v671
  %941 = vmatprep.subr.bf16.mxu0 %v680
  %942 = vmatpush1.bf16.msra.mxu0 %v679
  %943 = vmatprep.subr.bf16.mxu0 %v688
  %944 = vmatpush1.bf16.msra.mxu0 %v687
  %945 = vmatprep.subr.bf16.mxu0 %v696
  %946 = vmatpush1.bf16.msra.mxu0 %v695
  %947 = vmatprep.subr.bf16.mxu0 %v704
  %948 = vmatpush1.bf16.msra.mxu0 %v703
  %949 = vmatprep.mubr.bf16.mxu0 %v192
  %950 = vmatmul.mubr.bf16.gmra.mrb[0].mxu0 %v191
  %v951 = vpop.f32.mrb[0].mxu0
  %v952 = vadd.f32 %v167, %v951
  %v953 = vpop.f32.mrb[0].mxu0
  %v954 = vadd.f32 %v171, %v953
  %v955 = vpop.f32.mrb[0].mxu0
  %v956 = vpop.f32.mrb[0].mxu0
  %957 = vdwg.mxu0
  %958 = vmatprep.subr.bf16.mxu0 %v586
  %959 = vmatpush1.bf16.msra.mxu0 %v585
  %960 = vmatprep.subr.bf16.mxu0 %v594
  %961 = vmatpush1.bf16.msra.mxu0 %v593
  %962 = vmatprep.subr.bf16.mxu0 %v602
  %963 = vmatpush1.bf16.msra.mxu0 %v601
  %964 = vmatprep.subr.bf16.mxu0 %v610
  %965 = vmatpush1.bf16.msra.mxu0 %v609
  %966 = vmatprep.subr.bf16.mxu0 %v618
  %967 = vmatpush1.bf16.msra.mxu0 %v617
  %968 = vmatprep.subr.bf16.mxu0 %v626
  %969 = vmatpush1.bf16.msra.mxu0 %v625
  %970 = vmatprep.subr.bf16.mxu0 %v634
  %971 = vmatpush1.bf16.msra.mxu0 %v633
  %972 = vmatprep.subr.bf16.mxu0 %v642
  %973 = vmatpush1.bf16.msra.mxu0 %v641
  %974 = vmatprep.subr.bf16.mxu0 %v650
  %975 = vmatpush1.bf16.msra.mxu0 %v649
  %976 = vmatprep.subr.bf16.mxu0 %v658
  %977 = vmatpush1.bf16.msra.mxu0 %v657
  %978 = vmatprep.subr.bf16.mxu0 %v666
  %979 = vmatpush1.bf16.msra.mxu0 %v665
  %980 = vmatprep.subr.bf16.mxu0 %v674
  %981 = vmatpush1.bf16.msra.mxu0 %v673
  %982 = vmatprep.subr.bf16.mxu0 %v682
  %983 = vmatpush1.bf16.msra.mxu0 %v681
  %984 = vmatprep.subr.bf16.mxu0 %v690
  %985 = vmatpush1.bf16.msra.mxu0 %v689
  %986 = vmatprep.subr.bf16.mxu0 %v698
  %987 = vmatpush1.bf16.msra.mxu0 %v697
  %988 = vmatprep.subr.bf16.mxu0 %v706
  %989 = vmatpush1.bf16.msra.mxu0 %v705
  %990 = vmatprep.mubr.bf16.mxu0 %v192
  %991 = vmatmul.mubr.bf16.gmra.mrb[0].mxu0 %v191
  %v992 = vpop.f32.mrb[0].mxu0
  %v993 = vadd.f32 %v175, %v992
  %v994 = vpop.f32.mrb[0].mxu0
  %v995 = vadd.f32 %v179, %v994
  %v996 = vpop.f32.mrb[0].mxu0
  %v997 = vpop.f32.mrb[0].mxu0
  %998 = vdwg.mxu0
  %v999 = vld [vmem:[%s3] sm:$0xff]
  %v1000 = vld [vmem:[%s3 + $0x8] sm:$0xff]
  %v1001 = vld [vmem:[%s3 + $0x10] sm:$0xff]
  %v1002 = vld [vmem:[%s3 + $0x18] sm:$0xff]
  %v1003 = vld [vmem:[%s3 + $0x20] sm:$0xff]
  %v1004 = vld [vmem:[%s3 + $0x28] sm:$0xff]
  %v1005 = vld [vmem:[%s3 + $0x30] sm:$0xff]
  %v1006 = vld [vmem:[%s3 + $0x38] sm:$0xff]
  %v1007 = vadd.f32 %v870, %v999
  %v1008 = vadd.f32 %v872, %v1000
  %v1009 = vadd.f32 %v911, %v1001
  %v1010 = vadd.f32 %v913, %v1002
  %v1011 = vadd.f32 %v952, %v1003
  %v1012 = vadd.f32 %v954, %v1004
  %v1013 = vadd.f32 %v993, %v1005
  %v1014 = vadd.f32 %v995, %v1006
  %1015 = vst [vmem:[%s4] sm:$0xff] %v1007
  %1016 = vst [vmem:[%s4 + $0x8] sm:$0xff] %v1008
  %1017 = vst [vmem:[%s4 + $0x10] sm:$0xff] %v1009
  %1018 = vst [vmem:[%s4 + $0x18] sm:$0xff] %v1010
  %1019 = vst [vmem:[%s4 + $0x20] sm:$0xff] %v1011
  %1020 = vst [vmem:[%s4 + $0x28] sm:$0xff] %v1012
  %1021 = vst [vmem:[%s4 + $0x30] sm:$0xff] %v1013
  %1022 = vst [vmem:[%s4 + $0x38] sm:$0xff] %v1014
  // Predicated region
  $region18: #{detection2d_forward.15} parent=0 // pred_check
    _
  $region19: #{detection2d_forward.15} parent=0 // pred_check_branch
    %1024 = sbr.rel (0) target = $region21
  $region20: #{detection2d_forward.15} parent=0 // pred_region
    _
  $region21: #{detection2d_forward.15} parent=0 // pred_fallthru
    _
  // Predicated region
  $region22: #{detection2d_forward.15} parent=0 // pred_check
    _
  $region23: #{detection2d_forward.15} parent=0 // pred_check_branch
    %1026 = sbr.rel (0) target = $region25
  $region24: #{detection2d_forward.15} parent=0 // pred_region
    _
  $region25: #{detection2d_forward.15} parent=0 // pred_fallthru
    _

// kernel: detection2d_forward.14
$region0: #{detection2d_forward.14}
  #allocation0 [shape = 'u32[]', space=smem, size = 0x4, offset = 0x4, fixed_abs, tag = 'smem constant byte address 0x4 - core index']
  #allocation1 [shape = 'u32[144,128]{1,0:T(1,128)}', space=vmem, size = 0x12000, scoped, tag = 'internal scratch']
  %s0 = inlined_call_operand.vmem [shape: bf16[2,512], index: 0, kind: input, shape index: {}]
  %s1 = inlined_call_operand.vmem [shape: bf16[512,1024], index: 1, kind: input, shape index: {}]
  %s2 = inlined_call_operand.vmem [shape: f32[1,1024], index: 2, kind: input, shape index: {}]
  %s3 = inlined_call_operand.vmem [shape: f32[2,1024], index: 3, kind: output, shape index: {}]
  %s4 = sld [smem:[#allocation0]]
  $region22: #{detection2d_forward.14} parent=0
    _
  %s6 = ssub.s32 1, %s4
  %s7 = scalar_select 0, %s6, %s4
  // Predicated region
  $region2: #{detection2d_forward.14} parent=0 // pred_check
    _
  $region3: #{detection2d_forward.14} parent=0 // pred_check_branch
    %9 = sbr.rel (0) target = $region5
  $region4: #{detection2d_forward.14} parent=0 // pred_region
    _
  $region5: #{detection2d_forward.14} parent=0 // pred_fallthru
    _
  // Predicated region
  $region6: #{detection2d_forward.14} parent=0 // pred_check
    _
  $region7: #{detection2d_forward.14} parent=0 // pred_check_branch
    %11 = sbr.rel (0) target = $region9
  $region8: #{detection2d_forward.14} parent=0 // pred_region
    _
  $region9: #{detection2d_forward.14} parent=0 // pred_fallthru
    _
  // Predicated region
  $region10: #{detection2d_forward.14} parent=0 // pred_check
    _
  $region11: #{detection2d_forward.14} parent=0 // pred_check_branch
    %13 = sbr.rel (0) target = $region13
  $region12: #{detection2d_forward.14} parent=0 // pred_region
    _
  $region13: #{detection2d_forward.14} parent=0 // pred_fallthru
    _
  %v14 = vld [vmem:[%s0] sm:$0xf]
  %v15 = vld [vmem:[%s1] sm:$0xff]
  %v16 = vld [vmem:[%s1 + $0x8] sm:$0xff]
  %v17 = vld [vmem:[%s1 + $0x10] sm:$0xff]
  %v18 = vld [vmem:[%s1 + $0x18] sm:$0xff]
  %v19 = vld [vmem:[%s1 + $0x20] sm:$0xff]
  %v20 = vld [vmem:[%s1 + $0x28] sm:$0xff]
  %v21 = vld [vmem:[%s1 + $0x30] sm:$0xff]
  %v22 = vld [vmem:[%s1 + $0x38] sm:$0xff]
  %v23 = vld [vmem:[%s1 + $0x40] sm:$0xff]
  %v24 = vld [vmem:[%s1 + $0x48] sm:$0xff]
  %v25 = vld [vmem:[%s1 + $0x50] sm:$0xff]
  %v26 = vld [vmem:[%s1 + $0x58] sm:$0xff]
  %v27 = vld [vmem:[%s1 + $0x60] sm:$0xff]
  %v28 = vld [vmem:[%s1 + $0x68] sm:$0xff]
  %v29 = vld [vmem:[%s1 + $0x70] sm:$0xff]
  %v30 = vld [vmem:[%s1 + $0x78] sm:$0xff]
  %v31 = vld [vmem:[%s1 + $0x80] sm:$0xff]
  %v32 = vld [vmem:[%s1 + $0x88] sm:$0xff]
  %v33 = vld [vmem:[%s1 + $0x90] sm:$0xff]
  %v34 = vld [vmem:[%s1 + $0x98] sm:$0xff]
  %v35 = vld [vmem:[%s1 + $0xa0] sm:$0xff]
  %v36 = vld [vmem:[%s1 + $0xa8] sm:$0xff]
  %v37 = vld [vmem:[%s1 + $0xb0] sm:$0xff]
  %v38 = vld [vmem:[%s1 + $0xb8] sm:$0xff]
  %v39 = vld [vmem:[%s1 + $0xc0] sm:$0xff]
  %v40 = vld [vmem:[%s1 + $0xc8] sm:$0xff]
  %v41 = vld [vmem:[%s1 + $0xd0] sm:$0xff]
  %v42 = vld [vmem:[%s1 + $0xd8] sm:$0xff]
  %v43 = vld [vmem:[%s1 + $0xe0] sm:$0xff]
  %v44 = vld [vmem:[%s1 + $0xe8] sm:$0xff]
  %v45 = vld [vmem:[%s1 + $0xf0] sm:$0xff]
  %v46 = vld [vmem:[%s1 + $0xf8] sm:$0xff]
  %v47 = vld [vmem:[%s1 + $0x100] sm:$0xff]
  %v48 = vld [vmem:[%s1 + $0x108] sm:$0xff]
  %v49 = vld [vmem:[%s1 + $0x110] sm:$0xff]
  %v50 = vld [vmem:[%s1 + $0x118] sm:$0xff]
  %v51 = vld [vmem:[%s1 + $0x120] sm:$0xff]
  %v52 = vld [vmem:[%s1 + $0x128] sm:$0xff]
  %v53 = vld [vmem:[%s1 + $0x130] sm:$0xff]
  %v54 = vld [vmem:[%s1 + $0x138] sm:$0xff]
  %v55 = vld [vmem:[%s1 + $0x140] sm:$0xff]
  %v56 = vld [vmem:[%s1 + $0x148] sm:$0xff]
  %v57 = vld [vmem:[%s1 + $0x150] sm:$0xff]
  %v58 = vld [vmem:[%s1 + $0x158] sm:$0xff]
  %v59 = vld [vmem:[%s1 + $0x160] sm:$0xff]
  %v60 = vld [vmem:[%s1 + $0x168] sm:$0xff]
  %v61 = vld [vmem:[%s1 + $0x170] sm:$0xff]
  %v62 = vld [vmem:[%s1 + $0x178] sm:$0xff]
  %v63 = vld [vmem:[%s1 + $0x180] sm:$0xff]
  %v64 = vld [vmem:[%s1 + $0x188] sm:$0xff]
  %v65 = vld [vmem:[%s1 + $0x190] sm:$0xff]
  %v66 = vld [vmem:[%s1 + $0x198] sm:$0xff]
  %v67 = vld [vmem:[%s1 + $0x1a0] sm:$0xff]
  %v68 = vld [vmem:[%s1 + $0x1a8] sm:$0xff]
  %v69 = vld [vmem:[%s1 + $0x1b0] sm:$0xff]
  %v70 = vld [vmem:[%s1 + $0x1b8] sm:$0xff]
  %v71 = vld [vmem:[%s1 + $0x1c0] sm:$0xff]
  %v72 = vld [vmem:[%s1 + $0x1c8] sm:$0xff]
  %v73 = vld [vmem:[%s1 + $0x1d0] sm:$0xff]
  %v74 = vld [vmem:[%s1 + $0x1d8] sm:$0xff]
  %v75 = vld [vmem:[%s1 + $0x1e0] sm:$0xff]
  %v76 = vld [vmem:[%s1 + $0x1e8] sm:$0xff]
  %v77 = vld [vmem:[%s1 + $0x1f0] sm:$0xff]
  %v78 = vld [vmem:[%s1 + $0x1f8] sm:$0xff]
  %v79 = vld [vmem:[%s1 + $0x200] sm:$0xff]
  %v80 = vld [vmem:[%s1 + $0x208] sm:$0xff]
  %v81 = vld [vmem:[%s1 + $0x210] sm:$0xff]
  %v82 = vld [vmem:[%s1 + $0x218] sm:$0xff]
  %v83 = vld [vmem:[%s1 + $0x220] sm:$0xff]
  %v84 = vld [vmem:[%s1 + $0x228] sm:$0xff]
  %v85 = vld [vmem:[%s1 + $0x230] sm:$0xff]
  %v86 = vld [vmem:[%s1 + $0x238] sm:$0xff]
  %v87 = vld [vmem:[%s1 + $0x240] sm:$0xff]
  %v88 = vld [vmem:[%s1 + $0x248] sm:$0xff]
  %v89 = vld [vmem:[%s1 + $0x250] sm:$0xff]
  %v90 = vld [vmem:[%s1 + $0x258] sm:$0xff]
  %v91 = vld [vmem:[%s1 + $0x260] sm:$0xff]
  %v92 = vld [vmem:[%s1 + $0x268] sm:$0xff]
  %v93 = vld [vmem:[%s1 + $0x270] sm:$0xff]
  %v94 = vld [vmem:[%s1 + $0x278] sm:$0xff]
  %v95 = vld [vmem:[%s1 + $0x280] sm:$0xff]
  %v96 = vld [vmem:[%s1 + $0x288] sm:$0xff]
  %v97 = vld [vmem:[%s1 + $0x290] sm:$0xff]
  %v98 = vld [vmem:[%s1 + $0x298] sm:$0xff]
  %v99 = vld [vmem:[%s1 + $0x2a0] sm:$0xff]
  %v100 = vld [vmem:[%s1 + $0x2a8] sm:$0xff]
  %v101 = vld [vmem:[%s1 + $0x2b0] sm:$0xff]
  %v102 = vld [vmem:[%s1 + $0x2b8] sm:$0xff]
  %v103 = vld [vmem:[%s1 + $0x2c0] sm:$0xff]
  %v104 = vld [vmem:[%s1 + $0x2c8] sm:$0xff]
  %v105 = vld [vmem:[%s1 + $0x2d0] sm:$0xff]
  %v106 = vld [vmem:[%s1 + $0x2d8] sm:$0xff]
  %v107 = vld [vmem:[%s1 + $0x2e0] sm:$0xff]
  %v108 = vld [vmem:[%s1 + $0x2e8] sm:$0xff]
  %v109 = vld [vmem:[%s1 + $0x2f0] sm:$0xff]
  %v110 = vld [vmem:[%s1 + $0x2f8] sm:$0xff]
  %v111 = vld [vmem:[%s1 + $0x300] sm:$0xff]
  %v112 = vld [vmem:[%s1 + $0x308] sm:$0xff]
  %v113 = vld [vmem:[%s1 + $0x310] sm:$0xff]
  %v114 = vld [vmem:[%s1 + $0x318] sm:$0xff]
  %v115 = vld [vmem:[%s1 + $0x320] sm:$0xff]
  %v116 = vld [vmem:[%s1 + $0x328] sm:$0xff]
  %v117 = vld [vmem:[%s1 + $0x330] sm:$0xff]
  %v118 = vld [vmem:[%s1 + $0x338] sm:$0xff]
  %v119 = vld [vmem:[%s1 + $0x340] sm:$0xff]
  %v120 = vld [vmem:[%s1 + $0x348] sm:$0xff]
  %v121 = vld [vmem:[%s1 + $0x350] sm:$0xff]
  %v122 = vld [vmem:[%s1 + $0x358] sm:$0xff]
  %v123 = vld [vmem:[%s1 + $0x360] sm:$0xff]
  %v124 = vld [vmem:[%s1 + $0x368] sm:$0xff]
  %v125 = vld [vmem:[%s1 + $0x370] sm:$0xff]
  %v126 = vld [vmem:[%s1 + $0x378] sm:$0xff]
  %v127 = vld [vmem:[%s1 + $0x380] sm:$0xff]
  %v128 = vld [vmem:[%s1 + $0x388] sm:$0xff]
  %v129 = vld [vmem:[%s1 + $0x390] sm:$0xff]
  %v130 = vld [vmem:[%s1 + $0x398] sm:$0xff]
  %v131 = vld [vmem:[%s1 + $0x3a0] sm:$0xff]
  %v132 = vld [vmem:[%s1 + $0x3a8] sm:$0xff]
  %v133 = vld [vmem:[%s1 + $0x3b0] sm:$0xff]
  %v134 = vld [vmem:[%s1 + $0x3b8] sm:$0xff]
  %v135 = vld [vmem:[%s1 + $0x3c0] sm:$0xff]
  %v136 = vld [vmem:[%s1 + $0x3c8] sm:$0xff]
  %v137 = vld [vmem:[%s1 + $0x3d0] sm:$0xff]
  %v138 = vld [vmem:[%s1 + $0x3d8] sm:$0xff]
  %v139 = vld [vmem:[%s1 + $0x3e0] sm:$0xff]
  %v140 = vld [vmem:[%s1 + $0x3e8] sm:$0xff]
  %v141 = vld [vmem:[%s1 + $0x3f0] sm:$0xff]
  %v142 = vld [vmem:[%s1 + $0x3f8] sm:$0xff]
  %v143 = vld [vmem:[%s1 + $0x400] sm:$0xff]
  %v144 = vld [vmem:[%s1 + $0x408] sm:$0xff]
  %v145 = vld [vmem:[%s1 + $0x410] sm:$0xff]
  %v146 = vld [vmem:[%s1 + $0x418] sm:$0xff]
  %v147 = vld [vmem:[%s1 + $0x420] sm:$0xff]
  %v148 = vld [vmem:[%s1 + $0x428] sm:$0xff]
  %v149 = vld [vmem:[%s1 + $0x430] sm:$0xff]
  %v150 = vld [vmem:[%s1 + $0x438] sm:$0xff]
  %v151 = vld [vmem:[%s1 + $0x440] sm:$0xff]
  %v152 = vld [vmem:[%s1 + $0x448] sm:$0xff]
  %v153 = vld [vmem:[%s1 + $0x450] sm:$0xff]
  %v154 = vld [vmem:[%s1 + $0x458] sm:$0xff]
  %v155 = vld [vmem:[%s1 + $0x460] sm:$0xff]
  %v156 = vld [vmem:[%s1 + $0x468] sm:$0xff]
  %v157 = vld [vmem:[%s1 + $0x470] sm:$0xff]
  %v158 = vld [vmem:[%s1 + $0x478] sm:$0xff]
  %v159 = vld [vmem:[%s1 + $0x480] sm:$0xff]
  %v160 = vld [vmem:[%s1 + $0x488] sm:$0xff]
  %v161 = vld [vmem:[%s1 + $0x490] sm:$0xff]
  %v162 = vld [vmem:[%s1 + $0x498] sm:$0xff]
  %v163 = vld [vmem:[%s1 + $0x4a0] sm:$0xff]
  %v164 = vld [vmem:[%s1 + $0x4a8] sm:$0xff]
  %v165 = vld [vmem:[%s1 + $0x4b0] sm:$0xff]
  %v166 = vld [vmem:[%s1 + $0x4b8] sm:$0xff]
  %v167 = vld [vmem:[%s1 + $0x4c0] sm:$0xff]
  %v168 = vld [vmem:[%s1 + $0x4c8] sm:$0xff]
  %v169 = vld [vmem:[%s1 + $0x4d0] sm:$0xff]
  %v170 = vld [vmem:[%s1 + $0x4d8] sm:$0xff]
  %v171 = vld [vmem:[%s1 + $0x4e0] sm:$0xff]
  %v172 = vld [vmem:[%s1 + $0x4e8] sm:$0xff]
  %v173 = vld [vmem:[%s1 + $0x4f0] sm:$0xff]
  %v174 = vld [vmem:[%s1 + $0x4f8] sm:$0xff]
  %v175 = vld [vmem:[%s1 + $0x500] sm:$0xff]
  %v176 = vld [vmem:[%s1 + $0x508] sm:$0xff]
  %v177 = vld [vmem:[%s1 + $0x510] sm:$0xff]
  %v178 = vld [vmem:[%s1 + $0x518] sm:$0xff]
  %v179 = vld [vmem:[%s1 + $0x520] sm:$0xff]
  %v180 = vld [vmem:[%s1 + $0x528] sm:$0xff]
  %v181 = vld [vmem:[%s1 + $0x530] sm:$0xff]
  %v182 = vld [vmem:[%s1 + $0x538] sm:$0xff]
  %v183 = vld [vmem:[%s1 + $0x540] sm:$0xff]
  %v184 = vld [vmem:[%s1 + $0x548] sm:$0xff]
  %v185 = vld [vmem:[%s1 + $0x550] sm:$0xff]
  %v186 = vld [vmem:[%s1 + $0x558] sm:$0xff]
  %v187 = vld [vmem:[%s1 + $0x560] sm:$0xff]
  %v188 = vld [vmem:[%s1 + $0x568] sm:$0xff]
  %v189 = vld [vmem:[%s1 + $0x570] sm:$0xff]
  %v190 = vld [vmem:[%s1 + $0x578] sm:$0xff]
  %v191 = vld [vmem:[%s1 + $0x580] sm:$0xff]
  %v192 = vld [vmem:[%s1 + $0x588] sm:$0xff]
  %v193 = vld [vmem:[%s1 + $0x590] sm:$0xff]
  %v194 = vld [vmem:[%s1 + $0x598] sm:$0xff]
  %v195 = vld [vmem:[%s1 + $0x5a0] sm:$0xff]
  %v196 = vld [vmem:[%s1 + $0x5a8] sm:$0xff]
  %v197 = vld [vmem:[%s1 + $0x5b0] sm:$0xff]
  %v198 = vld [vmem:[%s1 + $0x5b8] sm:$0xff]
  %v199 = vld [vmem:[%s1 + $0x5c0] sm:$0xff]
  %v200 = vld [vmem:[%s1 + $0x5c8] sm:$0xff]
  %v201 = vld [vmem:[%s1 + $0x5d0] sm:$0xff]
  %v202 = vld [vmem:[%s1 + $0x5d8] sm:$0xff]
  %v203 = vld [vmem:[%s1 + $0x5e0] sm:$0xff]
  %v204 = vld [vmem:[%s1 + $0x5e8] sm:$0xff]
  %v205 = vld [vmem:[%s1 + $0x5f0] sm:$0xff]
  %v206 = vld [vmem:[%s1 + $0x5f8] sm:$0xff]
  %v207 = vld [vmem:[%s1 + $0x600] sm:$0xff]
  %v208 = vld [vmem:[%s1 + $0x608] sm:$0xff]
  %v209 = vld [vmem:[%s1 + $0x610] sm:$0xff]
  %v210 = vld [vmem:[%s1 + $0x618] sm:$0xff]
  %v211 = vld [vmem:[%s1 + $0x620] sm:$0xff]
  %v212 = vld [vmem:[%s1 + $0x628] sm:$0xff]
  %v213 = vld [vmem:[%s1 + $0x630] sm:$0xff]
  %v214 = vld [vmem:[%s1 + $0x638] sm:$0xff]
  %v215 = vld [vmem:[%s1 + $0x640] sm:$0xff]
  %v216 = vld [vmem:[%s1 + $0x648] sm:$0xff]
  %v217 = vld [vmem:[%s1 + $0x650] sm:$0xff]
  %v218 = vld [vmem:[%s1 + $0x658] sm:$0xff]
  %v219 = vld [vmem:[%s1 + $0x660] sm:$0xff]
  %v220 = vld [vmem:[%s1 + $0x668] sm:$0xff]
  %v221 = vld [vmem:[%s1 + $0x670] sm:$0xff]
  %v222 = vld [vmem:[%s1 + $0x678] sm:$0xff]
  %v223 = vld [vmem:[%s1 + $0x680] sm:$0xff]
  %v224 = vld [vmem:[%s1 + $0x688] sm:$0xff]
  %v225 = vld [vmem:[%s1 + $0x690] sm:$0xff]
  %v226 = vld [vmem:[%s1 + $0x698] sm:$0xff]
  %v227 = vld [vmem:[%s1 + $0x6a0] sm:$0xff]
  %v228 = vld [vmem:[%s1 + $0x6a8] sm:$0xff]
  %v229 = vld [vmem:[%s1 + $0x6b0] sm:$0xff]
  %v230 = vld [vmem:[%s1 + $0x6b8] sm:$0xff]
  %v231 = vld [vmem:[%s1 + $0x6c0] sm:$0xff]
  %v232 = vld [vmem:[%s1 + $0x6c8] sm:$0xff]
  %v233 = vld [vmem:[%s1 + $0x6d0] sm:$0xff]
  %v234 = vld [vmem:[%s1 + $0x6d8] sm:$0xff]
  %v235 = vld [vmem:[%s1 + $0x6e0] sm:$0xff]
  %v236 = vld [vmem:[%s1 + $0x6e8] sm:$0xff]
  %v237 = vld [vmem:[%s1 + $0x6f0] sm:$0xff]
  %v238 = vld [vmem:[%s1 + $0x6f8] sm:$0xff]
  %v239 = vld [vmem:[%s1 + $0x700] sm:$0xff]
  %v240 = vld [vmem:[%s1 + $0x708] sm:$0xff]
  %v241 = vld [vmem:[%s1 + $0x710] sm:$0xff]
  %v242 = vld [vmem:[%s1 + $0x718] sm:$0xff]
  %v243 = vld [vmem:[%s1 + $0x720] sm:$0xff]
  %v244 = vld [vmem:[%s1 + $0x728] sm:$0xff]
  %v245 = vld [vmem:[%s1 + $0x730] sm:$0xff]
  %v246 = vld [vmem:[%s1 + $0x738] sm:$0xff]
  %v247 = vld [vmem:[%s1 + $0x740] sm:$0xff]
  %v248 = vld [vmem:[%s1 + $0x748] sm:$0xff]
  %v249 = vld [vmem:[%s1 + $0x750] sm:$0xff]
  %v250 = vld [vmem:[%s1 + $0x758] sm:$0xff]
  %v251 = vld [vmem:[%s1 + $0x760] sm:$0xff]
  %v252 = vld [vmem:[%s1 + $0x768] sm:$0xff]
  %v253 = vld [vmem:[%s1 + $0x770] sm:$0xff]
  %v254 = vld [vmem:[%s1 + $0x778] sm:$0xff]
  %v255 = vld [vmem:[%s1 + $0x780] sm:$0xff]
  %v256 = vld [vmem:[%s1 + $0x788] sm:$0xff]
  %v257 = vld [vmem:[%s1 + $0x790] sm:$0xff]
  %v258 = vld [vmem:[%s1 + $0x798] sm:$0xff]
  %v259 = vld [vmem:[%s1 + $0x7a0] sm:$0xff]
  %v260 = vld [vmem:[%s1 + $0x7a8] sm:$0xff]
  %v261 = vld [vmem:[%s1 + $0x7b0] sm:$0xff]
  %v262 = vld [vmem:[%s1 + $0x7b8] sm:$0xff]
  %v263 = vld [vmem:[%s1 + $0x7c0] sm:$0xff]
  %v264 = vld [vmem:[%s1 + $0x7c8] sm:$0xff]
  %v265 = vld [vmem:[%s1 + $0x7d0] sm:$0xff]
  %v266 = vld [vmem:[%s1 + $0x7d8] sm:$0xff]
  %v267 = vld [vmem:[%s1 + $0x7e0] sm:$0xff]
  %v268 = vld [vmem:[%s1 + $0x7e8] sm:$0xff]
  %v269 = vld [vmem:[%s1 + $0x7f0] sm:$0xff]
  %v270 = vld [vmem:[%s1 + $0x7f8] sm:$0xff]
  %v271 = vld [vmem:[%s2] sm:$0xff]
  %v273 = vlaneseq
  %v274 = vshrl.u32 %v273, 7
  %v275 = vsub.s32 0, %v274
  %v276 = vrot.slane %v271, %v275
  %v277 = vlaneseq
  %v278 = vshrl.u32 %v277, 7
  %v279 = vsub.s32 1, %v278
  %v280 = vrot.slane %v271, %v279
  %v281 = vlaneseq
  %v282 = vshrl.u32 %v281, 7
  %v283 = vsub.s32 2, %v282
  %v284 = vrot.slane %v271, %v283
  %v285 = vlaneseq
  %v286 = vshrl.u32 %v285, 7
  %v287 = vsub.s32 3, %v286
  %v288 = vrot.slane %v271, %v287
  %v289 = vlaneseq
  %v290 = vshrl.u32 %v289, 7
  %v291 = vsub.s32 4, %v290
  %v292 = vrot.slane %v271, %v291
  %v293 = vlaneseq
  %v294 = vshrl.u32 %v293, 7
  %v295 = vsub.s32 5, %v294
  %v296 = vrot.slane %v271, %v295
  %v297 = vlaneseq
  %v298 = vshrl.u32 %v297, 7
  %v299 = vsub.s32 6, %v298
  %v300 = vrot.slane %v271, %v299
  %v301 = vlaneseq
  %v302 = vshrl.u32 %v301, 7
  %v303 = vsub.s32 7, %v302
  %v304 = vrot.slane %v271, %v303
  %v315 = vunpack.c.l.s4 1966171168
  %v316 = vunpack.c.0.s8 %v315
  %v317 = vlaneseq
  %v318 = vshrl.u32 %v317, 7
  %v319 = vsub.s32 %v316, %v318
  %v320 = vrot.slane %v14, %v319
  %v321 = vcombine.high %v320, %v320
  %v323 = vunpack.c.l.s4 1966171168
  %v324 = vunpack.c.0.s8 %v323
  %v325 = vlaneseq
  %v326 = vshrl.u32 %v325, 7
  %v327 = vsub.s32 %v324, %v326
  %v328 = vrot.slane %v320, %v327
  %v330 = vunpack.c.l.s4 1966171168
  %v331 = vunpack.c.0.s8 %v330
  %v332 = vlaneseq
  %v333 = vshrl.u32 %v332, 7
  %v334 = vsub.s32 %v331, %v333
  %v335 = vrot.slane %v321, %v334
  %v336 = vcombine.high %v328, %v328
  %v337 = vcombine.high %v335, %v335
  %v598 = vunpack.c.l.b16 %v15
  %v599 = vunpack.c.h.b16 %v15
  %v600 = vunpack.c.l.b16 %v16
  %v601 = vunpack.c.h.b16 %v16
  %v602 = vunpack.c.l.b16 %v17
  %v603 = vunpack.c.h.b16 %v17
  %v604 = vunpack.c.l.b16 %v18
  %v605 = vunpack.c.h.b16 %v18
  %v606 = vunpack.c.l.b16 %v19
  %v607 = vunpack.c.h.b16 %v19
  %v608 = vunpack.c.l.b16 %v20
  %v609 = vunpack.c.h.b16 %v20
  %v610 = vunpack.c.l.b16 %v21
  %v611 = vunpack.c.h.b16 %v21
  %v612 = vunpack.c.l.b16 %v22
  %v613 = vunpack.c.h.b16 %v22
  %v614 = vunpack.c.l.b16 %v23
  %v615 = vunpack.c.h.b16 %v23
  %v616 = vunpack.c.l.b16 %v24
  %v617 = vunpack.c.h.b16 %v24
  %v618 = vunpack.c.l.b16 %v25
  %v619 = vunpack.c.h.b16 %v25
  %v620 = vunpack.c.l.b16 %v26
  %v621 = vunpack.c.h.b16 %v26
  %v622 = vunpack.c.l.b16 %v27
  %v623 = vunpack.c.h.b16 %v27
  %v624 = vunpack.c.l.b16 %v28
  %v625 = vunpack.c.h.b16 %v28
  %v626 = vunpack.c.l.b16 %v29
  %v627 = vunpack.c.h.b16 %v29
  %v628 = vunpack.c.l.b16 %v30
  %v629 = vunpack.c.h.b16 %v30
  %v630 = vunpack.c.l.b16 %v31
  %v631 = vunpack.c.h.b16 %v31
  %v632 = vunpack.c.l.b16 %v32
  %v633 = vunpack.c.h.b16 %v32
  %v634 = vunpack.c.l.b16 %v33
  %v635 = vunpack.c.h.b16 %v33
  %v636 = vunpack.c.l.b16 %v34
  %v637 = vunpack.c.h.b16 %v34
  %v638 = vunpack.c.l.b16 %v35
  %v639 = vunpack.c.h.b16 %v35
  %v640 = vunpack.c.l.b16 %v36
  %v641 = vunpack.c.h.b16 %v36
  %v642 = vunpack.c.l.b16 %v37
  %v643 = vunpack.c.h.b16 %v37
  %v644 = vunpack.c.l.b16 %v38
  %v645 = vunpack.c.h.b16 %v38
  %v646 = vunpack.c.l.b16 %v39
  %v647 = vunpack.c.h.b16 %v39
  %v648 = vunpack.c.l.b16 %v40
  %v649 = vunpack.c.h.b16 %v40
  %v650 = vunpack.c.l.b16 %v41
  %v651 = vunpack.c.h.b16 %v41
  %v652 = vunpack.c.l.b16 %v42
  %v653 = vunpack.c.h.b16 %v42
  %v654 = vunpack.c.l.b16 %v43
  %v655 = vunpack.c.h.b16 %v43
  %v656 = vunpack.c.l.b16 %v44
  %v657 = vunpack.c.h.b16 %v44
  %v658 = vunpack.c.l.b16 %v45
  %v659 = vunpack.c.h.b16 %v45
  %v660 = vunpack.c.l.b16 %v46
  %v661 = vunpack.c.h.b16 %v46
  %v662 = vunpack.c.l.b16 %v47
  %v663 = vunpack.c.h.b16 %v47
  %v664 = vunpack.c.l.b16 %v48
  %v665 = vunpack.c.h.b16 %v48
  %v666 = vunpack.c.l.b16 %v49
  %v667 = vunpack.c.h.b16 %v49
  %v668 = vunpack.c.l.b16 %v50
  %v669 = vunpack.c.h.b16 %v50
  %v670 = vunpack.c.l.b16 %v51
  %v671 = vunpack.c.h.b16 %v51
  %v672 = vunpack.c.l.b16 %v52
  %v673 = vunpack.c.h.b16 %v52
  %v674 = vunpack.c.l.b16 %v53
  %v675 = vunpack.c.h.b16 %v53
  %v676 = vunpack.c.l.b16 %v54
  %v677 = vunpack.c.h.b16 %v54
  %v678 = vunpack.c.l.b16 %v55
  %v679 = vunpack.c.h.b16 %v55
  %v680 = vunpack.c.l.b16 %v56
  %v681 = vunpack.c.h.b16 %v56
  %v682 = vunpack.c.l.b16 %v57
  %v683 = vunpack.c.h.b16 %v57
  %v684 = vunpack.c.l.b16 %v58
  %v685 = vunpack.c.h.b16 %v58
  %v686 = vunpack.c.l.b16 %v59
  %v687 = vunpack.c.h.b16 %v59
  %v688 = vunpack.c.l.b16 %v60
  %v689 = vunpack.c.h.b16 %v60
  %v690 = vunpack.c.l.b16 %v61
  %v691 = vunpack.c.h.b16 %v61
  %v692 = vunpack.c.l.b16 %v62
  %v693 = vunpack.c.h.b16 %v62
  %v694 = vunpack.c.l.b16 %v63
  %v695 = vunpack.c.h.b16 %v63
  %v696 = vunpack.c.l.b16 %v64
  %v697 = vunpack.c.h.b16 %v64
  %v698 = vunpack.c.l.b16 %v65
  %v699 = vunpack.c.h.b16 %v65
  %v700 = vunpack.c.l.b16 %v66
  %v701 = vunpack.c.h.b16 %v66
  %v702 = vunpack.c.l.b16 %v67
  %v703 = vunpack.c.h.b16 %v67
  %v704 = vunpack.c.l.b16 %v68
  %v705 = vunpack.c.h.b16 %v68
  %v706 = vunpack.c.l.b16 %v69
  %v707 = vunpack.c.h.b16 %v69
  %v708 = vunpack.c.l.b16 %v70
  %v709 = vunpack.c.h.b16 %v70
  %v710 = vunpack.c.l.b16 %v71
  %v711 = vunpack.c.h.b16 %v71
  %v712 = vunpack.c.l.b16 %v72
  %v713 = vunpack.c.h.b16 %v72
  %v714 = vunpack.c.l.b16 %v73
  %v715 = vunpack.c.h.b16 %v73
  %v716 = vunpack.c.l.b16 %v74
  %v717 = vunpack.c.h.b16 %v74
  %v718 = vunpack.c.l.b16 %v75
  %v719 = vunpack.c.h.b16 %v75
  %v720 = vunpack.c.l.b16 %v76
  %v721 = vunpack.c.h.b16 %v76
  %v722 = vunpack.c.l.b16 %v77
  %v723 = vunpack.c.h.b16 %v77
  %v724 = vunpack.c.l.b16 %v78
  %v725 = vunpack.c.h.b16 %v78
  %v726 = vunpack.c.l.b16 %v79
  %v727 = vunpack.c.h.b16 %v79
  %v728 = vunpack.c.l.b16 %v80
  %v729 = vunpack.c.h.b16 %v80
  %v730 = vunpack.c.l.b16 %v81
  %v731 = vunpack.c.h.b16 %v81
  %v732 = vunpack.c.l.b16 %v82
  %v733 = vunpack.c.h.b16 %v82
  %v734 = vunpack.c.l.b16 %v83
  %v735 = vunpack.c.h.b16 %v83
  %v736 = vunpack.c.l.b16 %v84
  %v737 = vunpack.c.h.b16 %v84
  %v738 = vunpack.c.l.b16 %v85
  %v739 = vunpack.c.h.b16 %v85
  %v740 = vunpack.c.l.b16 %v86
  %v741 = vunpack.c.h.b16 %v86
  %v742 = vunpack.c.l.b16 %v87
  %v743 = vunpack.c.h.b16 %v87
  %v744 = vunpack.c.l.b16 %v88
  %v745 = vunpack.c.h.b16 %v88
  %v746 = vunpack.c.l.b16 %v89
  %v747 = vunpack.c.h.b16 %v89
  %v748 = vunpack.c.l.b16 %v90
  %v749 = vunpack.c.h.b16 %v90
  %v750 = vunpack.c.l.b16 %v91
  %v751 = vunpack.c.h.b16 %v91
  %v752 = vunpack.c.l.b16 %v92
  %v753 = vunpack.c.h.b16 %v92
  %v754 = vunpack.c.l.b16 %v93
  %v755 = vunpack.c.h.b16 %v93
  %v756 = vunpack.c.l.b16 %v94
  %v757 = vunpack.c.h.b16 %v94
  %v758 = vunpack.c.l.b16 %v95
  %v759 = vunpack.c.h.b16 %v95
  %v760 = vunpack.c.l.b16 %v96
  %v761 = vunpack.c.h.b16 %v96
  %v762 = vunpack.c.l.b16 %v97
  %v763 = vunpack.c.h.b16 %v97
  %v764 = vunpack.c.l.b16 %v98
  %v765 = vunpack.c.h.b16 %v98
  %v766 = vunpack.c.l.b16 %v99
  %v767 = vunpack.c.h.b16 %v99
  %v768 = vunpack.c.l.b16 %v100
  %v769 = vunpack.c.h.b16 %v100
  %v770 = vunpack.c.l.b16 %v101
  %v771 = vunpack.c.h.b16 %v101
  %v772 = vunpack.c.l.b16 %v102
  %v773 = vunpack.c.h.b16 %v102
  %v774 = vunpack.c.l.b16 %v103
  %v775 = vunpack.c.h.b16 %v103
  %v776 = vunpack.c.l.b16 %v104
  %v777 = vunpack.c.h.b16 %v104
  %v778 = vunpack.c.l.b16 %v105
  %v779 = vunpack.c.h.b16 %v105
  %v780 = vunpack.c.l.b16 %v106
  %v781 = vunpack.c.h.b16 %v106
  %v782 = vunpack.c.l.b16 %v107
  %v783 = vunpack.c.h.b16 %v107
  %v784 = vunpack.c.l.b16 %v108
  %v785 = vunpack.c.h.b16 %v108
  %v786 = vunpack.c.l.b16 %v109
  %v787 = vunpack.c.h.b16 %v109
  %v788 = vunpack.c.l.b16 %v110
  %v789 = vunpack.c.h.b16 %v110
  %v790 = vunpack.c.l.b16 %v111
  %v791 = vunpack.c.h.b16 %v111
  %v792 = vunpack.c.l.b16 %v112
  %v793 = vunpack.c.h.b16 %v112
  %v794 = vunpack.c.l.b16 %v113
  %v795 = vunpack.c.h.b16 %v113
  %v796 = vunpack.c.l.b16 %v114
  %v797 = vunpack.c.h.b16 %v114
  %v798 = vunpack.c.l.b16 %v115
  %v799 = vunpack.c.h.b16 %v115
  %v800 = vunpack.c.l.b16 %v116
  %v801 = vunpack.c.h.b16 %v116
  %v802 = vunpack.c.l.b16 %v117
  %v803 = vunpack.c.h.b16 %v117
  %v804 = vunpack.c.l.b16 %v118
  %v805 = vunpack.c.h.b16 %v118
  %v806 = vunpack.c.l.b16 %v119
  %v807 = vunpack.c.h.b16 %v119
  %v808 = vunpack.c.l.b16 %v120
  %v809 = vunpack.c.h.b16 %v120
  %v810 = vunpack.c.l.b16 %v121
  %v811 = vunpack.c.h.b16 %v121
  %v812 = vunpack.c.l.b16 %v122
  %v813 = vunpack.c.h.b16 %v122
  %v814 = vunpack.c.l.b16 %v123
  %v815 = vunpack.c.h.b16 %v123
  %v816 = vunpack.c.l.b16 %v124
  %v817 = vunpack.c.h.b16 %v124
  %v818 = vunpack.c.l.b16 %v125
  %v819 = vunpack.c.h.b16 %v125
  %v820 = vunpack.c.l.b16 %v126
  %v821 = vunpack.c.h.b16 %v126
  %v822 = vunpack.c.l.b16 %v127
  %v823 = vunpack.c.h.b16 %v127
  %v824 = vunpack.c.l.b16 %v128
  %v825 = vunpack.c.h.b16 %v128
  %v826 = vunpack.c.l.b16 %v129
  %v827 = vunpack.c.h.b16 %v129
  %v828 = vunpack.c.l.b16 %v130
  %v829 = vunpack.c.h.b16 %v130
  %v830 = vunpack.c.l.b16 %v131
  %v831 = vunpack.c.h.b16 %v131
  %v832 = vunpack.c.l.b16 %v132
  %v833 = vunpack.c.h.b16 %v132
  %v834 = vunpack.c.l.b16 %v133
  %v835 = vunpack.c.h.b16 %v133
  %v836 = vunpack.c.l.b16 %v134
  %v837 = vunpack.c.h.b16 %v134
  %v838 = vunpack.c.l.b16 %v135
  %v839 = vunpack.c.h.b16 %v135
  %v840 = vunpack.c.l.b16 %v136
  %v841 = vunpack.c.h.b16 %v136
  %v842 = vunpack.c.l.b16 %v137
  %v843 = vunpack.c.h.b16 %v137
  %v844 = vunpack.c.l.b16 %v138
  %v845 = vunpack.c.h.b16 %v138
  %v846 = vunpack.c.l.b16 %v139
  %v847 = vunpack.c.h.b16 %v139
  %v848 = vunpack.c.l.b16 %v140
  %v849 = vunpack.c.h.b16 %v140
  %v850 = vunpack.c.l.b16 %v141
  %v851 = vunpack.c.h.b16 %v141
  %v852 = vunpack.c.l.b16 %v142
  %v853 = vunpack.c.h.b16 %v142
  %v854 = vunpack.c.l.b16 %v143
  %v855 = vunpack.c.h.b16 %v143
  %v856 = vunpack.c.l.b16 %v144
  %v857 = vunpack.c.h.b16 %v144
  %v858 = vunpack.c.l.b16 %v145
  %v859 = vunpack.c.h.b16 %v145
  %v860 = vunpack.c.l.b16 %v146
  %v861 = vunpack.c.h.b16 %v146
  %v862 = vunpack.c.l.b16 %v147
  %v863 = vunpack.c.h.b16 %v147
  %v864 = vunpack.c.l.b16 %v148
  %v865 = vunpack.c.h.b16 %v148
  %v866 = vunpack.c.l.b16 %v149
  %v867 = vunpack.c.h.b16 %v149
  %v868 = vunpack.c.l.b16 %v150
  %v869 = vunpack.c.h.b16 %v150
  %v870 = vunpack.c.l.b16 %v151
  %v871 = vunpack.c.h.b16 %v151
  %v872 = vunpack.c.l.b16 %v152
  %v873 = vunpack.c.h.b16 %v152
  %v874 = vunpack.c.l.b16 %v153
  %v875 = vunpack.c.h.b16 %v153
  %v876 = vunpack.c.l.b16 %v154
  %v877 = vunpack.c.h.b16 %v154
  %v878 = vunpack.c.l.b16 %v155
  %v879 = vunpack.c.h.b16 %v155
  %v880 = vunpack.c.l.b16 %v156
  %v881 = vunpack.c.h.b16 %v156
  %v882 = vunpack.c.l.b16 %v157
  %v883 = vunpack.c.h.b16 %v157
  %v884 = vunpack.c.l.b16 %v158
  %v885 = vunpack.c.h.b16 %v158
  %v886 = vunpack.c.l.b16 %v159
  %v887 = vunpack.c.h.b16 %v159
  %v888 = vunpack.c.l.b16 %v160
  %v889 = vunpack.c.h.b16 %v160
  %v890 = vunpack.c.l.b16 %v161
  %v891 = vunpack.c.h.b16 %v161
  %v892 = vunpack.c.l.b16 %v162
  %v893 = vunpack.c.h.b16 %v162
  %v894 = vunpack.c.l.b16 %v163
  %v895 = vunpack.c.h.b16 %v163
  %v896 = vunpack.c.l.b16 %v164
  %v897 = vunpack.c.h.b16 %v164
  %v898 = vunpack.c.l.b16 %v165
  %v899 = vunpack.c.h.b16 %v165
  %v900 = vunpack.c.l.b16 %v166
  %v901 = vunpack.c.h.b16 %v166
  %v902 = vunpack.c.l.b16 %v167
  %v903 = vunpack.c.h.b16 %v167
  %v904 = vunpack.c.l.b16 %v168
  %v905 = vunpack.c.h.b16 %v168
  %v906 = vunpack.c.l.b16 %v169
  %v907 = vunpack.c.h.b16 %v169
  %v908 = vunpack.c.l.b16 %v170
  %v909 = vunpack.c.h.b16 %v170
  %v910 = vunpack.c.l.b16 %v171
  %v911 = vunpack.c.h.b16 %v171
  %v912 = vunpack.c.l.b16 %v172
  %v913 = vunpack.c.h.b16 %v172
  %v914 = vunpack.c.l.b16 %v173
  %v915 = vunpack.c.h.b16 %v173
  %v916 = vunpack.c.l.b16 %v174
  %v917 = vunpack.c.h.b16 %v174
  %v918 = vunpack.c.l.b16 %v175
  %v919 = vunpack.c.h.b16 %v175
  %v920 = vunpack.c.l.b16 %v176
  %v921 = vunpack.c.h.b16 %v176
  %v922 = vunpack.c.l.b16 %v177
  %v923 = vunpack.c.h.b16 %v177
  %v924 = vunpack.c.l.b16 %v178
  %v925 = vunpack.c.h.b16 %v178
  %v926 = vunpack.c.l.b16 %v179
  %v927 = vunpack.c.h.b16 %v179
  %v928 = vunpack.c.l.b16 %v180
  %v929 = vunpack.c.h.b16 %v180
  %v930 = vunpack.c.l.b16 %v181
  %v931 = vunpack.c.h.b16 %v181
  %v932 = vunpack.c.l.b16 %v182
  %v933 = vunpack.c.h.b16 %v182
  %v934 = vunpack.c.l.b16 %v183
  %v935 = vunpack.c.h.b16 %v183
  %v936 = vunpack.c.l.b16 %v184
  %v937 = vunpack.c.h.b16 %v184
  %v938 = vunpack.c.l.b16 %v185
  %v939 = vunpack.c.h.b16 %v185
  %v940 = vunpack.c.l.b16 %v186
  %v941 = vunpack.c.h.b16 %v186
  %v942 = vunpack.c.l.b16 %v187
  %v943 = vunpack.c.h.b16 %v187
  %v944 = vunpack.c.l.b16 %v188
  %v945 = vunpack.c.h.b16 %v188
  %v946 = vunpack.c.l.b16 %v189
  %v947 = vunpack.c.h.b16 %v189
  %v948 = vunpack.c.l.b16 %v190
  %v949 = vunpack.c.h.b16 %v190
  %v950 = vunpack.c.l.b16 %v191
  %v951 = vunpack.c.h.b16 %v191
  %v952 = vunpack.c.l.b16 %v192
  %v953 = vunpack.c.h.b16 %v192
  %v954 = vunpack.c.l.b16 %v193
  %v955 = vunpack.c.h.b16 %v193
  %v956 = vunpack.c.l.b16 %v194
  %v957 = vunpack.c.h.b16 %v194
  %v958 = vunpack.c.l.b16 %v195
  %v959 = vunpack.c.h.b16 %v195
  %v960 = vunpack.c.l.b16 %v196
  %v961 = vunpack.c.h.b16 %v196
  %v962 = vunpack.c.l.b16 %v197
  %v963 = vunpack.c.h.b16 %v197
  %v964 = vunpack.c.l.b16 %v198
  %v965 = vunpack.c.h.b16 %v198
  %v966 = vunpack.c.l.b16 %v199
  %v967 = vunpack.c.h.b16 %v199
  %v968 = vunpack.c.l.b16 %v200
  %v969 = vunpack.c.h.b16 %v200
  %v970 = vunpack.c.l.b16 %v201
  %v971 = vunpack.c.h.b16 %v201
  %v972 = vunpack.c.l.b16 %v202
  %v973 = vunpack.c.h.b16 %v202
  %v974 = vunpack.c.l.b16 %v203
  %v975 = vunpack.c.h.b16 %v203
  %v976 = vunpack.c.l.b16 %v204
  %v977 = vunpack.c.h.b16 %v204
  %v978 = vunpack.c.l.b16 %v205
  %v979 = vunpack.c.h.b16 %v205
  %v980 = vunpack.c.l.b16 %v206
  %v981 = vunpack.c.h.b16 %v206
  %v982 = vunpack.c.l.b16 %v207
  %v983 = vunpack.c.h.b16 %v207
  %v984 = vunpack.c.l.b16 %v208
  %v985 = vunpack.c.h.b16 %v208
  %v986 = vunpack.c.l.b16 %v209
  %v987 = vunpack.c.h.b16 %v209
  %v988 = vunpack.c.l.b16 %v210
  %v989 = vunpack.c.h.b16 %v210
  %v990 = vunpack.c.l.b16 %v211
  %v991 = vunpack.c.h.b16 %v211
  %v992 = vunpack.c.l.b16 %v212
  %v993 = vunpack.c.h.b16 %v212
  %v994 = vunpack.c.l.b16 %v213
  %v995 = vunpack.c.h.b16 %v213
  %v996 = vunpack.c.l.b16 %v214
  %v997 = vunpack.c.h.b16 %v214
  %v998 = vunpack.c.l.b16 %v215
  %v999 = vunpack.c.h.b16 %v215
  %v1000 = vunpack.c.l.b16 %v216
  %v1001 = vunpack.c.h.b16 %v216
  %v1002 = vunpack.c.l.b16 %v217
  %v1003 = vunpack.c.h.b16 %v217
  %v1004 = vunpack.c.l.b16 %v218
  %v1005 = vunpack.c.h.b16 %v218
  %v1006 = vunpack.c.l.b16 %v219
  %v1007 = vunpack.c.h.b16 %v219
  %v1008 = vunpack.c.l.b16 %v220
  %v1009 = vunpack.c.h.b16 %v220
  %v1010 = vunpack.c.l.b16 %v221
  %v1011 = vunpack.c.h.b16 %v221
  %v1012 = vunpack.c.l.b16 %v222
  %v1013 = vunpack.c.h.b16 %v222
  %v1014 = vunpack.c.l.b16 %v223
  %v1015 = vunpack.c.h.b16 %v223
  %v1016 = vunpack.c.l.b16 %v224
  %v1017 = vunpack.c.h.b16 %v224
  %v1018 = vunpack.c.l.b16 %v225
  %v1019 = vunpack.c.h.b16 %v225
  %v1020 = vunpack.c.l.b16 %v226
  %v1021 = vunpack.c.h.b16 %v226
  %v1022 = vunpack.c.l.b16 %v227
  %v1023 = vunpack.c.h.b16 %v227
  %v1024 = vunpack.c.l.b16 %v228
  %v1025 = vunpack.c.h.b16 %v228
  %v1026 = vunpack.c.l.b16 %v229
  %v1027 = vunpack.c.h.b16 %v229
  %v1028 = vunpack.c.l.b16 %v230
  %v1029 = vunpack.c.h.b16 %v230
  %v1030 = vunpack.c.l.b16 %v231
  %v1031 = vunpack.c.h.b16 %v231
  %v1032 = vunpack.c.l.b16 %v232
  %v1033 = vunpack.c.h.b16 %v232
  %v1034 = vunpack.c.l.b16 %v233
  %v1035 = vunpack.c.h.b16 %v233
  %v1036 = vunpack.c.l.b16 %v234
  %v1037 = vunpack.c.h.b16 %v234
  %v1038 = vunpack.c.l.b16 %v235
  %v1039 = vunpack.c.h.b16 %v235
  %v1040 = vunpack.c.l.b16 %v236
  %v1041 = vunpack.c.h.b16 %v236
  %v1042 = vunpack.c.l.b16 %v237
  %v1043 = vunpack.c.h.b16 %v237
  %v1044 = vunpack.c.l.b16 %v238
  %v1045 = vunpack.c.h.b16 %v238
  %v1046 = vunpack.c.l.b16 %v239
  %v1047 = vunpack.c.h.b16 %v239
  %v1048 = vunpack.c.l.b16 %v240
  %v1049 = vunpack.c.h.b16 %v240
  %v1050 = vunpack.c.l.b16 %v241
  %v1051 = vunpack.c.h.b16 %v241
  %v1052 = vunpack.c.l.b16 %v242
  %v1053 = vunpack.c.h.b16 %v242
  %v1054 = vunpack.c.l.b16 %v243
  %v1055 = vunpack.c.h.b16 %v243
  %v1056 = vunpack.c.l.b16 %v244
  %v1057 = vunpack.c.h.b16 %v244
  %v1058 = vunpack.c.l.b16 %v245
  %v1059 = vunpack.c.h.b16 %v245
  %v1060 = vunpack.c.l.b16 %v246
  %v1061 = vunpack.c.h.b16 %v246
  %v1062 = vunpack.c.l.b16 %v247
  %v1063 = vunpack.c.h.b16 %v247
  %v1064 = vunpack.c.l.b16 %v248
  %v1065 = vunpack.c.h.b16 %v248
  %v1066 = vunpack.c.l.b16 %v249
  %v1067 = vunpack.c.h.b16 %v249
  %v1068 = vunpack.c.l.b16 %v250
  %v1069 = vunpack.c.h.b16 %v250
  %v1070 = vunpack.c.l.b16 %v251
  %v1071 = vunpack.c.h.b16 %v251
  %v1072 = vunpack.c.l.b16 %v252
  %v1073 = vunpack.c.h.b16 %v252
  %v1074 = vunpack.c.l.b16 %v253
  %v1075 = vunpack.c.h.b16 %v253
  %v1076 = vunpack.c.l.b16 %v254
  %v1077 = vunpack.c.h.b16 %v254
  %v1078 = vunpack.c.l.b16 %v255
  %v1079 = vunpack.c.h.b16 %v255
  %v1080 = vunpack.c.l.b16 %v256
  %v1081 = vunpack.c.h.b16 %v256
  %v1082 = vunpack.c.l.b16 %v257
  %v1083 = vunpack.c.h.b16 %v257
  %v1084 = vunpack.c.l.b16 %v258
  %v1085 = vunpack.c.h.b16 %v258
  %v1086 = vunpack.c.l.b16 %v259
  %v1087 = vunpack.c.h.b16 %v259
  %v1088 = vunpack.c.l.b16 %v260
  %v1089 = vunpack.c.h.b16 %v260
  %v1090 = vunpack.c.l.b16 %v261
  %v1091 = vunpack.c.h.b16 %v261
  %v1092 = vunpack.c.l.b16 %v262
  %v1093 = vunpack.c.h.b16 %v262
  %v1094 = vunpack.c.l.b16 %v263
  %v1095 = vunpack.c.h.b16 %v263
  %v1096 = vunpack.c.l.b16 %v264
  %v1097 = vunpack.c.h.b16 %v264
  %v1098 = vunpack.c.l.b16 %v265
  %v1099 = vunpack.c.h.b16 %v265
  %v1100 = vunpack.c.l.b16 %v266
  %v1101 = vunpack.c.h.b16 %v266
  %v1102 = vunpack.c.l.b16 %v267
  %v1103 = vunpack.c.h.b16 %v267
  %v1104 = vunpack.c.l.b16 %v268
  %v1105 = vunpack.c.h.b16 %v268
  %v1106 = vunpack.c.l.b16 %v269
  %v1107 = vunpack.c.h.b16 %v269
  %v1108 = vunpack.c.l.b16 %v270
  %v1109 = vunpack.c.h.b16 %v270
  %v1110 = vpack.c.b16 %v606, %v598
  %v1111 = vpack.c.b16 %v607, %v599
  %v1112 = vpack.c.b16 %v608, %v600
  %v1113 = vpack.c.b16 %v609, %v601
  %v1114 = vpack.c.b16 %v610, %v602
  %v1115 = vpack.c.b16 %v611, %v603
  %v1116 = vpack.c.b16 %v612, %v604
  %v1117 = vpack.c.b16 %v613, %v605
  %v1118 = vpack.c.b16 %v622, %v614
  %v1119 = vpack.c.b16 %v623, %v615
  %v1120 = vpack.c.b16 %v624, %v616
  %v1121 = vpack.c.b16 %v625, %v617
  %v1122 = vpack.c.b16 %v626, %v618
  %v1123 = vpack.c.b16 %v627, %v619
  %v1124 = vpack.c.b16 %v628, %v620
  %v1125 = vpack.c.b16 %v629, %v621
  %v1126 = vpack.c.b16 %v638, %v630
  %v1127 = vpack.c.b16 %v639, %v631
  %v1128 = vpack.c.b16 %v640, %v632
  %v1129 = vpack.c.b16 %v641, %v633
  %v1130 = vpack.c.b16 %v642, %v634
  %v1131 = vpack.c.b16 %v643, %v635
  %v1132 = vpack.c.b16 %v644, %v636
  %v1133 = vpack.c.b16 %v645, %v637
  %v1134 = vpack.c.b16 %v654, %v646
  %v1135 = vpack.c.b16 %v655, %v647
  %v1136 = vpack.c.b16 %v656, %v648
  %v1137 = vpack.c.b16 %v657, %v649
  %v1138 = vpack.c.b16 %v658, %v650
  %v1139 = vpack.c.b16 %v659, %v651
  %v1140 = vpack.c.b16 %v660, %v652
  %v1141 = vpack.c.b16 %v661, %v653
  %v1142 = vpack.c.b16 %v670, %v662
  %v1143 = vpack.c.b16 %v671, %v663
  %v1144 = vpack.c.b16 %v672, %v664
  %v1145 = vpack.c.b16 %v673, %v665
  %v1146 = vpack.c.b16 %v674, %v666
  %v1147 = vpack.c.b16 %v675, %v667
  %v1148 = vpack.c.b16 %v676, %v668
  %v1149 = vpack.c.b16 %v677, %v669
  %v1150 = vpack.c.b16 %v686, %v678
  %v1151 = vpack.c.b16 %v687, %v679
  %v1152 = vpack.c.b16 %v688, %v680
  %v1153 = vpack.c.b16 %v689, %v681
  %v1154 = vpack.c.b16 %v690, %v682
  %v1155 = vpack.c.b16 %v691, %v683
  %v1156 = vpack.c.b16 %v692, %v684
  %v1157 = vpack.c.b16 %v693, %v685
  %v1158 = vpack.c.b16 %v702, %v694
  %v1159 = vpack.c.b16 %v703, %v695
  %v1160 = vpack.c.b16 %v704, %v696
  %v1161 = vpack.c.b16 %v705, %v697
  %v1162 = vpack.c.b16 %v706, %v698
  %v1163 = vpack.c.b16 %v707, %v699
  %v1164 = vpack.c.b16 %v708, %v700
  %v1165 = vpack.c.b16 %v709, %v701
  %v1166 = vpack.c.b16 %v718, %v710
  %v1167 = vpack.c.b16 %v719, %v711
  %v1168 = vpack.c.b16 %v720, %v712
  %v1169 = vpack.c.b16 %v721, %v713
  %v1170 = vpack.c.b16 %v722, %v714
  %v1171 = vpack.c.b16 %v723, %v715
  %v1172 = vpack.c.b16 %v724, %v716
  %v1173 = vpack.c.b16 %v725, %v717
  %v1174 = vpack.c.b16 %v734, %v726
  %v1175 = vpack.c.b16 %v735, %v727
  %v1176 = vpack.c.b16 %v736, %v728
  %v1177 = vpack.c.b16 %v737, %v729
  %v1178 = vpack.c.b16 %v738, %v730
  %v1179 = vpack.c.b16 %v739, %v731
  %v1180 = vpack.c.b16 %v740, %v732
  %v1181 = vpack.c.b16 %v741, %v733
  %v1182 = vpack.c.b16 %v750, %v742
  %v1183 = vpack.c.b16 %v751, %v743
  %v1184 = vpack.c.b16 %v752, %v744
  %v1185 = vpack.c.b16 %v753, %v745
  %v1186 = vpack.c.b16 %v754, %v746
  %v1187 = vpack.c.b16 %v755, %v747
  %v1188 = vpack.c.b16 %v756, %v748
  %v1189 = vpack.c.b16 %v757, %v749
  %v1190 = vpack.c.b16 %v766, %v758
  %v1191 = vpack.c.b16 %v767, %v759
  %v1192 = vpack.c.b16 %v768, %v760
  %v1193 = vpack.c.b16 %v769, %v761
  %v1194 = vpack.c.b16 %v770, %v762
  %v1195 = vpack.c.b16 %v771, %v763
  %v1196 = vpack.c.b16 %v772, %v764
  %v1197 = vpack.c.b16 %v773, %v765
  %v1198 = vpack.c.b16 %v782, %v774
  %v1199 = vpack.c.b16 %v783, %v775
  %v1200 = vpack.c.b16 %v784, %v776
  %v1201 = vpack.c.b16 %v785, %v777
  %v1202 = vpack.c.b16 %v786, %v778
  %v1203 = vpack.c.b16 %v787, %v779
  %v1204 = vpack.c.b16 %v788, %v780
  %v1205 = vpack.c.b16 %v789, %v781
  %v1206 = vpack.c.b16 %v798, %v790
  %v1207 = vpack.c.b16 %v799, %v791
  %v1208 = vpack.c.b16 %v800, %v792
  %v1209 = vpack.c.b16 %v801, %v793
  %v1210 = vpack.c.b16 %v802, %v794
  %v1211 = vpack.c.b16 %v803, %v795
  %v1212 = vpack.c.b16 %v804, %v796
  %v1213 = vpack.c.b16 %v805, %v797
  %v1214 = vpack.c.b16 %v814, %v806
  %v1215 = vpack.c.b16 %v815, %v807
  %v1216 = vpack.c.b16 %v816, %v808
  %v1217 = vpack.c.b16 %v817, %v809
  %v1218 = vpack.c.b16 %v818, %v810
  %v1219 = vpack.c.b16 %v819, %v811
  %v1220 = vpack.c.b16 %v820, %v812
  %v1221 = vpack.c.b16 %v821, %v813
  %v1222 = vpack.c.b16 %v830, %v822
  %v1223 = vpack.c.b16 %v831, %v823
  %v1224 = vpack.c.b16 %v832, %v824
  %v1225 = vpack.c.b16 %v833, %v825
  %v1226 = vpack.c.b16 %v834, %v826
  %v1227 = vpack.c.b16 %v835, %v827
  %v1228 = vpack.c.b16 %v836, %v828
  %v1229 = vpack.c.b16 %v837, %v829
  %v1230 = vpack.c.b16 %v846, %v838
  %v1231 = vpack.c.b16 %v847, %v839
  %v1232 = vpack.c.b16 %v848, %v840
  %v1233 = vpack.c.b16 %v849, %v841
  %v1234 = vpack.c.b16 %v850, %v842
  %v1235 = vpack.c.b16 %v851, %v843
  %v1236 = vpack.c.b16 %v852, %v844
  %v1237 = vpack.c.b16 %v853, %v845
  %v1238 = vpack.c.b16 %v862, %v854
  %v1239 = vpack.c.b16 %v863, %v855
  %v1240 = vpack.c.b16 %v864, %v856
  %v1241 = vpack.c.b16 %v865, %v857
  %v1242 = vpack.c.b16 %v866, %v858
  %v1243 = vpack.c.b16 %v867, %v859
  %v1244 = vpack.c.b16 %v868, %v860
  %v1245 = vpack.c.b16 %v869, %v861
  %v1246 = vpack.c.b16 %v878, %v870
  %v1247 = vpack.c.b16 %v879, %v871
  %v1248 = vpack.c.b16 %v880, %v872
  %v1249 = vpack.c.b16 %v881, %v873
  %v1250 = vpack.c.b16 %v882, %v874
  %v1251 = vpack.c.b16 %v883, %v875
  %v1252 = vpack.c.b16 %v884, %v876
  %v1253 = vpack.c.b16 %v885, %v877
  %v1254 = vpack.c.b16 %v894, %v886
  %v1255 = vpack.c.b16 %v895, %v887
  %v1256 = vpack.c.b16 %v896, %v888
  %v1257 = vpack.c.b16 %v897, %v889
  %v1258 = vpack.c.b16 %v898, %v890
  %v1259 = vpack.c.b16 %v899, %v891
  %v1260 = vpack.c.b16 %v900, %v892
  %v1261 = vpack.c.b16 %v901, %v893
  %v1262 = vpack.c.b16 %v910, %v902
  %v1263 = vpack.c.b16 %v911, %v903
  %v1264 = vpack.c.b16 %v912, %v904
  %v1265 = vpack.c.b16 %v913, %v905
  %v1266 = vpack.c.b16 %v914, %v906
  %v1267 = vpack.c.b16 %v915, %v907
  %v1268 = vpack.c.b16 %v916, %v908
  %v1269 = vpack.c.b16 %v917, %v909
  %v1270 = vpack.c.b16 %v926, %v918
  %v1271 = vpack.c.b16 %v927, %v919
  %v1272 = vpack.c.b16 %v928, %v920
  %v1273 = vpack.c.b16 %v929, %v921
  %v1274 = vpack.c.b16 %v930, %v922
  %v1275 = vpack.c.b16 %v931, %v923
  %v1276 = vpack.c.b16 %v932, %v924
  %v1277 = vpack.c.b16 %v933, %v925
  %v1278 = vpack.c.b16 %v942, %v934
  %v1279 = vpack.c.b16 %v943, %v935
  %v1280 = vpack.c.b16 %v944, %v936
  %v1281 = vpack.c.b16 %v945, %v937
  %v1282 = vpack.c.b16 %v946, %v938
  %v1283 = vpack.c.b16 %v947, %v939
  %v1284 = vpack.c.b16 %v948, %v940
  %v1285 = vpack.c.b16 %v949, %v941
  %v1286 = vpack.c.b16 %v958, %v950
  %v1287 = vpack.c.b16 %v959, %v951
  %v1288 = vpack.c.b16 %v960, %v952
  %v1289 = vpack.c.b16 %v961, %v953
  %v1290 = vpack.c.b16 %v962, %v954
  %v1291 = vpack.c.b16 %v963, %v955
  %v1292 = vpack.c.b16 %v964, %v956
  %v1293 = vpack.c.b16 %v965, %v957
  %v1294 = vpack.c.b16 %v974, %v966
  %v1295 = vpack.c.b16 %v975, %v967
  %v1296 = vpack.c.b16 %v976, %v968
  %v1297 = vpack.c.b16 %v977, %v969
  %v1298 = vpack.c.b16 %v978, %v970
  %v1299 = vpack.c.b16 %v979, %v971
  %v1300 = vpack.c.b16 %v980, %v972
  %v1301 = vpack.c.b16 %v981, %v973
  %v1302 = vpack.c.b16 %v990, %v982
  %v1303 = vpack.c.b16 %v991, %v983
  %v1304 = vpack.c.b16 %v992, %v984
  %v1305 = vpack.c.b16 %v993, %v985
  %v1306 = vpack.c.b16 %v994, %v986
  %v1307 = vpack.c.b16 %v995, %v987
  %v1308 = vpack.c.b16 %v996, %v988
  %v1309 = vpack.c.b16 %v997, %v989
  %v1310 = vpack.c.b16 %v1006, %v998
  %v1311 = vpack.c.b16 %v1007, %v999
  %v1312 = vpack.c.b16 %v1008, %v1000
  %v1313 = vpack.c.b16 %v1009, %v1001
  %v1314 = vpack.c.b16 %v1010, %v1002
  %v1315 = vpack.c.b16 %v1011, %v1003
  %v1316 = vpack.c.b16 %v1012, %v1004
  %v1317 = vpack.c.b16 %v1013, %v1005
  %v1318 = vpack.c.b16 %v1022, %v1014
  %v1319 = vpack.c.b16 %v1023, %v1015
  %v1320 = vpack.c.b16 %v1024, %v1016
  %v1321 = vpack.c.b16 %v1025, %v1017
  %v1322 = vpack.c.b16 %v1026, %v1018
  %v1323 = vpack.c.b16 %v1027, %v1019
  %v1324 = vpack.c.b16 %v1028, %v1020
  %v1325 = vpack.c.b16 %v1029, %v1021
  %v1326 = vpack.c.b16 %v1038, %v1030
  %v1327 = vpack.c.b16 %v1039, %v1031
  %v1328 = vpack.c.b16 %v1040, %v1032
  %v1329 = vpack.c.b16 %v1041, %v1033
  %v1330 = vpack.c.b16 %v1042, %v1034
  %v1331 = vpack.c.b16 %v1043, %v1035
  %v1332 = vpack.c.b16 %v1044, %v1036
  %v1333 = vpack.c.b16 %v1045, %v1037
  %v1334 = vpack.c.b16 %v1054, %v1046
  %v1335 = vpack.c.b16 %v1055, %v1047
  %v1336 = vpack.c.b16 %v1056, %v1048
  %v1337 = vpack.c.b16 %v1057, %v1049
  %v1338 = vpack.c.b16 %v1058, %v1050
  %v1339 = vpack.c.b16 %v1059, %v1051
  %v1340 = vpack.c.b16 %v1060, %v1052
  %v1341 = vpack.c.b16 %v1061, %v1053
  %v1342 = vpack.c.b16 %v1070, %v1062
  %v1343 = vpack.c.b16 %v1071, %v1063
  %v1344 = vpack.c.b16 %v1072, %v1064
  %v1345 = vpack.c.b16 %v1073, %v1065
  %v1346 = vpack.c.b16 %v1074, %v1066
  %v1347 = vpack.c.b16 %v1075, %v1067
  %v1348 = vpack.c.b16 %v1076, %v1068
  %v1349 = vpack.c.b16 %v1077, %v1069
  %v1350 = vpack.c.b16 %v1086, %v1078
  %v1351 = vpack.c.b16 %v1087, %v1079
  %v1352 = vpack.c.b16 %v1088, %v1080
  %v1353 = vpack.c.b16 %v1089, %v1081
  %v1354 = vpack.c.b16 %v1090, %v1082
  %v1355 = vpack.c.b16 %v1091, %v1083
  %v1356 = vpack.c.b16 %v1092, %v1084
  %v1357 = vpack.c.b16 %v1093, %v1085
  %v1358 = vpack.c.b16 %v1102, %v1094
  %v1359 = vpack.c.b16 %v1103, %v1095
  %v1360 = vpack.c.b16 %v1104, %v1096
  %v1361 = vpack.c.b16 %v1105, %v1097
  %v1362 = vpack.c.b16 %v1106, %v1098
  %v1363 = vpack.c.b16 %v1107, %v1099
  %v1364 = vpack.c.b16 %v1108, %v1100
  %v1365 = vpack.c.b16 %v1109, %v1101
  %1622 = vmatprep.subr.bf16.mxu0 %v1111
  %1623 = vmatpush1.bf16.msra.mxu0 %v1110
  %1624 = vmatprep.subr.bf16.mxu0 %v1119
  %1625 = vmatpush1.bf16.msra.mxu0 %v1118
  %1626 = vmatprep.subr.bf16.mxu0 %v1127
  %1627 = vmatpush1.bf16.msra.mxu0 %v1126
  %1628 = vmatprep.subr.bf16.mxu0 %v1135
  %1629 = vmatpush1.bf16.msra.mxu0 %v1134
  %1630 = vmatprep.subr.bf16.mxu0 %v1143
  %1631 = vmatpush1.bf16.msra.mxu0 %v1142
  %1632 = vmatprep.subr.bf16.mxu0 %v1151
  %1633 = vmatpush1.bf16.msra.mxu0 %v1150
  %1634 = vmatprep.subr.bf16.mxu0 %v1159
  %1635 = vmatpush1.bf16.msra.mxu0 %v1158
  %1636 = vmatprep.subr.bf16.mxu0 %v1167
  %1637 = vmatpush1.bf16.msra.mxu0 %v1166
  %1638 = vmatprep.subr.bf16.mxu0 %v1175
  %1639 = vmatpush1.bf16.msra.mxu0 %v1174
  %1640 = vmatprep.subr.bf16.mxu0 %v1183
  %1641 = vmatpush1.bf16.msra.mxu0 %v1182
  %1642 = vmatprep.subr.bf16.mxu0 %v1191
  %1643 = vmatpush1.bf16.msra.mxu0 %v1190
  %1644 = vmatprep.subr.bf16.mxu0 %v1199
  %1645 = vmatpush1.bf16.msra.mxu0 %v1198
  %1646 = vmatprep.subr.bf16.mxu0 %v1207
  %1647 = vmatpush1.bf16.msra.mxu0 %v1206
  %1648 = vmatprep.subr.bf16.mxu0 %v1215
  %1649 = vmatpush1.bf16.msra.mxu0 %v1214
  %1650 = vmatprep.subr.bf16.mxu0 %v1223
  %1651 = vmatpush1.bf16.msra.mxu0 %v1222
  %1652 = vmatprep.subr.bf16.mxu0 %v1231
  %1653 = vmatpush1.bf16.msra.mxu0 %v1230
  %1654 = vmatprep.mubr.bf16.mxu0 %v335
  %1655 = vmatmul.mubr.bf16.gmra.mrb[0].mxu0 %v328
  %v1656 = vpop.f32.mrb[0].mxu0
  %v1657 = vadd.f32 %v276, %v1656
  %v1658 = vpop.f32.mrb[0].mxu0
  %v1659 = vadd.f32 %v280, %v1658
  %v1660 = vpop.f32.mrb[0].mxu0
  %v1661 = vpop.f32.mrb[0].mxu0
  %1662 = vdwg.mxu0
  %1663 = vmatprep.subr.bf16.mxu0 %v1239
  %1664 = vmatpush1.bf16.msra.mxu0 %v1238
  %1665 = vmatprep.subr.bf16.mxu0 %v1247
  %1666 = vmatpush1.bf16.msra.mxu0 %v1246
  %1667 = vmatprep.subr.bf16.mxu0 %v1255
  %1668 = vmatpush1.bf16.msra.mxu0 %v1254
  %1669 = vmatprep.subr.bf16.mxu0 %v1263
  %1670 = vmatpush1.bf16.msra.mxu0 %v1262
  %1671 = vmatprep.subr.bf16.mxu0 %v1271
  %1672 = vmatpush1.bf16.msra.mxu0 %v1270
  %1673 = vmatprep.subr.bf16.mxu0 %v1279
  %1674 = vmatpush1.bf16.msra.mxu0 %v1278
  %1675 = vmatprep.subr.bf16.mxu0 %v1287
  %1676 = vmatpush1.bf16.msra.mxu0 %v1286
  %1677 = vmatprep.subr.bf16.mxu0 %v1295
  %1678 = vmatpush1.bf16.msra.mxu0 %v1294
  %1679 = vmatprep.subr.bf16.mxu0 %v1303
  %1680 = vmatpush1.bf16.msra.mxu0 %v1302
  %1681 = vmatprep.subr.bf16.mxu0 %v1311
  %1682 = vmatpush1.bf16.msra.mxu0 %v1310
  %1683 = vmatprep.subr.bf16.mxu0 %v1319
  %1684 = vmatpush1.bf16.msra.mxu0 %v1318
  %1685 = vmatprep.subr.bf16.mxu0 %v1327
  %1686 = vmatpush1.bf16.msra.mxu0 %v1326
  %1687 = vmatprep.subr.bf16.mxu0 %v1335
  %1688 = vmatpush1.bf16.msra.mxu0 %v1334
  %1689 = vmatprep.subr.bf16.mxu0 %v1343
  %1690 = vmatpush1.bf16.msra.mxu0 %v1342
  %1691 = vmatprep.subr.bf16.mxu0 %v1351
  %1692 = vmatpush1.bf16.msra.mxu0 %v1350
  %1693 = vmatprep.subr.bf16.mxu0 %v1359
  %1694 = vmatpush1.bf16.msra.mxu0 %v1358
  %1695 = vmatprep.mubr.bf16.mxu0 %v337
  %1696 = vmatmul.mubr.bf16.gmra.mrb[0].mxu0 %v336
  %v1697 = vpop.f32.mrb[0].mxu0
  %v1698 = vadd.f32 %v1657, %v1697
  %v1699 = vpop.f32.mrb[0].mxu0
  %v1700 = vadd.f32 %v1659, %v1699
  %v1701 = vpop.f32.mrb[0].mxu0
  %v1702 = vpop.f32.mrb[0].mxu0
  %1703 = vdwg.mxu0
  %1704 = vmatprep.subr.bf16.mxu0 %v1113
  %1705 = vmatpush1.bf16.msra.mxu0 %v1112
  %1706 = vmatprep.subr.bf16.mxu0 %v1121
  %1707 = vmatpush1.bf16.msra.mxu0 %v1120
  %1708 = vmatprep.subr.bf16.mxu0 %v1129
  %1709 = vmatpush1.bf16.msra.mxu0 %v1128
  %1710 = vmatprep.subr.bf16.mxu0 %v1137
  %1711 = vmatpush1.bf16.msra.mxu0 %v1136
  %1712 = vmatprep.subr.bf16.mxu0 %v1145
  %1713 = vmatpush1.bf16.msra.mxu0 %v1144
  %1714 = vmatprep.subr.bf16.mxu0 %v1153
  %1715 = vmatpush1.bf16.msra.mxu0 %v1152
  %1716 = vmatprep.subr.bf16.mxu0 %v1161
  %1717 = vmatpush1.bf16.msra.mxu0 %v1160
  %1718 = vmatprep.subr.bf16.mxu0 %v1169
  %1719 = vmatpush1.bf16.msra.mxu0 %v1168
  %1720 = vmatprep.subr.bf16.mxu0 %v1177
  %1721 = vmatpush1.bf16.msra.mxu0 %v1176
  %1722 = vmatprep.subr.bf16.mxu0 %v1185
  %1723 = vmatpush1.bf16.msra.mxu0 %v1184
  %1724 = vmatprep.subr.bf16.mxu0 %v1193
  %1725 = vmatpush1.bf16.msra.mxu0 %v1192
  %1726 = vmatprep.subr.bf16.mxu0 %v1201
  %1727 = vmatpush1.bf16.msra.mxu0 %v1200
  %1728 = vmatprep.subr.bf16.mxu0 %v1209
  %1729 = vmatpush1.bf16.msra.mxu0 %v1208
  %1730 = vmatprep.subr.bf16.mxu0 %v1217
  %1731 = vmatpush1.bf16.msra.mxu0 %v1216
  %1732 = vmatprep.subr.bf16.mxu0 %v1225
  %1733 = vmatpush1.bf16.msra.mxu0 %v1224
  %1734 = vmatprep.subr.bf16.mxu0 %v1233
  %1735 = vmatpush1.bf16.msra.mxu0 %v1232
  %1736 = vmatprep.mubr.bf16.mxu0 %v335
  %1737 = vmatmul.mubr.bf16.gmra.mrb[0].mxu0 %v328
  %v1738 = vpop.f32.mrb[0].mxu0
  %v1739 = vadd.f32 %v284, %v1738
  %v1740 = vpop.f32.mrb[0].mxu0
  %v1741 = vadd.f32 %v288, %v1740
  %v1742 = vpop.f32.mrb[0].mxu0
  %v1743 = vpop.f32.mrb[0].mxu0
  %1744 = vdwg.mxu0
  %1745 = vmatprep.subr.bf16.mxu0 %v1241
  %1746 = vmatpush1.bf16.msra.mxu0 %v1240
  %1747 = vmatprep.subr.bf16.mxu0 %v1249
  %1748 = vmatpush1.bf16.msra.mxu0 %v1248
  %1749 = vmatprep.subr.bf16.mxu0 %v1257
  %1750 = vmatpush1.bf16.msra.mxu0 %v1256
  %1751 = vmatprep.subr.bf16.mxu0 %v1265
  %1752 = vmatpush1.bf16.msra.mxu0 %v1264
  %1753 = vmatprep.subr.bf16.mxu0 %v1273
  %1754 = vmatpush1.bf16.msra.mxu0 %v1272
  %1755 = vmatprep.subr.bf16.mxu0 %v1281
  %1756 = vmatpush1.bf16.msra.mxu0 %v1280
  %1757 = vmatprep.subr.bf16.mxu0 %v1289
  %1758 = vmatpush1.bf16.msra.mxu0 %v1288
  %1759 = vmatprep.subr.bf16.mxu0 %v1297
  %1760 = vmatpush1.bf16.msra.mxu0 %v1296
  %1761 = vmatprep.subr.bf16.mxu0 %v1305
  %1762 = vmatpush1.bf16.msra.mxu0 %v1304
  %1763 = vmatprep.subr.bf16.mxu0 %v1313
  %1764 = vmatpush1.bf16.msra.mxu0 %v1312
  %1765 = vmatprep.subr.bf16.mxu0 %v1321
  %1766 = vmatpush1.bf16.msra.mxu0 %v1320
  %1767 = vmatprep.subr.bf16.mxu0 %v1329
  %1768 = vmatpush1.bf16.msra.mxu0 %v1328
  %1769 = vmatprep.subr.bf16.mxu0 %v1337
  %1770 = vmatpush1.bf16.msra.mxu0 %v1336
  %1771 = vmatprep.subr.bf16.mxu0 %v1345
  %1772 = vmatpush1.bf16.msra.mxu0 %v1344
  %1773 = vmatprep.subr.bf16.mxu0 %v1353
  %1774 = vmatpush1.bf16.msra.mxu0 %v1352
  %1775 = vmatprep.subr.bf16.mxu0 %v1361
  %1776 = vmatpush1.bf16.msra.mxu0 %v1360
  %1777 = vmatprep.mubr.bf16.mxu0 %v337
  %1778 = vmatmul.mubr.bf16.gmra.mrb[0].mxu0 %v336
  %v1779 = vpop.f32.mrb[0].mxu0
  %v1780 = vadd.f32 %v1739, %v1779
  %v1781 = vpop.f32.mrb[0].mxu0
  %v1782 = vadd.f32 %v1741, %v1781
  %v1783 = vpop.f32.mrb[0].mxu0
  %v1784 = vpop.f32.mrb[0].mxu0
  %1785 = vdwg.mxu0
  %1786 = vmatprep.subr.bf16.mxu0 %v1115
  %1787 = vmatpush1.bf16.msra.mxu0 %v1114
  %1788 = vmatprep.subr.bf16.mxu0 %v1123
  %1789 = vmatpush1.bf16.msra.mxu0 %v1122
  %1790 = vmatprep.subr.bf16.mxu0 %v1131
  %1791 = vmatpush1.bf16.msra.mxu0 %v1130
  %1792 = vmatprep.subr.bf16.mxu0 %v1139
  %1793 = vmatpush1.bf16.msra.mxu0 %v1138
  %1794 = vmatprep.subr.bf16.mxu0 %v1147
  %1795 = vmatpush1.bf16.msra.mxu0 %v1146
  %1796 = vmatprep.subr.bf16.mxu0 %v1155
  %1797 = vmatpush1.bf16.msra.mxu0 %v1154
  %1798 = vmatprep.subr.bf16.mxu0 %v1163
  %1799 = vmatpush1.bf16.msra.mxu0 %v1162
  %1800 = vmatprep.subr.bf16.mxu0 %v1171
  %1801 = vmatpush1.bf16.msra.mxu0 %v1170
  %1802 = vmatprep.subr.bf16.mxu0 %v1179
  %1803 = vmatpush1.bf16.msra.mxu0 %v1178
  %1804 = vmatprep.subr.bf16.mxu0 %v1187
  %1805 = vmatpush1.bf16.msra.mxu0 %v1186
  %1806 = vmatprep.subr.bf16.mxu0 %v1195
  %1807 = vmatpush1.bf16.msra.mxu0 %v1194
  %1808 = vmatprep.subr.bf16.mxu0 %v1203
  %1809 = vmatpush1.bf16.msra.mxu0 %v1202
  %1810 = vmatprep.subr.bf16.mxu0 %v1211
  %1811 = vmatpush1.bf16.msra.mxu0 %v1210
  %1812 = vmatprep.subr.bf16.mxu0 %v1219
  %1813 = vmatpush1.bf16.msra.mxu0 %v1218
  %1814 = vmatprep.subr.bf16.mxu0 %v1227
  %1815 = vmatpush1.bf16.msra.mxu0 %v1226
  %1816 = vmatprep.subr.bf16.mxu0 %v1235
  %1817 = vmatpush1.bf16.msra.mxu0 %v1234
  %1818 = vmatprep.mubr.bf16.mxu0 %v335
  %1819 = vmatmul.mubr.bf16.gmra.mrb[0].mxu0 %v328
  %v1820 = vpop.f32.mrb[0].mxu0
  %v1821 = vadd.f32 %v292, %v1820
  %v1822 = vpop.f32.mrb[0].mxu0
  %v1823 = vadd.f32 %v296, %v1822
  %v1824 = vpop.f32.mrb[0].mxu0
  %v1825 = vpop.f32.mrb[0].mxu0
  %1826 = vdwg.mxu0
  %1827 = vmatprep.subr.bf16.mxu0 %v1243
  %1828 = vmatpush1.bf16.msra.mxu0 %v1242
  %1829 = vmatprep.subr.bf16.mxu0 %v1251
  %1830 = vmatpush1.bf16.msra.mxu0 %v1250
  %1831 = vmatprep.subr.bf16.mxu0 %v1259
  %1832 = vmatpush1.bf16.msra.mxu0 %v1258
  %1833 = vmatprep.subr.bf16.mxu0 %v1267
  %1834 = vmatpush1.bf16.msra.mxu0 %v1266
  %1835 = vmatprep.subr.bf16.mxu0 %v1275
  %1836 = vmatpush1.bf16.msra.mxu0 %v1274
  %1837 = vmatprep.subr.bf16.mxu0 %v1283
  %1838 = vmatpush1.bf16.msra.mxu0 %v1282
  %1839 = vmatprep.subr.bf16.mxu0 %v1291
  %1840 = vmatpush1.bf16.msra.mxu0 %v1290
  %1841 = vmatprep.subr.bf16.mxu0 %v1299
  %1842 = vmatpush1.bf16.msra.mxu0 %v1298
  %1843 = vmatprep.subr.bf16.mxu0 %v1307
  %1844 = vmatpush1.bf16.msra.mxu0 %v1306
  %1845 = vmatprep.subr.bf16.mxu0 %v1315
  %1846 = vmatpush1.bf16.msra.mxu0 %v1314
  %1847 = vmatprep.subr.bf16.mxu0 %v1323
  %1848 = vmatpush1.bf16.msra.mxu0 %v1322
  %1849 = vmatprep.subr.bf16.mxu0 %v1331
  %1850 = vmatpush1.bf16.msra.mxu0 %v1330
  %1851 = vmatprep.subr.bf16.mxu0 %v1339
  %1852 = vmatpush1.bf16.msra.mxu0 %v1338
  %1853 = vmatprep.subr.bf16.mxu0 %v1347
  %1854 = vmatpush1.bf16.msra.mxu0 %v1346
  %1855 = vmatprep.subr.bf16.mxu0 %v1355
  %1856 = vmatpush1.bf16.msra.mxu0 %v1354
  %1857 = vmatprep.subr.bf16.mxu0 %v1363
  %1858 = vmatpush1.bf16.msra.mxu0 %v1362
  %1859 = vmatprep.mubr.bf16.mxu0 %v337
  %1860 = vmatmul.mubr.bf16.gmra.mrb[0].mxu0 %v336
  %v1861 = vpop.f32.mrb[0].mxu0
  %v1862 = vadd.f32 %v1821, %v1861
  %v1863 = vpop.f32.mrb[0].mxu0
  %v1864 = vadd.f32 %v1823, %v1863
  %v1865 = vpop.f32.mrb[0].mxu0
  %v1866 = vpop.f32.mrb[0].mxu0
  %1867 = vdwg.mxu0
  %1868 = vmatprep.subr.bf16.mxu0 %v1117
  %1869 = vmatpush1.bf16.msra.mxu0 %v1116
  %1870 = vmatprep.subr.bf16.mxu0 %v1125
  %1871 = vmatpush1.bf16.msra.mxu0 %v1124
  %1872 = vmatprep.subr.bf16.mxu0 %v1133
  %1873 = vmatpush1.bf16.msra.mxu0 %v1132
  %1874 = vmatprep.subr.bf16.mxu0 %v1141
  %1875 = vmatpush1.bf16.msra.mxu0 %v1140
  %1876 = vmatprep.subr.bf16.mxu0 %v1149
  %1877 = vmatpush1.bf16.msra.mxu0 %v1148
  %1878 = vmatprep.subr.bf16.mxu0 %v1157
  %1879 = vmatpush1.bf16.msra.mxu0 %v1156
  %1880 = vmatprep.subr.bf16.mxu0 %v1165
  %1881 = vmatpush1.bf16.msra.mxu0 %v1164
  %1882 = vmatprep.subr.bf16.mxu0 %v1173
  %1883 = vmatpush1.bf16.msra.mxu0 %v1172
  %1884 = vmatprep.subr.bf16.mxu0 %v1181
  %1885 = vmatpush1.bf16.msra.mxu0 %v1180
  %1886 = vmatprep.subr.bf16.mxu0 %v1189
  %1887 = vmatpush1.bf16.msra.mxu0 %v1188
  %1888 = vmatprep.subr.bf16.mxu0 %v1197
  %1889 = vmatpush1.bf16.msra.mxu0 %v1196
  %1890 = vmatprep.subr.bf16.mxu0 %v1205
  %1891 = vmatpush1.bf16.msra.mxu0 %v1204
  %1892 = vmatprep.subr.bf16.mxu0 %v1213
  %1893 = vmatpush1.bf16.msra.mxu0 %v1212
  %1894 = vmatprep.subr.bf16.mxu0 %v1221
  %1895 = vmatpush1.bf16.msra.mxu0 %v1220
  %1896 = vmatprep.subr.bf16.mxu0 %v1229
  %1897 = vmatpush1.bf16.msra.mxu0 %v1228
  %1898 = vmatprep.subr.bf16.mxu0 %v1237
  %1899 = vmatpush1.bf16.msra.mxu0 %v1236
  %1900 = vmatprep.mubr.bf16.mxu0 %v335
  %1901 = vmatmul.mubr.bf16.gmra.mrb[0].mxu0 %v328
  %v1902 = vpop.f32.mrb[0].mxu0
  %v1903 = vadd.f32 %v300, %v1902
  %v1904 = vpop.f32.mrb[0].mxu0
  %v1905 = vadd.f32 %v304, %v1904
  %v1906 = vpop.f32.mrb[0].mxu0
  %v1907 = vpop.f32.mrb[0].mxu0
  %1908 = vdwg.mxu0
  %1909 = vmatprep.subr.bf16.mxu0 %v1245
  %1910 = vmatpush1.bf16.msra.mxu0 %v1244
  %1911 = vmatprep.subr.bf16.mxu0 %v1253
  %1912 = vmatpush1.bf16.msra.mxu0 %v1252
  %1913 = vmatprep.subr.bf16.mxu0 %v1261
  %1914 = vmatpush1.bf16.msra.mxu0 %v1260
  %1915 = vmatprep.subr.bf16.mxu0 %v1269
  %1916 = vmatpush1.bf16.msra.mxu0 %v1268
  %1917 = vmatprep.subr.bf16.mxu0 %v1277
  %1918 = vmatpush1.bf16.msra.mxu0 %v1276
  %1919 = vmatprep.subr.bf16.mxu0 %v1285
  %1920 = vmatpush1.bf16.msra.mxu0 %v1284
  %1921 = vmatprep.subr.bf16.mxu0 %v1293
  %1922 = vmatpush1.bf16.msra.mxu0 %v1292
  %1923 = vmatprep.subr.bf16.mxu0 %v1301
  %1924 = vmatpush1.bf16.msra.mxu0 %v1300
  %1925 = vmatprep.subr.bf16.mxu0 %v1309
  %1926 = vmatpush1.bf16.msra.mxu0 %v1308
  %1927 = vmatprep.subr.bf16.mxu0 %v1317
  %1928 = vmatpush1.bf16.msra.mxu0 %v1316
  %1929 = vmatprep.subr.bf16.mxu0 %v1325
  %1930 = vmatpush1.bf16.msra.mxu0 %v1324
  %1931 = vmatprep.subr.bf16.mxu0 %v1333
  %1932 = vmatpush1.bf16.msra.mxu0 %v1332
  %1933 = vmatprep.subr.bf16.mxu0 %v1341
  %1934 = vmatpush1.bf16.msra.mxu0 %v1340
  %1935 = vmatprep.subr.bf16.mxu0 %v1349
  %1936 = vmatpush1.bf16.msra.mxu0 %v1348
  %1937 = vmatprep.subr.bf16.mxu0 %v1357
  %1938 = vmatpush1.bf16.msra.mxu0 %v1356
  %1939 = vmatprep.subr.bf16.mxu0 %v1365
  %1940 = vmatpush1.bf16.msra.mxu0 %v1364
  %1941 = vmatprep.mubr.bf16.mxu0 %v337
  %1942 = vmatmul.mubr.bf16.gmra.mrb[0].mxu0 %v336
  %v1943 = vpop.f32.mrb[0].mxu0
  %v1944 = vadd.f32 %v1903, %v1943
  %v1945 = vpop.f32.mrb[0].mxu0
  %v1946 = vadd.f32 %v1905, %v1945
  %v1947 = vpop.f32.mrb[0].mxu0
  %v1948 = vpop.f32.mrb[0].mxu0
  %1949 = vdwg.mxu0
  %v1958 = vcombine.low %v1698, %v1700
  %v1959 = vcombine.low %v1780, %v1782
  %v1961 = vunpack.c.l.s4 1983009808
  %v1962 = vunpack.c.0.s8 %v1961
  %v1963 = vlaneseq
  %v1964 = vshrl.u32 %v1963, 7
  %v1965 = vsub.s32 %v1962, %v1964
  %v1966 = vrot.slane %v1958, %v1965
  %v1968 = vunpack.c.l.s4 1983009808
  %v1969 = vunpack.c.0.s8 %v1968
  %v1970 = vlaneseq
  %v1971 = vshrl.u32 %v1970, 7
  %v1972 = vsub.s32 %v1969, %v1971
  %v1973 = vrot.slane %v1959, %v1972
  %v1974 = vcombine.low %v1966, %v1973
  %v1975 = vcombine.low %v1862, %v1864
  %v1976 = vcombine.low %v1944, %v1946
  %v1978 = vunpack.c.l.s4 1983009808
  %v1979 = vunpack.c.0.s8 %v1978
  %v1980 = vlaneseq
  %v1981 = vshrl.u32 %v1980, 7
  %v1982 = vsub.s32 %v1979, %v1981
  %v1983 = vrot.slane %v1975, %v1982
  %v1985 = vunpack.c.l.s4 1983009808
  %v1986 = vunpack.c.0.s8 %v1985
  %v1987 = vlaneseq
  %v1988 = vshrl.u32 %v1987, 7
  %v1989 = vsub.s32 %v1986, %v1988
  %v1990 = vrot.slane %v1976, %v1989
  %v1991 = vcombine.low %v1983, %v1990
  %1994 = vst [vmem:[%s3] sm:$0xff] %v1974
  %1995 = vst [vmem:[%s3 + $0x8] sm:$0xff] %v1991
  // Predicated region
  $region14: #{detection2d_forward.14} parent=0 // pred_check
    _
  $region15: #{detection2d_forward.14} parent=0 // pred_check_branch
    %1997 = sbr.rel (0) target = $region17
  $region16: #{detection2d_forward.14} parent=0 // pred_region
    _
  $region17: #{detection2d_forward.14} parent=0 // pred_fallthru
    _
  // Predicated region
  $region18: #{detection2d_forward.14} parent=0 // pred_check
    _
  $region19: #{detection2d_forward.14} parent=0 // pred_check_branch
    %1999 = sbr.rel (0) target = $region21
  $region20: #{detection2d_forward.14} parent=0 // pred_region
    _
  $region21: #{detection2d_forward.14} parent=0 // pred_fallthru
    _

// kernel: detection2d_forward.16
$region0: #{detection2d_forward.16}
  #allocation0 [shape = 'u32[]', space=smem, size = 0x4, offset = 0x4, fixed_abs, tag = 'smem constant byte address 0x4 - core index']
  #allocation1 [shape = 'u32[144,128]{1,0:T(1,128)}', space=vmem, size = 0x12000, scoped, tag = 'internal scratch']
  %s0 = inlined_call_operand.vmem [shape: bf16[32,128], index: 0, kind: input, shape index: {}]
  %s1 = inlined_call_operand.vmem [shape: bf16[128,1024], index: 1, kind: input, shape index: {}]
  %s2 = inlined_call_operand.vmem [shape: f32[1,1024], index: 2, kind: input, shape index: {}]
  %s3 = inlined_call_operand.vmem [shape: f32[32,1024], index: 3, kind: input, shape index: {}]
  %s4 = inlined_call_operand.vmem [shape: f32[32,1024], index: 4, kind: output, shape index: {}]
  %s5 = sld [smem:[#allocation0]]
  $region26: #{detection2d_forward.16} parent=0
    _
  %s7 = ssub.s32 1, %s5
  %s8 = scalar_select 0, %s7, %s5
  // Predicated region
  $region2: #{detection2d_forward.16} parent=0 // pred_check
    _
  $region3: #{detection2d_forward.16} parent=0 // pred_check_branch
    %10 = sbr.rel (0) target = $region5
  $region4: #{detection2d_forward.16} parent=0 // pred_region
    _
  $region5: #{detection2d_forward.16} parent=0 // pred_fallthru
    _
  // Predicated region
  $region6: #{detection2d_forward.16} parent=0 // pred_check
    _
  $region7: #{detection2d_forward.16} parent=0 // pred_check_branch
    %12 = sbr.rel (0) target = $region9
  $region8: #{detection2d_forward.16} parent=0 // pred_region
    _
  $region9: #{detection2d_forward.16} parent=0 // pred_fallthru
    _
  // Predicated region
  $region10: #{detection2d_forward.16} parent=0 // pred_check
    _
  $region11: #{detection2d_forward.16} parent=0 // pred_check_branch
    %14 = sbr.rel (0) target = $region13
  $region12: #{detection2d_forward.16} parent=0 // pred_region
    _
  $region13: #{detection2d_forward.16} parent=0 // pred_fallthru
    _
  // Predicated region
  $region14: #{detection2d_forward.16} parent=0 // pred_check
    _
  $region15: #{detection2d_forward.16} parent=0 // pred_check_branch
    %16 = sbr.rel (0) target = $region17
  $region16: #{detection2d_forward.16} parent=0 // pred_region
    _
  $region17: #{detection2d_forward.16} parent=0 // pred_fallthru
    _
  %v18 = vld [vmem:[%s0] sm:$0xf]
  %v19 = vld [vmem:[%s0 + $0x4] sm:$0xf]
  %v20 = vld [vmem:[%s0 + $0x8] sm:$0xf]
  %v21 = vld [vmem:[%s0 + $0xc] sm:$0xf]
  %v22 = vld [vmem:[%s1] sm:$0xff]
  %v23 = vld [vmem:[%s1 + $0x8] sm:$0xff]
  %v24 = vld [vmem:[%s1 + $0x10] sm:$0xff]
  %v25 = vld [vmem:[%s1 + $0x18] sm:$0xff]
  %v26 = vld [vmem:[%s1 + $0x20] sm:$0xff]
  %v27 = vld [vmem:[%s1 + $0x28] sm:$0xff]
  %v28 = vld [vmem:[%s1 + $0x30] sm:$0xff]
  %v29 = vld [vmem:[%s1 + $0x38] sm:$0xff]
  %v30 = vld [vmem:[%s1 + $0x40] sm:$0xff]
  %v31 = vld [vmem:[%s1 + $0x48] sm:$0xff]
  %v32 = vld [vmem:[%s1 + $0x50] sm:$0xff]
  %v33 = vld [vmem:[%s1 + $0x58] sm:$0xff]
  %v34 = vld [vmem:[%s1 + $0x60] sm:$0xff]
  %v35 = vld [vmem:[%s1 + $0x68] sm:$0xff]
  %v36 = vld [vmem:[%s1 + $0x70] sm:$0xff]
  %v37 = vld [vmem:[%s1 + $0x78] sm:$0xff]
  %v38 = vld [vmem:[%s1 + $0x80] sm:$0xff]
  %v39 = vld [vmem:[%s1 + $0x88] sm:$0xff]
  %v40 = vld [vmem:[%s1 + $0x90] sm:$0xff]
  %v41 = vld [vmem:[%s1 + $0x98] sm:$0xff]
  %v42 = vld [vmem:[%s1 + $0xa0] sm:$0xff]
  %v43 = vld [vmem:[%s1 + $0xa8] sm:$0xff]
  %v44 = vld [vmem:[%s1 + $0xb0] sm:$0xff]
  %v45 = vld [vmem:[%s1 + $0xb8] sm:$0xff]
  %v46 = vld [vmem:[%s1 + $0xc0] sm:$0xff]
  %v47 = vld [vmem:[%s1 + $0xc8] sm:$0xff]
  %v48 = vld [vmem:[%s1 + $0xd0] sm:$0xff]
  %v49 = vld [vmem:[%s1 + $0xd8] sm:$0xff]
  %v50 = vld [vmem:[%s1 + $0xe0] sm:$0xff]
  %v51 = vld [vmem:[%s1 + $0xe8] sm:$0xff]
  %v52 = vld [vmem:[%s1 + $0xf0] sm:$0xff]
  %v53 = vld [vmem:[%s1 + $0xf8] sm:$0xff]
  %v54 = vld [vmem:[%s1 + $0x100] sm:$0xff]
  %v55 = vld [vmem:[%s1 + $0x108] sm:$0xff]
  %v56 = vld [vmem:[%s1 + $0x110] sm:$0xff]
  %v57 = vld [vmem:[%s1 + $0x118] sm:$0xff]
  %v58 = vld [vmem:[%s1 + $0x120] sm:$0xff]
  %v59 = vld [vmem:[%s1 + $0x128] sm:$0xff]
  %v60 = vld [vmem:[%s1 + $0x130] sm:$0xff]
  %v61 = vld [vmem:[%s1 + $0x138] sm:$0xff]
  %v62 = vld [vmem:[%s1 + $0x140] sm:$0xff]
  %v63 = vld [vmem:[%s1 + $0x148] sm:$0xff]
  %v64 = vld [vmem:[%s1 + $0x150] sm:$0xff]
  %v65 = vld [vmem:[%s1 + $0x158] sm:$0xff]
  %v66 = vld [vmem:[%s1 + $0x160] sm:$0xff]
  %v67 = vld [vmem:[%s1 + $0x168] sm:$0xff]
  %v68 = vld [vmem:[%s1 + $0x170] sm:$0xff]
  %v69 = vld [vmem:[%s1 + $0x178] sm:$0xff]
  %v70 = vld [vmem:[%s1 + $0x180] sm:$0xff]
  %v71 = vld [vmem:[%s1 + $0x188] sm:$0xff]
  %v72 = vld [vmem:[%s1 + $0x190] sm:$0xff]
  %v73 = vld [vmem:[%s1 + $0x198] sm:$0xff]
  %v74 = vld [vmem:[%s1 + $0x1a0] sm:$0xff]
  %v75 = vld [vmem:[%s1 + $0x1a8] sm:$0xff]
  %v76 = vld [vmem:[%s1 + $0x1b0] sm:$0xff]
  %v77 = vld [vmem:[%s1 + $0x1b8] sm:$0xff]
  %v78 = vld [vmem:[%s1 + $0x1c0] sm:$0xff]
  %v79 = vld [vmem:[%s1 + $0x1c8] sm:$0xff]
  %v80 = vld [vmem:[%s1 + $0x1d0] sm:$0xff]
  %v81 = vld [vmem:[%s1 + $0x1d8] sm:$0xff]
  %v82 = vld [vmem:[%s1 + $0x1e0] sm:$0xff]
  %v83 = vld [vmem:[%s1 + $0x1e8] sm:$0xff]
  %v84 = vld [vmem:[%s1 + $0x1f0] sm:$0xff]
  %v85 = vld [vmem:[%s1 + $0x1f8] sm:$0xff]
  %v86 = vld [vmem:[%s2] sm:$0xff]
  %v88 = vlaneseq
  %v89 = vshrl.u32 %v88, 7
  %v90 = vsub.s32 0, %v89
  %v91 = vrot.slane %v86, %v90
  %v92 = vlaneseq
  %v93 = vshrl.u32 %v92, 7
  %v94 = vsub.s32 1, %v93
  %v95 = vrot.slane %v86, %v94
  %v96 = vlaneseq
  %v97 = vshrl.u32 %v96, 7
  %v98 = vsub.s32 2, %v97
  %v99 = vrot.slane %v86, %v98
  %v100 = vlaneseq
  %v101 = vshrl.u32 %v100, 7
  %v102 = vsub.s32 3, %v101
  %v103 = vrot.slane %v86, %v102
  %v104 = vlaneseq
  %v105 = vshrl.u32 %v104, 7
  %v106 = vsub.s32 4, %v105
  %v107 = vrot.slane %v86, %v106
  %v108 = vlaneseq
  %v109 = vshrl.u32 %v108, 7
  %v110 = vsub.s32 5, %v109
  %v111 = vrot.slane %v86, %v110
  %v112 = vlaneseq
  %v113 = vshrl.u32 %v112, 7
  %v114 = vsub.s32 6, %v113
  %v115 = vrot.slane %v86, %v114
  %v116 = vlaneseq
  %v117 = vshrl.u32 %v116, 7
  %v118 = vsub.s32 7, %v117
  %v119 = vrot.slane %v86, %v118
  %v132 = vunpack.c.l.b16 %v18
  %v133 = vunpack.c.l.b16 %v19
  %v134 = vunpack.c.l.b16 %v20
  %v135 = vunpack.c.l.b16 %v21
  %v136 = vpack.c.b16 %v133, %v132
  %v137 = vpack.c.b16 %v135, %v134
  %v204 = vunpack.c.l.b16 %v22
  %v205 = vunpack.c.h.b16 %v22
  %v206 = vunpack.c.l.b16 %v23
  %v207 = vunpack.c.h.b16 %v23
  %v208 = vunpack.c.l.b16 %v24
  %v209 = vunpack.c.h.b16 %v24
  %v210 = vunpack.c.l.b16 %v25
  %v211 = vunpack.c.h.b16 %v25
  %v212 = vunpack.c.l.b16 %v26
  %v213 = vunpack.c.h.b16 %v26
  %v214 = vunpack.c.l.b16 %v27
  %v215 = vunpack.c.h.b16 %v27
  %v216 = vunpack.c.l.b16 %v28
  %v217 = vunpack.c.h.b16 %v28
  %v218 = vunpack.c.l.b16 %v29
  %v219 = vunpack.c.h.b16 %v29
  %v220 = vunpack.c.l.b16 %v30
  %v221 = vunpack.c.h.b16 %v30
  %v222 = vunpack.c.l.b16 %v31
  %v223 = vunpack.c.h.b16 %v31
  %v224 = vunpack.c.l.b16 %v32
  %v225 = vunpack.c.h.b16 %v32
  %v226 = vunpack.c.l.b16 %v33
  %v227 = vunpack.c.h.b16 %v33
  %v228 = vunpack.c.l.b16 %v34
  %v229 = vunpack.c.h.b16 %v34
  %v230 = vunpack.c.l.b16 %v35
  %v231 = vunpack.c.h.b16 %v35
  %v232 = vunpack.c.l.b16 %v36
  %v233 = vunpack.c.h.b16 %v36
  %v234 = vunpack.c.l.b16 %v37
  %v235 = vunpack.c.h.b16 %v37
  %v236 = vunpack.c.l.b16 %v38
  %v237 = vunpack.c.h.b16 %v38
  %v238 = vunpack.c.l.b16 %v39
  %v239 = vunpack.c.h.b16 %v39
  %v240 = vunpack.c.l.b16 %v40
  %v241 = vunpack.c.h.b16 %v40
  %v242 = vunpack.c.l.b16 %v41
  %v243 = vunpack.c.h.b16 %v41
  %v244 = vunpack.c.l.b16 %v42
  %v245 = vunpack.c.h.b16 %v42
  %v246 = vunpack.c.l.b16 %v43
  %v247 = vunpack.c.h.b16 %v43
  %v248 = vunpack.c.l.b16 %v44
  %v249 = vunpack.c.h.b16 %v44
  %v250 = vunpack.c.l.b16 %v45
  %v251 = vunpack.c.h.b16 %v45
  %v252 = vunpack.c.l.b16 %v46
  %v253 = vunpack.c.h.b16 %v46
  %v254 = vunpack.c.l.b16 %v47
  %v255 = vunpack.c.h.b16 %v47
  %v256 = vunpack.c.l.b16 %v48
  %v257 = vunpack.c.h.b16 %v48
  %v258 = vunpack.c.l.b16 %v49
  %v259 = vunpack.c.h.b16 %v49
  %v260 = vunpack.c.l.b16 %v50
  %v261 = vunpack.c.h.b16 %v50
  %v262 = vunpack.c.l.b16 %v51
  %v263 = vunpack.c.h.b16 %v51
  %v264 = vunpack.c.l.b16 %v52
  %v265 = vunpack.c.h.b16 %v52
  %v266 = vunpack.c.l.b16 %v53
  %v267 = vunpack.c.h.b16 %v53
  %v268 = vunpack.c.l.b16 %v54
  %v269 = vunpack.c.h.b16 %v54
  %v270 = vunpack.c.l.b16 %v55
  %v271 = vunpack.c.h.b16 %v55
  %v272 = vunpack.c.l.b16 %v56
  %v273 = vunpack.c.h.b16 %v56
  %v274 = vunpack.c.l.b16 %v57
  %v275 = vunpack.c.h.b16 %v57
  %v276 = vunpack.c.l.b16 %v58
  %v277 = vunpack.c.h.b16 %v58
  %v278 = vunpack.c.l.b16 %v59
  %v279 = vunpack.c.h.b16 %v59
  %v280 = vunpack.c.l.b16 %v60
  %v281 = vunpack.c.h.b16 %v60
  %v282 = vunpack.c.l.b16 %v61
  %v283 = vunpack.c.h.b16 %v61
  %v284 = vunpack.c.l.b16 %v62
  %v285 = vunpack.c.h.b16 %v62
  %v286 = vunpack.c.l.b16 %v63
  %v287 = vunpack.c.h.b16 %v63
  %v288 = vunpack.c.l.b16 %v64
  %v289 = vunpack.c.h.b16 %v64
  %v290 = vunpack.c.l.b16 %v65
  %v291 = vunpack.c.h.b16 %v65
  %v292 = vunpack.c.l.b16 %v66
  %v293 = vunpack.c.h.b16 %v66
  %v294 = vunpack.c.l.b16 %v67
  %v295 = vunpack.c.h.b16 %v67
  %v296 = vunpack.c.l.b16 %v68
  %v297 = vunpack.c.h.b16 %v68
  %v298 = vunpack.c.l.b16 %v69
  %v299 = vunpack.c.h.b16 %v69
  %v300 = vunpack.c.l.b16 %v70
  %v301 = vunpack.c.h.b16 %v70
  %v302 = vunpack.c.l.b16 %v71
  %v303 = vunpack.c.h.b16 %v71
  %v304 = vunpack.c.l.b16 %v72
  %v305 = vunpack.c.h.b16 %v72
  %v306 = vunpack.c.l.b16 %v73
  %v307 = vunpack.c.h.b16 %v73
  %v308 = vunpack.c.l.b16 %v74
  %v309 = vunpack.c.h.b16 %v74
  %v310 = vunpack.c.l.b16 %v75
  %v311 = vunpack.c.h.b16 %v75
  %v312 = vunpack.c.l.b16 %v76
  %v313 = vunpack.c.h.b16 %v76
  %v314 = vunpack.c.l.b16 %v77
  %v315 = vunpack.c.h.b16 %v77
  %v316 = vunpack.c.l.b16 %v78
  %v317 = vunpack.c.h.b16 %v78
  %v318 = vunpack.c.l.b16 %v79
  %v319 = vunpack.c.h.b16 %v79
  %v320 = vunpack.c.l.b16 %v80
  %v321 = vunpack.c.h.b16 %v80
  %v322 = vunpack.c.l.b16 %v81
  %v323 = vunpack.c.h.b16 %v81
  %v324 = vunpack.c.l.b16 %v82
  %v325 = vunpack.c.h.b16 %v82
  %v326 = vunpack.c.l.b16 %v83
  %v327 = vunpack.c.h.b16 %v83
  %v328 = vunpack.c.l.b16 %v84
  %v329 = vunpack.c.h.b16 %v84
  %v330 = vunpack.c.l.b16 %v85
  %v331 = vunpack.c.h.b16 %v85
  %v332 = vpack.c.b16 %v212, %v204
  %v333 = vpack.c.b16 %v213, %v205
  %v334 = vpack.c.b16 %v214, %v206
  %v335 = vpack.c.b16 %v215, %v207
  %v336 = vpack.c.b16 %v216, %v208
  %v337 = vpack.c.b16 %v217, %v209
  %v338 = vpack.c.b16 %v218, %v210
  %v339 = vpack.c.b16 %v219, %v211
  %v340 = vpack.c.b16 %v228, %v220
  %v341 = vpack.c.b16 %v229, %v221
  %v342 = vpack.c.b16 %v230, %v222
  %v343 = vpack.c.b16 %v231, %v223
  %v344 = vpack.c.b16 %v232, %v224
  %v345 = vpack.c.b16 %v233, %v225
  %v346 = vpack.c.b16 %v234, %v226
  %v347 = vpack.c.b16 %v235, %v227
  %v348 = vpack.c.b16 %v244, %v236
  %v349 = vpack.c.b16 %v245, %v237
  %v350 = vpack.c.b16 %v246, %v238
  %v351 = vpack.c.b16 %v247, %v239
  %v352 = vpack.c.b16 %v248, %v240
  %v353 = vpack.c.b16 %v249, %v241
  %v354 = vpack.c.b16 %v250, %v242
  %v355 = vpack.c.b16 %v251, %v243
  %v356 = vpack.c.b16 %v260, %v252
  %v357 = vpack.c.b16 %v261, %v253
  %v358 = vpack.c.b16 %v262, %v254
  %v359 = vpack.c.b16 %v263, %v255
  %v360 = vpack.c.b16 %v264, %v256
  %v361 = vpack.c.b16 %v265, %v257
  %v362 = vpack.c.b16 %v266, %v258
  %v363 = vpack.c.b16 %v267, %v259
  %v364 = vpack.c.b16 %v276, %v268
  %v365 = vpack.c.b16 %v277, %v269
  %v366 = vpack.c.b16 %v278, %v270
  %v367 = vpack.c.b16 %v279, %v271
  %v368 = vpack.c.b16 %v280, %v272
  %v369 = vpack.c.b16 %v281, %v273
  %v370 = vpack.c.b16 %v282, %v274
  %v371 = vpack.c.b16 %v283, %v275
  %v372 = vpack.c.b16 %v292, %v284
  %v373 = vpack.c.b16 %v293, %v285
  %v374 = vpack.c.b16 %v294, %v286
  %v375 = vpack.c.b16 %v295, %v287
  %v376 = vpack.c.b16 %v296, %v288
  %v377 = vpack.c.b16 %v297, %v289
  %v378 = vpack.c.b16 %v298, %v290
  %v379 = vpack.c.b16 %v299, %v291
  %v380 = vpack.c.b16 %v308, %v300
  %v381 = vpack.c.b16 %v309, %v301
  %v382 = vpack.c.b16 %v310, %v302
  %v383 = vpack.c.b16 %v311, %v303
  %v384 = vpack.c.b16 %v312, %v304
  %v385 = vpack.c.b16 %v313, %v305
  %v386 = vpack.c.b16 %v314, %v306
  %v387 = vpack.c.b16 %v315, %v307
  %v388 = vpack.c.b16 %v324, %v316
  %v389 = vpack.c.b16 %v325, %v317
  %v390 = vpack.c.b16 %v326, %v318
  %v391 = vpack.c.b16 %v327, %v319
  %v392 = vpack.c.b16 %v328, %v320
  %v393 = vpack.c.b16 %v329, %v321
  %v394 = vpack.c.b16 %v330, %v322
  %v395 = vpack.c.b16 %v331, %v323
  %460 = vmatprep.subr.bf16.mxu0 %v333
  %461 = vmatpush1.bf16.msra.mxu0 %v332
  %462 = vmatprep.subr.bf16.mxu0 %v341
  %463 = vmatpush1.bf16.msra.mxu0 %v340
  %464 = vmatprep.subr.bf16.mxu0 %v349
  %465 = vmatpush1.bf16.msra.mxu0 %v348
  %466 = vmatprep.subr.bf16.mxu0 %v357
  %467 = vmatpush1.bf16.msra.mxu0 %v356
  %468 = vmatprep.subr.bf16.mxu0 %v365
  %469 = vmatpush1.bf16.msra.mxu0 %v364
  %470 = vmatprep.subr.bf16.mxu0 %v373
  %471 = vmatpush1.bf16.msra.mxu0 %v372
  %472 = vmatprep.subr.bf16.mxu0 %v381
  %473 = vmatpush1.bf16.msra.mxu0 %v380
  %474 = vmatprep.subr.bf16.mxu0 %v389
  %475 = vmatpush1.bf16.msra.mxu0 %v388
  %476 = vmatprep.subr.bf16.mxu0 0
  %477 = vmatpush1.bf16.msra.mxu0 0
  %478 = vmatprep.subr.bf16.mxu0 0
  %479 = vmatpush1.bf16.msra.mxu0 0
  %480 = vmatprep.subr.bf16.mxu0 0
  %481 = vmatpush1.bf16.msra.mxu0 0
  %482 = vmatprep.subr.bf16.mxu0 0
  %483 = vmatpush1.bf16.msra.mxu0 0
  %484 = vmatprep.subr.bf16.mxu0 0
  %485 = vmatpush1.bf16.msra.mxu0 0
  %486 = vmatprep.subr.bf16.mxu0 0
  %487 = vmatpush1.bf16.msra.mxu0 0
  %488 = vmatprep.subr.bf16.mxu0 0
  %489 = vmatpush1.bf16.msra.mxu0 0
  %490 = vmatprep.subr.bf16.mxu0 0
  %491 = vmatpush1.bf16.msra.mxu0 0
  %492 = vmatprep.mubr.bf16.mxu0 0
  %493 = vmatmul.mubr.bf16.gmra.mrb[0].mxu0 %v136
  %v494 = vpop.f32.mrb[0].mxu0
  %v495 = vadd.f32 %v91, %v494
  %v496 = vpop.f32.mrb[0].mxu0
  %v497 = vadd.f32 %v95, %v496
  %v498 = vpop.f32.mrb[0].mxu0
  %v499 = vadd.f32 %v91, %v498
  %v500 = vpop.f32.mrb[0].mxu0
  %v501 = vadd.f32 %v95, %v500
  %502 = vmatprep.mubr.bf16.mxu0 0
  %503 = vmatmul.mubr.bf16.gmra.mrb[0].mxu0 %v137
  %v504 = vpop.f32.mrb[0].mxu0
  %v505 = vadd.f32 %v91, %v504
  %v506 = vpop.f32.mrb[0].mxu0
  %v507 = vadd.f32 %v95, %v506
  %v508 = vpop.f32.mrb[0].mxu0
  %v509 = vadd.f32 %v91, %v508
  %v510 = vpop.f32.mrb[0].mxu0
  %v511 = vadd.f32 %v95, %v510
  %512 = vdwg.mxu0
  %513 = vmatprep.subr.bf16.mxu0 %v335
  %514 = vmatpush1.bf16.msra.mxu0 %v334
  %515 = vmatprep.subr.bf16.mxu0 %v343
  %516 = vmatpush1.bf16.msra.mxu0 %v342
  %517 = vmatprep.subr.bf16.mxu0 %v351
  %518 = vmatpush1.bf16.msra.mxu0 %v350
  %519 = vmatprep.subr.bf16.mxu0 %v359
  %520 = vmatpush1.bf16.msra.mxu0 %v358
  %521 = vmatprep.subr.bf16.mxu0 %v367
  %522 = vmatpush1.bf16.msra.mxu0 %v366
  %523 = vmatprep.subr.bf16.mxu0 %v375
  %524 = vmatpush1.bf16.msra.mxu0 %v374
  %525 = vmatprep.subr.bf16.mxu0 %v383
  %526 = vmatpush1.bf16.msra.mxu0 %v382
  %527 = vmatprep.subr.bf16.mxu0 %v391
  %528 = vmatpush1.bf16.msra.mxu0 %v390
  %529 = vmatprep.subr.bf16.mxu0 0
  %530 = vmatpush1.bf16.msra.mxu0 0
  %531 = vmatprep.subr.bf16.mxu0 0
  %532 = vmatpush1.bf16.msra.mxu0 0
  %533 = vmatprep.subr.bf16.mxu0 0
  %534 = vmatpush1.bf16.msra.mxu0 0
  %535 = vmatprep.subr.bf16.mxu0 0
  %536 = vmatpush1.bf16.msra.mxu0 0
  %537 = vmatprep.subr.bf16.mxu0 0
  %538 = vmatpush1.bf16.msra.mxu0 0
  %539 = vmatprep.subr.bf16.mxu0 0
  %540 = vmatpush1.bf16.msra.mxu0 0
  %541 = vmatprep.subr.bf16.mxu0 0
  %542 = vmatpush1.bf16.msra.mxu0 0
  %543 = vmatprep.subr.bf16.mxu0 0
  %544 = vmatpush1.bf16.msra.mxu0 0
  %545 = vmatprep.mubr.bf16.mxu0 0
  %546 = vmatmul.mubr.bf16.gmra.mrb[0].mxu0 %v136
  %v547 = vpop.f32.mrb[0].mxu0
  %v548 = vadd.f32 %v99, %v547
  %v549 = vpop.f32.mrb[0].mxu0
  %v550 = vadd.f32 %v103, %v549
  %v551 = vpop.f32.mrb[0].mxu0
  %v552 = vadd.f32 %v99, %v551
  %v553 = vpop.f32.mrb[0].mxu0
  %v554 = vadd.f32 %v103, %v553
  %555 = vmatprep.mubr.bf16.mxu0 0
  %556 = vmatmul.mubr.bf16.gmra.mrb[0].mxu0 %v137
  %v557 = vpop.f32.mrb[0].mxu0
  %v558 = vadd.f32 %v99, %v557
  %v559 = vpop.f32.mrb[0].mxu0
  %v560 = vadd.f32 %v103, %v559
  %v561 = vpop.f32.mrb[0].mxu0
  %v562 = vadd.f32 %v99, %v561
  %v563 = vpop.f32.mrb[0].mxu0
  %v564 = vadd.f32 %v103, %v563
  %565 = vdwg.mxu0
  %566 = vmatprep.subr.bf16.mxu0 %v337
  %567 = vmatpush1.bf16.msra.mxu0 %v336
  %568 = vmatprep.subr.bf16.mxu0 %v345
  %569 = vmatpush1.bf16.msra.mxu0 %v344
  %570 = vmatprep.subr.bf16.mxu0 %v353
  %571 = vmatpush1.bf16.msra.mxu0 %v352
  %572 = vmatprep.subr.bf16.mxu0 %v361
  %573 = vmatpush1.bf16.msra.mxu0 %v360
  %574 = vmatprep.subr.bf16.mxu0 %v369
  %575 = vmatpush1.bf16.msra.mxu0 %v368
  %576 = vmatprep.subr.bf16.mxu0 %v377
  %577 = vmatpush1.bf16.msra.mxu0 %v376
  %578 = vmatprep.subr.bf16.mxu0 %v385
  %579 = vmatpush1.bf16.msra.mxu0 %v384
  %580 = vmatprep.subr.bf16.mxu0 %v393
  %581 = vmatpush1.bf16.msra.mxu0 %v392
  %582 = vmatprep.subr.bf16.mxu0 0
  %583 = vmatpush1.bf16.msra.mxu0 0
  %584 = vmatprep.subr.bf16.mxu0 0
  %585 = vmatpush1.bf16.msra.mxu0 0
  %586 = vmatprep.subr.bf16.mxu0 0
  %587 = vmatpush1.bf16.msra.mxu0 0
  %588 = vmatprep.subr.bf16.mxu0 0
  %589 = vmatpush1.bf16.msra.mxu0 0
  %590 = vmatprep.subr.bf16.mxu0 0
  %591 = vmatpush1.bf16.msra.mxu0 0
  %592 = vmatprep.subr.bf16.mxu0 0
  %593 = vmatpush1.bf16.msra.mxu0 0
  %594 = vmatprep.subr.bf16.mxu0 0
  %595 = vmatpush1.bf16.msra.mxu0 0
  %596 = vmatprep.subr.bf16.mxu0 0
  %597 = vmatpush1.bf16.msra.mxu0 0
  %598 = vmatprep.mubr.bf16.mxu0 0
  %599 = vmatmul.mubr.bf16.gmra.mrb[0].mxu0 %v136
  %v600 = vpop.f32.mrb[0].mxu0
  %v601 = vadd.f32 %v107, %v600
  %v602 = vpop.f32.mrb[0].mxu0
  %v603 = vadd.f32 %v111, %v602
  %v604 = vpop.f32.mrb[0].mxu0
  %v605 = vadd.f32 %v107, %v604
  %v606 = vpop.f32.mrb[0].mxu0
  %v607 = vadd.f32 %v111, %v606
  %608 = vmatprep.mubr.bf16.mxu0 0
  %609 = vmatmul.mubr.bf16.gmra.mrb[0].mxu0 %v137
  %v610 = vpop.f32.mrb[0].mxu0
  %v611 = vadd.f32 %v107, %v610
  %v612 = vpop.f32.mrb[0].mxu0
  %v613 = vadd.f32 %v111, %v612
  %v614 = vpop.f32.mrb[0].mxu0
  %v615 = vadd.f32 %v107, %v614
  %v616 = vpop.f32.mrb[0].mxu0
  %v617 = vadd.f32 %v111, %v616
  %618 = vdwg.mxu0
  %619 = vmatprep.subr.bf16.mxu0 %v339
  %620 = vmatpush1.bf16.msra.mxu0 %v338
  %621 = vmatprep.subr.bf16.mxu0 %v347
  %622 = vmatpush1.bf16.msra.mxu0 %v346
  %623 = vmatprep.subr.bf16.mxu0 %v355
  %624 = vmatpush1.bf16.msra.mxu0 %v354
  %625 = vmatprep.subr.bf16.mxu0 %v363
  %626 = vmatpush1.bf16.msra.mxu0 %v362
  %627 = vmatprep.subr.bf16.mxu0 %v371
  %628 = vmatpush1.bf16.msra.mxu0 %v370
  %629 = vmatprep.subr.bf16.mxu0 %v379
  %630 = vmatpush1.bf16.msra.mxu0 %v378
  %631 = vmatprep.subr.bf16.mxu0 %v387
  %632 = vmatpush1.bf16.msra.mxu0 %v386
  %633 = vmatprep.subr.bf16.mxu0 %v395
  %634 = vmatpush1.bf16.msra.mxu0 %v394
  %635 = vmatprep.subr.bf16.mxu0 0
  %636 = vmatpush1.bf16.msra.mxu0 0
  %637 = vmatprep.subr.bf16.mxu0 0
  %638 = vmatpush1.bf16.msra.mxu0 0
  %639 = vmatprep.subr.bf16.mxu0 0
  %640 = vmatpush1.bf16.msra.mxu0 0
  %641 = vmatprep.subr.bf16.mxu0 0
  %642 = vmatpush1.bf16.msra.mxu0 0
  %643 = vmatprep.subr.bf16.mxu0 0
  %644 = vmatpush1.bf16.msra.mxu0 0
  %645 = vmatprep.subr.bf16.mxu0 0
  %646 = vmatpush1.bf16.msra.mxu0 0
  %647 = vmatprep.subr.bf16.mxu0 0
  %648 = vmatpush1.bf16.msra.mxu0 0
  %649 = vmatprep.subr.bf16.mxu0 0
  %650 = vmatpush1.bf16.msra.mxu0 0
  %651 = vmatprep.mubr.bf16.mxu0 0
  %652 = vmatmul.mubr.bf16.gmra.mrb[0].mxu0 %v136
  %v653 = vpop.f32.mrb[0].mxu0
  %v654 = vadd.f32 %v115, %v653
  %v655 = vpop.f32.mrb[0].mxu0
  %v656 = vadd.f32 %v119, %v655
  %v657 = vpop.f32.mrb[0].mxu0
  %v658 = vadd.f32 %v115, %v657
  %v659 = vpop.f32.mrb[0].mxu0
  %v660 = vadd.f32 %v119, %v659
  %661 = vmatprep.mubr.bf16.mxu0 0
  %662 = vmatmul.mubr.bf16.gmra.mrb[0].mxu0 %v137
  %v663 = vpop.f32.mrb[0].mxu0
  %v664 = vadd.f32 %v115, %v663
  %v665 = vpop.f32.mrb[0].mxu0
  %v666 = vadd.f32 %v119, %v665
  %v667 = vpop.f32.mrb[0].mxu0
  %v668 = vadd.f32 %v115, %v667
  %v669 = vpop.f32.mrb[0].mxu0
  %v670 = vadd.f32 %v119, %v669
  %671 = vdwg.mxu0
  %v672 = vld [vmem:[%s3] sm:$0xff]
  %v673 = vld [vmem:[%s3 + $0x8] sm:$0xff]
  %v674 = vld [vmem:[%s3 + $0x10] sm:$0xff]
  %v675 = vld [vmem:[%s3 + $0x18] sm:$0xff]
  %v676 = vld [vmem:[%s3 + $0x20] sm:$0xff]
  %v677 = vld [vmem:[%s3 + $0x28] sm:$0xff]
  %v678 = vld [vmem:[%s3 + $0x30] sm:$0xff]
  %v679 = vld [vmem:[%s3 + $0x38] sm:$0xff]
  %v680 = vld [vmem:[%s3 + $0x40] sm:$0xff]
  %v681 = vld [vmem:[%s3 + $0x48] sm:$0xff]
  %v682 = vld [vmem:[%s3 + $0x50] sm:$0xff]
  %v683 = vld [vmem:[%s3 + $0x58] sm:$0xff]
  %v684 = vld [vmem:[%s3 + $0x60] sm:$0xff]
  %v685 = vld [vmem:[%s3 + $0x68] sm:$0xff]
  %v686 = vld [vmem:[%s3 + $0x70] sm:$0xff]
  %v687 = vld [vmem:[%s3 + $0x78] sm:$0xff]
  %v688 = vld [vmem:[%s3 + $0x80] sm:$0xff]
  %v689 = vld [vmem:[%s3 + $0x88] sm:$0xff]
  %v690 = vld [vmem:[%s3 + $0x90] sm:$0xff]
  %v691 = vld [vmem:[%s3 + $0x98] sm:$0xff]
  %v692 = vld [vmem:[%s3 + $0xa0] sm:$0xff]
  %v693 = vld [vmem:[%s3 + $0xa8] sm:$0xff]
  %v694 = vld [vmem:[%s3 + $0xb0] sm:$0xff]
  %v695 = vld [vmem:[%s3 + $0xb8] sm:$0xff]
  %v696 = vld [vmem:[%s3 + $0xc0] sm:$0xff]
  %v697 = vld [vmem:[%s3 + $0xc8] sm:$0xff]
  %v698 = vld [vmem:[%s3 + $0xd0] sm:$0xff]
  %v699 = vld [vmem:[%s3 + $0xd8] sm:$0xff]
  %v700 = vld [vmem:[%s3 + $0xe0] sm:$0xff]
  %v701 = vld [vmem:[%s3 + $0xe8] sm:$0xff]
  %v702 = vld [vmem:[%s3 + $0xf0] sm:$0xff]
  %v703 = vld [vmem:[%s3 + $0xf8] sm:$0xff]
  %v704 = vadd.f32 %v495, %v672
  %v705 = vadd.f32 %v497, %v673
  %v706 = vadd.f32 %v548, %v674
  %v707 = vadd.f32 %v550, %v675
  %v708 = vadd.f32 %v601, %v676
  %v709 = vadd.f32 %v603, %v677
  %v710 = vadd.f32 %v654, %v678
  %v711 = vadd.f32 %v656, %v679
  %v712 = vadd.f32 %v499, %v680
  %v713 = vadd.f32 %v501, %v681
  %v714 = vadd.f32 %v552, %v682
  %v715 = vadd.f32 %v554, %v683
  %v716 = vadd.f32 %v605, %v684
  %v717 = vadd.f32 %v607, %v685
  %v718 = vadd.f32 %v658, %v686
  %v719 = vadd.f32 %v660, %v687
  %v720 = vadd.f32 %v505, %v688
  %v721 = vadd.f32 %v507, %v689
  %v722 = vadd.f32 %v558, %v690
  %v723 = vadd.f32 %v560, %v691
  %v724 = vadd.f32 %v611, %v692
  %v725 = vadd.f32 %v613, %v693
  %v726 = vadd.f32 %v664, %v694
  %v727 = vadd.f32 %v666, %v695
  %v728 = vadd.f32 %v509, %v696
  %v729 = vadd.f32 %v511, %v697
  %v730 = vadd.f32 %v562, %v698
  %v731 = vadd.f32 %v564, %v699
  %v732 = vadd.f32 %v615, %v700
  %v733 = vadd.f32 %v617, %v701
  %v734 = vadd.f32 %v668, %v702
  %v735 = vadd.f32 %v670, %v703
  %736 = vst [vmem:[%s4] sm:$0xff] %v704
  %737 = vst [vmem:[%s4 + $0x8] sm:$0xff] %v705
  %738 = vst [vmem:[%s4 + $0x10] sm:$0xff] %v706
  %739 = vst [vmem:[%s4 + $0x18] sm:$0xff] %v707
  %740 = vst [vmem:[%s4 + $0x20] sm:$0xff] %v708
  %741 = vst [vmem:[%s4 + $0x28] sm:$0xff] %v709
  %742 = vst [vmem:[%s4 + $0x30] sm:$0xff] %v710
  %743 = vst [vmem:[%s4 + $0x38] sm:$0xff] %v711
  %744 = vst [vmem:[%s4 + $0x40] sm:$0xff] %v712
  %745 = vst [vmem:[%s4 + $0x48] sm:$0xff] %v713
  %746 = vst [vmem:[%s4 + $0x50] sm:$0xff] %v714
  %747 = vst [vmem:[%s4 + $0x58] sm:$0xff] %v715
  %748 = vst [vmem:[%s4 + $0x60] sm:$0xff] %v716
  %749 = vst [vmem:[%s4 + $0x68] sm:$0xff] %v717
  %750 = vst [vmem:[%s4 + $0x70] sm:$0xff] %v718
  %751 = vst [vmem:[%s4 + $0x78] sm:$0xff] %v719
  %752 = vst [vmem:[%s4 + $0x80] sm:$0xff] %v720
  %753 = vst [vmem:[%s4 + $0x88] sm:$0xff] %v721
  %754 = vst [vmem:[%s4 + $0x90] sm:$0xff] %v722
  %755 = vst [vmem:[%s4 + $0x98] sm:$0xff] %v723
  %756 = vst [vmem:[%s4 + $0xa0] sm:$0xff] %v724
  %757 = vst [vmem:[%s4 + $0xa8] sm:$0xff] %v725
  %758 = vst [vmem:[%s4 + $0xb0] sm:$0xff] %v726
  %759 = vst [vmem:[%s4 + $0xb8] sm:$0xff] %v727
  %760 = vst [vmem:[%s4 + $0xc0] sm:$0xff] %v728
  %761 = vst [vmem:[%s4 + $0xc8] sm:$0xff] %v729
  %762 = vst [vmem:[%s4 + $0xd0] sm:$0xff] %v730
  %763 = vst [vmem:[%s4 + $0xd8] sm:$0xff] %v731
  %764 = vst [vmem:[%s4 + $0xe0] sm:$0xff] %v732
  %765 = vst [vmem:[%s4 + $0xe8] sm:$0xff] %v733
  %766 = vst [vmem:[%s4 + $0xf0] sm:$0xff] %v734
  %767 = vst [vmem:[%s4 + $0xf8] sm:$0xff] %v735
  // Predicated region
  $region18: #{detection2d_forward.16} parent=0 // pred_check
    _
  $region19: #{detection2d_forward.16} parent=0 // pred_check_branch
    %769 = sbr.rel (0) target = $region21
  $region20: #{detection2d_forward.16} parent=0 // pred_region
    _
  $region21: #{detection2d_forward.16} parent=0 // pred_fallthru
    _
  // Predicated region
  $region22: #{detection2d_forward.16} parent=0 // pred_check
    _
  $region23: #{detection2d_forward.16} parent=0 // pred_check_branch
    %771 = sbr.rel (0) target = $region25
  $region24: #{detection2d_forward.16} parent=0 // pred_region
    _
  $region25: #{detection2d_forward.16} parent=0 // pred_fallthru
    _

// kernel: detection2d_forward.13
$region0: #{detection2d_forward.13}
  #allocation0 [shape = 'u32[]', space=smem, size = 0x4, offset = 0x4, fixed_abs, tag = 'smem constant byte address 0x4 - core index']
  #allocation1 [shape = 'u32[144,128]{1,0:T(1,128)}', space=vmem, size = 0x12000, scoped, tag = 'internal scratch']
  %s0 = inlined_call_operand.vmem [shape: bf16[2,2304], index: 0, kind: input, shape index: {}]
  %s1 = inlined_call_operand.vmem [shape: bf16[2304,512], index: 1, kind: input, shape index: {}]
  %s2 = inlined_call_operand.vmem [shape: f32[1,512], index: 2, kind: input, shape index: {}]
  %s3 = inlined_call_operand.vmem [shape: bf16[2,512], index: 3, kind: output, shape index: {}]
  %s4 = sld [smem:[#allocation0]]
  $region22: #{detection2d_forward.13} parent=0
    _
  %s6 = ssub.s32 1, %s4
  %s7 = scalar_select 0, %s6, %s4
  // Predicated region
  $region2: #{detection2d_forward.13} parent=0 // pred_check
    _
  $region3: #{detection2d_forward.13} parent=0 // pred_check_branch
    %9 = sbr.rel (0) target = $region5
  $region4: #{detection2d_forward.13} parent=0 // pred_region
    _
  $region5: #{detection2d_forward.13} parent=0 // pred_fallthru
    _
  // Predicated region
  $region6: #{detection2d_forward.13} parent=0 // pred_check
    _
  $region7: #{detection2d_forward.13} parent=0 // pred_check_branch
    %11 = sbr.rel (0) target = $region9
  $region8: #{detection2d_forward.13} parent=0 // pred_region
    _
  $region9: #{detection2d_forward.13} parent=0 // pred_fallthru
    _
  // Predicated region
  $region10: #{detection2d_forward.13} parent=0 // pred_check
    _
  $region11: #{detection2d_forward.13} parent=0 // pred_check_branch
    %13 = sbr.rel (0) target = $region13
  $region12: #{detection2d_forward.13} parent=0 // pred_region
    _
  $region13: #{detection2d_forward.13} parent=0 // pred_fallthru
    _
  %v14 = vld [vmem:[%s0] sm:$0xff]
  %v15 = vld [vmem:[%s0 + $0x8] sm:$0xff]
  %v16 = vld [vmem:[%s0 + $0x10] sm:$0x3]
  %v17 = vld [vmem:[%s1] sm:$0xff]
  %v18 = vld [vmem:[%s1 + $0x8] sm:$0xff]
  %v19 = vld [vmem:[%s1 + $0x10] sm:$0xff]
  %v20 = vld [vmem:[%s1 + $0x18] sm:$0xff]
  %v21 = vld [vmem:[%s1 + $0x20] sm:$0xff]
  %v22 = vld [vmem:[%s1 + $0x28] sm:$0xff]
  %v23 = vld [vmem:[%s1 + $0x30] sm:$0xff]
  %v24 = vld [vmem:[%s1 + $0x38] sm:$0xff]
  %v25 = vld [vmem:[%s1 + $0x40] sm:$0xff]
  %v26 = vld [vmem:[%s1 + $0x48] sm:$0xff]
  %v27 = vld [vmem:[%s1 + $0x50] sm:$0xff]
  %v28 = vld [vmem:[%s1 + $0x58] sm:$0xff]
  %v29 = vld [vmem:[%s1 + $0x60] sm:$0xff]
  %v30 = vld [vmem:[%s1 + $0x68] sm:$0xff]
  %v31 = vld [vmem:[%s1 + $0x70] sm:$0xff]
  %v32 = vld [vmem:[%s1 + $0x78] sm:$0xff]
  %v33 = vld [vmem:[%s1 + $0x80] sm:$0xff]
  %v34 = vld [vmem:[%s1 + $0x88] sm:$0xff]
  %v35 = vld [vmem:[%s1 + $0x90] sm:$0xff]
  %v36 = vld [vmem:[%s1 + $0x98] sm:$0xff]
  %v37 = vld [vmem:[%s1 + $0xa0] sm:$0xff]
  %v38 = vld [vmem:[%s1 + $0xa8] sm:$0xff]
  %v39 = vld [vmem:[%s1 + $0xb0] sm:$0xff]
  %v40 = vld [vmem:[%s1 + $0xb8] sm:$0xff]
  %v41 = vld [vmem:[%s1 + $0xc0] sm:$0xff]
  %v42 = vld [vmem:[%s1 + $0xc8] sm:$0xff]
  %v43 = vld [vmem:[%s1 + $0xd0] sm:$0xff]
  %v44 = vld [vmem:[%s1 + $0xd8] sm:$0xff]
  %v45 = vld [vmem:[%s1 + $0xe0] sm:$0xff]
  %v46 = vld [vmem:[%s1 + $0xe8] sm:$0xff]
  %v47 = vld [vmem:[%s1 + $0xf0] sm:$0xff]
  %v48 = vld [vmem:[%s1 + $0xf8] sm:$0xff]
  %v49 = vld [vmem:[%s1 + $0x100] sm:$0xff]
  %v50 = vld [vmem:[%s1 + $0x108] sm:$0xff]
  %v51 = vld [vmem:[%s1 + $0x110] sm:$0xff]
  %v52 = vld [vmem:[%s1 + $0x118] sm:$0xff]
  %v53 = vld [vmem:[%s1 + $0x120] sm:$0xff]
  %v54 = vld [vmem:[%s1 + $0x128] sm:$0xff]
  %v55 = vld [vmem:[%s1 + $0x130] sm:$0xff]
  %v56 = vld [vmem:[%s1 + $0x138] sm:$0xff]
  %v57 = vld [vmem:[%s1 + $0x140] sm:$0xff]
  %v58 = vld [vmem:[%s1 + $0x148] sm:$0xff]
  %v59 = vld [vmem:[%s1 + $0x150] sm:$0xff]
  %v60 = vld [vmem:[%s1 + $0x158] sm:$0xff]
  %v61 = vld [vmem:[%s1 + $0x160] sm:$0xff]
  %v62 = vld [vmem:[%s1 + $0x168] sm:$0xff]
  %v63 = vld [vmem:[%s1 + $0x170] sm:$0xff]
  %v64 = vld [vmem:[%s1 + $0x178] sm:$0xff]
  %v65 = vld [vmem:[%s1 + $0x180] sm:$0xff]
  %v66 = vld [vmem:[%s1 + $0x188] sm:$0xff]
  %v67 = vld [vmem:[%s1 + $0x190] sm:$0xff]
  %v68 = vld [vmem:[%s1 + $0x198] sm:$0xff]
  %v69 = vld [vmem:[%s1 + $0x1a0] sm:$0xff]
  %v70 = vld [vmem:[%s1 + $0x1a8] sm:$0xff]
  %v71 = vld [vmem:[%s1 + $0x1b0] sm:$0xff]
  %v72 = vld [vmem:[%s1 + $0x1b8] sm:$0xff]
  %v73 = vld [vmem:[%s1 + $0x1c0] sm:$0xff]
  %v74 = vld [vmem:[%s1 + $0x1c8] sm:$0xff]
  %v75 = vld [vmem:[%s1 + $0x1d0] sm:$0xff]
  %v76 = vld [vmem:[%s1 + $0x1d8] sm:$0xff]
  %v77 = vld [vmem:[%s1 + $0x1e0] sm:$0xff]
  %v78 = vld [vmem:[%s1 + $0x1e8] sm:$0xff]
  %v79 = vld [vmem:[%s1 + $0x1f0] sm:$0xff]
  %v80 = vld [vmem:[%s1 + $0x1f8] sm:$0xff]
  %v81 = vld [vmem:[%s1 + $0x200] sm:$0xff]
  %v82 = vld [vmem:[%s1 + $0x208] sm:$0xff]
  %v83 = vld [vmem:[%s1 + $0x210] sm:$0xff]
  %v84 = vld [vmem:[%s1 + $0x218] sm:$0xff]
  %v85 = vld [vmem:[%s1 + $0x220] sm:$0xff]
  %v86 = vld [vmem:[%s1 + $0x228] sm:$0xff]
  %v87 = vld [vmem:[%s1 + $0x230] sm:$0xff]
  %v88 = vld [vmem:[%s1 + $0x238] sm:$0xff]
  %v89 = vld [vmem:[%s1 + $0x240] sm:$0xff]
  %v90 = vld [vmem:[%s1 + $0x248] sm:$0xff]
  %v91 = vld [vmem:[%s1 + $0x250] sm:$0xff]
  %v92 = vld [vmem:[%s1 + $0x258] sm:$0xff]
  %v93 = vld [vmem:[%s1 + $0x260] sm:$0xff]
  %v94 = vld [vmem:[%s1 + $0x268] sm:$0xff]
  %v95 = vld [vmem:[%s1 + $0x270] sm:$0xff]
  %v96 = vld [vmem:[%s1 + $0x278] sm:$0xff]
  %v97 = vld [vmem:[%s1 + $0x280] sm:$0xff]
  %v98 = vld [vmem:[%s1 + $0x288] sm:$0xff]
  %v99 = vld [vmem:[%s1 + $0x290] sm:$0xff]
  %v100 = vld [vmem:[%s1 + $0x298] sm:$0xff]
  %v101 = vld [vmem:[%s1 + $0x2a0] sm:$0xff]
  %v102 = vld [vmem:[%s1 + $0x2a8] sm:$0xff]
  %v103 = vld [vmem:[%s1 + $0x2b0] sm:$0xff]
  %v104 = vld [vmem:[%s1 + $0x2b8] sm:$0xff]
  %v105 = vld [vmem:[%s1 + $0x2c0] sm:$0xff]
  %v106 = vld [vmem:[%s1 + $0x2c8] sm:$0xff]
  %v107 = vld [vmem:[%s1 + $0x2d0] sm:$0xff]
  %v108 = vld [vmem:[%s1 + $0x2d8] sm:$0xff]
  %v109 = vld [vmem:[%s1 + $0x2e0] sm:$0xff]
  %v110 = vld [vmem:[%s1 + $0x2e8] sm:$0xff]
  %v111 = vld [vmem:[%s1 + $0x2f0] sm:$0xff]
  %v112 = vld [vmem:[%s1 + $0x2f8] sm:$0xff]
  %v113 = vld [vmem:[%s1 + $0x300] sm:$0xff]
  %v114 = vld [vmem:[%s1 + $0x308] sm:$0xff]
  %v115 = vld [vmem:[%s1 + $0x310] sm:$0xff]
  %v116 = vld [vmem:[%s1 + $0x318] sm:$0xff]
  %v117 = vld [vmem:[%s1 + $0x320] sm:$0xff]
  %v118 = vld [vmem:[%s1 + $0x328] sm:$0xff]
  %v119 = vld [vmem:[%s1 + $0x330] sm:$0xff]
  %v120 = vld [vmem:[%s1 + $0x338] sm:$0xff]
  %v121 = vld [vmem:[%s1 + $0x340] sm:$0xff]
  %v122 = vld [vmem:[%s1 + $0x348] sm:$0xff]
  %v123 = vld [vmem:[%s1 + $0x350] sm:$0xff]
  %v124 = vld [vmem:[%s1 + $0x358] sm:$0xff]
  %v125 = vld [vmem:[%s1 + $0x360] sm:$0xff]
  %v126 = vld [vmem:[%s1 + $0x368] sm:$0xff]
  %v127 = vld [vmem:[%s1 + $0x370] sm:$0xff]
  %v128 = vld [vmem:[%s1 + $0x378] sm:$0xff]
  %v129 = vld [vmem:[%s1 + $0x380] sm:$0xff]
  %v130 = vld [vmem:[%s1 + $0x388] sm:$0xff]
  %v131 = vld [vmem:[%s1 + $0x390] sm:$0xff]
  %v132 = vld [vmem:[%s1 + $0x398] sm:$0xff]
  %v133 = vld [vmem:[%s1 + $0x3a0] sm:$0xff]
  %v134 = vld [vmem:[%s1 + $0x3a8] sm:$0xff]
  %v135 = vld [vmem:[%s1 + $0x3b0] sm:$0xff]
  %v136 = vld [vmem:[%s1 + $0x3b8] sm:$0xff]
  %v137 = vld [vmem:[%s1 + $0x3c0] sm:$0xff]
  %v138 = vld [vmem:[%s1 + $0x3c8] sm:$0xff]
  %v139 = vld [vmem:[%s1 + $0x3d0] sm:$0xff]
  %v140 = vld [vmem:[%s1 + $0x3d8] sm:$0xff]
  %v141 = vld [vmem:[%s1 + $0x3e0] sm:$0xff]
  %v142 = vld [vmem:[%s1 + $0x3e8] sm:$0xff]
  %v143 = vld [vmem:[%s1 + $0x3f0] sm:$0xff]
  %v144 = vld [vmem:[%s1 + $0x3f8] sm:$0xff]
  %v145 = vld [vmem:[%s1 + $0x400] sm:$0xff]
  %v146 = vld [vmem:[%s1 + $0x408] sm:$0xff]
  %v147 = vld [vmem:[%s1 + $0x410] sm:$0xff]
  %v148 = vld [vmem:[%s1 + $0x418] sm:$0xff]
  %v149 = vld [vmem:[%s1 + $0x420] sm:$0xff]
  %v150 = vld [vmem:[%s1 + $0x428] sm:$0xff]
  %v151 = vld [vmem:[%s1 + $0x430] sm:$0xff]
  %v152 = vld [vmem:[%s1 + $0x438] sm:$0xff]
  %v153 = vld [vmem:[%s1 + $0x440] sm:$0xff]
  %v154 = vld [vmem:[%s1 + $0x448] sm:$0xff]
  %v155 = vld [vmem:[%s1 + $0x450] sm:$0xff]
  %v156 = vld [vmem:[%s1 + $0x458] sm:$0xff]
  %v157 = vld [vmem:[%s1 + $0x460] sm:$0xff]
  %v158 = vld [vmem:[%s1 + $0x468] sm:$0xff]
  %v159 = vld [vmem:[%s1 + $0x470] sm:$0xff]
  %v160 = vld [vmem:[%s1 + $0x478] sm:$0xff]
  %v161 = vld [vmem:[%s1 + $0x480] sm:$0xff]
  %v162 = vld [vmem:[%s1 + $0x488] sm:$0xff]
  %v163 = vld [vmem:[%s1 + $0x490] sm:$0xff]
  %v164 = vld [vmem:[%s1 + $0x498] sm:$0xff]
  %v165 = vld [vmem:[%s1 + $0x4a0] sm:$0xff]
  %v166 = vld [vmem:[%s1 + $0x4a8] sm:$0xff]
  %v167 = vld [vmem:[%s1 + $0x4b0] sm:$0xff]
  %v168 = vld [vmem:[%s1 + $0x4b8] sm:$0xff]
  %v169 = vld [vmem:[%s1 + $0x4c0] sm:$0xff]
  %v170 = vld [vmem:[%s1 + $0x4c8] sm:$0xff]
  %v171 = vld [vmem:[%s1 + $0x4d0] sm:$0xff]
  %v172 = vld [vmem:[%s1 + $0x4d8] sm:$0xff]
  %v173 = vld [vmem:[%s1 + $0x4e0] sm:$0xff]
  %v174 = vld [vmem:[%s1 + $0x4e8] sm:$0xff]
  %v175 = vld [vmem:[%s1 + $0x4f0] sm:$0xff]
  %v176 = vld [vmem:[%s1 + $0x4f8] sm:$0xff]
  %v177 = vld [vmem:[%s1 + $0x500] sm:$0xff]
  %v178 = vld [vmem:[%s1 + $0x508] sm:$0xff]
  %v179 = vld [vmem:[%s1 + $0x510] sm:$0xff]
  %v180 = vld [vmem:[%s1 + $0x518] sm:$0xff]
  %v181 = vld [vmem:[%s1 + $0x520] sm:$0xff]
  %v182 = vld [vmem:[%s1 + $0x528] sm:$0xff]
  %v183 = vld [vmem:[%s1 + $0x530] sm:$0xff]
  %v184 = vld [vmem:[%s1 + $0x538] sm:$0xff]
  %v185 = vld [vmem:[%s1 + $0x540] sm:$0xff]
  %v186 = vld [vmem:[%s1 + $0x548] sm:$0xff]
  %v187 = vld [vmem:[%s1 + $0x550] sm:$0xff]
  %v188 = vld [vmem:[%s1 + $0x558] sm:$0xff]
  %v189 = vld [vmem:[%s1 + $0x560] sm:$0xff]
  %v190 = vld [vmem:[%s1 + $0x568] sm:$0xff]
  %v191 = vld [vmem:[%s1 + $0x570] sm:$0xff]
  %v192 = vld [vmem:[%s1 + $0x578] sm:$0xff]
  %v193 = vld [vmem:[%s1 + $0x580] sm:$0xff]
  %v194 = vld [vmem:[%s1 + $0x588] sm:$0xff]
  %v195 = vld [vmem:[%s1 + $0x590] sm:$0xff]
  %v196 = vld [vmem:[%s1 + $0x598] sm:$0xff]
  %v197 = vld [vmem:[%s1 + $0x5a0] sm:$0xff]
  %v198 = vld [vmem:[%s1 + $0x5a8] sm:$0xff]
  %v199 = vld [vmem:[%s1 + $0x5b0] sm:$0xff]
  %v200 = vld [vmem:[%s1 + $0x5b8] sm:$0xff]
  %v201 = vld [vmem:[%s1 + $0x5c0] sm:$0xff]
  %v202 = vld [vmem:[%s1 + $0x5c8] sm:$0xff]
  %v203 = vld [vmem:[%s1 + $0x5d0] sm:$0xff]
  %v204 = vld [vmem:[%s1 + $0x5d8] sm:$0xff]
  %v205 = vld [vmem:[%s1 + $0x5e0] sm:$0xff]
  %v206 = vld [vmem:[%s1 + $0x5e8] sm:$0xff]
  %v207 = vld [vmem:[%s1 + $0x5f0] sm:$0xff]
  %v208 = vld [vmem:[%s1 + $0x5f8] sm:$0xff]
  %v209 = vld [vmem:[%s1 + $0x600] sm:$0xff]
  %v210 = vld [vmem:[%s1 + $0x608] sm:$0xff]
  %v211 = vld [vmem:[%s1 + $0x610] sm:$0xff]
  %v212 = vld [vmem:[%s1 + $0x618] sm:$0xff]
  %v213 = vld [vmem:[%s1 + $0x620] sm:$0xff]
  %v214 = vld [vmem:[%s1 + $0x628] sm:$0xff]
  %v215 = vld [vmem:[%s1 + $0x630] sm:$0xff]
  %v216 = vld [vmem:[%s1 + $0x638] sm:$0xff]
  %v217 = vld [vmem:[%s1 + $0x640] sm:$0xff]
  %v218 = vld [vmem:[%s1 + $0x648] sm:$0xff]
  %v219 = vld [vmem:[%s1 + $0x650] sm:$0xff]
  %v220 = vld [vmem:[%s1 + $0x658] sm:$0xff]
  %v221 = vld [vmem:[%s1 + $0x660] sm:$0xff]
  %v222 = vld [vmem:[%s1 + $0x668] sm:$0xff]
  %v223 = vld [vmem:[%s1 + $0x670] sm:$0xff]
  %v224 = vld [vmem:[%s1 + $0x678] sm:$0xff]
  %v225 = vld [vmem:[%s1 + $0x680] sm:$0xff]
  %v226 = vld [vmem:[%s1 + $0x688] sm:$0xff]
  %v227 = vld [vmem:[%s1 + $0x690] sm:$0xff]
  %v228 = vld [vmem:[%s1 + $0x698] sm:$0xff]
  %v229 = vld [vmem:[%s1 + $0x6a0] sm:$0xff]
  %v230 = vld [vmem:[%s1 + $0x6a8] sm:$0xff]
  %v231 = vld [vmem:[%s1 + $0x6b0] sm:$0xff]
  %v232 = vld [vmem:[%s1 + $0x6b8] sm:$0xff]
  %v233 = vld [vmem:[%s1 + $0x6c0] sm:$0xff]
  %v234 = vld [vmem:[%s1 + $0x6c8] sm:$0xff]
  %v235 = vld [vmem:[%s1 + $0x6d0] sm:$0xff]
  %v236 = vld [vmem:[%s1 + $0x6d8] sm:$0xff]
  %v237 = vld [vmem:[%s1 + $0x6e0] sm:$0xff]
  %v238 = vld [vmem:[%s1 + $0x6e8] sm:$0xff]
  %v239 = vld [vmem:[%s1 + $0x6f0] sm:$0xff]
  %v240 = vld [vmem:[%s1 + $0x6f8] sm:$0xff]
  %v241 = vld [vmem:[%s1 + $0x700] sm:$0xff]
  %v242 = vld [vmem:[%s1 + $0x708] sm:$0xff]
  %v243 = vld [vmem:[%s1 + $0x710] sm:$0xff]
  %v244 = vld [vmem:[%s1 + $0x718] sm:$0xff]
  %v245 = vld [vmem:[%s1 + $0x720] sm:$0xff]
  %v246 = vld [vmem:[%s1 + $0x728] sm:$0xff]
  %v247 = vld [vmem:[%s1 + $0x730] sm:$0xff]
  %v248 = vld [vmem:[%s1 + $0x738] sm:$0xff]
  %v249 = vld [vmem:[%s1 + $0x740] sm:$0xff]
  %v250 = vld [vmem:[%s1 + $0x748] sm:$0xff]
  %v251 = vld [vmem:[%s1 + $0x750] sm:$0xff]
  %v252 = vld [vmem:[%s1 + $0x758] sm:$0xff]
  %v253 = vld [vmem:[%s1 + $0x760] sm:$0xff]
  %v254 = vld [vmem:[%s1 + $0x768] sm:$0xff]
  %v255 = vld [vmem:[%s1 + $0x770] sm:$0xff]
  %v256 = vld [vmem:[%s1 + $0x778] sm:$0xff]
  %v257 = vld [vmem:[%s1 + $0x780] sm:$0xff]
  %v258 = vld [vmem:[%s1 + $0x788] sm:$0xff]
  %v259 = vld [vmem:[%s1 + $0x790] sm:$0xff]
  %v260 = vld [vmem:[%s1 + $0x798] sm:$0xff]
  %v261 = vld [vmem:[%s1 + $0x7a0] sm:$0xff]
  %v262 = vld [vmem:[%s1 + $0x7a8] sm:$0xff]
  %v263 = vld [vmem:[%s1 + $0x7b0] sm:$0xff]
  %v264 = vld [vmem:[%s1 + $0x7b8] sm:$0xff]
  %v265 = vld [vmem:[%s1 + $0x7c0] sm:$0xff]
  %v266 = vld [vmem:[%s1 + $0x7c8] sm:$0xff]
  %v267 = vld [vmem:[%s1 + $0x7d0] sm:$0xff]
  %v268 = vld [vmem:[%s1 + $0x7d8] sm:$0xff]
  %v269 = vld [vmem:[%s1 + $0x7e0] sm:$0xff]
  %v270 = vld [vmem:[%s1 + $0x7e8] sm:$0xff]
  %v271 = vld [vmem:[%s1 + $0x7f0] sm:$0xff]
  %v272 = vld [vmem:[%s1 + $0x7f8] sm:$0xff]
  %v273 = vld [vmem:[%s1 + $0x800] sm:$0xff]
  %v274 = vld [vmem:[%s1 + $0x808] sm:$0xff]
  %v275 = vld [vmem:[%s1 + $0x810] sm:$0xff]
  %v276 = vld [vmem:[%s1 + $0x818] sm:$0xff]
  %v277 = vld [vmem:[%s1 + $0x820] sm:$0xff]
  %v278 = vld [vmem:[%s1 + $0x828] sm:$0xff]
  %v279 = vld [vmem:[%s1 + $0x830] sm:$0xff]
  %v280 = vld [vmem:[%s1 + $0x838] sm:$0xff]
  %v281 = vld [vmem:[%s1 + $0x840] sm:$0xff]
  %v282 = vld [vmem:[%s1 + $0x848] sm:$0xff]
  %v283 = vld [vmem:[%s1 + $0x850] sm:$0xff]
  %v284 = vld [vmem:[%s1 + $0x858] sm:$0xff]
  %v285 = vld [vmem:[%s1 + $0x860] sm:$0xff]
  %v286 = vld [vmem:[%s1 + $0x868] sm:$0xff]
  %v287 = vld [vmem:[%s1 + $0x870] sm:$0xff]
  %v288 = vld [vmem:[%s1 + $0x878] sm:$0xff]
  %v289 = vld [vmem:[%s1 + $0x880] sm:$0xff]
  %v290 = vld [vmem:[%s1 + $0x888] sm:$0xff]
  %v291 = vld [vmem:[%s1 + $0x890] sm:$0xff]
  %v292 = vld [vmem:[%s1 + $0x898] sm:$0xff]
  %v293 = vld [vmem:[%s1 + $0x8a0] sm:$0xff]
  %v294 = vld [vmem:[%s1 + $0x8a8] sm:$0xff]
  %v295 = vld [vmem:[%s1 + $0x8b0] sm:$0xff]
  %v296 = vld [vmem:[%s1 + $0x8b8] sm:$0xff]
  %v297 = vld [vmem:[%s1 + $0x8c0] sm:$0xff]
  %v298 = vld [vmem:[%s1 + $0x8c8] sm:$0xff]
  %v299 = vld [vmem:[%s1 + $0x8d0] sm:$0xff]
  %v300 = vld [vmem:[%s1 + $0x8d8] sm:$0xff]
  %v301 = vld [vmem:[%s1 + $0x8e0] sm:$0xff]
  %v302 = vld [vmem:[%s1 + $0x8e8] sm:$0xff]
  %v303 = vld [vmem:[%s1 + $0x8f0] sm:$0xff]
  %v304 = vld [vmem:[%s1 + $0x8f8] sm:$0xff]
  %v305 = vld [vmem:[%s1 + $0x900] sm:$0xff]
  %v306 = vld [vmem:[%s1 + $0x908] sm:$0xff]
  %v307 = vld [vmem:[%s1 + $0x910] sm:$0xff]
  %v308 = vld [vmem:[%s1 + $0x918] sm:$0xff]
  %v309 = vld [vmem:[%s1 + $0x920] sm:$0xff]
  %v310 = vld [vmem:[%s1 + $0x928] sm:$0xff]
  %v311 = vld [vmem:[%s1 + $0x930] sm:$0xff]
  %v312 = vld [vmem:[%s1 + $0x938] sm:$0xff]
  %v313 = vld [vmem:[%s1 + $0x940] sm:$0xff]
  %v314 = vld [vmem:[%s1 + $0x948] sm:$0xff]
  %v315 = vld [vmem:[%s1 + $0x950] sm:$0xff]
  %v316 = vld [vmem:[%s1 + $0x958] sm:$0xff]
  %v317 = vld [vmem:[%s1 + $0x960] sm:$0xff]
  %v318 = vld [vmem:[%s1 + $0x968] sm:$0xff]
  %v319 = vld [vmem:[%s1 + $0x970] sm:$0xff]
  %v320 = vld [vmem:[%s1 + $0x978] sm:$0xff]
  %v321 = vld [vmem:[%s1 + $0x980] sm:$0xff]
  %v322 = vld [vmem:[%s1 + $0x988] sm:$0xff]
  %v323 = vld [vmem:[%s1 + $0x990] sm:$0xff]
  %v324 = vld [vmem:[%s1 + $0x998] sm:$0xff]
  %v325 = vld [vmem:[%s1 + $0x9a0] sm:$0xff]
  %v326 = vld [vmem:[%s1 + $0x9a8] sm:$0xff]
  %v327 = vld [vmem:[%s1 + $0x9b0] sm:$0xff]
  %v328 = vld [vmem:[%s1 + $0x9b8] sm:$0xff]
  %v329 = vld [vmem:[%s1 + $0x9c0] sm:$0xff]
  %v330 = vld [vmem:[%s1 + $0x9c8] sm:$0xff]
  %v331 = vld [vmem:[%s1 + $0x9d0] sm:$0xff]
  %v332 = vld [vmem:[%s1 + $0x9d8] sm:$0xff]
  %v333 = vld [vmem:[%s1 + $0x9e0] sm:$0xff]
  %v334 = vld [vmem:[%s1 + $0x9e8] sm:$0xff]
  %v335 = vld [vmem:[%s1 + $0x9f0] sm:$0xff]
  %v336 = vld [vmem:[%s1 + $0x9f8] sm:$0xff]
  %v337 = vld [vmem:[%s1 + $0xa00] sm:$0xff]
  %v338 = vld [vmem:[%s1 + $0xa08] sm:$0xff]
  %v339 = vld [vmem:[%s1 + $0xa10] sm:$0xff]
  %v340 = vld [vmem:[%s1 + $0xa18] sm:$0xff]
  %v341 = vld [vmem:[%s1 + $0xa20] sm:$0xff]
  %v342 = vld [vmem:[%s1 + $0xa28] sm:$0xff]
  %v343 = vld [vmem:[%s1 + $0xa30] sm:$0xff]
  %v344 = vld [vmem:[%s1 + $0xa38] sm:$0xff]
  %v345 = vld [vmem:[%s1 + $0xa40] sm:$0xff]
  %v346 = vld [vmem:[%s1 + $0xa48] sm:$0xff]
  %v347 = vld [vmem:[%s1 + $0xa50] sm:$0xff]
  %v348 = vld [vmem:[%s1 + $0xa58] sm:$0xff]
  %v349 = vld [vmem:[%s1 + $0xa60] sm:$0xff]
  %v350 = vld [vmem:[%s1 + $0xa68] sm:$0xff]
  %v351 = vld [vmem:[%s1 + $0xa70] sm:$0xff]
  %v352 = vld [vmem:[%s1 + $0xa78] sm:$0xff]
  %v353 = vld [vmem:[%s1 + $0xa80] sm:$0xff]
  %v354 = vld [vmem:[%s1 + $0xa88] sm:$0xff]
  %v355 = vld [vmem:[%s1 + $0xa90] sm:$0xff]
  %v356 = vld [vmem:[%s1 + $0xa98] sm:$0xff]
  %v357 = vld [vmem:[%s1 + $0xaa0] sm:$0xff]
  %v358 = vld [vmem:[%s1 + $0xaa8] sm:$0xff]
  %v359 = vld [vmem:[%s1 + $0xab0] sm:$0xff]
  %v360 = vld [vmem:[%s1 + $0xab8] sm:$0xff]
  %v361 = vld [vmem:[%s1 + $0xac0] sm:$0xff]
  %v362 = vld [vmem:[%s1 + $0xac8] sm:$0xff]
  %v363 = vld [vmem:[%s1 + $0xad0] sm:$0xff]
  %v364 = vld [vmem:[%s1 + $0xad8] sm:$0xff]
  %v365 = vld [vmem:[%s1 + $0xae0] sm:$0xff]
  %v366 = vld [vmem:[%s1 + $0xae8] sm:$0xff]
  %v367 = vld [vmem:[%s1 + $0xaf0] sm:$0xff]
  %v368 = vld [vmem:[%s1 + $0xaf8] sm:$0xff]
  %v369 = vld [vmem:[%s1 + $0xb00] sm:$0xff]
  %v370 = vld [vmem:[%s1 + $0xb08] sm:$0xff]
  %v371 = vld [vmem:[%s1 + $0xb10] sm:$0xff]
  %v372 = vld [vmem:[%s1 + $0xb18] sm:$0xff]
  %v373 = vld [vmem:[%s1 + $0xb20] sm:$0xff]
  %v374 = vld [vmem:[%s1 + $0xb28] sm:$0xff]
  %v375 = vld [vmem:[%s1 + $0xb30] sm:$0xff]
  %v376 = vld [vmem:[%s1 + $0xb38] sm:$0xff]
  %v377 = vld [vmem:[%s1 + $0xb40] sm:$0xff]
  %v378 = vld [vmem:[%s1 + $0xb48] sm:$0xff]
  %v379 = vld [vmem:[%s1 + $0xb50] sm:$0xff]
  %v380 = vld [vmem:[%s1 + $0xb58] sm:$0xff]
  %v381 = vld [vmem:[%s1 + $0xb60] sm:$0xff]
  %v382 = vld [vmem:[%s1 + $0xb68] sm:$0xff]
  %v383 = vld [vmem:[%s1 + $0xb70] sm:$0xff]
  %v384 = vld [vmem:[%s1 + $0xb78] sm:$0xff]
  %v385 = vld [vmem:[%s1 + $0xb80] sm:$0xff]
  %v386 = vld [vmem:[%s1 + $0xb88] sm:$0xff]
  %v387 = vld [vmem:[%s1 + $0xb90] sm:$0xff]
  %v388 = vld [vmem:[%s1 + $0xb98] sm:$0xff]
  %v389 = vld [vmem:[%s1 + $0xba0] sm:$0xff]
  %v390 = vld [vmem:[%s1 + $0xba8] sm:$0xff]
  %v391 = vld [vmem:[%s1 + $0xbb0] sm:$0xff]
  %v392 = vld [vmem:[%s1 + $0xbb8] sm:$0xff]
  %v393 = vld [vmem:[%s1 + $0xbc0] sm:$0xff]
  %v394 = vld [vmem:[%s1 + $0xbc8] sm:$0xff]
  %v395 = vld [vmem:[%s1 + $0xbd0] sm:$0xff]
  %v396 = vld [vmem:[%s1 + $0xbd8] sm:$0xff]
  %v397 = vld [vmem:[%s1 + $0xbe0] sm:$0xff]
  %v398 = vld [vmem:[%s1 + $0xbe8] sm:$0xff]
  %v399 = vld [vmem:[%s1 + $0xbf0] sm:$0xff]
  %v400 = vld [vmem:[%s1 + $0xbf8] sm:$0xff]
  %v401 = vld [vmem:[%s1 + $0xc00] sm:$0xff]
  %v402 = vld [vmem:[%s1 + $0xc08] sm:$0xff]
  %v403 = vld [vmem:[%s1 + $0xc10] sm:$0xff]
  %v404 = vld [vmem:[%s1 + $0xc18] sm:$0xff]
  %v405 = vld [vmem:[%s1 + $0xc20] sm:$0xff]
  %v406 = vld [vmem:[%s1 + $0xc28] sm:$0xff]
  %v407 = vld [vmem:[%s1 + $0xc30] sm:$0xff]
  %v408 = vld [vmem:[%s1 + $0xc38] sm:$0xff]
  %v409 = vld [vmem:[%s1 + $0xc40] sm:$0xff]
  %v410 = vld [vmem:[%s1 + $0xc48] sm:$0xff]
  %v411 = vld [vmem:[%s1 + $0xc50] sm:$0xff]
  %v412 = vld [vmem:[%s1 + $0xc58] sm:$0xff]
  %v413 = vld [vmem:[%s1 + $0xc60] sm:$0xff]
  %v414 = vld [vmem:[%s1 + $0xc68] sm:$0xff]
  %v415 = vld [vmem:[%s1 + $0xc70] sm:$0xff]
  %v416 = vld [vmem:[%s1 + $0xc78] sm:$0xff]
  %v417 = vld [vmem:[%s1 + $0xc80] sm:$0xff]
  %v418 = vld [vmem:[%s1 + $0xc88] sm:$0xff]
  %v419 = vld [vmem:[%s1 + $0xc90] sm:$0xff]
  %v420 = vld [vmem:[%s1 + $0xc98] sm:$0xff]
  %v421 = vld [vmem:[%s1 + $0xca0] sm:$0xff]
  %v422 = vld [vmem:[%s1 + $0xca8] sm:$0xff]
  %v423 = vld [vmem:[%s1 + $0xcb0] sm:$0xff]
  %v424 = vld [vmem:[%s1 + $0xcb8] sm:$0xff]
  %v425 = vld [vmem:[%s1 + $0xcc0] sm:$0xff]
  %v426 = vld [vmem:[%s1 + $0xcc8] sm:$0xff]
  %v427 = vld [vmem:[%s1 + $0xcd0] sm:$0xff]
  %v428 = vld [vmem:[%s1 + $0xcd8] sm:$0xff]
  %v429 = vld [vmem:[%s1 + $0xce0] sm:$0xff]
  %v430 = vld [vmem:[%s1 + $0xce8] sm:$0xff]
  %v431 = vld [vmem:[%s1 + $0xcf0] sm:$0xff]
  %v432 = vld [vmem:[%s1 + $0xcf8] sm:$0xff]
  %v433 = vld [vmem:[%s1 + $0xd00] sm:$0xff]
  %v434 = vld [vmem:[%s1 + $0xd08] sm:$0xff]
  %v435 = vld [vmem:[%s1 + $0xd10] sm:$0xff]
  %v436 = vld [vmem:[%s1 + $0xd18] sm:$0xff]
  %v437 = vld [vmem:[%s1 + $0xd20] sm:$0xff]
  %v438 = vld [vmem:[%s1 + $0xd28] sm:$0xff]
  %v439 = vld [vmem:[%s1 + $0xd30] sm:$0xff]
  %v440 = vld [vmem:[%s1 + $0xd38] sm:$0xff]
  %v441 = vld [vmem:[%s1 + $0xd40] sm:$0xff]
  %v442 = vld [vmem:[%s1 + $0xd48] sm:$0xff]
  %v443 = vld [vmem:[%s1 + $0xd50] sm:$0xff]
  %v444 = vld [vmem:[%s1 + $0xd58] sm:$0xff]
  %v445 = vld [vmem:[%s1 + $0xd60] sm:$0xff]
  %v446 = vld [vmem:[%s1 + $0xd68] sm:$0xff]
  %v447 = vld [vmem:[%s1 + $0xd70] sm:$0xff]
  %v448 = vld [vmem:[%s1 + $0xd78] sm:$0xff]
  %v449 = vld [vmem:[%s1 + $0xd80] sm:$0xff]
  %v450 = vld [vmem:[%s1 + $0xd88] sm:$0xff]
  %v451 = vld [vmem:[%s1 + $0xd90] sm:$0xff]
  %v452 = vld [vmem:[%s1 + $0xd98] sm:$0xff]
  %v453 = vld [vmem:[%s1 + $0xda0] sm:$0xff]
  %v454 = vld [vmem:[%s1 + $0xda8] sm:$0xff]
  %v455 = vld [vmem:[%s1 + $0xdb0] sm:$0xff]
  %v456 = vld [vmem:[%s1 + $0xdb8] sm:$0xff]
  %v457 = vld [vmem:[%s1 + $0xdc0] sm:$0xff]
  %v458 = vld [vmem:[%s1 + $0xdc8] sm:$0xff]
  %v459 = vld [vmem:[%s1 + $0xdd0] sm:$0xff]
  %v460 = vld [vmem:[%s1 + $0xdd8] sm:$0xff]
  %v461 = vld [vmem:[%s1 + $0xde0] sm:$0xff]
  %v462 = vld [vmem:[%s1 + $0xde8] sm:$0xff]
  %v463 = vld [vmem:[%s1 + $0xdf0] sm:$0xff]
  %v464 = vld [vmem:[%s1 + $0xdf8] sm:$0xff]
  %v465 = vld [vmem:[%s1 + $0xe00] sm:$0xff]
  %v466 = vld [vmem:[%s1 + $0xe08] sm:$0xff]
  %v467 = vld [vmem:[%s1 + $0xe10] sm:$0xff]
  %v468 = vld [vmem:[%s1 + $0xe18] sm:$0xff]
  %v469 = vld [vmem:[%s1 + $0xe20] sm:$0xff]
  %v470 = vld [vmem:[%s1 + $0xe28] sm:$0xff]
  %v471 = vld [vmem:[%s1 + $0xe30] sm:$0xff]
  %v472 = vld [vmem:[%s1 + $0xe38] sm:$0xff]
  %v473 = vld [vmem:[%s1 + $0xe40] sm:$0xff]
  %v474 = vld [vmem:[%s1 + $0xe48] sm:$0xff]
  %v475 = vld [vmem:[%s1 + $0xe50] sm:$0xff]
  %v476 = vld [vmem:[%s1 + $0xe58] sm:$0xff]
  %v477 = vld [vmem:[%s1 + $0xe60] sm:$0xff]
  %v478 = vld [vmem:[%s1 + $0xe68] sm:$0xff]
  %v479 = vld [vmem:[%s1 + $0xe70] sm:$0xff]
  %v480 = vld [vmem:[%s1 + $0xe78] sm:$0xff]
  %v481 = vld [vmem:[%s1 + $0xe80] sm:$0xff]
  %v482 = vld [vmem:[%s1 + $0xe88] sm:$0xff]
  %v483 = vld [vmem:[%s1 + $0xe90] sm:$0xff]
  %v484 = vld [vmem:[%s1 + $0xe98] sm:$0xff]
  %v485 = vld [vmem:[%s1 + $0xea0] sm:$0xff]
  %v486 = vld [vmem:[%s1 + $0xea8] sm:$0xff]
  %v487 = vld [vmem:[%s1 + $0xeb0] sm:$0xff]
  %v488 = vld [vmem:[%s1 + $0xeb8] sm:$0xff]
  %v489 = vld [vmem:[%s1 + $0xec0] sm:$0xff]
  %v490 = vld [vmem:[%s1 + $0xec8] sm:$0xff]
  %v491 = vld [vmem:[%s1 + $0xed0] sm:$0xff]
  %v492 = vld [vmem:[%s1 + $0xed8] sm:$0xff]
  %v493 = vld [vmem:[%s1 + $0xee0] sm:$0xff]
  %v494 = vld [vmem:[%s1 + $0xee8] sm:$0xff]
  %v495 = vld [vmem:[%s1 + $0xef0] sm:$0xff]
  %v496 = vld [vmem:[%s1 + $0xef8] sm:$0xff]
  %v497 = vld [vmem:[%s1 + $0xf00] sm:$0xff]
  %v498 = vld [vmem:[%s1 + $0xf08] sm:$0xff]
  %v499 = vld [vmem:[%s1 + $0xf10] sm:$0xff]
  %v500 = vld [vmem:[%s1 + $0xf18] sm:$0xff]
  %v501 = vld [vmem:[%s1 + $0xf20] sm:$0xff]
  %v502 = vld [vmem:[%s1 + $0xf28] sm:$0xff]
  %v503 = vld [vmem:[%s1 + $0xf30] sm:$0xff]
  %v504 = vld [vmem:[%s1 + $0xf38] sm:$0xff]
  %v505 = vld [vmem:[%s1 + $0xf40] sm:$0xff]
  %v506 = vld [vmem:[%s1 + $0xf48] sm:$0xff]
  %v507 = vld [vmem:[%s1 + $0xf50] sm:$0xff]
  %v508 = vld [vmem:[%s1 + $0xf58] sm:$0xff]
  %v509 = vld [vmem:[%s1 + $0xf60] sm:$0xff]
  %v510 = vld [vmem:[%s1 + $0xf68] sm:$0xff]
  %v511 = vld [vmem:[%s1 + $0xf70] sm:$0xff]
  %v512 = vld [vmem:[%s1 + $0xf78] sm:$0xff]
  %v513 = vld [vmem:[%s1 + $0xf80] sm:$0xff]
  %v514 = vld [vmem:[%s1 + $0xf88] sm:$0xff]
  %v515 = vld [vmem:[%s1 + $0xf90] sm:$0xff]
  %v516 = vld [vmem:[%s1 + $0xf98] sm:$0xff]
  %v517 = vld [vmem:[%s1 + $0xfa0] sm:$0xff]
  %v518 = vld [vmem:[%s1 + $0xfa8] sm:$0xff]
  %v519 = vld [vmem:[%s1 + $0xfb0] sm:$0xff]
  %v520 = vld [vmem:[%s1 + $0xfb8] sm:$0xff]
  %v521 = vld [vmem:[%s1 + $0xfc0] sm:$0xff]
  %v522 = vld [vmem:[%s1 + $0xfc8] sm:$0xff]
  %v523 = vld [vmem:[%s1 + $0xfd0] sm:$0xff]
  %v524 = vld [vmem:[%s1 + $0xfd8] sm:$0xff]
  %v525 = vld [vmem:[%s1 + $0xfe0] sm:$0xff]
  %v526 = vld [vmem:[%s1 + $0xfe8] sm:$0xff]
  %v527 = vld [vmem:[%s1 + $0xff0] sm:$0xff]
  %v528 = vld [vmem:[%s1 + $0xff8] sm:$0xff]
  %v529 = vld [vmem:[%s1 + $0x1000] sm:$0xff]
  %v530 = vld [vmem:[%s1 + $0x1008] sm:$0xff]
  %v531 = vld [vmem:[%s1 + $0x1010] sm:$0xff]
  %v532 = vld [vmem:[%s1 + $0x1018] sm:$0xff]
  %v533 = vld [vmem:[%s1 + $0x1020] sm:$0xff]
  %v534 = vld [vmem:[%s1 + $0x1028] sm:$0xff]
  %v535 = vld [vmem:[%s1 + $0x1030] sm:$0xff]
  %v536 = vld [vmem:[%s1 + $0x1038] sm:$0xff]
  %v537 = vld [vmem:[%s1 + $0x1040] sm:$0xff]
  %v538 = vld [vmem:[%s1 + $0x1048] sm:$0xff]
  %v539 = vld [vmem:[%s1 + $0x1050] sm:$0xff]
  %v540 = vld [vmem:[%s1 + $0x1058] sm:$0xff]
  %v541 = vld [vmem:[%s1 + $0x1060] sm:$0xff]
  %v542 = vld [vmem:[%s1 + $0x1068] sm:$0xff]
  %v543 = vld [vmem:[%s1 + $0x1070] sm:$0xff]
  %v544 = vld [vmem:[%s1 + $0x1078] sm:$0xff]
  %v545 = vld [vmem:[%s1 + $0x1080] sm:$0xff]
  %v546 = vld [vmem:[%s1 + $0x1088] sm:$0xff]
  %v547 = vld [vmem:[%s1 + $0x1090] sm:$0xff]
  %v548 = vld [vmem:[%s1 + $0x1098] sm:$0xff]
  %v549 = vld [vmem:[%s1 + $0x10a0] sm:$0xff]
  %v550 = vld [vmem:[%s1 + $0x10a8] sm:$0xff]
  %v551 = vld [vmem:[%s1 + $0x10b0] sm:$0xff]
  %v552 = vld [vmem:[%s1 + $0x10b8] sm:$0xff]
  %v553 = vld [vmem:[%s1 + $0x10c0] sm:$0xff]
  %v554 = vld [vmem:[%s1 + $0x10c8] sm:$0xff]
  %v555 = vld [vmem:[%s1 + $0x10d0] sm:$0xff]
  %v556 = vld [vmem:[%s1 + $0x10d8] sm:$0xff]
  %v557 = vld [vmem:[%s1 + $0x10e0] sm:$0xff]
  %v558 = vld [vmem:[%s1 + $0x10e8] sm:$0xff]
  %v559 = vld [vmem:[%s1 + $0x10f0] sm:$0xff]
  %v560 = vld [vmem:[%s1 + $0x10f8] sm:$0xff]
  %v561 = vld [vmem:[%s1 + $0x1100] sm:$0xff]
  %v562 = vld [vmem:[%s1 + $0x1108] sm:$0xff]
  %v563 = vld [vmem:[%s1 + $0x1110] sm:$0xff]
  %v564 = vld [vmem:[%s1 + $0x1118] sm:$0xff]
  %v565 = vld [vmem:[%s1 + $0x1120] sm:$0xff]
  %v566 = vld [vmem:[%s1 + $0x1128] sm:$0xff]
  %v567 = vld [vmem:[%s1 + $0x1130] sm:$0xff]
  %v568 = vld [vmem:[%s1 + $0x1138] sm:$0xff]
  %v569 = vld [vmem:[%s1 + $0x1140] sm:$0xff]
  %v570 = vld [vmem:[%s1 + $0x1148] sm:$0xff]
  %v571 = vld [vmem:[%s1 + $0x1150] sm:$0xff]
  %v572 = vld [vmem:[%s1 + $0x1158] sm:$0xff]
  %v573 = vld [vmem:[%s1 + $0x1160] sm:$0xff]
  %v574 = vld [vmem:[%s1 + $0x1168] sm:$0xff]
  %v575 = vld [vmem:[%s1 + $0x1170] sm:$0xff]
  %v576 = vld [vmem:[%s1 + $0x1178] sm:$0xff]
  %v577 = vld [vmem:[%s1 + $0x1180] sm:$0xff]
  %v578 = vld [vmem:[%s1 + $0x1188] sm:$0xff]
  %v579 = vld [vmem:[%s1 + $0x1190] sm:$0xff]
  %v580 = vld [vmem:[%s1 + $0x1198] sm:$0xff]
  %v581 = vld [vmem:[%s1 + $0x11a0] sm:$0xff]
  %v582 = vld [vmem:[%s1 + $0x11a8] sm:$0xff]
  %v583 = vld [vmem:[%s1 + $0x11b0] sm:$0xff]
  %v584 = vld [vmem:[%s1 + $0x11b8] sm:$0xff]
  %v585 = vld [vmem:[%s1 + $0x11c0] sm:$0xff]
  %v586 = vld [vmem:[%s1 + $0x11c8] sm:$0xff]
  %v587 = vld [vmem:[%s1 + $0x11d0] sm:$0xff]
  %v588 = vld [vmem:[%s1 + $0x11d8] sm:$0xff]
  %v589 = vld [vmem:[%s1 + $0x11e0] sm:$0xff]
  %v590 = vld [vmem:[%s1 + $0x11e8] sm:$0xff]
  %v591 = vld [vmem:[%s1 + $0x11f0] sm:$0xff]
  %v592 = vld [vmem:[%s1 + $0x11f8] sm:$0xff]
  %v593 = vld [vmem:[%s2] sm:$0xf]
  %v595 = vlaneseq
  %v596 = vshrl.u32 %v595, 7
  %v597 = vsub.s32 0, %v596
  %v598 = vrot.slane %v593, %v597
  %v599 = vlaneseq
  %v600 = vshrl.u32 %v599, 7
  %v601 = vsub.s32 1, %v600
  %v602 = vrot.slane %v593, %v601
  %v603 = vlaneseq
  %v604 = vshrl.u32 %v603, 7
  %v605 = vsub.s32 2, %v604
  %v606 = vrot.slane %v593, %v605
  %v607 = vlaneseq
  %v608 = vshrl.u32 %v607, 7
  %v609 = vsub.s32 3, %v608
  %v610 = vrot.slane %v593, %v609
  %v618 = vcombine.high %v14, %v14
  %v620 = vunpack.c.l.s4 1966171168
  %v621 = vunpack.c.0.s8 %v620
  %v622 = vlaneseq
  %v623 = vshrl.u32 %v622, 7
  %v624 = vsub.s32 %v621, %v623
  %v625 = vrot.slane %v14, %v624
  %v627 = vunpack.c.l.s4 1966171168
  %v628 = vunpack.c.0.s8 %v627
  %v629 = vlaneseq
  %v630 = vshrl.u32 %v629, 7
  %v631 = vsub.s32 %v628, %v630
  %v632 = vrot.slane %v618, %v631
  %v633 = vcombine.high %v625, %v625
  %v634 = vcombine.high %v632, %v632
  %v636 = vunpack.c.l.s4 1966171168
  %v637 = vunpack.c.0.s8 %v636
  %v638 = vlaneseq
  %v639 = vshrl.u32 %v638, 7
  %v640 = vsub.s32 %v637, %v639
  %v641 = vrot.slane %v625, %v640
  %v643 = vunpack.c.l.s4 1966171168
  %v644 = vunpack.c.0.s8 %v643
  %v645 = vlaneseq
  %v646 = vshrl.u32 %v645, 7
  %v647 = vsub.s32 %v644, %v646
  %v648 = vrot.slane %v632, %v647
  %v650 = vunpack.c.l.s4 1966171168
  %v651 = vunpack.c.0.s8 %v650
  %v652 = vlaneseq
  %v653 = vshrl.u32 %v652, 7
  %v654 = vsub.s32 %v651, %v653
  %v655 = vrot.slane %v633, %v654
  %v657 = vunpack.c.l.s4 1966171168
  %v658 = vunpack.c.0.s8 %v657
  %v659 = vlaneseq
  %v660 = vshrl.u32 %v659, 7
  %v661 = vsub.s32 %v658, %v660
  %v662 = vrot.slane %v634, %v661
  %v663 = vcombine.high %v641, %v641
  %v664 = vcombine.high %v648, %v648
  %v665 = vcombine.high %v655, %v655
  %v666 = vcombine.high %v662, %v662
  %v667 = vcombine.high %v15, %v15
  %v669 = vunpack.c.l.s4 1966171168
  %v670 = vunpack.c.0.s8 %v669
  %v671 = vlaneseq
  %v672 = vshrl.u32 %v671, 7
  %v673 = vsub.s32 %v670, %v672
  %v674 = vrot.slane %v15, %v673
  %v676 = vunpack.c.l.s4 1966171168
  %v677 = vunpack.c.0.s8 %v676
  %v678 = vlaneseq
  %v679 = vshrl.u32 %v678, 7
  %v680 = vsub.s32 %v677, %v679
  %v681 = vrot.slane %v667, %v680
  %v682 = vcombine.high %v674, %v674
  %v683 = vcombine.high %v681, %v681
  %v685 = vunpack.c.l.s4 1966171168
  %v686 = vunpack.c.0.s8 %v685
  %v687 = vlaneseq
  %v688 = vshrl.u32 %v687, 7
  %v689 = vsub.s32 %v686, %v688
  %v690 = vrot.slane %v674, %v689
  %v692 = vunpack.c.l.s4 1966171168
  %v693 = vunpack.c.0.s8 %v692
  %v694 = vlaneseq
  %v695 = vshrl.u32 %v694, 7
  %v696 = vsub.s32 %v693, %v695
  %v697 = vrot.slane %v681, %v696
  %v699 = vunpack.c.l.s4 1966171168
  %v700 = vunpack.c.0.s8 %v699
  %v701 = vlaneseq
  %v702 = vshrl.u32 %v701, 7
  %v703 = vsub.s32 %v700, %v702
  %v704 = vrot.slane %v682, %v703
  %v706 = vunpack.c.l.s4 1966171168
  %v707 = vunpack.c.0.s8 %v706
  %v708 = vlaneseq
  %v709 = vshrl.u32 %v708, 7
  %v710 = vsub.s32 %v707, %v709
  %v711 = vrot.slane %v683, %v710
  %v712 = vcombine.high %v690, %v690
  %v713 = vcombine.high %v697, %v697
  %v714 = vcombine.high %v704, %v704
  %v715 = vcombine.high %v711, %v711
  %v717 = vunpack.c.l.s4 1966171168
  %v718 = vunpack.c.0.s8 %v717
  %v719 = vlaneseq
  %v720 = vshrl.u32 %v719, 7
  %v721 = vsub.s32 %v718, %v720
  %v722 = vrot.slane %v16, %v721
  %v723 = vcombine.high %v722, %v722
  %v725 = vunpack.c.l.s4 1966171168
  %v726 = vunpack.c.0.s8 %v725
  %v727 = vlaneseq
  %v728 = vshrl.u32 %v727, 7
  %v729 = vsub.s32 %v726, %v728
  %v730 = vrot.slane %v722, %v729
  %v732 = vunpack.c.l.s4 1966171168
  %v733 = vunpack.c.0.s8 %v732
  %v734 = vlaneseq
  %v735 = vshrl.u32 %v734, 7
  %v736 = vsub.s32 %v733, %v735
  %v737 = vrot.slane %v723, %v736
  %v1332 = vunpack.c.l.b16 %v17
  %v1333 = vunpack.c.h.b16 %v17
  %v1334 = vunpack.c.l.b16 %v18
  %v1335 = vunpack.c.h.b16 %v18
  %v1336 = vunpack.c.l.b16 %v19
  %v1337 = vunpack.c.h.b16 %v19
  %v1338 = vunpack.c.l.b16 %v20
  %v1339 = vunpack.c.h.b16 %v20
  %v1340 = vunpack.c.l.b16 %v21
  %v1341 = vunpack.c.h.b16 %v21
  %v1342 = vunpack.c.l.b16 %v22
  %v1343 = vunpack.c.h.b16 %v22
  %v1344 = vunpack.c.l.b16 %v23
  %v1345 = vunpack.c.h.b16 %v23
  %v1346 = vunpack.c.l.b16 %v24
  %v1347 = vunpack.c.h.b16 %v24
  %v1348 = vunpack.c.l.b16 %v25
  %v1349 = vunpack.c.h.b16 %v25
  %v1350 = vunpack.c.l.b16 %v26
  %v1351 = vunpack.c.h.b16 %v26
  %v1352 = vunpack.c.l.b16 %v27
  %v1353 = vunpack.c.h.b16 %v27
  %v1354 = vunpack.c.l.b16 %v28
  %v1355 = vunpack.c.h.b16 %v28
  %v1356 = vunpack.c.l.b16 %v29
  %v1357 = vunpack.c.h.b16 %v29
  %v1358 = vunpack.c.l.b16 %v30
  %v1359 = vunpack.c.h.b16 %v30
  %v1360 = vunpack.c.l.b16 %v31
  %v1361 = vunpack.c.h.b16 %v31
  %v1362 = vunpack.c.l.b16 %v32
  %v1363 = vunpack.c.h.b16 %v32
  %v1364 = vunpack.c.l.b16 %v33
  %v1365 = vunpack.c.h.b16 %v33
  %v1366 = vunpack.c.l.b16 %v34
  %v1367 = vunpack.c.h.b16 %v34
  %v1368 = vunpack.c.l.b16 %v35
  %v1369 = vunpack.c.h.b16 %v35
  %v1370 = vunpack.c.l.b16 %v36
  %v1371 = vunpack.c.h.b16 %v36
  %v1372 = vunpack.c.l.b16 %v37
  %v1373 = vunpack.c.h.b16 %v37
  %v1374 = vunpack.c.l.b16 %v38
  %v1375 = vunpack.c.h.b16 %v38
  %v1376 = vunpack.c.l.b16 %v39
  %v1377 = vunpack.c.h.b16 %v39
  %v1378 = vunpack.c.l.b16 %v40
  %v1379 = vunpack.c.h.b16 %v40
  %v1380 = vunpack.c.l.b16 %v41
  %v1381 = vunpack.c.h.b16 %v41
  %v1382 = vunpack.c.l.b16 %v42
  %v1383 = vunpack.c.h.b16 %v42
  %v1384 = vunpack.c.l.b16 %v43
  %v1385 = vunpack.c.h.b16 %v43
  %v1386 = vunpack.c.l.b16 %v44
  %v1387 = vunpack.c.h.b16 %v44
  %v1388 = vunpack.c.l.b16 %v45
  %v1389 = vunpack.c.h.b16 %v45
  %v1390 = vunpack.c.l.b16 %v46
  %v1391 = vunpack.c.h.b16 %v46
  %v1392 = vunpack.c.l.b16 %v47
  %v1393 = vunpack.c.h.b16 %v47
  %v1394 = vunpack.c.l.b16 %v48
  %v1395 = vunpack.c.h.b16 %v48
  %v1396 = vunpack.c.l.b16 %v49
  %v1397 = vunpack.c.h.b16 %v49
  %v1398 = vunpack.c.l.b16 %v50
  %v1399 = vunpack.c.h.b16 %v50
  %v1400 = vunpack.c.l.b16 %v51
  %v1401 = vunpack.c.h.b16 %v51
  %v1402 = vunpack.c.l.b16 %v52
  %v1403 = vunpack.c.h.b16 %v52
  %v1404 = vunpack.c.l.b16 %v53
  %v1405 = vunpack.c.h.b16 %v53
  %v1406 = vunpack.c.l.b16 %v54
  %v1407 = vunpack.c.h.b16 %v54
  %v1408 = vunpack.c.l.b16 %v55
  %v1409 = vunpack.c.h.b16 %v55
  %v1410 = vunpack.c.l.b16 %v56
  %v1411 = vunpack.c.h.b16 %v56
  %v1412 = vunpack.c.l.b16 %v57
  %v1413 = vunpack.c.h.b16 %v57
  %v1414 = vunpack.c.l.b16 %v58
  %v1415 = vunpack.c.h.b16 %v58
  %v1416 = vunpack.c.l.b16 %v59
  %v1417 = vunpack.c.h.b16 %v59
  %v1418 = vunpack.c.l.b16 %v60
  %v1419 = vunpack.c.h.b16 %v60
  %v1420 = vunpack.c.l.b16 %v61
  %v1421 = vunpack.c.h.b16 %v61
  %v1422 = vunpack.c.l.b16 %v62
  %v1423 = vunpack.c.h.b16 %v62
  %v1424 = vunpack.c.l.b16 %v63
  %v1425 = vunpack.c.h.b16 %v63
  %v1426 = vunpack.c.l.b16 %v64
  %v1427 = vunpack.c.h.b16 %v64
  %v1428 = vunpack.c.l.b16 %v65
  %v1429 = vunpack.c.h.b16 %v65
  %v1430 = vunpack.c.l.b16 %v66
  %v1431 = vunpack.c.h.b16 %v66
  %v1432 = vunpack.c.l.b16 %v67
  %v1433 = vunpack.c.h.b16 %v67
  %v1434 = vunpack.c.l.b16 %v68
  %v1435 = vunpack.c.h.b16 %v68
  %v1436 = vunpack.c.l.b16 %v69
  %v1437 = vunpack.c.h.b16 %v69
  %v1438 = vunpack.c.l.b16 %v70
  %v1439 = vunpack.c.h.b16 %v70
  %v1440 = vunpack.c.l.b16 %v71
  %v1441 = vunpack.c.h.b16 %v71
  %v1442 = vunpack.c.l.b16 %v72
  %v1443 = vunpack.c.h.b16 %v72
  %v1444 = vunpack.c.l.b16 %v73
  %v1445 = vunpack.c.h.b16 %v73
  %v1446 = vunpack.c.l.b16 %v74
  %v1447 = vunpack.c.h.b16 %v74
  %v1448 = vunpack.c.l.b16 %v75
  %v1449 = vunpack.c.h.b16 %v75
  %v1450 = vunpack.c.l.b16 %v76
  %v1451 = vunpack.c.h.b16 %v76
  %v1452 = vunpack.c.l.b16 %v77
  %v1453 = vunpack.c.h.b16 %v77
  %v1454 = vunpack.c.l.b16 %v78
  %v1455 = vunpack.c.h.b16 %v78
  %v1456 = vunpack.c.l.b16 %v79
  %v1457 = vunpack.c.h.b16 %v79
  %v1458 = vunpack.c.l.b16 %v80
  %v1459 = vunpack.c.h.b16 %v80
  %v1460 = vunpack.c.l.b16 %v81
  %v1461 = vunpack.c.h.b16 %v81
  %v1462 = vunpack.c.l.b16 %v82
  %v1463 = vunpack.c.h.b16 %v82
  %v1464 = vunpack.c.l.b16 %v83
  %v1465 = vunpack.c.h.b16 %v83
  %v1466 = vunpack.c.l.b16 %v84
  %v1467 = vunpack.c.h.b16 %v84
  %v1468 = vunpack.c.l.b16 %v85
  %v1469 = vunpack.c.h.b16 %v85
  %v1470 = vunpack.c.l.b16 %v86
  %v1471 = vunpack.c.h.b16 %v86
  %v1472 = vunpack.c.l.b16 %v87
  %v1473 = vunpack.c.h.b16 %v87
  %v1474 = vunpack.c.l.b16 %v88
  %v1475 = vunpack.c.h.b16 %v88
  %v1476 = vunpack.c.l.b16 %v89
  %v1477 = vunpack.c.h.b16 %v89
  %v1478 = vunpack.c.l.b16 %v90
  %v1479 = vunpack.c.h.b16 %v90
  %v1480 = vunpack.c.l.b16 %v91
  %v1481 = vunpack.c.h.b16 %v91
  %v1482 = vunpack.c.l.b16 %v92
  %v1483 = vunpack.c.h.b16 %v92
  %v1484 = vunpack.c.l.b16 %v93
  %v1485 = vunpack.c.h.b16 %v93
  %v1486 = vunpack.c.l.b16 %v94
  %v1487 = vunpack.c.h.b16 %v94
  %v1488 = vunpack.c.l.b16 %v95
  %v1489 = vunpack.c.h.b16 %v95
  %v1490 = vunpack.c.l.b16 %v96
  %v1491 = vunpack.c.h.b16 %v96
  %v1492 = vunpack.c.l.b16 %v97
  %v1493 = vunpack.c.h.b16 %v97
  %v1494 = vunpack.c.l.b16 %v98
  %v1495 = vunpack.c.h.b16 %v98
  %v1496 = vunpack.c.l.b16 %v99
  %v1497 = vunpack.c.h.b16 %v99
  %v1498 = vunpack.c.l.b16 %v100
  %v1499 = vunpack.c.h.b16 %v100
  %v1500 = vunpack.c.l.b16 %v101
  %v1501 = vunpack.c.h.b16 %v101
  %v1502 = vunpack.c.l.b16 %v102
  %v1503 = vunpack.c.h.b16 %v102
  %v1504 = vunpack.c.l.b16 %v103
  %v1505 = vunpack.c.h.b16 %v103
  %v1506 = vunpack.c.l.b16 %v104
  %v1507 = vunpack.c.h.b16 %v104
  %v1508 = vunpack.c.l.b16 %v105
  %v1509 = vunpack.c.h.b16 %v105
  %v1510 = vunpack.c.l.b16 %v106
  %v1511 = vunpack.c.h.b16 %v106
  %v1512 = vunpack.c.l.b16 %v107
  %v1513 = vunpack.c.h.b16 %v107
  %v1514 = vunpack.c.l.b16 %v108
  %v1515 = vunpack.c.h.b16 %v108
  %v1516 = vunpack.c.l.b16 %v109
  %v1517 = vunpack.c.h.b16 %v109
  %v1518 = vunpack.c.l.b16 %v110
  %v1519 = vunpack.c.h.b16 %v110
  %v1520 = vunpack.c.l.b16 %v111
  %v1521 = vunpack.c.h.b16 %v111
  %v1522 = vunpack.c.l.b16 %v112
  %v1523 = vunpack.c.h.b16 %v112
  %v1524 = vunpack.c.l.b16 %v113
  %v1525 = vunpack.c.h.b16 %v113
  %v1526 = vunpack.c.l.b16 %v114
  %v1527 = vunpack.c.h.b16 %v114
  %v1528 = vunpack.c.l.b16 %v115
  %v1529 = vunpack.c.h.b16 %v115
  %v1530 = vunpack.c.l.b16 %v116
  %v1531 = vunpack.c.h.b16 %v116
  %v1532 = vunpack.c.l.b16 %v117
  %v1533 = vunpack.c.h.b16 %v117
  %v1534 = vunpack.c.l.b16 %v118
  %v1535 = vunpack.c.h.b16 %v118
  %v1536 = vunpack.c.l.b16 %v119
  %v1537 = vunpack.c.h.b16 %v119
  %v1538 = vunpack.c.l.b16 %v120
  %v1539 = vunpack.c.h.b16 %v120
  %v1540 = vunpack.c.l.b16 %v121
  %v1541 = vunpack.c.h.b16 %v121
  %v1542 = vunpack.c.l.b16 %v122
  %v1543 = vunpack.c.h.b16 %v122
  %v1544 = vunpack.c.l.b16 %v123
  %v1545 = vunpack.c.h.b16 %v123
  %v1546 = vunpack.c.l.b16 %v124
  %v1547 = vunpack.c.h.b16 %v124
  %v1548 = vunpack.c.l.b16 %v125
  %v1549 = vunpack.c.h.b16 %v125
  %v1550 = vunpack.c.l.b16 %v126
  %v1551 = vunpack.c.h.b16 %v126
  %v1552 = vunpack.c.l.b16 %v127
  %v1553 = vunpack.c.h.b16 %v127
  %v1554 = vunpack.c.l.b16 %v128
  %v1555 = vunpack.c.h.b16 %v128
  %v1556 = vunpack.c.l.b16 %v129
  %v1557 = vunpack.c.h.b16 %v129
  %v1558 = vunpack.c.l.b16 %v130
  %v1559 = vunpack.c.h.b16 %v130
  %v1560 = vunpack.c.l.b16 %v131
  %v1561 = vunpack.c.h.b16 %v131
  %v1562 = vunpack.c.l.b16 %v132
  %v1563 = vunpack.c.h.b16 %v132
  %v1564 = vunpack.c.l.b16 %v133
  %v1565 = vunpack.c.h.b16 %v133
  %v1566 = vunpack.c.l.b16 %v134
  %v1567 = vunpack.c.h.b16 %v134
  %v1568 = vunpack.c.l.b16 %v135
  %v1569 = vunpack.c.h.b16 %v135
  %v1570 = vunpack.c.l.b16 %v136
  %v1571 = vunpack.c.h.b16 %v136
  %v1572 = vunpack.c.l.b16 %v137
  %v1573 = vunpack.c.h.b16 %v137
  %v1574 = vunpack.c.l.b16 %v138
  %v1575 = vunpack.c.h.b16 %v138
  %v1576 = vunpack.c.l.b16 %v139
  %v1577 = vunpack.c.h.b16 %v139
  %v1578 = vunpack.c.l.b16 %v140
  %v1579 = vunpack.c.h.b16 %v140
  %v1580 = vunpack.c.l.b16 %v141
  %v1581 = vunpack.c.h.b16 %v141
  %v1582 = vunpack.c.l.b16 %v142
  %v1583 = vunpack.c.h.b16 %v142
  %v1584 = vunpack.c.l.b16 %v143
  %v1585 = vunpack.c.h.b16 %v143
  %v1586 = vunpack.c.l.b16 %v144
  %v1587 = vunpack.c.h.b16 %v144
  %v1588 = vunpack.c.l.b16 %v145
  %v1589 = vunpack.c.h.b16 %v145
  %v1590 = vunpack.c.l.b16 %v146
  %v1591 = vunpack.c.h.b16 %v146
  %v1592 = vunpack.c.l.b16 %v147
  %v1593 = vunpack.c.h.b16 %v147
  %v1594 = vunpack.c.l.b16 %v148
  %v1595 = vunpack.c.h.b16 %v148
  %v1596 = vunpack.c.l.b16 %v149
  %v1597 = vunpack.c.h.b16 %v149
  %v1598 = vunpack.c.l.b16 %v150
  %v1599 = vunpack.c.h.b16 %v150
  %v1600 = vunpack.c.l.b16 %v151
  %v1601 = vunpack.c.h.b16 %v151
  %v1602 = vunpack.c.l.b16 %v152
  %v1603 = vunpack.c.h.b16 %v152
  %v1604 = vunpack.c.l.b16 %v153
  %v1605 = vunpack.c.h.b16 %v153
  %v1606 = vunpack.c.l.b16 %v154
  %v1607 = vunpack.c.h.b16 %v154
  %v1608 = vunpack.c.l.b16 %v155
  %v1609 = vunpack.c.h.b16 %v155
  %v1610 = vunpack.c.l.b16 %v156
  %v1611 = vunpack.c.h.b16 %v156
  %v1612 = vunpack.c.l.b16 %v157
  %v1613 = vunpack.c.h.b16 %v157
  %v1614 = vunpack.c.l.b16 %v158
  %v1615 = vunpack.c.h.b16 %v158
  %v1616 = vunpack.c.l.b16 %v159
  %v1617 = vunpack.c.h.b16 %v159
  %v1618 = vunpack.c.l.b16 %v160
  %v1619 = vunpack.c.h.b16 %v160
  %v1620 = vunpack.c.l.b16 %v161
  %v1621 = vunpack.c.h.b16 %v161
  %v1622 = vunpack.c.l.b16 %v162
  %v1623 = vunpack.c.h.b16 %v162
  %v1624 = vunpack.c.l.b16 %v163
  %v1625 = vunpack.c.h.b16 %v163
  %v1626 = vunpack.c.l.b16 %v164
  %v1627 = vunpack.c.h.b16 %v164
  %v1628 = vunpack.c.l.b16 %v165
  %v1629 = vunpack.c.h.b16 %v165
  %v1630 = vunpack.c.l.b16 %v166
  %v1631 = vunpack.c.h.b16 %v166
  %v1632 = vunpack.c.l.b16 %v167
  %v1633 = vunpack.c.h.b16 %v167
  %v1634 = vunpack.c.l.b16 %v168
  %v1635 = vunpack.c.h.b16 %v168
  %v1636 = vunpack.c.l.b16 %v169
  %v1637 = vunpack.c.h.b16 %v169
  %v1638 = vunpack.c.l.b16 %v170
  %v1639 = vunpack.c.h.b16 %v170
  %v1640 = vunpack.c.l.b16 %v171
  %v1641 = vunpack.c.h.b16 %v171
  %v1642 = vunpack.c.l.b16 %v172
  %v1643 = vunpack.c.h.b16 %v172
  %v1644 = vunpack.c.l.b16 %v173
  %v1645 = vunpack.c.h.b16 %v173
  %v1646 = vunpack.c.l.b16 %v174
  %v1647 = vunpack.c.h.b16 %v174
  %v1648 = vunpack.c.l.b16 %v175
  %v1649 = vunpack.c.h.b16 %v175
  %v1650 = vunpack.c.l.b16 %v176
  %v1651 = vunpack.c.h.b16 %v176
  %v1652 = vunpack.c.l.b16 %v177
  %v1653 = vunpack.c.h.b16 %v177
  %v1654 = vunpack.c.l.b16 %v178
  %v1655 = vunpack.c.h.b16 %v178
  %v1656 = vunpack.c.l.b16 %v179
  %v1657 = vunpack.c.h.b16 %v179
  %v1658 = vunpack.c.l.b16 %v180
  %v1659 = vunpack.c.h.b16 %v180
  %v1660 = vunpack.c.l.b16 %v181
  %v1661 = vunpack.c.h.b16 %v181
  %v1662 = vunpack.c.l.b16 %v182
  %v1663 = vunpack.c.h.b16 %v182
  %v1664 = vunpack.c.l.b16 %v183
  %v1665 = vunpack.c.h.b16 %v183
  %v1666 = vunpack.c.l.b16 %v184
  %v1667 = vunpack.c.h.b16 %v184
  %v1668 = vunpack.c.l.b16 %v185
  %v1669 = vunpack.c.h.b16 %v185
  %v1670 = vunpack.c.l.b16 %v186
  %v1671 = vunpack.c.h.b16 %v186
  %v1672 = vunpack.c.l.b16 %v187
  %v1673 = vunpack.c.h.b16 %v187
  %v1674 = vunpack.c.l.b16 %v188
  %v1675 = vunpack.c.h.b16 %v188
  %v1676 = vunpack.c.l.b16 %v189
  %v1677 = vunpack.c.h.b16 %v189
  %v1678 = vunpack.c.l.b16 %v190
  %v1679 = vunpack.c.h.b16 %v190
  %v1680 = vunpack.c.l.b16 %v191
  %v1681 = vunpack.c.h.b16 %v191
  %v1682 = vunpack.c.l.b16 %v192
  %v1683 = vunpack.c.h.b16 %v192
  %v1684 = vunpack.c.l.b16 %v193
  %v1685 = vunpack.c.h.b16 %v193
  %v1686 = vunpack.c.l.b16 %v194
  %v1687 = vunpack.c.h.b16 %v194
  %v1688 = vunpack.c.l.b16 %v195
  %v1689 = vunpack.c.h.b16 %v195
  %v1690 = vunpack.c.l.b16 %v196
  %v1691 = vunpack.c.h.b16 %v196
  %v1692 = vunpack.c.l.b16 %v197
  %v1693 = vunpack.c.h.b16 %v197
  %v1694 = vunpack.c.l.b16 %v198
  %v1695 = vunpack.c.h.b16 %v198
  %v1696 = vunpack.c.l.b16 %v199
  %v1697 = vunpack.c.h.b16 %v199
  %v1698 = vunpack.c.l.b16 %v200
  %v1699 = vunpack.c.h.b16 %v200
  %v1700 = vunpack.c.l.b16 %v201
  %v1701 = vunpack.c.h.b16 %v201
  %v1702 = vunpack.c.l.b16 %v202
  %v1703 = vunpack.c.h.b16 %v202
  %v1704 = vunpack.c.l.b16 %v203
  %v1705 = vunpack.c.h.b16 %v203
  %v1706 = vunpack.c.l.b16 %v204
  %v1707 = vunpack.c.h.b16 %v204
  %v1708 = vunpack.c.l.b16 %v205
  %v1709 = vunpack.c.h.b16 %v205
  %v1710 = vunpack.c.l.b16 %v206
  %v1711 = vunpack.c.h.b16 %v206
  %v1712 = vunpack.c.l.b16 %v207
  %v1713 = vunpack.c.h.b16 %v207
  %v1714 = vunpack.c.l.b16 %v208
  %v1715 = vunpack.c.h.b16 %v208
  %v1716 = vunpack.c.l.b16 %v209
  %v1717 = vunpack.c.h.b16 %v209
  %v1718 = vunpack.c.l.b16 %v210
  %v1719 = vunpack.c.h.b16 %v210
  %v1720 = vunpack.c.l.b16 %v211
  %v1721 = vunpack.c.h.b16 %v211
  %v1722 = vunpack.c.l.b16 %v212
  %v1723 = vunpack.c.h.b16 %v212
  %v1724 = vunpack.c.l.b16 %v213
  %v1725 = vunpack.c.h.b16 %v213
  %v1726 = vunpack.c.l.b16 %v214
  %v1727 = vunpack.c.h.b16 %v214
  %v1728 = vunpack.c.l.b16 %v215
  %v1729 = vunpack.c.h.b16 %v215
  %v1730 = vunpack.c.l.b16 %v216
  %v1731 = vunpack.c.h.b16 %v216
  %v1732 = vunpack.c.l.b16 %v217
  %v1733 = vunpack.c.h.b16 %v217
  %v1734 = vunpack.c.l.b16 %v218
  %v1735 = vunpack.c.h.b16 %v218
  %v1736 = vunpack.c.l.b16 %v219
  %v1737 = vunpack.c.h.b16 %v219
  %v1738 = vunpack.c.l.b16 %v220
  %v1739 = vunpack.c.h.b16 %v220
  %v1740 = vunpack.c.l.b16 %v221
  %v1741 = vunpack.c.h.b16 %v221
  %v1742 = vunpack.c.l.b16 %v222
  %v1743 = vunpack.c.h.b16 %v222
  %v1744 = vunpack.c.l.b16 %v223
  %v1745 = vunpack.c.h.b16 %v223
  %v1746 = vunpack.c.l.b16 %v224
  %v1747 = vunpack.c.h.b16 %v224
  %v1748 = vunpack.c.l.b16 %v225
  %v1749 = vunpack.c.h.b16 %v225
  %v1750 = vunpack.c.l.b16 %v226
  %v1751 = vunpack.c.h.b16 %v226
  %v1752 = vunpack.c.l.b16 %v227
  %v1753 = vunpack.c.h.b16 %v227
  %v1754 = vunpack.c.l.b16 %v228
  %v1755 = vunpack.c.h.b16 %v228
  %v1756 = vunpack.c.l.b16 %v229
  %v1757 = vunpack.c.h.b16 %v229
  %v1758 = vunpack.c.l.b16 %v230
  %v1759 = vunpack.c.h.b16 %v230
  %v1760 = vunpack.c.l.b16 %v231
  %v1761 = vunpack.c.h.b16 %v231
  %v1762 = vunpack.c.l.b16 %v232
  %v1763 = vunpack.c.h.b16 %v232
  %v1764 = vunpack.c.l.b16 %v233
  %v1765 = vunpack.c.h.b16 %v233
  %v1766 = vunpack.c.l.b16 %v234
  %v1767 = vunpack.c.h.b16 %v234
  %v1768 = vunpack.c.l.b16 %v235
  %v1769 = vunpack.c.h.b16 %v235
  %v1770 = vunpack.c.l.b16 %v236
  %v1771 = vunpack.c.h.b16 %v236
  %v1772 = vunpack.c.l.b16 %v237
  %v1773 = vunpack.c.h.b16 %v237
  %v1774 = vunpack.c.l.b16 %v238
  %v1775 = vunpack.c.h.b16 %v238
  %v1776 = vunpack.c.l.b16 %v239
  %v1777 = vunpack.c.h.b16 %v239
  %v1778 = vunpack.c.l.b16 %v240
  %v1779 = vunpack.c.h.b16 %v240
  %v1780 = vunpack.c.l.b16 %v241
  %v1781 = vunpack.c.h.b16 %v241
  %v1782 = vunpack.c.l.b16 %v242
  %v1783 = vunpack.c.h.b16 %v242
  %v1784 = vunpack.c.l.b16 %v243
  %v1785 = vunpack.c.h.b16 %v243
  %v1786 = vunpack.c.l.b16 %v244
  %v1787 = vunpack.c.h.b16 %v244
  %v1788 = vunpack.c.l.b16 %v245
  %v1789 = vunpack.c.h.b16 %v245
  %v1790 = vunpack.c.l.b16 %v246
  %v1791 = vunpack.c.h.b16 %v246
  %v1792 = vunpack.c.l.b16 %v247
  %v1793 = vunpack.c.h.b16 %v247
  %v1794 = vunpack.c.l.b16 %v248
  %v1795 = vunpack.c.h.b16 %v248
  %v1796 = vunpack.c.l.b16 %v249
  %v1797 = vunpack.c.h.b16 %v249
  %v1798 = vunpack.c.l.b16 %v250
  %v1799 = vunpack.c.h.b16 %v250
  %v1800 = vunpack.c.l.b16 %v251
  %v1801 = vunpack.c.h.b16 %v251
  %v1802 = vunpack.c.l.b16 %v252
  %v1803 = vunpack.c.h.b16 %v252
  %v1804 = vunpack.c.l.b16 %v253
  %v1805 = vunpack.c.h.b16 %v253
  %v1806 = vunpack.c.l.b16 %v254
  %v1807 = vunpack.c.h.b16 %v254
  %v1808 = vunpack.c.l.b16 %v255
  %v1809 = vunpack.c.h.b16 %v255
  %v1810 = vunpack.c.l.b16 %v256
  %v1811 = vunpack.c.h.b16 %v256
  %v1812 = vunpack.c.l.b16 %v257
  %v1813 = vunpack.c.h.b16 %v257
  %v1814 = vunpack.c.l.b16 %v258
  %v1815 = vunpack.c.h.b16 %v258
  %v1816 = vunpack.c.l.b16 %v259
  %v1817 = vunpack.c.h.b16 %v259
  %v1818 = vunpack.c.l.b16 %v260
  %v1819 = vunpack.c.h.b16 %v260
  %v1820 = vunpack.c.l.b16 %v261
  %v1821 = vunpack.c.h.b16 %v261
  %v1822 = vunpack.c.l.b16 %v262
  %v1823 = vunpack.c.h.b16 %v262
  %v1824 = vunpack.c.l.b16 %v263
  %v1825 = vunpack.c.h.b16 %v263
  %v1826 = vunpack.c.l.b16 %v264
  %v1827 = vunpack.c.h.b16 %v264
  %v1828 = vunpack.c.l.b16 %v265
  %v1829 = vunpack.c.h.b16 %v265
  %v1830 = vunpack.c.l.b16 %v266
  %v1831 = vunpack.c.h.b16 %v266
  %v1832 = vunpack.c.l.b16 %v267
  %v1833 = vunpack.c.h.b16 %v267
  %v1834 = vunpack.c.l.b16 %v268
  %v1835 = vunpack.c.h.b16 %v268
  %v1836 = vunpack.c.l.b16 %v269
  %v1837 = vunpack.c.h.b16 %v269
  %v1838 = vunpack.c.l.b16 %v270
  %v1839 = vunpack.c.h.b16 %v270
  %v1840 = vunpack.c.l.b16 %v271
  %v1841 = vunpack.c.h.b16 %v271
  %v1842 = vunpack.c.l.b16 %v272
  %v1843 = vunpack.c.h.b16 %v272
  %v1844 = vunpack.c.l.b16 %v273
  %v1845 = vunpack.c.h.b16 %v273
  %v1846 = vunpack.c.l.b16 %v274
  %v1847 = vunpack.c.h.b16 %v274
  %v1848 = vunpack.c.l.b16 %v275
  %v1849 = vunpack.c.h.b16 %v275
  %v1850 = vunpack.c.l.b16 %v276
  %v1851 = vunpack.c.h.b16 %v276
  %v1852 = vunpack.c.l.b16 %v277
  %v1853 = vunpack.c.h.b16 %v277
  %v1854 = vunpack.c.l.b16 %v278
  %v1855 = vunpack.c.h.b16 %v278
  %v1856 = vunpack.c.l.b16 %v279
  %v1857 = vunpack.c.h.b16 %v279
  %v1858 = vunpack.c.l.b16 %v280
  %v1859 = vunpack.c.h.b16 %v280
  %v1860 = vunpack.c.l.b16 %v281
  %v1861 = vunpack.c.h.b16 %v281
  %v1862 = vunpack.c.l.b16 %v282
  %v1863 = vunpack.c.h.b16 %v282
  %v1864 = vunpack.c.l.b16 %v283
  %v1865 = vunpack.c.h.b16 %v283
  %v1866 = vunpack.c.l.b16 %v284
  %v1867 = vunpack.c.h.b16 %v284
  %v1868 = vunpack.c.l.b16 %v285
  %v1869 = vunpack.c.h.b16 %v285
  %v1870 = vunpack.c.l.b16 %v286
  %v1871 = vunpack.c.h.b16 %v286
  %v1872 = vunpack.c.l.b16 %v287
  %v1873 = vunpack.c.h.b16 %v287
  %v1874 = vunpack.c.l.b16 %v288
  %v1875 = vunpack.c.h.b16 %v288
  %v1876 = vunpack.c.l.b16 %v289
  %v1877 = vunpack.c.h.b16 %v289
  %v1878 = vunpack.c.l.b16 %v290
  %v1879 = vunpack.c.h.b16 %v290
  %v1880 = vunpack.c.l.b16 %v291
  %v1881 = vunpack.c.h.b16 %v291
  %v1882 = vunpack.c.l.b16 %v292
  %v1883 = vunpack.c.h.b16 %v292
  %v1884 = vunpack.c.l.b16 %v293
  %v1885 = vunpack.c.h.b16 %v293
  %v1886 = vunpack.c.l.b16 %v294
  %v1887 = vunpack.c.h.b16 %v294
  %v1888 = vunpack.c.l.b16 %v295
  %v1889 = vunpack.c.h.b16 %v295
  %v1890 = vunpack.c.l.b16 %v296
  %v1891 = vunpack.c.h.b16 %v296
  %v1892 = vunpack.c.l.b16 %v297
  %v1893 = vunpack.c.h.b16 %v297
  %v1894 = vunpack.c.l.b16 %v298
  %v1895 = vunpack.c.h.b16 %v298
  %v1896 = vunpack.c.l.b16 %v299
  %v1897 = vunpack.c.h.b16 %v299
  %v1898 = vunpack.c.l.b16 %v300
  %v1899 = vunpack.c.h.b16 %v300
  %v1900 = vunpack.c.l.b16 %v301
  %v1901 = vunpack.c.h.b16 %v301
  %v1902 = vunpack.c.l.b16 %v302
  %v1903 = vunpack.c.h.b16 %v302
  %v1904 = vunpack.c.l.b16 %v303
  %v1905 = vunpack.c.h.b16 %v303
  %v1906 = vunpack.c.l.b16 %v304
  %v1907 = vunpack.c.h.b16 %v304
  %v1908 = vunpack.c.l.b16 %v305
  %v1909 = vunpack.c.h.b16 %v305
  %v1910 = vunpack.c.l.b16 %v306
  %v1911 = vunpack.c.h.b16 %v306
  %v1912 = vunpack.c.l.b16 %v307
  %v1913 = vunpack.c.h.b16 %v307
  %v1914 = vunpack.c.l.b16 %v308
  %v1915 = vunpack.c.h.b16 %v308
  %v1916 = vunpack.c.l.b16 %v309
  %v1917 = vunpack.c.h.b16 %v309
  %v1918 = vunpack.c.l.b16 %v310
  %v1919 = vunpack.c.h.b16 %v310
  %v1920 = vunpack.c.l.b16 %v311
  %v1921 = vunpack.c.h.b16 %v311
  %v1922 = vunpack.c.l.b16 %v312
  %v1923 = vunpack.c.h.b16 %v312
  %v1924 = vunpack.c.l.b16 %v313
  %v1925 = vunpack.c.h.b16 %v313
  %v1926 = vunpack.c.l.b16 %v314
  %v1927 = vunpack.c.h.b16 %v314
  %v1928 = vunpack.c.l.b16 %v315
  %v1929 = vunpack.c.h.b16 %v315
  %v1930 = vunpack.c.l.b16 %v316
  %v1931 = vunpack.c.h.b16 %v316
  %v1932 = vunpack.c.l.b16 %v317
  %v1933 = vunpack.c.h.b16 %v317
  %v1934 = vunpack.c.l.b16 %v318
  %v1935 = vunpack.c.h.b16 %v318
  %v1936 = vunpack.c.l.b16 %v319
  %v1937 = vunpack.c.h.b16 %v319
  %v1938 = vunpack.c.l.b16 %v320
  %v1939 = vunpack.c.h.b16 %v320
  %v1940 = vunpack.c.l.b16 %v321
  %v1941 = vunpack.c.h.b16 %v321
  %v1942 = vunpack.c.l.b16 %v322
  %v1943 = vunpack.c.h.b16 %v322
  %v1944 = vunpack.c.l.b16 %v323
  %v1945 = vunpack.c.h.b16 %v323
  %v1946 = vunpack.c.l.b16 %v324
  %v1947 = vunpack.c.h.b16 %v324
  %v1948 = vunpack.c.l.b16 %v325
  %v1949 = vunpack.c.h.b16 %v325
  %v1950 = vunpack.c.l.b16 %v326
  %v1951 = vunpack.c.h.b16 %v326
  %v1952 = vunpack.c.l.b16 %v327
  %v1953 = vunpack.c.h.b16 %v327
  %v1954 = vunpack.c.l.b16 %v328
  %v1955 = vunpack.c.h.b16 %v328
  %v1956 = vunpack.c.l.b16 %v329
  %v1957 = vunpack.c.h.b16 %v329
  %v1958 = vunpack.c.l.b16 %v330
  %v1959 = vunpack.c.h.b16 %v330
  %v1960 = vunpack.c.l.b16 %v331
  %v1961 = vunpack.c.h.b16 %v331
  %v1962 = vunpack.c.l.b16 %v332
  %v1963 = vunpack.c.h.b16 %v332
  %v1964 = vunpack.c.l.b16 %v333
  %v1965 = vunpack.c.h.b16 %v333
  %v1966 = vunpack.c.l.b16 %v334
  %v1967 = vunpack.c.h.b16 %v334
  %v1968 = vunpack.c.l.b16 %v335
  %v1969 = vunpack.c.h.b16 %v335
  %v1970 = vunpack.c.l.b16 %v336
  %v1971 = vunpack.c.h.b16 %v336
  %v1972 = vunpack.c.l.b16 %v337
  %v1973 = vunpack.c.h.b16 %v337
  %v1974 = vunpack.c.l.b16 %v338
  %v1975 = vunpack.c.h.b16 %v338
  %v1976 = vunpack.c.l.b16 %v339
  %v1977 = vunpack.c.h.b16 %v339
  %v1978 = vunpack.c.l.b16 %v340
  %v1979 = vunpack.c.h.b16 %v340
  %v1980 = vunpack.c.l.b16 %v341
  %v1981 = vunpack.c.h.b16 %v341
  %v1982 = vunpack.c.l.b16 %v342
  %v1983 = vunpack.c.h.b16 %v342
  %v1984 = vunpack.c.l.b16 %v343
  %v1985 = vunpack.c.h.b16 %v343
  %v1986 = vunpack.c.l.b16 %v344
  %v1987 = vunpack.c.h.b16 %v344
  %v1988 = vunpack.c.l.b16 %v345
  %v1989 = vunpack.c.h.b16 %v345
  %v1990 = vunpack.c.l.b16 %v346
  %v1991 = vunpack.c.h.b16 %v346
  %v1992 = vunpack.c.l.b16 %v347
  %v1993 = vunpack.c.h.b16 %v347
  %v1994 = vunpack.c.l.b16 %v348
  %v1995 = vunpack.c.h.b16 %v348
  %v1996 = vunpack.c.l.b16 %v349
  %v1997 = vunpack.c.h.b16 %v349
  %v1998 = vunpack.c.l.b16 %v350
  %v1999 = vunpack.c.h.b16 %v350
  %v2000 = vunpack.c.l.b16 %v351
  %v2001 = vunpack.c.h.b16 %v351
  %v2002 = vunpack.c.l.b16 %v352
  %v2003 = vunpack.c.h.b16 %v352
  %v2004 = vunpack.c.l.b16 %v353
  %v2005 = vunpack.c.h.b16 %v353
  %v2006 = vunpack.c.l.b16 %v354
  %v2007 = vunpack.c.h.b16 %v354
  %v2008 = vunpack.c.l.b16 %v355
  %v2009 = vunpack.c.h.b16 %v355
  %v2010 = vunpack.c.l.b16 %v356
  %v2011 = vunpack.c.h.b16 %v356
  %v2012 = vunpack.c.l.b16 %v357
  %v2013 = vunpack.c.h.b16 %v357
  %v2014 = vunpack.c.l.b16 %v358
  %v2015 = vunpack.c.h.b16 %v358
  %v2016 = vunpack.c.l.b16 %v359
  %v2017 = vunpack.c.h.b16 %v359
  %v2018 = vunpack.c.l.b16 %v360
  %v2019 = vunpack.c.h.b16 %v360
  %v2020 = vunpack.c.l.b16 %v361
  %v2021 = vunpack.c.h.b16 %v361
  %v2022 = vunpack.c.l.b16 %v362
  %v2023 = vunpack.c.h.b16 %v362
  %v2024 = vunpack.c.l.b16 %v363
  %v2025 = vunpack.c.h.b16 %v363
  %v2026 = vunpack.c.l.b16 %v364
  %v2027 = vunpack.c.h.b16 %v364
  %v2028 = vunpack.c.l.b16 %v365
  %v2029 = vunpack.c.h.b16 %v365
  %v2030 = vunpack.c.l.b16 %v366
  %v2031 = vunpack.c.h.b16 %v366
  %v2032 = vunpack.c.l.b16 %v367
  %v2033 = vunpack.c.h.b16 %v367
  %v2034 = vunpack.c.l.b16 %v368
  %v2035 = vunpack.c.h.b16 %v368
  %v2036 = vunpack.c.l.b16 %v369
  %v2037 = vunpack.c.h.b16 %v369
  %v2038 = vunpack.c.l.b16 %v370
  %v2039 = vunpack.c.h.b16 %v370
  %v2040 = vunpack.c.l.b16 %v371
  %v2041 = vunpack.c.h.b16 %v371
  %v2042 = vunpack.c.l.b16 %v372
  %v2043 = vunpack.c.h.b16 %v372
  %v2044 = vunpack.c.l.b16 %v373
  %v2045 = vunpack.c.h.b16 %v373
  %v2046 = vunpack.c.l.b16 %v374
  %v2047 = vunpack.c.h.b16 %v374
  %v2048 = vunpack.c.l.b16 %v375
  %v2049 = vunpack.c.h.b16 %v375
  %v2050 = vunpack.c.l.b16 %v376
  %v2051 = vunpack.c.h.b16 %v376
  %v2052 = vunpack.c.l.b16 %v377
  %v2053 = vunpack.c.h.b16 %v377
  %v2054 = vunpack.c.l.b16 %v378
  %v2055 = vunpack.c.h.b16 %v378
  %v2056 = vunpack.c.l.b16 %v379
  %v2057 = vunpack.c.h.b16 %v379
  %v2058 = vunpack.c.l.b16 %v380
  %v2059 = vunpack.c.h.b16 %v380
  %v2060 = vunpack.c.l.b16 %v381
  %v2061 = vunpack.c.h.b16 %v381
  %v2062 = vunpack.c.l.b16 %v382
  %v2063 = vunpack.c.h.b16 %v382
  %v2064 = vunpack.c.l.b16 %v383
  %v2065 = vunpack.c.h.b16 %v383
  %v2066 = vunpack.c.l.b16 %v384
  %v2067 = vunpack.c.h.b16 %v384
  %v2068 = vunpack.c.l.b16 %v385
  %v2069 = vunpack.c.h.b16 %v385
  %v2070 = vunpack.c.l.b16 %v386
  %v2071 = vunpack.c.h.b16 %v386
  %v2072 = vunpack.c.l.b16 %v387
  %v2073 = vunpack.c.h.b16 %v387
  %v2074 = vunpack.c.l.b16 %v388
  %v2075 = vunpack.c.h.b16 %v388
  %v2076 = vunpack.c.l.b16 %v389
  %v2077 = vunpack.c.h.b16 %v389
  %v2078 = vunpack.c.l.b16 %v390
  %v2079 = vunpack.c.h.b16 %v390
  %v2080 = vunpack.c.l.b16 %v391
  %v2081 = vunpack.c.h.b16 %v391
  %v2082 = vunpack.c.l.b16 %v392
  %v2083 = vunpack.c.h.b16 %v392
  %v2084 = vunpack.c.l.b16 %v393
  %v2085 = vunpack.c.h.b16 %v393
  %v2086 = vunpack.c.l.b16 %v394
  %v2087 = vunpack.c.h.b16 %v394
  %v2088 = vunpack.c.l.b16 %v395
  %v2089 = vunpack.c.h.b16 %v395
  %v2090 = vunpack.c.l.b16 %v396
  %v2091 = vunpack.c.h.b16 %v396
  %v2092 = vunpack.c.l.b16 %v397
  %v2093 = vunpack.c.h.b16 %v397
  %v2094 = vunpack.c.l.b16 %v398
  %v2095 = vunpack.c.h.b16 %v398
  %v2096 = vunpack.c.l.b16 %v399
  %v2097 = vunpack.c.h.b16 %v399
  %v2098 = vunpack.c.l.b16 %v400
  %v2099 = vunpack.c.h.b16 %v400
  %v2100 = vunpack.c.l.b16 %v401
  %v2101 = vunpack.c.h.b16 %v401
  %v2102 = vunpack.c.l.b16 %v402
  %v2103 = vunpack.c.h.b16 %v402
  %v2104 = vunpack.c.l.b16 %v403
  %v2105 = vunpack.c.h.b16 %v403
  %v2106 = vunpack.c.l.b16 %v404
  %v2107 = vunpack.c.h.b16 %v404
  %v2108 = vunpack.c.l.b16 %v405
  %v2109 = vunpack.c.h.b16 %v405
  %v2110 = vunpack.c.l.b16 %v406
  %v2111 = vunpack.c.h.b16 %v406
  %v2112 = vunpack.c.l.b16 %v407
  %v2113 = vunpack.c.h.b16 %v407
  %v2114 = vunpack.c.l.b16 %v408
  %v2115 = vunpack.c.h.b16 %v408
  %v2116 = vunpack.c.l.b16 %v409
  %v2117 = vunpack.c.h.b16 %v409
  %v2118 = vunpack.c.l.b16 %v410
  %v2119 = vunpack.c.h.b16 %v410
  %v2120 = vunpack.c.l.b16 %v411
  %v2121 = vunpack.c.h.b16 %v411
  %v2122 = vunpack.c.l.b16 %v412
  %v2123 = vunpack.c.h.b16 %v412
  %v2124 = vunpack.c.l.b16 %v413
  %v2125 = vunpack.c.h.b16 %v413
  %v2126 = vunpack.c.l.b16 %v414
  %v2127 = vunpack.c.h.b16 %v414
  %v2128 = vunpack.c.l.b16 %v415
  %v2129 = vunpack.c.h.b16 %v415
  %v2130 = vunpack.c.l.b16 %v416
  %v2131 = vunpack.c.h.b16 %v416
  %v2132 = vunpack.c.l.b16 %v417
  %v2133 = vunpack.c.h.b16 %v417
  %v2134 = vunpack.c.l.b16 %v418
  %v2135 = vunpack.c.h.b16 %v418
  %v2136 = vunpack.c.l.b16 %v419
  %v2137 = vunpack.c.h.b16 %v419
  %v2138 = vunpack.c.l.b16 %v420
  %v2139 = vunpack.c.h.b16 %v420
  %v2140 = vunpack.c.l.b16 %v421
  %v2141 = vunpack.c.h.b16 %v421
  %v2142 = vunpack.c.l.b16 %v422
  %v2143 = vunpack.c.h.b16 %v422
  %v2144 = vunpack.c.l.b16 %v423
  %v2145 = vunpack.c.h.b16 %v423
  %v2146 = vunpack.c.l.b16 %v424
  %v2147 = vunpack.c.h.b16 %v424
  %v2148 = vunpack.c.l.b16 %v425
  %v2149 = vunpack.c.h.b16 %v425
  %v2150 = vunpack.c.l.b16 %v426
  %v2151 = vunpack.c.h.b16 %v426
  %v2152 = vunpack.c.l.b16 %v427
  %v2153 = vunpack.c.h.b16 %v427
  %v2154 = vunpack.c.l.b16 %v428
  %v2155 = vunpack.c.h.b16 %v428
  %v2156 = vunpack.c.l.b16 %v429
  %v2157 = vunpack.c.h.b16 %v429
  %v2158 = vunpack.c.l.b16 %v430
  %v2159 = vunpack.c.h.b16 %v430
  %v2160 = vunpack.c.l.b16 %v431
  %v2161 = vunpack.c.h.b16 %v431
  %v2162 = vunpack.c.l.b16 %v432
  %v2163 = vunpack.c.h.b16 %v432
  %v2164 = vunpack.c.l.b16 %v433
  %v2165 = vunpack.c.h.b16 %v433
  %v2166 = vunpack.c.l.b16 %v434
  %v2167 = vunpack.c.h.b16 %v434
  %v2168 = vunpack.c.l.b16 %v435
  %v2169 = vunpack.c.h.b16 %v435
  %v2170 = vunpack.c.l.b16 %v436
  %v2171 = vunpack.c.h.b16 %v436
  %v2172 = vunpack.c.l.b16 %v437
  %v2173 = vunpack.c.h.b16 %v437
  %v2174 = vunpack.c.l.b16 %v438
  %v2175 = vunpack.c.h.b16 %v438
  %v2176 = vunpack.c.l.b16 %v439
  %v2177 = vunpack.c.h.b16 %v439
  %v2178 = vunpack.c.l.b16 %v440
  %v2179 = vunpack.c.h.b16 %v440
  %v2180 = vunpack.c.l.b16 %v441
  %v2181 = vunpack.c.h.b16 %v441
  %v2182 = vunpack.c.l.b16 %v442
  %v2183 = vunpack.c.h.b16 %v442
  %v2184 = vunpack.c.l.b16 %v443
  %v2185 = vunpack.c.h.b16 %v443
  %v2186 = vunpack.c.l.b16 %v444
  %v2187 = vunpack.c.h.b16 %v444
  %v2188 = vunpack.c.l.b16 %v445
  %v2189 = vunpack.c.h.b16 %v445
  %v2190 = vunpack.c.l.b16 %v446
  %v2191 = vunpack.c.h.b16 %v446
  %v2192 = vunpack.c.l.b16 %v447
  %v2193 = vunpack.c.h.b16 %v447
  %v2194 = vunpack.c.l.b16 %v448
  %v2195 = vunpack.c.h.b16 %v448
  %v2196 = vunpack.c.l.b16 %v449
  %v2197 = vunpack.c.h.b16 %v449
  %v2198 = vunpack.c.l.b16 %v450
  %v2199 = vunpack.c.h.b16 %v450
  %v2200 = vunpack.c.l.b16 %v451
  %v2201 = vunpack.c.h.b16 %v451
  %v2202 = vunpack.c.l.b16 %v452
  %v2203 = vunpack.c.h.b16 %v452
  %v2204 = vunpack.c.l.b16 %v453
  %v2205 = vunpack.c.h.b16 %v453
  %v2206 = vunpack.c.l.b16 %v454
  %v2207 = vunpack.c.h.b16 %v454
  %v2208 = vunpack.c.l.b16 %v455
  %v2209 = vunpack.c.h.b16 %v455
  %v2210 = vunpack.c.l.b16 %v456
  %v2211 = vunpack.c.h.b16 %v456
  %v2212 = vunpack.c.l.b16 %v457
  %v2213 = vunpack.c.h.b16 %v457
  %v2214 = vunpack.c.l.b16 %v458
  %v2215 = vunpack.c.h.b16 %v458
  %v2216 = vunpack.c.l.b16 %v459
  %v2217 = vunpack.c.h.b16 %v459
  %v2218 = vunpack.c.l.b16 %v460
  %v2219 = vunpack.c.h.b16 %v460
  %v2220 = vunpack.c.l.b16 %v461
  %v2221 = vunpack.c.h.b16 %v461
  %v2222 = vunpack.c.l.b16 %v462
  %v2223 = vunpack.c.h.b16 %v462
  %v2224 = vunpack.c.l.b16 %v463
  %v2225 = vunpack.c.h.b16 %v463
  %v2226 = vunpack.c.l.b16 %v464
  %v2227 = vunpack.c.h.b16 %v464
  %v2228 = vunpack.c.l.b16 %v465
  %v2229 = vunpack.c.h.b16 %v465
  %v2230 = vunpack.c.l.b16 %v466
  %v2231 = vunpack.c.h.b16 %v466
  %v2232 = vunpack.c.l.b16 %v467
  %v2233 = vunpack.c.h.b16 %v467
  %v2234 = vunpack.c.l.b16 %v468
  %v2235 = vunpack.c.h.b16 %v468
  %v2236 = vunpack.c.l.b16 %v469
  %v2237 = vunpack.c.h.b16 %v469
  %v2238 = vunpack.c.l.b16 %v470
  %v2239 = vunpack.c.h.b16 %v470
  %v2240 = vunpack.c.l.b16 %v471
  %v2241 = vunpack.c.h.b16 %v471
  %v2242 = vunpack.c.l.b16 %v472
  %v2243 = vunpack.c.h.b16 %v472
  %v2244 = vunpack.c.l.b16 %v473
  %v2245 = vunpack.c.h.b16 %v473
  %v2246 = vunpack.c.l.b16 %v474
  %v2247 = vunpack.c.h.b16 %v474
  %v2248 = vunpack.c.l.b16 %v475
  %v2249 = vunpack.c.h.b16 %v475
  %v2250 = vunpack.c.l.b16 %v476
  %v2251 = vunpack.c.h.b16 %v476
  %v2252 = vunpack.c.l.b16 %v477
  %v2253 = vunpack.c.h.b16 %v477
  %v2254 = vunpack.c.l.b16 %v478
  %v2255 = vunpack.c.h.b16 %v478
  %v2256 = vunpack.c.l.b16 %v479
  %v2257 = vunpack.c.h.b16 %v479
  %v2258 = vunpack.c.l.b16 %v480
  %v2259 = vunpack.c.h.b16 %v480
  %v2260 = vunpack.c.l.b16 %v481
  %v2261 = vunpack.c.h.b16 %v481
  %v2262 = vunpack.c.l.b16 %v482
  %v2263 = vunpack.c.h.b16 %v482
  %v2264 = vunpack.c.l.b16 %v483
  %v2265 = vunpack.c.h.b16 %v483
  %v2266 = vunpack.c.l.b16 %v484
  %v2267 = vunpack.c.h.b16 %v484
  %v2268 = vunpack.c.l.b16 %v485
  %v2269 = vunpack.c.h.b16 %v485
  %v2270 = vunpack.c.l.b16 %v486
  %v2271 = vunpack.c.h.b16 %v486
  %v2272 = vunpack.c.l.b16 %v487
  %v2273 = vunpack.c.h.b16 %v487
  %v2274 = vunpack.c.l.b16 %v488
  %v2275 = vunpack.c.h.b16 %v488
  %v2276 = vunpack.c.l.b16 %v489
  %v2277 = vunpack.c.h.b16 %v489
  %v2278 = vunpack.c.l.b16 %v490
  %v2279 = vunpack.c.h.b16 %v490
  %v2280 = vunpack.c.l.b16 %v491
  %v2281 = vunpack.c.h.b16 %v491
  %v2282 = vunpack.c.l.b16 %v492
  %v2283 = vunpack.c.h.b16 %v492
  %v2284 = vunpack.c.l.b16 %v493
  %v2285 = vunpack.c.h.b16 %v493
  %v2286 = vunpack.c.l.b16 %v494
  %v2287 = vunpack.c.h.b16 %v494
  %v2288 = vunpack.c.l.b16 %v495
  %v2289 = vunpack.c.h.b16 %v495
  %v2290 = vunpack.c.l.b16 %v496
  %v2291 = vunpack.c.h.b16 %v496
  %v2292 = vunpack.c.l.b16 %v497
  %v2293 = vunpack.c.h.b16 %v497
  %v2294 = vunpack.c.l.b16 %v498
  %v2295 = vunpack.c.h.b16 %v498
  %v2296 = vunpack.c.l.b16 %v499
  %v2297 = vunpack.c.h.b16 %v499
  %v2298 = vunpack.c.l.b16 %v500
  %v2299 = vunpack.c.h.b16 %v500
  %v2300 = vunpack.c.l.b16 %v501
  %v2301 = vunpack.c.h.b16 %v501
  %v2302 = vunpack.c.l.b16 %v502
  %v2303 = vunpack.c.h.b16 %v502
  %v2304 = vunpack.c.l.b16 %v503
  %v2305 = vunpack.c.h.b16 %v503
  %v2306 = vunpack.c.l.b16 %v504
  %v2307 = vunpack.c.h.b16 %v504
  %v2308 = vunpack.c.l.b16 %v505
  %v2309 = vunpack.c.h.b16 %v505
  %v2310 = vunpack.c.l.b16 %v506
  %v2311 = vunpack.c.h.b16 %v506
  %v2312 = vunpack.c.l.b16 %v507
  %v2313 = vunpack.c.h.b16 %v507
  %v2314 = vunpack.c.l.b16 %v508
  %v2315 = vunpack.c.h.b16 %v508
  %v2316 = vunpack.c.l.b16 %v509
  %v2317 = vunpack.c.h.b16 %v509
  %v2318 = vunpack.c.l.b16 %v510
  %v2319 = vunpack.c.h.b16 %v510
  %v2320 = vunpack.c.l.b16 %v511
  %v2321 = vunpack.c.h.b16 %v511
  %v2322 = vunpack.c.l.b16 %v512
  %v2323 = vunpack.c.h.b16 %v512
  %v2324 = vunpack.c.l.b16 %v513
  %v2325 = vunpack.c.h.b16 %v513
  %v2326 = vunpack.c.l.b16 %v514
  %v2327 = vunpack.c.h.b16 %v514
  %v2328 = vunpack.c.l.b16 %v515
  %v2329 = vunpack.c.h.b16 %v515
  %v2330 = vunpack.c.l.b16 %v516
  %v2331 = vunpack.c.h.b16 %v516
  %v2332 = vunpack.c.l.b16 %v517
  %v2333 = vunpack.c.h.b16 %v517
  %v2334 = vunpack.c.l.b16 %v518
  %v2335 = vunpack.c.h.b16 %v518
  %v2336 = vunpack.c.l.b16 %v519
  %v2337 = vunpack.c.h.b16 %v519
  %v2338 = vunpack.c.l.b16 %v520
  %v2339 = vunpack.c.h.b16 %v520
  %v2340 = vunpack.c.l.b16 %v521
  %v2341 = vunpack.c.h.b16 %v521
  %v2342 = vunpack.c.l.b16 %v522
  %v2343 = vunpack.c.h.b16 %v522
  %v2344 = vunpack.c.l.b16 %v523
  %v2345 = vunpack.c.h.b16 %v523
  %v2346 = vunpack.c.l.b16 %v524
  %v2347 = vunpack.c.h.b16 %v524
  %v2348 = vunpack.c.l.b16 %v525
  %v2349 = vunpack.c.h.b16 %v525
  %v2350 = vunpack.c.l.b16 %v526
  %v2351 = vunpack.c.h.b16 %v526
  %v2352 = vunpack.c.l.b16 %v527
  %v2353 = vunpack.c.h.b16 %v527
  %v2354 = vunpack.c.l.b16 %v528
  %v2355 = vunpack.c.h.b16 %v528
  %v2356 = vunpack.c.l.b16 %v529
  %v2357 = vunpack.c.h.b16 %v529
  %v2358 = vunpack.c.l.b16 %v530
  %v2359 = vunpack.c.h.b16 %v530
  %v2360 = vunpack.c.l.b16 %v531
  %v2361 = vunpack.c.h.b16 %v531
  %v2362 = vunpack.c.l.b16 %v532
  %v2363 = vunpack.c.h.b16 %v532
  %v2364 = vunpack.c.l.b16 %v533
  %v2365 = vunpack.c.h.b16 %v533
  %v2366 = vunpack.c.l.b16 %v534
  %v2367 = vunpack.c.h.b16 %v534
  %v2368 = vunpack.c.l.b16 %v535
  %v2369 = vunpack.c.h.b16 %v535
  %v2370 = vunpack.c.l.b16 %v536
  %v2371 = vunpack.c.h.b16 %v536
  %v2372 = vunpack.c.l.b16 %v537
  %v2373 = vunpack.c.h.b16 %v537
  %v2374 = vunpack.c.l.b16 %v538
  %v2375 = vunpack.c.h.b16 %v538
  %v2376 = vunpack.c.l.b16 %v539
  %v2377 = vunpack.c.h.b16 %v539
  %v2378 = vunpack.c.l.b16 %v540
  %v2379 = vunpack.c.h.b16 %v540
  %v2380 = vunpack.c.l.b16 %v541
  %v2381 = vunpack.c.h.b16 %v541
  %v2382 = vunpack.c.l.b16 %v542
  %v2383 = vunpack.c.h.b16 %v542
  %v2384 = vunpack.c.l.b16 %v543
  %v2385 = vunpack.c.h.b16 %v543
  %v2386 = vunpack.c.l.b16 %v544
  %v2387 = vunpack.c.h.b16 %v544
  %v2388 = vunpack.c.l.b16 %v545
  %v2389 = vunpack.c.h.b16 %v545
  %v2390 = vunpack.c.l.b16 %v546
  %v2391 = vunpack.c.h.b16 %v546
  %v2392 = vunpack.c.l.b16 %v547
  %v2393 = vunpack.c.h.b16 %v547
  %v2394 = vunpack.c.l.b16 %v548
  %v2395 = vunpack.c.h.b16 %v548
  %v2396 = vunpack.c.l.b16 %v549
  %v2397 = vunpack.c.h.b16 %v549
  %v2398 = vunpack.c.l.b16 %v550
  %v2399 = vunpack.c.h.b16 %v550
  %v2400 = vunpack.c.l.b16 %v551
  %v2401 = vunpack.c.h.b16 %v551
  %v2402 = vunpack.c.l.b16 %v552
  %v2403 = vunpack.c.h.b16 %v552
  %v2404 = vunpack.c.l.b16 %v553
  %v2405 = vunpack.c.h.b16 %v553
  %v2406 = vunpack.c.l.b16 %v554
  %v2407 = vunpack.c.h.b16 %v554
  %v2408 = vunpack.c.l.b16 %v555
  %v2409 = vunpack.c.h.b16 %v555
  %v2410 = vunpack.c.l.b16 %v556
  %v2411 = vunpack.c.h.b16 %v556
  %v2412 = vunpack.c.l.b16 %v557
  %v2413 = vunpack.c.h.b16 %v557
  %v2414 = vunpack.c.l.b16 %v558
  %v2415 = vunpack.c.h.b16 %v558
  %v2416 = vunpack.c.l.b16 %v559
  %v2417 = vunpack.c.h.b16 %v559
  %v2418 = vunpack.c.l.b16 %v560
  %v2419 = vunpack.c.h.b16 %v560
  %v2420 = vunpack.c.l.b16 %v561
  %v2421 = vunpack.c.h.b16 %v561
  %v2422 = vunpack.c.l.b16 %v562
  %v2423 = vunpack.c.h.b16 %v562
  %v2424 = vunpack.c.l.b16 %v563
  %v2425 = vunpack.c.h.b16 %v563
  %v2426 = vunpack.c.l.b16 %v564
  %v2427 = vunpack.c.h.b16 %v564
  %v2428 = vunpack.c.l.b16 %v565
  %v2429 = vunpack.c.h.b16 %v565
  %v2430 = vunpack.c.l.b16 %v566
  %v2431 = vunpack.c.h.b16 %v566
  %v2432 = vunpack.c.l.b16 %v567
  %v2433 = vunpack.c.h.b16 %v567
  %v2434 = vunpack.c.l.b16 %v568
  %v2435 = vunpack.c.h.b16 %v568
  %v2436 = vunpack.c.l.b16 %v569
  %v2437 = vunpack.c.h.b16 %v569
  %v2438 = vunpack.c.l.b16 %v570
  %v2439 = vunpack.c.h.b16 %v570
  %v2440 = vunpack.c.l.b16 %v571
  %v2441 = vunpack.c.h.b16 %v571
  %v2442 = vunpack.c.l.b16 %v572
  %v2443 = vunpack.c.h.b16 %v572
  %v2444 = vunpack.c.l.b16 %v573
  %v2445 = vunpack.c.h.b16 %v573
  %v2446 = vunpack.c.l.b16 %v574
  %v2447 = vunpack.c.h.b16 %v574
  %v2448 = vunpack.c.l.b16 %v575
  %v2449 = vunpack.c.h.b16 %v575
  %v2450 = vunpack.c.l.b16 %v576
  %v2451 = vunpack.c.h.b16 %v576
  %v2452 = vunpack.c.l.b16 %v577
  %v2453 = vunpack.c.h.b16 %v577
  %v2454 = vunpack.c.l.b16 %v578
  %v2455 = vunpack.c.h.b16 %v578
  %v2456 = vunpack.c.l.b16 %v579
  %v2457 = vunpack.c.h.b16 %v579
  %v2458 = vunpack.c.l.b16 %v580
  %v2459 = vunpack.c.h.b16 %v580
  %v2460 = vunpack.c.l.b16 %v581
  %v2461 = vunpack.c.h.b16 %v581
  %v2462 = vunpack.c.l.b16 %v582
  %v2463 = vunpack.c.h.b16 %v582
  %v2464 = vunpack.c.l.b16 %v583
  %v2465 = vunpack.c.h.b16 %v583
  %v2466 = vunpack.c.l.b16 %v584
  %v2467 = vunpack.c.h.b16 %v584
  %v2468 = vunpack.c.l.b16 %v585
  %v2469 = vunpack.c.h.b16 %v585
  %v2470 = vunpack.c.l.b16 %v586
  %v2471 = vunpack.c.h.b16 %v586
  %v2472 = vunpack.c.l.b16 %v587
  %v2473 = vunpack.c.h.b16 %v587
  %v2474 = vunpack.c.l.b16 %v588
  %v2475 = vunpack.c.h.b16 %v588
  %v2476 = vunpack.c.l.b16 %v589
  %v2477 = vunpack.c.h.b16 %v589
  %v2478 = vunpack.c.l.b16 %v590
  %v2479 = vunpack.c.h.b16 %v590
  %v2480 = vunpack.c.l.b16 %v591
  %v2481 = vunpack.c.h.b16 %v591
  %v2482 = vunpack.c.l.b16 %v592
  %v2483 = vunpack.c.h.b16 %v592
  %v2484 = vpack.c.b16 %v1336, %v1332
  %v2485 = vpack.c.b16 %v1337, %v1333
  %v2486 = vpack.c.b16 %v1338, %v1334
  %v2487 = vpack.c.b16 %v1339, %v1335
  %v2488 = vpack.c.b16 %v1344, %v1340
  %v2489 = vpack.c.b16 %v1345, %v1341
  %v2490 = vpack.c.b16 %v1346, %v1342
  %v2491 = vpack.c.b16 %v1347, %v1343
  %v2492 = vpack.c.b16 %v1352, %v1348
  %v2493 = vpack.c.b16 %v1353, %v1349
  %v2494 = vpack.c.b16 %v1354, %v1350
  %v2495 = vpack.c.b16 %v1355, %v1351
  %v2496 = vpack.c.b16 %v1360, %v1356
  %v2497 = vpack.c.b16 %v1361, %v1357
  %v2498 = vpack.c.b16 %v1362, %v1358
  %v2499 = vpack.c.b16 %v1363, %v1359
  %v2500 = vpack.c.b16 %v1368, %v1364
  %v2501 = vpack.c.b16 %v1369, %v1365
  %v2502 = vpack.c.b16 %v1370, %v1366
  %v2503 = vpack.c.b16 %v1371, %v1367
  %v2504 = vpack.c.b16 %v1376, %v1372
  %v2505 = vpack.c.b16 %v1377, %v1373
  %v2506 = vpack.c.b16 %v1378, %v1374
  %v2507 = vpack.c.b16 %v1379, %v1375
  %v2508 = vpack.c.b16 %v1384, %v1380
  %v2509 = vpack.c.b16 %v1385, %v1381
  %v2510 = vpack.c.b16 %v1386, %v1382
  %v2511 = vpack.c.b16 %v1387, %v1383
  %v2512 = vpack.c.b16 %v1392, %v1388
  %v2513 = vpack.c.b16 %v1393, %v1389
  %v2514 = vpack.c.b16 %v1394, %v1390
  %v2515 = vpack.c.b16 %v1395, %v1391
  %v2516 = vpack.c.b16 %v1400, %v1396
  %v2517 = vpack.c.b16 %v1401, %v1397
  %v2518 = vpack.c.b16 %v1402, %v1398
  %v2519 = vpack.c.b16 %v1403, %v1399
  %v2520 = vpack.c.b16 %v1408, %v1404
  %v2521 = vpack.c.b16 %v1409, %v1405
  %v2522 = vpack.c.b16 %v1410, %v1406
  %v2523 = vpack.c.b16 %v1411, %v1407
  %v2524 = vpack.c.b16 %v1416, %v1412
  %v2525 = vpack.c.b16 %v1417, %v1413
  %v2526 = vpack.c.b16 %v1418, %v1414
  %v2527 = vpack.c.b16 %v1419, %v1415
  %v2528 = vpack.c.b16 %v1424, %v1420
  %v2529 = vpack.c.b16 %v1425, %v1421
  %v2530 = vpack.c.b16 %v1426, %v1422
  %v2531 = vpack.c.b16 %v1427, %v1423
  %v2532 = vpack.c.b16 %v1432, %v1428
  %v2533 = vpack.c.b16 %v1433, %v1429
  %v2534 = vpack.c.b16 %v1434, %v1430
  %v2535 = vpack.c.b16 %v1435, %v1431
  %v2536 = vpack.c.b16 %v1440, %v1436
  %v2537 = vpack.c.b16 %v1441, %v1437
  %v2538 = vpack.c.b16 %v1442, %v1438
  %v2539 = vpack.c.b16 %v1443, %v1439
  %v2540 = vpack.c.b16 %v1448, %v1444
  %v2541 = vpack.c.b16 %v1449, %v1445
  %v2542 = vpack.c.b16 %v1450, %v1446
  %v2543 = vpack.c.b16 %v1451, %v1447
  %v2544 = vpack.c.b16 %v1456, %v1452
  %v2545 = vpack.c.b16 %v1457, %v1453
  %v2546 = vpack.c.b16 %v1458, %v1454
  %v2547 = vpack.c.b16 %v1459, %v1455
  %v2548 = vpack.c.b16 %v1464, %v1460
  %v2549 = vpack.c.b16 %v1465, %v1461
  %v2550 = vpack.c.b16 %v1466, %v1462
  %v2551 = vpack.c.b16 %v1467, %v1463
  %v2552 = vpack.c.b16 %v1472, %v1468
  %v2553 = vpack.c.b16 %v1473, %v1469
  %v2554 = vpack.c.b16 %v1474, %v1470
  %v2555 = vpack.c.b16 %v1475, %v1471
  %v2556 = vpack.c.b16 %v1480, %v1476
  %v2557 = vpack.c.b16 %v1481, %v1477
  %v2558 = vpack.c.b16 %v1482, %v1478
  %v2559 = vpack.c.b16 %v1483, %v1479
  %v2560 = vpack.c.b16 %v1488, %v1484
  %v2561 = vpack.c.b16 %v1489, %v1485
  %v2562 = vpack.c.b16 %v1490, %v1486
  %v2563 = vpack.c.b16 %v1491, %v1487
  %v2564 = vpack.c.b16 %v1496, %v1492
  %v2565 = vpack.c.b16 %v1497, %v1493
  %v2566 = vpack.c.b16 %v1498, %v1494
  %v2567 = vpack.c.b16 %v1499, %v1495
  %v2568 = vpack.c.b16 %v1504, %v1500
  %v2569 = vpack.c.b16 %v1505, %v1501
  %v2570 = vpack.c.b16 %v1506, %v1502
  %v2571 = vpack.c.b16 %v1507, %v1503
  %v2572 = vpack.c.b16 %v1512, %v1508
  %v2573 = vpack.c.b16 %v1513, %v1509
  %v2574 = vpack.c.b16 %v1514, %v1510
  %v2575 = vpack.c.b16 %v1515, %v1511
  %v2576 = vpack.c.b16 %v1520, %v1516
  %v2577 = vpack.c.b16 %v1521, %v1517
  %v2578 = vpack.c.b16 %v1522, %v1518
  %v2579 = vpack.c.b16 %v1523, %v1519
  %v2580 = vpack.c.b16 %v1528, %v1524
  %v2581 = vpack.c.b16 %v1529, %v1525
  %v2582 = vpack.c.b16 %v1530, %v1526
  %v2583 = vpack.c.b16 %v1531, %v1527
  %v2584 = vpack.c.b16 %v1536, %v1532
  %v2585 = vpack.c.b16 %v1537, %v1533
  %v2586 = vpack.c.b16 %v1538, %v1534
  %v2587 = vpack.c.b16 %v1539, %v1535
  %v2588 = vpack.c.b16 %v1544, %v1540
  %v2589 = vpack.c.b16 %v1545, %v1541
  %v2590 = vpack.c.b16 %v1546, %v1542
  %v2591 = vpack.c.b16 %v1547, %v1543
  %v2592 = vpack.c.b16 %v1552, %v1548
  %v2593 = vpack.c.b16 %v1553, %v1549
  %v2594 = vpack.c.b16 %v1554, %v1550
  %v2595 = vpack.c.b16 %v1555, %v1551
  %v2596 = vpack.c.b16 %v1560, %v1556
  %v2597 = vpack.c.b16 %v1561, %v1557
  %v2598 = vpack.c.b16 %v1562, %v1558
  %v2599 = vpack.c.b16 %v1563, %v1559
  %v2600 = vpack.c.b16 %v1568, %v1564
  %v2601 = vpack.c.b16 %v1569, %v1565
  %v2602 = vpack.c.b16 %v1570, %v1566
  %v2603 = vpack.c.b16 %v1571, %v1567
  %v2604 = vpack.c.b16 %v1576, %v1572
  %v2605 = vpack.c.b16 %v1577, %v1573
  %v2606 = vpack.c.b16 %v1578, %v1574
  %v2607 = vpack.c.b16 %v1579, %v1575
  %v2608 = vpack.c.b16 %v1584, %v1580
  %v2609 = vpack.c.b16 %v1585, %v1581
  %v2610 = vpack.c.b16 %v1586, %v1582
  %v2611 = vpack.c.b16 %v1587, %v1583
  %v2612 = vpack.c.b16 %v1592, %v1588
  %v2613 = vpack.c.b16 %v1593, %v1589
  %v2614 = vpack.c.b16 %v1594, %v1590
  %v2615 = vpack.c.b16 %v1595, %v1591
  %v2616 = vpack.c.b16 %v1600, %v1596
  %v2617 = vpack.c.b16 %v1601, %v1597
  %v2618 = vpack.c.b16 %v1602, %v1598
  %v2619 = vpack.c.b16 %v1603, %v1599
  %v2620 = vpack.c.b16 %v1608, %v1604
  %v2621 = vpack.c.b16 %v1609, %v1605
  %v2622 = vpack.c.b16 %v1610, %v1606
  %v2623 = vpack.c.b16 %v1611, %v1607
  %v2624 = vpack.c.b16 %v1616, %v1612
  %v2625 = vpack.c.b16 %v1617, %v1613
  %v2626 = vpack.c.b16 %v1618, %v1614
  %v2627 = vpack.c.b16 %v1619, %v1615
  %v2628 = vpack.c.b16 %v1624, %v1620
  %v2629 = vpack.c.b16 %v1625, %v1621
  %v2630 = vpack.c.b16 %v1626, %v1622
  %v2631 = vpack.c.b16 %v1627, %v1623
  %v2632 = vpack.c.b16 %v1632, %v1628
  %v2633 = vpack.c.b16 %v1633, %v1629
  %v2634 = vpack.c.b16 %v1634, %v1630
  %v2635 = vpack.c.b16 %v1635, %v1631
  %v2636 = vpack.c.b16 %v1640, %v1636
  %v2637 = vpack.c.b16 %v1641, %v1637
  %v2638 = vpack.c.b16 %v1642, %v1638
  %v2639 = vpack.c.b16 %v1643, %v1639
  %v2640 = vpack.c.b16 %v1648, %v1644
  %v2641 = vpack.c.b16 %v1649, %v1645
  %v2642 = vpack.c.b16 %v1650, %v1646
  %v2643 = vpack.c.b16 %v1651, %v1647
  %v2644 = vpack.c.b16 %v1656, %v1652
  %v2645 = vpack.c.b16 %v1657, %v1653
  %v2646 = vpack.c.b16 %v1658, %v1654
  %v2647 = vpack.c.b16 %v1659, %v1655
  %v2648 = vpack.c.b16 %v1664, %v1660
  %v2649 = vpack.c.b16 %v1665, %v1661
  %v2650 = vpack.c.b16 %v1666, %v1662
  %v2651 = vpack.c.b16 %v1667, %v1663
  %v2652 = vpack.c.b16 %v1672, %v1668
  %v2653 = vpack.c.b16 %v1673, %v1669
  %v2654 = vpack.c.b16 %v1674, %v1670
  %v2655 = vpack.c.b16 %v1675, %v1671
  %v2656 = vpack.c.b16 %v1680, %v1676
  %v2657 = vpack.c.b16 %v1681, %v1677
  %v2658 = vpack.c.b16 %v1682, %v1678
  %v2659 = vpack.c.b16 %v1683, %v1679
  %v2660 = vpack.c.b16 %v1688, %v1684
  %v2661 = vpack.c.b16 %v1689, %v1685
  %v2662 = vpack.c.b16 %v1690, %v1686
  %v2663 = vpack.c.b16 %v1691, %v1687
  %v2664 = vpack.c.b16 %v1696, %v1692
  %v2665 = vpack.c.b16 %v1697, %v1693
  %v2666 = vpack.c.b16 %v1698, %v1694
  %v2667 = vpack.c.b16 %v1699, %v1695
  %v2668 = vpack.c.b16 %v1704, %v1700
  %v2669 = vpack.c.b16 %v1705, %v1701
  %v2670 = vpack.c.b16 %v1706, %v1702
  %v2671 = vpack.c.b16 %v1707, %v1703
  %v2672 = vpack.c.b16 %v1712, %v1708
  %v2673 = vpack.c.b16 %v1713, %v1709
  %v2674 = vpack.c.b16 %v1714, %v1710
  %v2675 = vpack.c.b16 %v1715, %v1711
  %v2676 = vpack.c.b16 %v1720, %v1716
  %v2677 = vpack.c.b16 %v1721, %v1717
  %v2678 = vpack.c.b16 %v1722, %v1718
  %v2679 = vpack.c.b16 %v1723, %v1719
  %v2680 = vpack.c.b16 %v1728, %v1724
  %v2681 = vpack.c.b16 %v1729, %v1725
  %v2682 = vpack.c.b16 %v1730, %v1726
  %v2683 = vpack.c.b16 %v1731, %v1727
  %v2684 = vpack.c.b16 %v1736, %v1732
  %v2685 = vpack.c.b16 %v1737, %v1733
  %v2686 = vpack.c.b16 %v1738, %v1734
  %v2687 = vpack.c.b16 %v1739, %v1735
  %v2688 = vpack.c.b16 %v1744, %v1740
  %v2689 = vpack.c.b16 %v1745, %v1741
  %v2690 = vpack.c.b16 %v1746, %v1742
  %v2691 = vpack.c.b16 %v1747, %v1743
  %v2692 = vpack.c.b16 %v1752, %v1748
  %v2693 = vpack.c.b16 %v1753, %v1749
  %v2694 = vpack.c.b16 %v1754, %v1750
  %v2695 = vpack.c.b16 %v1755, %v1751
  %v2696 = vpack.c.b16 %v1760, %v1756
  %v2697 = vpack.c.b16 %v1761, %v1757
  %v2698 = vpack.c.b16 %v1762, %v1758
  %v2699 = vpack.c.b16 %v1763, %v1759
  %v2700 = vpack.c.b16 %v1768, %v1764
  %v2701 = vpack.c.b16 %v1769, %v1765
  %v2702 = vpack.c.b16 %v1770, %v1766
  %v2703 = vpack.c.b16 %v1771, %v1767
  %v2704 = vpack.c.b16 %v1776, %v1772
  %v2705 = vpack.c.b16 %v1777, %v1773
  %v2706 = vpack.c.b16 %v1778, %v1774
  %v2707 = vpack.c.b16 %v1779, %v1775
  %v2708 = vpack.c.b16 %v1784, %v1780
  %v2709 = vpack.c.b16 %v1785, %v1781
  %v2710 = vpack.c.b16 %v1786, %v1782
  %v2711 = vpack.c.b16 %v1787, %v1783
  %v2712 = vpack.c.b16 %v1792, %v1788
  %v2713 = vpack.c.b16 %v1793, %v1789
  %v2714 = vpack.c.b16 %v1794, %v1790
  %v2715 = vpack.c.b16 %v1795, %v1791
  %v2716 = vpack.c.b16 %v1800, %v1796
  %v2717 = vpack.c.b16 %v1801, %v1797
  %v2718 = vpack.c.b16 %v1802, %v1798
  %v2719 = vpack.c.b16 %v1803, %v1799
  %v2720 = vpack.c.b16 %v1808, %v1804
  %v2721 = vpack.c.b16 %v1809, %v1805
  %v2722 = vpack.c.b16 %v1810, %v1806
  %v2723 = vpack.c.b16 %v1811, %v1807
  %v2724 = vpack.c.b16 %v1816, %v1812
  %v2725 = vpack.c.b16 %v1817, %v1813
  %v2726 = vpack.c.b16 %v1818, %v1814
  %v2727 = vpack.c.b16 %v1819, %v1815
  %v2728 = vpack.c.b16 %v1824, %v1820
  %v2729 = vpack.c.b16 %v1825, %v1821
  %v2730 = vpack.c.b16 %v1826, %v1822
  %v2731 = vpack.c.b16 %v1827, %v1823
  %v2732 = vpack.c.b16 %v1832, %v1828
  %v2733 = vpack.c.b16 %v1833, %v1829
  %v2734 = vpack.c.b16 %v1834, %v1830
  %v2735 = vpack.c.b16 %v1835, %v1831
  %v2736 = vpack.c.b16 %v1840, %v1836
  %v2737 = vpack.c.b16 %v1841, %v1837
  %v2738 = vpack.c.b16 %v1842, %v1838
  %v2739 = vpack.c.b16 %v1843, %v1839
  %v2740 = vpack.c.b16 %v1848, %v1844
  %v2741 = vpack.c.b16 %v1849, %v1845
  %v2742 = vpack.c.b16 %v1850, %v1846
  %v2743 = vpack.c.b16 %v1851, %v1847
  %v2744 = vpack.c.b16 %v1856, %v1852
  %v2745 = vpack.c.b16 %v1857, %v1853
  %v2746 = vpack.c.b16 %v1858, %v1854
  %v2747 = vpack.c.b16 %v1859, %v1855
  %v2748 = vpack.c.b16 %v1864, %v1860
  %v2749 = vpack.c.b16 %v1865, %v1861
  %v2750 = vpack.c.b16 %v1866, %v1862
  %v2751 = vpack.c.b16 %v1867, %v1863
  %v2752 = vpack.c.b16 %v1872, %v1868
  %v2753 = vpack.c.b16 %v1873, %v1869
  %v2754 = vpack.c.b16 %v1874, %v1870
  %v2755 = vpack.c.b16 %v1875, %v1871
  %v2756 = vpack.c.b16 %v1880, %v1876
  %v2757 = vpack.c.b16 %v1881, %v1877
  %v2758 = vpack.c.b16 %v1882, %v1878
  %v2759 = vpack.c.b16 %v1883, %v1879
  %v2760 = vpack.c.b16 %v1888, %v1884
  %v2761 = vpack.c.b16 %v1889, %v1885
  %v2762 = vpack.c.b16 %v1890, %v1886
  %v2763 = vpack.c.b16 %v1891, %v1887
  %v2764 = vpack.c.b16 %v1896, %v1892
  %v2765 = vpack.c.b16 %v1897, %v1893
  %v2766 = vpack.c.b16 %v1898, %v1894
  %v2767 = vpack.c.b16 %v1899, %v1895
  %v2768 = vpack.c.b16 %v1904, %v1900
  %v2769 = vpack.c.b16 %v1905, %v1901
  %v2770 = vpack.c.b16 %v1906, %v1902
  %v2771 = vpack.c.b16 %v1907, %v1903
  %v2772 = vpack.c.b16 %v1912, %v1908
  %v2773 = vpack.c.b16 %v1913, %v1909
  %v2774 = vpack.c.b16 %v1914, %v1910
  %v2775 = vpack.c.b16 %v1915, %v1911
  %v2776 = vpack.c.b16 %v1920, %v1916
  %v2777 = vpack.c.b16 %v1921, %v1917
  %v2778 = vpack.c.b16 %v1922, %v1918
  %v2779 = vpack.c.b16 %v1923, %v1919
  %v2780 = vpack.c.b16 %v1928, %v1924
  %v2781 = vpack.c.b16 %v1929, %v1925
  %v2782 = vpack.c.b16 %v1930, %v1926
  %v2783 = vpack.c.b16 %v1931, %v1927
  %v2784 = vpack.c.b16 %v1936, %v1932
  %v2785 = vpack.c.b16 %v1937, %v1933
  %v2786 = vpack.c.b16 %v1938, %v1934
  %v2787 = vpack.c.b16 %v1939, %v1935
  %v2788 = vpack.c.b16 %v1944, %v1940
  %v2789 = vpack.c.b16 %v1945, %v1941
  %v2790 = vpack.c.b16 %v1946, %v1942
  %v2791 = vpack.c.b16 %v1947, %v1943
  %v2792 = vpack.c.b16 %v1952, %v1948
  %v2793 = vpack.c.b16 %v1953, %v1949
  %v2794 = vpack.c.b16 %v1954, %v1950
  %v2795 = vpack.c.b16 %v1955, %v1951
  %v2796 = vpack.c.b16 %v1960, %v1956
  %v2797 = vpack.c.b16 %v1961, %v1957
  %v2798 = vpack.c.b16 %v1962, %v1958
  %v2799 = vpack.c.b16 %v1963, %v1959
  %v2800 = vpack.c.b16 %v1968, %v1964
  %v2801 = vpack.c.b16 %v1969, %v1965
  %v2802 = vpack.c.b16 %v1970, %v1966
  %v2803 = vpack.c.b16 %v1971, %v1967
  %v2804 = vpack.c.b16 %v1976, %v1972
  %v2805 = vpack.c.b16 %v1977, %v1973
  %v2806 = vpack.c.b16 %v1978, %v1974
  %v2807 = vpack.c.b16 %v1979, %v1975
  %v2808 = vpack.c.b16 %v1984, %v1980
  %v2809 = vpack.c.b16 %v1985, %v1981
  %v2810 = vpack.c.b16 %v1986, %v1982
  %v2811 = vpack.c.b16 %v1987, %v1983
  %v2812 = vpack.c.b16 %v1992, %v1988
  %v2813 = vpack.c.b16 %v1993, %v1989
  %v2814 = vpack.c.b16 %v1994, %v1990
  %v2815 = vpack.c.b16 %v1995, %v1991
  %v2816 = vpack.c.b16 %v2000, %v1996
  %v2817 = vpack.c.b16 %v2001, %v1997
  %v2818 = vpack.c.b16 %v2002, %v1998
  %v2819 = vpack.c.b16 %v2003, %v1999
  %v2820 = vpack.c.b16 %v2008, %v2004
  %v2821 = vpack.c.b16 %v2009, %v2005
  %v2822 = vpack.c.b16 %v2010, %v2006
  %v2823 = vpack.c.b16 %v2011, %v2007
  %v2824 = vpack.c.b16 %v2016, %v2012
  %v2825 = vpack.c.b16 %v2017, %v2013
  %v2826 = vpack.c.b16 %v2018, %v2014
  %v2827 = vpack.c.b16 %v2019, %v2015
  %v2828 = vpack.c.b16 %v2024, %v2020
  %v2829 = vpack.c.b16 %v2025, %v2021
  %v2830 = vpack.c.b16 %v2026, %v2022
  %v2831 = vpack.c.b16 %v2027, %v2023
  %v2832 = vpack.c.b16 %v2032, %v2028
  %v2833 = vpack.c.b16 %v2033, %v2029
  %v2834 = vpack.c.b16 %v2034, %v2030
  %v2835 = vpack.c.b16 %v2035, %v2031
  %v2836 = vpack.c.b16 %v2040, %v2036
  %v2837 = vpack.c.b16 %v2041, %v2037
  %v2838 = vpack.c.b16 %v2042, %v2038
  %v2839 = vpack.c.b16 %v2043, %v2039
  %v2840 = vpack.c.b16 %v2048, %v2044
  %v2841 = vpack.c.b16 %v2049, %v2045
  %v2842 = vpack.c.b16 %v2050, %v2046
  %v2843 = vpack.c.b16 %v2051, %v2047
  %v2844 = vpack.c.b16 %v2056, %v2052
  %v2845 = vpack.c.b16 %v2057, %v2053
  %v2846 = vpack.c.b16 %v2058, %v2054
  %v2847 = vpack.c.b16 %v2059, %v2055
  %v2848 = vpack.c.b16 %v2064, %v2060
  %v2849 = vpack.c.b16 %v2065, %v2061
  %v2850 = vpack.c.b16 %v2066, %v2062
  %v2851 = vpack.c.b16 %v2067, %v2063
  %v2852 = vpack.c.b16 %v2072, %v2068
  %v2853 = vpack.c.b16 %v2073, %v2069
  %v2854 = vpack.c.b16 %v2074, %v2070
  %v2855 = vpack.c.b16 %v2075, %v2071
  %v2856 = vpack.c.b16 %v2080, %v2076
  %v2857 = vpack.c.b16 %v2081, %v2077
  %v2858 = vpack.c.b16 %v2082, %v2078
  %v2859 = vpack.c.b16 %v2083, %v2079
  %v2860 = vpack.c.b16 %v2088, %v2084
  %v2861 = vpack.c.b16 %v2089, %v2085
  %v2862 = vpack.c.b16 %v2090, %v2086
  %v2863 = vpack.c.b16 %v2091, %v2087
  %v2864 = vpack.c.b16 %v2096, %v2092
  %v2865 = vpack.c.b16 %v2097, %v2093
  %v2866 = vpack.c.b16 %v2098, %v2094
  %v2867 = vpack.c.b16 %v2099, %v2095
  %v2868 = vpack.c.b16 %v2104, %v2100
  %v2869 = vpack.c.b16 %v2105, %v2101
  %v2870 = vpack.c.b16 %v2106, %v2102
  %v2871 = vpack.c.b16 %v2107, %v2103
  %v2872 = vpack.c.b16 %v2112, %v2108
  %v2873 = vpack.c.b16 %v2113, %v2109
  %v2874 = vpack.c.b16 %v2114, %v2110
  %v2875 = vpack.c.b16 %v2115, %v2111
  %v2876 = vpack.c.b16 %v2120, %v2116
  %v2877 = vpack.c.b16 %v2121, %v2117
  %v2878 = vpack.c.b16 %v2122, %v2118
  %v2879 = vpack.c.b16 %v2123, %v2119
  %v2880 = vpack.c.b16 %v2128, %v2124
  %v2881 = vpack.c.b16 %v2129, %v2125
  %v2882 = vpack.c.b16 %v2130, %v2126
  %v2883 = vpack.c.b16 %v2131, %v2127
  %v2884 = vpack.c.b16 %v2136, %v2132
  %v2885 = vpack.c.b16 %v2137, %v2133
  %v2886 = vpack.c.b16 %v2138, %v2134
  %v2887 = vpack.c.b16 %v2139, %v2135
  %v2888 = vpack.c.b16 %v2144, %v2140
  %v2889 = vpack.c.b16 %v2145, %v2141
  %v2890 = vpack.c.b16 %v2146, %v2142
  %v2891 = vpack.c.b16 %v2147, %v2143
  %v2892 = vpack.c.b16 %v2152, %v2148
  %v2893 = vpack.c.b16 %v2153, %v2149
  %v2894 = vpack.c.b16 %v2154, %v2150
  %v2895 = vpack.c.b16 %v2155, %v2151
  %v2896 = vpack.c.b16 %v2160, %v2156
  %v2897 = vpack.c.b16 %v2161, %v2157
  %v2898 = vpack.c.b16 %v2162, %v2158
  %v2899 = vpack.c.b16 %v2163, %v2159
  %v2900 = vpack.c.b16 %v2168, %v2164
  %v2901 = vpack.c.b16 %v2169, %v2165
  %v2902 = vpack.c.b16 %v2170, %v2166
  %v2903 = vpack.c.b16 %v2171, %v2167
  %v2904 = vpack.c.b16 %v2176, %v2172
  %v2905 = vpack.c.b16 %v2177, %v2173
  %v2906 = vpack.c.b16 %v2178, %v2174
  %v2907 = vpack.c.b16 %v2179, %v2175
  %v2908 = vpack.c.b16 %v2184, %v2180
  %v2909 = vpack.c.b16 %v2185, %v2181
  %v2910 = vpack.c.b16 %v2186, %v2182
  %v2911 = vpack.c.b16 %v2187, %v2183
  %v2912 = vpack.c.b16 %v2192, %v2188
  %v2913 = vpack.c.b16 %v2193, %v2189
  %v2914 = vpack.c.b16 %v2194, %v2190
  %v2915 = vpack.c.b16 %v2195, %v2191
  %v2916 = vpack.c.b16 %v2200, %v2196
  %v2917 = vpack.c.b16 %v2201, %v2197
  %v2918 = vpack.c.b16 %v2202, %v2198
  %v2919 = vpack.c.b16 %v2203, %v2199
  %v2920 = vpack.c.b16 %v2208, %v2204
  %v2921 = vpack.c.b16 %v2209, %v2205
  %v2922 = vpack.c.b16 %v2210, %v2206
  %v2923 = vpack.c.b16 %v2211, %v2207
  %v2924 = vpack.c.b16 %v2216, %v2212
  %v2925 = vpack.c.b16 %v2217, %v2213
  %v2926 = vpack.c.b16 %v2218, %v2214
  %v2927 = vpack.c.b16 %v2219, %v2215
  %v2928 = vpack.c.b16 %v2224, %v2220
  %v2929 = vpack.c.b16 %v2225, %v2221
  %v2930 = vpack.c.b16 %v2226, %v2222
  %v2931 = vpack.c.b16 %v2227, %v2223
  %v2932 = vpack.c.b16 %v2232, %v2228
  %v2933 = vpack.c.b16 %v2233, %v2229
  %v2934 = vpack.c.b16 %v2234, %v2230
  %v2935 = vpack.c.b16 %v2235, %v2231
  %v2936 = vpack.c.b16 %v2240, %v2236
  %v2937 = vpack.c.b16 %v2241, %v2237
  %v2938 = vpack.c.b16 %v2242, %v2238
  %v2939 = vpack.c.b16 %v2243, %v2239
  %v2940 = vpack.c.b16 %v2248, %v2244
  %v2941 = vpack.c.b16 %v2249, %v2245
  %v2942 = vpack.c.b16 %v2250, %v2246
  %v2943 = vpack.c.b16 %v2251, %v2247
  %v2944 = vpack.c.b16 %v2256, %v2252
  %v2945 = vpack.c.b16 %v2257, %v2253
  %v2946 = vpack.c.b16 %v2258, %v2254
  %v2947 = vpack.c.b16 %v2259, %v2255
  %v2948 = vpack.c.b16 %v2264, %v2260
  %v2949 = vpack.c.b16 %v2265, %v2261
  %v2950 = vpack.c.b16 %v2266, %v2262
  %v2951 = vpack.c.b16 %v2267, %v2263
  %v2952 = vpack.c.b16 %v2272, %v2268
  %v2953 = vpack.c.b16 %v2273, %v2269
  %v2954 = vpack.c.b16 %v2274, %v2270
  %v2955 = vpack.c.b16 %v2275, %v2271
  %v2956 = vpack.c.b16 %v2280, %v2276
  %v2957 = vpack.c.b16 %v2281, %v2277
  %v2958 = vpack.c.b16 %v2282, %v2278
  %v2959 = vpack.c.b16 %v2283, %v2279
  %v2960 = vpack.c.b16 %v2288, %v2284
  %v2961 = vpack.c.b16 %v2289, %v2285
  %v2962 = vpack.c.b16 %v2290, %v2286
  %v2963 = vpack.c.b16 %v2291, %v2287
  %v2964 = vpack.c.b16 %v2296, %v2292
  %v2965 = vpack.c.b16 %v2297, %v2293
  %v2966 = vpack.c.b16 %v2298, %v2294
  %v2967 = vpack.c.b16 %v2299, %v2295
  %v2968 = vpack.c.b16 %v2304, %v2300
  %v2969 = vpack.c.b16 %v2305, %v2301
  %v2970 = vpack.c.b16 %v2306, %v2302
  %v2971 = vpack.c.b16 %v2307, %v2303
  %v2972 = vpack.c.b16 %v2312, %v2308
  %v2973 = vpack.c.b16 %v2313, %v2309
  %v2974 = vpack.c.b16 %v2314, %v2310
  %v2975 = vpack.c.b16 %v2315, %v2311
  %v2976 = vpack.c.b16 %v2320, %v2316
  %v2977 = vpack.c.b16 %v2321, %v2317
  %v2978 = vpack.c.b16 %v2322, %v2318
  %v2979 = vpack.c.b16 %v2323, %v2319
  %v2980 = vpack.c.b16 %v2328, %v2324
  %v2981 = vpack.c.b16 %v2329, %v2325
  %v2982 = vpack.c.b16 %v2330, %v2326
  %v2983 = vpack.c.b16 %v2331, %v2327
  %v2984 = vpack.c.b16 %v2336, %v2332
  %v2985 = vpack.c.b16 %v2337, %v2333
  %v2986 = vpack.c.b16 %v2338, %v2334
  %v2987 = vpack.c.b16 %v2339, %v2335
  %v2988 = vpack.c.b16 %v2344, %v2340
  %v2989 = vpack.c.b16 %v2345, %v2341
  %v2990 = vpack.c.b16 %v2346, %v2342
  %v2991 = vpack.c.b16 %v2347, %v2343
  %v2992 = vpack.c.b16 %v2352, %v2348
  %v2993 = vpack.c.b16 %v2353, %v2349
  %v2994 = vpack.c.b16 %v2354, %v2350
  %v2995 = vpack.c.b16 %v2355, %v2351
  %v2996 = vpack.c.b16 %v2360, %v2356
  %v2997 = vpack.c.b16 %v2361, %v2357
  %v2998 = vpack.c.b16 %v2362, %v2358
  %v2999 = vpack.c.b16 %v2363, %v2359
  %v3000 = vpack.c.b16 %v2368, %v2364
  %v3001 = vpack.c.b16 %v2369, %v2365
  %v3002 = vpack.c.b16 %v2370, %v2366
  %v3003 = vpack.c.b16 %v2371, %v2367
  %v3004 = vpack.c.b16 %v2376, %v2372
  %v3005 = vpack.c.b16 %v2377, %v2373
  %v3006 = vpack.c.b16 %v2378, %v2374
  %v3007 = vpack.c.b16 %v2379, %v2375
  %v3008 = vpack.c.b16 %v2384, %v2380
  %v3009 = vpack.c.b16 %v2385, %v2381
  %v3010 = vpack.c.b16 %v2386, %v2382
  %v3011 = vpack.c.b16 %v2387, %v2383
  %v3012 = vpack.c.b16 %v2392, %v2388
  %v3013 = vpack.c.b16 %v2393, %v2389
  %v3014 = vpack.c.b16 %v2394, %v2390
  %v3015 = vpack.c.b16 %v2395, %v2391
  %v3016 = vpack.c.b16 %v2400, %v2396
  %v3017 = vpack.c.b16 %v2401, %v2397
  %v3018 = vpack.c.b16 %v2402, %v2398
  %v3019 = vpack.c.b16 %v2403, %v2399
  %v3020 = vpack.c.b16 %v2408, %v2404
  %v3021 = vpack.c.b16 %v2409, %v2405
  %v3022 = vpack.c.b16 %v2410, %v2406
  %v3023 = vpack.c.b16 %v2411, %v2407
  %v3024 = vpack.c.b16 %v2416, %v2412
  %v3025 = vpack.c.b16 %v2417, %v2413
  %v3026 = vpack.c.b16 %v2418, %v2414
  %v3027 = vpack.c.b16 %v2419, %v2415
  %v3028 = vpack.c.b16 %v2424, %v2420
  %v3029 = vpack.c.b16 %v2425, %v2421
  %v3030 = vpack.c.b16 %v2426, %v2422
  %v3031 = vpack.c.b16 %v2427, %v2423
  %v3032 = vpack.c.b16 %v2432, %v2428
  %v3033 = vpack.c.b16 %v2433, %v2429
  %v3034 = vpack.c.b16 %v2434, %v2430
  %v3035 = vpack.c.b16 %v2435, %v2431
  %v3036 = vpack.c.b16 %v2440, %v2436
  %v3037 = vpack.c.b16 %v2441, %v2437
  %v3038 = vpack.c.b16 %v2442, %v2438
  %v3039 = vpack.c.b16 %v2443, %v2439
  %v3040 = vpack.c.b16 %v2448, %v2444
  %v3041 = vpack.c.b16 %v2449, %v2445
  %v3042 = vpack.c.b16 %v2450, %v2446
  %v3043 = vpack.c.b16 %v2451, %v2447
  %v3044 = vpack.c.b16 %v2456, %v2452
  %v3045 = vpack.c.b16 %v2457, %v2453
  %v3046 = vpack.c.b16 %v2458, %v2454
  %v3047 = vpack.c.b16 %v2459, %v2455
  %v3048 = vpack.c.b16 %v2464, %v2460
  %v3049 = vpack.c.b16 %v2465, %v2461
  %v3050 = vpack.c.b16 %v2466, %v2462
  %v3051 = vpack.c.b16 %v2467, %v2463
  %v3052 = vpack.c.b16 %v2472, %v2468
  %v3053 = vpack.c.b16 %v2473, %v2469
  %v3054 = vpack.c.b16 %v2474, %v2470
  %v3055 = vpack.c.b16 %v2475, %v2471
  %v3056 = vpack.c.b16 %v2480, %v2476
  %v3057 = vpack.c.b16 %v2481, %v2477
  %v3058 = vpack.c.b16 %v2482, %v2478
  %v3059 = vpack.c.b16 %v2483, %v2479
  %3636 = vmatprep.subr.bf16.mxu0 %v2485
  %3637 = vmatpush1.bf16.msra.mxu0 %v2484
  %3638 = vmatprep.subr.bf16.mxu0 %v2489
  %3639 = vmatpush1.bf16.msra.mxu0 %v2488
  %3640 = vmatprep.subr.bf16.mxu0 %v2493
  %3641 = vmatpush1.bf16.msra.mxu0 %v2492
  %3642 = vmatprep.subr.bf16.mxu0 %v2497
  %3643 = vmatpush1.bf16.msra.mxu0 %v2496
  %3644 = vmatprep.subr.bf16.mxu0 %v2501
  %3645 = vmatpush1.bf16.msra.mxu0 %v2500
  %3646 = vmatprep.subr.bf16.mxu0 %v2505
  %3647 = vmatpush1.bf16.msra.mxu0 %v2504
  %3648 = vmatprep.subr.bf16.mxu0 %v2509
  %3649 = vmatpush1.bf16.msra.mxu0 %v2508
  %3650 = vmatprep.subr.bf16.mxu0 %v2513
  %3651 = vmatpush1.bf16.msra.mxu0 %v2512
  %3652 = vmatprep.subr.bf16.mxu0 %v2517
  %3653 = vmatpush1.bf16.msra.mxu0 %v2516
  %3654 = vmatprep.subr.bf16.mxu0 %v2521
  %3655 = vmatpush1.bf16.msra.mxu0 %v2520
  %3656 = vmatprep.subr.bf16.mxu0 %v2525
  %3657 = vmatpush1.bf16.msra.mxu0 %v2524
  %3658 = vmatprep.subr.bf16.mxu0 %v2529
  %3659 = vmatpush1.bf16.msra.mxu0 %v2528
  %3660 = vmatprep.subr.bf16.mxu0 %v2533
  %3661 = vmatpush1.bf16.msra.mxu0 %v2532
  %3662 = vmatprep.subr.bf16.mxu0 %v2537
  %3663 = vmatpush1.bf16.msra.mxu0 %v2536
  %3664 = vmatprep.subr.bf16.mxu0 %v2541
  %3665 = vmatpush1.bf16.msra.mxu0 %v2540
  %3666 = vmatprep.subr.bf16.mxu0 %v2545
  %3667 = vmatpush1.bf16.msra.mxu0 %v2544
  %3668 = vmatprep.mubr.bf16.mxu0 %v655
  %3669 = vmatmul.mubr.bf16.gmra.mrb[0].mxu0 %v641
  %v3670 = vpop.f32.mrb[0].mxu0
  %v3671 = vadd.f32 %v598, %v3670
  %v3672 = vpop.f32.mrb[0].mxu0
  %v3673 = vadd.f32 %v602, %v3672
  %v3674 = vpop.f32.mrb[0].mxu0
  %v3675 = vpop.f32.mrb[0].mxu0
  %3676 = vdwg.mxu0
  %3677 = vmatprep.subr.bf16.mxu0 %v2549
  %3678 = vmatpush1.bf16.msra.mxu0 %v2548
  %3679 = vmatprep.subr.bf16.mxu0 %v2553
  %3680 = vmatpush1.bf16.msra.mxu0 %v2552
  %3681 = vmatprep.subr.bf16.mxu0 %v2557
  %3682 = vmatpush1.bf16.msra.mxu0 %v2556
  %3683 = vmatprep.subr.bf16.mxu0 %v2561
  %3684 = vmatpush1.bf16.msra.mxu0 %v2560
  %3685 = vmatprep.subr.bf16.mxu0 %v2565
  %3686 = vmatpush1.bf16.msra.mxu0 %v2564
  %3687 = vmatprep.subr.bf16.mxu0 %v2569
  %3688 = vmatpush1.bf16.msra.mxu0 %v2568
  %3689 = vmatprep.subr.bf16.mxu0 %v2573
  %3690 = vmatpush1.bf16.msra.mxu0 %v2572
  %3691 = vmatprep.subr.bf16.mxu0 %v2577
  %3692 = vmatpush1.bf16.msra.mxu0 %v2576
  %3693 = vmatprep.subr.bf16.mxu0 %v2581
  %3694 = vmatpush1.bf16.msra.mxu0 %v2580
  %3695 = vmatprep.subr.bf16.mxu0 %v2585
  %3696 = vmatpush1.bf16.msra.mxu0 %v2584
  %3697 = vmatprep.subr.bf16.mxu0 %v2589
  %3698 = vmatpush1.bf16.msra.mxu0 %v2588
  %3699 = vmatprep.subr.bf16.mxu0 %v2593
  %3700 = vmatpush1.bf16.msra.mxu0 %v2592
  %3701 = vmatprep.subr.bf16.mxu0 %v2597
  %3702 = vmatpush1.bf16.msra.mxu0 %v2596
  %3703 = vmatprep.subr.bf16.mxu0 %v2601
  %3704 = vmatpush1.bf16.msra.mxu0 %v2600
  %3705 = vmatprep.subr.bf16.mxu0 %v2605
  %3706 = vmatpush1.bf16.msra.mxu0 %v2604
  %3707 = vmatprep.subr.bf16.mxu0 %v2609
  %3708 = vmatpush1.bf16.msra.mxu0 %v2608
  %3709 = vmatprep.mubr.bf16.mxu0 %v665
  %3710 = vmatmul.mubr.bf16.gmra.mrb[0].mxu0 %v663
  %v3711 = vpop.f32.mrb[0].mxu0
  %v3712 = vadd.f32 %v3671, %v3711
  %v3713 = vpop.f32.mrb[0].mxu0
  %v3714 = vadd.f32 %v3673, %v3713
  %v3715 = vpop.f32.mrb[0].mxu0
  %v3716 = vpop.f32.mrb[0].mxu0
  %3717 = vdwg.mxu0
  %3718 = vmatprep.subr.bf16.mxu0 %v2613
  %3719 = vmatpush1.bf16.msra.mxu0 %v2612
  %3720 = vmatprep.subr.bf16.mxu0 %v2617
  %3721 = vmatpush1.bf16.msra.mxu0 %v2616
  %3722 = vmatprep.subr.bf16.mxu0 %v2621
  %3723 = vmatpush1.bf16.msra.mxu0 %v2620
  %3724 = vmatprep.subr.bf16.mxu0 %v2625
  %3725 = vmatpush1.bf16.msra.mxu0 %v2624
  %3726 = vmatprep.subr.bf16.mxu0 %v2629
  %3727 = vmatpush1.bf16.msra.mxu0 %v2628
  %3728 = vmatprep.subr.bf16.mxu0 %v2633
  %3729 = vmatpush1.bf16.msra.mxu0 %v2632
  %3730 = vmatprep.subr.bf16.mxu0 %v2637
  %3731 = vmatpush1.bf16.msra.mxu0 %v2636
  %3732 = vmatprep.subr.bf16.mxu0 %v2641
  %3733 = vmatpush1.bf16.msra.mxu0 %v2640
  %3734 = vmatprep.subr.bf16.mxu0 %v2645
  %3735 = vmatpush1.bf16.msra.mxu0 %v2644
  %3736 = vmatprep.subr.bf16.mxu0 %v2649
  %3737 = vmatpush1.bf16.msra.mxu0 %v2648
  %3738 = vmatprep.subr.bf16.mxu0 %v2653
  %3739 = vmatpush1.bf16.msra.mxu0 %v2652
  %3740 = vmatprep.subr.bf16.mxu0 %v2657
  %3741 = vmatpush1.bf16.msra.mxu0 %v2656
  %3742 = vmatprep.subr.bf16.mxu0 %v2661
  %3743 = vmatpush1.bf16.msra.mxu0 %v2660
  %3744 = vmatprep.subr.bf16.mxu0 %v2665
  %3745 = vmatpush1.bf16.msra.mxu0 %v2664
  %3746 = vmatprep.subr.bf16.mxu0 %v2669
  %3747 = vmatpush1.bf16.msra.mxu0 %v2668
  %3748 = vmatprep.subr.bf16.mxu0 %v2673
  %3749 = vmatpush1.bf16.msra.mxu0 %v2672
  %3750 = vmatprep.mubr.bf16.mxu0 %v662
  %3751 = vmatmul.mubr.bf16.gmra.mrb[0].mxu0 %v648
  %v3752 = vpop.f32.mrb[0].mxu0
  %v3753 = vadd.f32 %v3712, %v3752
  %v3754 = vpop.f32.mrb[0].mxu0
  %v3755 = vadd.f32 %v3714, %v3754
  %v3756 = vpop.f32.mrb[0].mxu0
  %v3757 = vpop.f32.mrb[0].mxu0
  %3758 = vdwg.mxu0
  %3759 = vmatprep.subr.bf16.mxu0 %v2677
  %3760 = vmatpush1.bf16.msra.mxu0 %v2676
  %3761 = vmatprep.subr.bf16.mxu0 %v2681
  %3762 = vmatpush1.bf16.msra.mxu0 %v2680
  %3763 = vmatprep.subr.bf16.mxu0 %v2685
  %3764 = vmatpush1.bf16.msra.mxu0 %v2684
  %3765 = vmatprep.subr.bf16.mxu0 %v2689
  %3766 = vmatpush1.bf16.msra.mxu0 %v2688
  %3767 = vmatprep.subr.bf16.mxu0 %v2693
  %3768 = vmatpush1.bf16.msra.mxu0 %v2692
  %3769 = vmatprep.subr.bf16.mxu0 %v2697
  %3770 = vmatpush1.bf16.msra.mxu0 %v2696
  %3771 = vmatprep.subr.bf16.mxu0 %v2701
  %3772 = vmatpush1.bf16.msra.mxu0 %v2700
  %3773 = vmatprep.subr.bf16.mxu0 %v2705
  %3774 = vmatpush1.bf16.msra.mxu0 %v2704
  %3775 = vmatprep.subr.bf16.mxu0 %v2709
  %3776 = vmatpush1.bf16.msra.mxu0 %v2708
  %3777 = vmatprep.subr.bf16.mxu0 %v2713
  %3778 = vmatpush1.bf16.msra.mxu0 %v2712
  %3779 = vmatprep.subr.bf16.mxu0 %v2717
  %3780 = vmatpush1.bf16.msra.mxu0 %v2716
  %3781 = vmatprep.subr.bf16.mxu0 %v2721
  %3782 = vmatpush1.bf16.msra.mxu0 %v2720
  %3783 = vmatprep.subr.bf16.mxu0 %v2725
  %3784 = vmatpush1.bf16.msra.mxu0 %v2724
  %3785 = vmatprep.subr.bf16.mxu0 %v2729
  %3786 = vmatpush1.bf16.msra.mxu0 %v2728
  %3787 = vmatprep.subr.bf16.mxu0 %v2733
  %3788 = vmatpush1.bf16.msra.mxu0 %v2732
  %3789 = vmatprep.subr.bf16.mxu0 %v2737
  %3790 = vmatpush1.bf16.msra.mxu0 %v2736
  %3791 = vmatprep.mubr.bf16.mxu0 %v666
  %3792 = vmatmul.mubr.bf16.gmra.mrb[0].mxu0 %v664
  %v3793 = vpop.f32.mrb[0].mxu0
  %v3794 = vadd.f32 %v3753, %v3793
  %v3795 = vpop.f32.mrb[0].mxu0
  %v3796 = vadd.f32 %v3755, %v3795
  %v3797 = vpop.f32.mrb[0].mxu0
  %v3798 = vpop.f32.mrb[0].mxu0
  %3799 = vdwg.mxu0
  %3800 = vmatprep.subr.bf16.mxu0 %v2741
  %3801 = vmatpush1.bf16.msra.mxu0 %v2740
  %3802 = vmatprep.subr.bf16.mxu0 %v2745
  %3803 = vmatpush1.bf16.msra.mxu0 %v2744
  %3804 = vmatprep.subr.bf16.mxu0 %v2749
  %3805 = vmatpush1.bf16.msra.mxu0 %v2748
  %3806 = vmatprep.subr.bf16.mxu0 %v2753
  %3807 = vmatpush1.bf16.msra.mxu0 %v2752
  %3808 = vmatprep.subr.bf16.mxu0 %v2757
  %3809 = vmatpush1.bf16.msra.mxu0 %v2756
  %3810 = vmatprep.subr.bf16.mxu0 %v2761
  %3811 = vmatpush1.bf16.msra.mxu0 %v2760
  %3812 = vmatprep.subr.bf16.mxu0 %v2765
  %3813 = vmatpush1.bf16.msra.mxu0 %v2764
  %3814 = vmatprep.subr.bf16.mxu0 %v2769
  %3815 = vmatpush1.bf16.msra.mxu0 %v2768
  %3816 = vmatprep.subr.bf16.mxu0 %v2773
  %3817 = vmatpush1.bf16.msra.mxu0 %v2772
  %3818 = vmatprep.subr.bf16.mxu0 %v2777
  %3819 = vmatpush1.bf16.msra.mxu0 %v2776
  %3820 = vmatprep.subr.bf16.mxu0 %v2781
  %3821 = vmatpush1.bf16.msra.mxu0 %v2780
  %3822 = vmatprep.subr.bf16.mxu0 %v2785
  %3823 = vmatpush1.bf16.msra.mxu0 %v2784
  %3824 = vmatprep.subr.bf16.mxu0 %v2789
  %3825 = vmatpush1.bf16.msra.mxu0 %v2788
  %3826 = vmatprep.subr.bf16.mxu0 %v2793
  %3827 = vmatpush1.bf16.msra.mxu0 %v2792
  %3828 = vmatprep.subr.bf16.mxu0 %v2797
  %3829 = vmatpush1.bf16.msra.mxu0 %v2796
  %3830 = vmatprep.subr.bf16.mxu0 %v2801
  %3831 = vmatpush1.bf16.msra.mxu0 %v2800
  %3832 = vmatprep.mubr.bf16.mxu0 %v704
  %3833 = vmatmul.mubr.bf16.gmra.mrb[0].mxu0 %v690
  %v3834 = vpop.f32.mrb[0].mxu0
  %v3835 = vadd.f32 %v3794, %v3834
  %v3836 = vpop.f32.mrb[0].mxu0
  %v3837 = vadd.f32 %v3796, %v3836
  %v3838 = vpop.f32.mrb[0].mxu0
  %v3839 = vpop.f32.mrb[0].mxu0
  %3840 = vdwg.mxu0
  %3841 = vmatprep.subr.bf16.mxu0 %v2805
  %3842 = vmatpush1.bf16.msra.mxu0 %v2804
  %3843 = vmatprep.subr.bf16.mxu0 %v2809
  %3844 = vmatpush1.bf16.msra.mxu0 %v2808
  %3845 = vmatprep.subr.bf16.mxu0 %v2813
  %3846 = vmatpush1.bf16.msra.mxu0 %v2812
  %3847 = vmatprep.subr.bf16.mxu0 %v2817
  %3848 = vmatpush1.bf16.msra.mxu0 %v2816
  %3849 = vmatprep.subr.bf16.mxu0 %v2821
  %3850 = vmatpush1.bf16.msra.mxu0 %v2820
  %3851 = vmatprep.subr.bf16.mxu0 %v2825
  %3852 = vmatpush1.bf16.msra.mxu0 %v2824
  %3853 = vmatprep.subr.bf16.mxu0 %v2829
  %3854 = vmatpush1.bf16.msra.mxu0 %v2828
  %3855 = vmatprep.subr.bf16.mxu0 %v2833
  %3856 = vmatpush1.bf16.msra.mxu0 %v2832
  %3857 = vmatprep.subr.bf16.mxu0 %v2837
  %3858 = vmatpush1.bf16.msra.mxu0 %v2836
  %3859 = vmatprep.subr.bf16.mxu0 %v2841
  %3860 = vmatpush1.bf16.msra.mxu0 %v2840
  %3861 = vmatprep.subr.bf16.mxu0 %v2845
  %3862 = vmatpush1.bf16.msra.mxu0 %v2844
  %3863 = vmatprep.subr.bf16.mxu0 %v2849
  %3864 = vmatpush1.bf16.msra.mxu0 %v2848
  %3865 = vmatprep.subr.bf16.mxu0 %v2853
  %3866 = vmatpush1.bf16.msra.mxu0 %v2852
  %3867 = vmatprep.subr.bf16.mxu0 %v2857
  %3868 = vmatpush1.bf16.msra.mxu0 %v2856
  %3869 = vmatprep.subr.bf16.mxu0 %v2861
  %3870 = vmatpush1.bf16.msra.mxu0 %v2860
  %3871 = vmatprep.subr.bf16.mxu0 %v2865
  %3872 = vmatpush1.bf16.msra.mxu0 %v2864
  %3873 = vmatprep.mubr.bf16.mxu0 %v714
  %3874 = vmatmul.mubr.bf16.gmra.mrb[0].mxu0 %v712
  %v3875 = vpop.f32.mrb[0].mxu0
  %v3876 = vadd.f32 %v3835, %v3875
  %v3877 = vpop.f32.mrb[0].mxu0
  %v3878 = vadd.f32 %v3837, %v3877
  %v3879 = vpop.f32.mrb[0].mxu0
  %v3880 = vpop.f32.mrb[0].mxu0
  %3881 = vdwg.mxu0
  %3882 = vmatprep.subr.bf16.mxu0 %v2869
  %3883 = vmatpush1.bf16.msra.mxu0 %v2868
  %3884 = vmatprep.subr.bf16.mxu0 %v2873
  %3885 = vmatpush1.bf16.msra.mxu0 %v2872
  %3886 = vmatprep.subr.bf16.mxu0 %v2877
  %3887 = vmatpush1.bf16.msra.mxu0 %v2876
  %3888 = vmatprep.subr.bf16.mxu0 %v2881
  %3889 = vmatpush1.bf16.msra.mxu0 %v2880
  %3890 = vmatprep.subr.bf16.mxu0 %v2885
  %3891 = vmatpush1.bf16.msra.mxu0 %v2884
  %3892 = vmatprep.subr.bf16.mxu0 %v2889
  %3893 = vmatpush1.bf16.msra.mxu0 %v2888
  %3894 = vmatprep.subr.bf16.mxu0 %v2893
  %3895 = vmatpush1.bf16.msra.mxu0 %v2892
  %3896 = vmatprep.subr.bf16.mxu0 %v2897
  %3897 = vmatpush1.bf16.msra.mxu0 %v2896
  %3898 = vmatprep.subr.bf16.mxu0 %v2901
  %3899 = vmatpush1.bf16.msra.mxu0 %v2900
  %3900 = vmatprep.subr.bf16.mxu0 %v2905
  %3901 = vmatpush1.bf16.msra.mxu0 %v2904
  %3902 = vmatprep.subr.bf16.mxu0 %v2909
  %3903 = vmatpush1.bf16.msra.mxu0 %v2908
  %3904 = vmatprep.subr.bf16.mxu0 %v2913
  %3905 = vmatpush1.bf16.msra.mxu0 %v2912
  %3906 = vmatprep.subr.bf16.mxu0 %v2917
  %3907 = vmatpush1.bf16.msra.mxu0 %v2916
  %3908 = vmatprep.subr.bf16.mxu0 %v2921
  %3909 = vmatpush1.bf16.msra.mxu0 %v2920
  %3910 = vmatprep.subr.bf16.mxu0 %v2925
  %3911 = vmatpush1.bf16.msra.mxu0 %v2924
  %3912 = vmatprep.subr.bf16.mxu0 %v2929
  %3913 = vmatpush1.bf16.msra.mxu0 %v2928
  %3914 = vmatprep.mubr.bf16.mxu0 %v711
  %3915 = vmatmul.mubr.bf16.gmra.mrb[0].mxu0 %v697
  %v3916 = vpop.f32.mrb[0].mxu0
  %v3917 = vadd.f32 %v3876, %v3916
  %v3918 = vpop.f32.mrb[0].mxu0
  %v3919 = vadd.f32 %v3878, %v3918
  %v3920 = vpop.f32.mrb[0].mxu0
  %v3921 = vpop.f32.mrb[0].mxu0
  %3922 = vdwg.mxu0
  %3923 = vmatprep.subr.bf16.mxu0 %v2933
  %3924 = vmatpush1.bf16.msra.mxu0 %v2932
  %3925 = vmatprep.subr.bf16.mxu0 %v2937
  %3926 = vmatpush1.bf16.msra.mxu0 %v2936
  %3927 = vmatprep.subr.bf16.mxu0 %v2941
  %3928 = vmatpush1.bf16.msra.mxu0 %v2940
  %3929 = vmatprep.subr.bf16.mxu0 %v2945
  %3930 = vmatpush1.bf16.msra.mxu0 %v2944
  %3931 = vmatprep.subr.bf16.mxu0 %v2949
  %3932 = vmatpush1.bf16.msra.mxu0 %v2948
  %3933 = vmatprep.subr.bf16.mxu0 %v2953
  %3934 = vmatpush1.bf16.msra.mxu0 %v2952
  %3935 = vmatprep.subr.bf16.mxu0 %v2957
  %3936 = vmatpush1.bf16.msra.mxu0 %v2956
  %3937 = vmatprep.subr.bf16.mxu0 %v2961
  %3938 = vmatpush1.bf16.msra.mxu0 %v2960
  %3939 = vmatprep.subr.bf16.mxu0 %v2965
  %3940 = vmatpush1.bf16.msra.mxu0 %v2964
  %3941 = vmatprep.subr.bf16.mxu0 %v2969
  %3942 = vmatpush1.bf16.msra.mxu0 %v2968
  %3943 = vmatprep.subr.bf16.mxu0 %v2973
  %3944 = vmatpush1.bf16.msra.mxu0 %v2972
  %3945 = vmatprep.subr.bf16.mxu0 %v2977
  %3946 = vmatpush1.bf16.msra.mxu0 %v2976
  %3947 = vmatprep.subr.bf16.mxu0 %v2981
  %3948 = vmatpush1.bf16.msra.mxu0 %v2980
  %3949 = vmatprep.subr.bf16.mxu0 %v2985
  %3950 = vmatpush1.bf16.msra.mxu0 %v2984
  %3951 = vmatprep.subr.bf16.mxu0 %v2989
  %3952 = vmatpush1.bf16.msra.mxu0 %v2988
  %3953 = vmatprep.subr.bf16.mxu0 %v2993
  %3954 = vmatpush1.bf16.msra.mxu0 %v2992
  %3955 = vmatprep.mubr.bf16.mxu0 %v715
  %3956 = vmatmul.mubr.bf16.gmra.mrb[0].mxu0 %v713
  %v3957 = vpop.f32.mrb[0].mxu0
  %v3958 = vadd.f32 %v3917, %v3957
  %v3959 = vpop.f32.mrb[0].mxu0
  %v3960 = vadd.f32 %v3919, %v3959
  %v3961 = vpop.f32.mrb[0].mxu0
  %v3962 = vpop.f32.mrb[0].mxu0
  %3963 = vdwg.mxu0
  %3964 = vmatprep.subr.bf16.mxu0 %v2997
  %3965 = vmatpush1.bf16.msra.mxu0 %v2996
  %3966 = vmatprep.subr.bf16.mxu0 %v3001
  %3967 = vmatpush1.bf16.msra.mxu0 %v3000
  %3968 = vmatprep.subr.bf16.mxu0 %v3005
  %3969 = vmatpush1.bf16.msra.mxu0 %v3004
  %3970 = vmatprep.subr.bf16.mxu0 %v3009
  %3971 = vmatpush1.bf16.msra.mxu0 %v3008
  %3972 = vmatprep.subr.bf16.mxu0 %v3013
  %3973 = vmatpush1.bf16.msra.mxu0 %v3012
  %3974 = vmatprep.subr.bf16.mxu0 %v3017
  %3975 = vmatpush1.bf16.msra.mxu0 %v3016
  %3976 = vmatprep.subr.bf16.mxu0 %v3021
  %3977 = vmatpush1.bf16.msra.mxu0 %v3020
  %3978 = vmatprep.subr.bf16.mxu0 %v3025
  %3979 = vmatpush1.bf16.msra.mxu0 %v3024
  %3980 = vmatprep.subr.bf16.mxu0 %v3029
  %3981 = vmatpush1.bf16.msra.mxu0 %v3028
  %3982 = vmatprep.subr.bf16.mxu0 %v3033
  %3983 = vmatpush1.bf16.msra.mxu0 %v3032
  %3984 = vmatprep.subr.bf16.mxu0 %v3037
  %3985 = vmatpush1.bf16.msra.mxu0 %v3036
  %3986 = vmatprep.subr.bf16.mxu0 %v3041
  %3987 = vmatpush1.bf16.msra.mxu0 %v3040
  %3988 = vmatprep.subr.bf16.mxu0 %v3045
  %3989 = vmatpush1.bf16.msra.mxu0 %v3044
  %3990 = vmatprep.subr.bf16.mxu0 %v3049
  %3991 = vmatpush1.bf16.msra.mxu0 %v3048
  %3992 = vmatprep.subr.bf16.mxu0 %v3053
  %3993 = vmatpush1.bf16.msra.mxu0 %v3052
  %3994 = vmatprep.subr.bf16.mxu0 %v3057
  %3995 = vmatpush1.bf16.msra.mxu0 %v3056
  %3996 = vmatprep.mubr.bf16.mxu0 %v737
  %3997 = vmatmul.mubr.bf16.gmra.mrb[0].mxu0 %v730
  %v3998 = vpop.f32.mrb[0].mxu0
  %v3999 = vadd.f32 %v3958, %v3998
  %v4000 = vpop.f32.mrb[0].mxu0
  %v4001 = vadd.f32 %v3960, %v4000
  %v4002 = vpop.f32.mrb[0].mxu0
  %v4003 = vpop.f32.mrb[0].mxu0
  %4004 = vdwg.mxu0
  %4005 = vmatprep.subr.bf16.mxu0 %v2487
  %4006 = vmatpush1.bf16.msra.mxu0 %v2486
  %4007 = vmatprep.subr.bf16.mxu0 %v2491
  %4008 = vmatpush1.bf16.msra.mxu0 %v2490
  %4009 = vmatprep.subr.bf16.mxu0 %v2495
  %4010 = vmatpush1.bf16.msra.mxu0 %v2494
  %4011 = vmatprep.subr.bf16.mxu0 %v2499
  %4012 = vmatpush1.bf16.msra.mxu0 %v2498
  %4013 = vmatprep.subr.bf16.mxu0 %v2503
  %4014 = vmatpush1.bf16.msra.mxu0 %v2502
  %4015 = vmatprep.subr.bf16.mxu0 %v2507
  %4016 = vmatpush1.bf16.msra.mxu0 %v2506
  %4017 = vmatprep.subr.bf16.mxu0 %v2511
  %4018 = vmatpush1.bf16.msra.mxu0 %v2510
  %4019 = vmatprep.subr.bf16.mxu0 %v2515
  %4020 = vmatpush1.bf16.msra.mxu0 %v2514
  %4021 = vmatprep.subr.bf16.mxu0 %v2519
  %4022 = vmatpush1.bf16.msra.mxu0 %v2518
  %4023 = vmatprep.subr.bf16.mxu0 %v2523
  %4024 = vmatpush1.bf16.msra.mxu0 %v2522
  %4025 = vmatprep.subr.bf16.mxu0 %v2527
  %4026 = vmatpush1.bf16.msra.mxu0 %v2526
  %4027 = vmatprep.subr.bf16.mxu0 %v2531
  %4028 = vmatpush1.bf16.msra.mxu0 %v2530
  %4029 = vmatprep.subr.bf16.mxu0 %v2535
  %4030 = vmatpush1.bf16.msra.mxu0 %v2534
  %4031 = vmatprep.subr.bf16.mxu0 %v2539
  %4032 = vmatpush1.bf16.msra.mxu0 %v2538
  %4033 = vmatprep.subr.bf16.mxu0 %v2543
  %4034 = vmatpush1.bf16.msra.mxu0 %v2542
  %4035 = vmatprep.subr.bf16.mxu0 %v2547
  %4036 = vmatpush1.bf16.msra.mxu0 %v2546
  %4037 = vmatprep.mubr.bf16.mxu0 %v655
  %4038 = vmatmul.mubr.bf16.gmra.mrb[0].mxu0 %v641
  %v4039 = vpop.f32.mrb[0].mxu0
  %v4040 = vadd.f32 %v606, %v4039
  %v4041 = vpop.f32.mrb[0].mxu0
  %v4042 = vadd.f32 %v610, %v4041
  %v4043 = vpop.f32.mrb[0].mxu0
  %v4044 = vpop.f32.mrb[0].mxu0
  %4045 = vdwg.mxu0
  %4046 = vmatprep.subr.bf16.mxu0 %v2551
  %4047 = vmatpush1.bf16.msra.mxu0 %v2550
  %4048 = vmatprep.subr.bf16.mxu0 %v2555
  %4049 = vmatpush1.bf16.msra.mxu0 %v2554
  %4050 = vmatprep.subr.bf16.mxu0 %v2559
  %4051 = vmatpush1.bf16.msra.mxu0 %v2558
  %4052 = vmatprep.subr.bf16.mxu0 %v2563
  %4053 = vmatpush1.bf16.msra.mxu0 %v2562
  %4054 = vmatprep.subr.bf16.mxu0 %v2567
  %4055 = vmatpush1.bf16.msra.mxu0 %v2566
  %4056 = vmatprep.subr.bf16.mxu0 %v2571
  %4057 = vmatpush1.bf16.msra.mxu0 %v2570
  %4058 = vmatprep.subr.bf16.mxu0 %v2575
  %4059 = vmatpush1.bf16.msra.mxu0 %v2574
  %4060 = vmatprep.subr.bf16.mxu0 %v2579
  %4061 = vmatpush1.bf16.msra.mxu0 %v2578
  %4062 = vmatprep.subr.bf16.mxu0 %v2583
  %4063 = vmatpush1.bf16.msra.mxu0 %v2582
  %4064 = vmatprep.subr.bf16.mxu0 %v2587
  %4065 = vmatpush1.bf16.msra.mxu0 %v2586
  %4066 = vmatprep.subr.bf16.mxu0 %v2591
  %4067 = vmatpush1.bf16.msra.mxu0 %v2590
  %4068 = vmatprep.subr.bf16.mxu0 %v2595
  %4069 = vmatpush1.bf16.msra.mxu0 %v2594
  %4070 = vmatprep.subr.bf16.mxu0 %v2599
  %4071 = vmatpush1.bf16.msra.mxu0 %v2598
  %4072 = vmatprep.subr.bf16.mxu0 %v2603
  %4073 = vmatpush1.bf16.msra.mxu0 %v2602
  %4074 = vmatprep.subr.bf16.mxu0 %v2607
  %4075 = vmatpush1.bf16.msra.mxu0 %v2606
  %4076 = vmatprep.subr.bf16.mxu0 %v2611
  %4077 = vmatpush1.bf16.msra.mxu0 %v2610
  %4078 = vmatprep.mubr.bf16.mxu0 %v665
  %4079 = vmatmul.mubr.bf16.gmra.mrb[0].mxu0 %v663
  %v4080 = vpop.f32.mrb[0].mxu0
  %v4081 = vadd.f32 %v4040, %v4080
  %v4082 = vpop.f32.mrb[0].mxu0
  %v4083 = vadd.f32 %v4042, %v4082
  %v4084 = vpop.f32.mrb[0].mxu0
  %v4085 = vpop.f32.mrb[0].mxu0
  %4086 = vdwg.mxu0
  %4087 = vmatprep.subr.bf16.mxu0 %v2615
  %4088 = vmatpush1.bf16.msra.mxu0 %v2614
  %4089 = vmatprep.subr.bf16.mxu0 %v2619
  %4090 = vmatpush1.bf16.msra.mxu0 %v2618
  %4091 = vmatprep.subr.bf16.mxu0 %v2623
  %4092 = vmatpush1.bf16.msra.mxu0 %v2622
  %4093 = vmatprep.subr.bf16.mxu0 %v2627
  %4094 = vmatpush1.bf16.msra.mxu0 %v2626
  %4095 = vmatprep.subr.bf16.mxu0 %v2631
  %4096 = vmatpush1.bf16.msra.mxu0 %v2630
  %4097 = vmatprep.subr.bf16.mxu0 %v2635
  %4098 = vmatpush1.bf16.msra.mxu0 %v2634
  %4099 = vmatprep.subr.bf16.mxu0 %v2639
  %4100 = vmatpush1.bf16.msra.mxu0 %v2638
  %4101 = vmatprep.subr.bf16.mxu0 %v2643
  %4102 = vmatpush1.bf16.msra.mxu0 %v2642
  %4103 = vmatprep.subr.bf16.mxu0 %v2647
  %4104 = vmatpush1.bf16.msra.mxu0 %v2646
  %4105 = vmatprep.subr.bf16.mxu0 %v2651
  %4106 = vmatpush1.bf16.msra.mxu0 %v2650
  %4107 = vmatprep.subr.bf16.mxu0 %v2655
  %4108 = vmatpush1.bf16.msra.mxu0 %v2654
  %4109 = vmatprep.subr.bf16.mxu0 %v2659
  %4110 = vmatpush1.bf16.msra.mxu0 %v2658
  %4111 = vmatprep.subr.bf16.mxu0 %v2663
  %4112 = vmatpush1.bf16.msra.mxu0 %v2662
  %4113 = vmatprep.subr.bf16.mxu0 %v2667
  %4114 = vmatpush1.bf16.msra.mxu0 %v2666
  %4115 = vmatprep.subr.bf16.mxu0 %v2671
  %4116 = vmatpush1.bf16.msra.mxu0 %v2670
  %4117 = vmatprep.subr.bf16.mxu0 %v2675
  %4118 = vmatpush1.bf16.msra.mxu0 %v2674
  %4119 = vmatprep.mubr.bf16.mxu0 %v662
  %4120 = vmatmul.mubr.bf16.gmra.mrb[0].mxu0 %v648
  %v4121 = vpop.f32.mrb[0].mxu0
  %v4122 = vadd.f32 %v4081, %v4121
  %v4123 = vpop.f32.mrb[0].mxu0
  %v4124 = vadd.f32 %v4083, %v4123
  %v4125 = vpop.f32.mrb[0].mxu0
  %v4126 = vpop.f32.mrb[0].mxu0
  %4127 = vdwg.mxu0
  %4128 = vmatprep.subr.bf16.mxu0 %v2679
  %4129 = vmatpush1.bf16.msra.mxu0 %v2678
  %4130 = vmatprep.subr.bf16.mxu0 %v2683
  %4131 = vmatpush1.bf16.msra.mxu0 %v2682
  %4132 = vmatprep.subr.bf16.mxu0 %v2687
  %4133 = vmatpush1.bf16.msra.mxu0 %v2686
  %4134 = vmatprep.subr.bf16.mxu0 %v2691
  %4135 = vmatpush1.bf16.msra.mxu0 %v2690
  %4136 = vmatprep.subr.bf16.mxu0 %v2695
  %4137 = vmatpush1.bf16.msra.mxu0 %v2694
  %4138 = vmatprep.subr.bf16.mxu0 %v2699
  %4139 = vmatpush1.bf16.msra.mxu0 %v2698
  %4140 = vmatprep.subr.bf16.mxu0 %v2703
  %4141 = vmatpush1.bf16.msra.mxu0 %v2702
  %4142 = vmatprep.subr.bf16.mxu0 %v2707
  %4143 = vmatpush1.bf16.msra.mxu0 %v2706
  %4144 = vmatprep.subr.bf16.mxu0 %v2711
  %4145 = vmatpush1.bf16.msra.mxu0 %v2710
  %4146 = vmatprep.subr.bf16.mxu0 %v2715
  %4147 = vmatpush1.bf16.msra.mxu0 %v2714
  %4148 = vmatprep.subr.bf16.mxu0 %v2719
  %4149 = vmatpush1.bf16.msra.mxu0 %v2718
  %4150 = vmatprep.subr.bf16.mxu0 %v2723
  %4151 = vmatpush1.bf16.msra.mxu0 %v2722
  %4152 = vmatprep.subr.bf16.mxu0 %v2727
  %4153 = vmatpush1.bf16.msra.mxu0 %v2726
  %4154 = vmatprep.subr.bf16.mxu0 %v2731
  %4155 = vmatpush1.bf16.msra.mxu0 %v2730
  %4156 = vmatprep.subr.bf16.mxu0 %v2735
  %4157 = vmatpush1.bf16.msra.mxu0 %v2734
  %4158 = vmatprep.subr.bf16.mxu0 %v2739
  %4159 = vmatpush1.bf16.msra.mxu0 %v2738
  %4160 = vmatprep.mubr.bf16.mxu0 %v666
  %4161 = vmatmul.mubr.bf16.gmra.mrb[0].mxu0 %v664
  %v4162 = vpop.f32.mrb[0].mxu0
  %v4163 = vadd.f32 %v4122, %v4162
  %v4164 = vpop.f32.mrb[0].mxu0
  %v4165 = vadd.f32 %v4124, %v4164
  %v4166 = vpop.f32.mrb[0].mxu0
  %v4167 = vpop.f32.mrb[0].mxu0
  %4168 = vdwg.mxu0
  %4169 = vmatprep.subr.bf16.mxu0 %v2743
  %4170 = vmatpush1.bf16.msra.mxu0 %v2742
  %4171 = vmatprep.subr.bf16.mxu0 %v2747
  %4172 = vmatpush1.bf16.msra.mxu0 %v2746
  %4173 = vmatprep.subr.bf16.mxu0 %v2751
  %4174 = vmatpush1.bf16.msra.mxu0 %v2750
  %4175 = vmatprep.subr.bf16.mxu0 %v2755
  %4176 = vmatpush1.bf16.msra.mxu0 %v2754
  %4177 = vmatprep.subr.bf16.mxu0 %v2759
  %4178 = vmatpush1.bf16.msra.mxu0 %v2758
  %4179 = vmatprep.subr.bf16.mxu0 %v2763
  %4180 = vmatpush1.bf16.msra.mxu0 %v2762
  %4181 = vmatprep.subr.bf16.mxu0 %v2767
  %4182 = vmatpush1.bf16.msra.mxu0 %v2766
  %4183 = vmatprep.subr.bf16.mxu0 %v2771
  %4184 = vmatpush1.bf16.msra.mxu0 %v2770
  %4185 = vmatprep.subr.bf16.mxu0 %v2775
  %4186 = vmatpush1.bf16.msra.mxu0 %v2774
  %4187 = vmatprep.subr.bf16.mxu0 %v2779
  %4188 = vmatpush1.bf16.msra.mxu0 %v2778
  %4189 = vmatprep.subr.bf16.mxu0 %v2783
  %4190 = vmatpush1.bf16.msra.mxu0 %v2782
  %4191 = vmatprep.subr.bf16.mxu0 %v2787
  %4192 = vmatpush1.bf16.msra.mxu0 %v2786
  %4193 = vmatprep.subr.bf16.mxu0 %v2791
  %4194 = vmatpush1.bf16.msra.mxu0 %v2790
  %4195 = vmatprep.subr.bf16.mxu0 %v2795
  %4196 = vmatpush1.bf16.msra.mxu0 %v2794
  %4197 = vmatprep.subr.bf16.mxu0 %v2799
  %4198 = vmatpush1.bf16.msra.mxu0 %v2798
  %4199 = vmatprep.subr.bf16.mxu0 %v2803
  %4200 = vmatpush1.bf16.msra.mxu0 %v2802
  %4201 = vmatprep.mubr.bf16.mxu0 %v704
  %4202 = vmatmul.mubr.bf16.gmra.mrb[0].mxu0 %v690
  %v4203 = vpop.f32.mrb[0].mxu0
  %v4204 = vadd.f32 %v4163, %v4203
  %v4205 = vpop.f32.mrb[0].mxu0
  %v4206 = vadd.f32 %v4165, %v4205
  %v4207 = vpop.f32.mrb[0].mxu0
  %v4208 = vpop.f32.mrb[0].mxu0
  %4209 = vdwg.mxu0
  %4210 = vmatprep.subr.bf16.mxu0 %v2807
  %4211 = vmatpush1.bf16.msra.mxu0 %v2806
  %4212 = vmatprep.subr.bf16.mxu0 %v2811
  %4213 = vmatpush1.bf16.msra.mxu0 %v2810
  %4214 = vmatprep.subr.bf16.mxu0 %v2815
  %4215 = vmatpush1.bf16.msra.mxu0 %v2814
  %4216 = vmatprep.subr.bf16.mxu0 %v2819
  %4217 = vmatpush1.bf16.msra.mxu0 %v2818
  %4218 = vmatprep.subr.bf16.mxu0 %v2823
  %4219 = vmatpush1.bf16.msra.mxu0 %v2822
  %4220 = vmatprep.subr.bf16.mxu0 %v2827
  %4221 = vmatpush1.bf16.msra.mxu0 %v2826
  %4222 = vmatprep.subr.bf16.mxu0 %v2831
  %4223 = vmatpush1.bf16.msra.mxu0 %v2830
  %4224 = vmatprep.subr.bf16.mxu0 %v2835
  %4225 = vmatpush1.bf16.msra.mxu0 %v2834
  %4226 = vmatprep.subr.bf16.mxu0 %v2839
  %4227 = vmatpush1.bf16.msra.mxu0 %v2838
  %4228 = vmatprep.subr.bf16.mxu0 %v2843
  %4229 = vmatpush1.bf16.msra.mxu0 %v2842
  %4230 = vmatprep.subr.bf16.mxu0 %v2847
  %4231 = vmatpush1.bf16.msra.mxu0 %v2846
  %4232 = vmatprep.subr.bf16.mxu0 %v2851
  %4233 = vmatpush1.bf16.msra.mxu0 %v2850
  %4234 = vmatprep.subr.bf16.mxu0 %v2855
  %4235 = vmatpush1.bf16.msra.mxu0 %v2854
  %4236 = vmatprep.subr.bf16.mxu0 %v2859
  %4237 = vmatpush1.bf16.msra.mxu0 %v2858
  %4238 = vmatprep.subr.bf16.mxu0 %v2863
  %4239 = vmatpush1.bf16.msra.mxu0 %v2862
  %4240 = vmatprep.subr.bf16.mxu0 %v2867
  %4241 = vmatpush1.bf16.msra.mxu0 %v2866
  %4242 = vmatprep.mubr.bf16.mxu0 %v714
  %4243 = vmatmul.mubr.bf16.gmra.mrb[0].mxu0 %v712
  %v4244 = vpop.f32.mrb[0].mxu0
  %v4245 = vadd.f32 %v4204, %v4244
  %v4246 = vpop.f32.mrb[0].mxu0
  %v4247 = vadd.f32 %v4206, %v4246
  %v4248 = vpop.f32.mrb[0].mxu0
  %v4249 = vpop.f32.mrb[0].mxu0
  %4250 = vdwg.mxu0
  %4251 = vmatprep.subr.bf16.mxu0 %v2871
  %4252 = vmatpush1.bf16.msra.mxu0 %v2870
  %4253 = vmatprep.subr.bf16.mxu0 %v2875
  %4254 = vmatpush1.bf16.msra.mxu0 %v2874
  %4255 = vmatprep.subr.bf16.mxu0 %v2879
  %4256 = vmatpush1.bf16.msra.mxu0 %v2878
  %4257 = vmatprep.subr.bf16.mxu0 %v2883
  %4258 = vmatpush1.bf16.msra.mxu0 %v2882
  %4259 = vmatprep.subr.bf16.mxu0 %v2887
  %4260 = vmatpush1.bf16.msra.mxu0 %v2886
  %4261 = vmatprep.subr.bf16.mxu0 %v2891
  %4262 = vmatpush1.bf16.msra.mxu0 %v2890
  %4263 = vmatprep.subr.bf16.mxu0 %v2895
  %4264 = vmatpush1.bf16.msra.mxu0 %v2894
  %4265 = vmatprep.subr.bf16.mxu0 %v2899
  %4266 = vmatpush1.bf16.msra.mxu0 %v2898
  %4267 = vmatprep.subr.bf16.mxu0 %v2903
  %4268 = vmatpush1.bf16.msra.mxu0 %v2902
  %4269 = vmatprep.subr.bf16.mxu0 %v2907
  %4270 = vmatpush1.bf16.msra.mxu0 %v2906
  %4271 = vmatprep.subr.bf16.mxu0 %v2911
  %4272 = vmatpush1.bf16.msra.mxu0 %v2910
  %4273 = vmatprep.subr.bf16.mxu0 %v2915
  %4274 = vmatpush1.bf16.msra.mxu0 %v2914
  %4275 = vmatprep.subr.bf16.mxu0 %v2919
  %4276 = vmatpush1.bf16.msra.mxu0 %v2918
  %4277 = vmatprep.subr.bf16.mxu0 %v2923
  %4278 = vmatpush1.bf16.msra.mxu0 %v2922
  %4279 = vmatprep.subr.bf16.mxu0 %v2927
  %4280 = vmatpush1.bf16.msra.mxu0 %v2926
  %4281 = vmatprep.subr.bf16.mxu0 %v2931
  %4282 = vmatpush1.bf16.msra.mxu0 %v2930
  %4283 = vmatprep.mubr.bf16.mxu0 %v711
  %4284 = vmatmul.mubr.bf16.gmra.mrb[0].mxu0 %v697
  %v4285 = vpop.f32.mrb[0].mxu0
  %v4286 = vadd.f32 %v4245, %v4285
  %v4287 = vpop.f32.mrb[0].mxu0
  %v4288 = vadd.f32 %v4247, %v4287
  %v4289 = vpop.f32.mrb[0].mxu0
  %v4290 = vpop.f32.mrb[0].mxu0
  %4291 = vdwg.mxu0
  %4292 = vmatprep.subr.bf16.mxu0 %v2935
  %4293 = vmatpush1.bf16.msra.mxu0 %v2934
  %4294 = vmatprep.subr.bf16.mxu0 %v2939
  %4295 = vmatpush1.bf16.msra.mxu0 %v2938
  %4296 = vmatprep.subr.bf16.mxu0 %v2943
  %4297 = vmatpush1.bf16.msra.mxu0 %v2942
  %4298 = vmatprep.subr.bf16.mxu0 %v2947
  %4299 = vmatpush1.bf16.msra.mxu0 %v2946
  %4300 = vmatprep.subr.bf16.mxu0 %v2951
  %4301 = vmatpush1.bf16.msra.mxu0 %v2950
  %4302 = vmatprep.subr.bf16.mxu0 %v2955
  %4303 = vmatpush1.bf16.msra.mxu0 %v2954
  %4304 = vmatprep.subr.bf16.mxu0 %v2959
  %4305 = vmatpush1.bf16.msra.mxu0 %v2958
  %4306 = vmatprep.subr.bf16.mxu0 %v2963
  %4307 = vmatpush1.bf16.msra.mxu0 %v2962
  %4308 = vmatprep.subr.bf16.mxu0 %v2967
  %4309 = vmatpush1.bf16.msra.mxu0 %v2966
  %4310 = vmatprep.subr.bf16.mxu0 %v2971
  %4311 = vmatpush1.bf16.msra.mxu0 %v2970
  %4312 = vmatprep.subr.bf16.mxu0 %v2975
  %4313 = vmatpush1.bf16.msra.mxu0 %v2974
  %4314 = vmatprep.subr.bf16.mxu0 %v2979
  %4315 = vmatpush1.bf16.msra.mxu0 %v2978
  %4316 = vmatprep.subr.bf16.mxu0 %v2983
  %4317 = vmatpush1.bf16.msra.mxu0 %v2982
  %4318 = vmatprep.subr.bf16.mxu0 %v2987
  %4319 = vmatpush1.bf16.msra.mxu0 %v2986
  %4320 = vmatprep.subr.bf16.mxu0 %v2991
  %4321 = vmatpush1.bf16.msra.mxu0 %v2990
  %4322 = vmatprep.subr.bf16.mxu0 %v2995
  %4323 = vmatpush1.bf16.msra.mxu0 %v2994
  %4324 = vmatprep.mubr.bf16.mxu0 %v715
  %4325 = vmatmul.mubr.bf16.gmra.mrb[0].mxu0 %v713
  %v4326 = vpop.f32.mrb[0].mxu0
  %v4327 = vadd.f32 %v4286, %v4326
  %v4328 = vpop.f32.mrb[0].mxu0
  %v4329 = vadd.f32 %v4288, %v4328
  %v4330 = vpop.f32.mrb[0].mxu0
  %v4331 = vpop.f32.mrb[0].mxu0
  %4332 = vdwg.mxu0
  %4333 = vmatprep.subr.bf16.mxu0 %v2999
  %4334 = vmatpush1.bf16.msra.mxu0 %v2998
  %4335 = vmatprep.subr.bf16.mxu0 %v3003
  %4336 = vmatpush1.bf16.msra.mxu0 %v3002
  %4337 = vmatprep.subr.bf16.mxu0 %v3007
  %4338 = vmatpush1.bf16.msra.mxu0 %v3006
  %4339 = vmatprep.subr.bf16.mxu0 %v3011
  %4340 = vmatpush1.bf16.msra.mxu0 %v3010
  %4341 = vmatprep.subr.bf16.mxu0 %v3015
  %4342 = vmatpush1.bf16.msra.mxu0 %v3014
  %4343 = vmatprep.subr.bf16.mxu0 %v3019
  %4344 = vmatpush1.bf16.msra.mxu0 %v3018
  %4345 = vmatprep.subr.bf16.mxu0 %v3023
  %4346 = vmatpush1.bf16.msra.mxu0 %v3022
  %4347 = vmatprep.subr.bf16.mxu0 %v3027
  %4348 = vmatpush1.bf16.msra.mxu0 %v3026
  %4349 = vmatprep.subr.bf16.mxu0 %v3031
  %4350 = vmatpush1.bf16.msra.mxu0 %v3030
  %4351 = vmatprep.subr.bf16.mxu0 %v3035
  %4352 = vmatpush1.bf16.msra.mxu0 %v3034
  %4353 = vmatprep.subr.bf16.mxu0 %v3039
  %4354 = vmatpush1.bf16.msra.mxu0 %v3038
  %4355 = vmatprep.subr.bf16.mxu0 %v3043
  %4356 = vmatpush1.bf16.msra.mxu0 %v3042
  %4357 = vmatprep.subr.bf16.mxu0 %v3047
  %4358 = vmatpush1.bf16.msra.mxu0 %v3046
  %4359 = vmatprep.subr.bf16.mxu0 %v3051
  %4360 = vmatpush1.bf16.msra.mxu0 %v3050
  %4361 = vmatprep.subr.bf16.mxu0 %v3055
  %4362 = vmatpush1.bf16.msra.mxu0 %v3054
  %4363 = vmatprep.subr.bf16.mxu0 %v3059
  %4364 = vmatpush1.bf16.msra.mxu0 %v3058
  %4365 = vmatprep.mubr.bf16.mxu0 %v737
  %4366 = vmatmul.mubr.bf16.gmra.mrb[0].mxu0 %v730
  %v4367 = vpop.f32.mrb[0].mxu0
  %v4368 = vadd.f32 %v4327, %v4367
  %v4369 = vpop.f32.mrb[0].mxu0
  %v4370 = vadd.f32 %v4329, %v4369
  %v4371 = vpop.f32.mrb[0].mxu0
  %v4372 = vpop.f32.mrb[0].mxu0
  %4373 = vdwg.mxu0
  %v4374 = vmax.f32 %v3999, 0.0
  %v4375 = vmax.f32 %v4001, 0.0
  %v4376 = vmax.f32 %v4368, 0.0
  %v4377 = vmax.f32 %v4370, 0.0
  %v4378 = vpack.c.bf16 %v4374, %v4374
  %v4379 = vpack.c.bf16 %v4375, %v4375
  %v4380 = vpack.c.bf16 %v4376, %v4376
  %v4381 = vpack.c.bf16 %v4377, %v4377
  %v4386 = vcombine.low %v4378, %v4379
  %v4387 = vcombine.low %v4380, %v4381
  %v4389 = vunpack.c.l.s4 1966171168
  %v4390 = vunpack.c.0.s8 %v4389
  %v4391 = vlaneseq
  %v4392 = vshrl.u32 %v4391, 7
  %v4393 = vsub.s32 %v4390, %v4392
  %v4394 = vrot.slane %v4386, %v4393
  %v4396 = vunpack.c.l.s4 1966171168
  %v4397 = vunpack.c.0.s8 %v4396
  %v4398 = vlaneseq
  %v4399 = vshrl.u32 %v4398, 7
  %v4400 = vsub.s32 %v4397, %v4399
  %v4401 = vrot.slane %v4387, %v4400
  %v4402 = vcombine.low %v4394, %v4401
  %v4404 = vunpack.c.l.s4 1966171168
  %v4405 = vunpack.c.0.s8 %v4404
  %v4406 = vlaneseq
  %v4407 = vshrl.u32 %v4406, 7
  %v4408 = vsub.s32 %v4405, %v4407
  %v4409 = vrot.slane %v4402, %v4408
  %4411 = vst [vmem:[%s3] sm:$0xf] %v4409
  // Predicated region
  $region14: #{detection2d_forward.13} parent=0 // pred_check
    _
  $region15: #{detection2d_forward.13} parent=0 // pred_check_branch
    %4413 = sbr.rel (0) target = $region17
  $region16: #{detection2d_forward.13} parent=0 // pred_region
    _
  $region17: #{detection2d_forward.13} parent=0 // pred_fallthru
    _
  // Predicated region
  $region18: #{detection2d_forward.13} parent=0 // pred_check
    _
  $region19: #{detection2d_forward.13} parent=0 // pred_check_branch
    %4415 = sbr.rel (0) target = $region21
  $region20: #{detection2d_forward.13} parent=0 // pred_region
    _
  $region21: #{detection2d_forward.13} parent=0 // pred_fallthru
    _

// kernel: detection2d_forward.17
$region0: #{detection2d_forward.17}
  #allocation0 [shape = 'u32[]', space=smem, size = 0x4, offset = 0x4, fixed_abs, tag = 'smem constant byte address 0x4 - core index']
  #allocation1 [shape = 'u32[144,128]{1,0:T(1,128)}', space=vmem, size = 0x12000, scoped, tag = 'internal scratch']
  %s0 = inlined_call_operand.vmem [shape: bf16[128,64], index: 0, kind: input, shape index: {}]
  %s1 = inlined_call_operand.vmem [shape: bf16[64,1024], index: 1, kind: input, shape index: {}]
  %s2 = inlined_call_operand.vmem [shape: f32[1,1024], index: 2, kind: input, shape index: {}]
  %s3 = inlined_call_operand.vmem [shape: f32[128,1024], index: 3, kind: input, shape index: {}]
  %s4 = inlined_call_operand.hbm [shape: f32[128,1024], index: 4, kind: output, shape index: {}]
  %s5 = sld [smem:[#allocation0]]
  $region26: #{detection2d_forward.17} parent=0
    _
  %s7 = ssub.s32 1, %s5
  %s8 = scalar_select 0, %s7, %s5
  $region1: #{detection2d_forward.17} parent=0
    #allocation2 [shape = 'u8[524288]{0}', space=vmem, size = 0x80000, scoped, tag = 'output window, operand 0, single buffered']
    #allocation3 [shape = 's32[1]{0}', space=sflag, size = 0x4, scoped, tag = 'scoped memory for detection2d_forward.17']
    %9 = vsyncpa [#allocation3], 0
    // Predicated region
    $region2: #{detection2d_forward.17} parent=1 // pred_check
      _
    $region3: #{detection2d_forward.17} parent=1 // pred_check_branch
      %11 = sbr.rel (0) target = $region5
    $region4: #{detection2d_forward.17} parent=1 // pred_region
      _
    $region5: #{detection2d_forward.17} parent=1 // pred_fallthru
      _
    // Predicated region
    $region6: #{detection2d_forward.17} parent=1 // pred_check
      _
    $region7: #{detection2d_forward.17} parent=1 // pred_check_branch
      %13 = sbr.rel (0) target = $region9
    $region8: #{detection2d_forward.17} parent=1 // pred_region
      _
    $region9: #{detection2d_forward.17} parent=1 // pred_fallthru
      _
    // Predicated region
    $region10: #{detection2d_forward.17} parent=1 // pred_check
      _
    $region11: #{detection2d_forward.17} parent=1 // pred_check_branch
      %15 = sbr.rel (0) target = $region13
    $region12: #{detection2d_forward.17} parent=1 // pred_region
      _
    $region13: #{detection2d_forward.17} parent=1 // pred_fallthru
      _
    // Predicated region
    $region14: #{detection2d_forward.17} parent=1 // pred_check
      _
    $region15: #{detection2d_forward.17} parent=1 // pred_check_branch
      %17 = sbr.rel (0) target = $region17
    $region16: #{detection2d_forward.17} parent=1 // pred_region
      _
    $region17: #{detection2d_forward.17} parent=1 // pred_fallthru
      _
    %v19 = vld [vmem:[%s0] sm:$0xf]
    %v20 = vld [vmem:[%s0 + $0x4] sm:$0xf]
    %v21 = vld [vmem:[%s0 + $0x8] sm:$0xf]
    %v22 = vld [vmem:[%s0 + $0xc] sm:$0xf]
    %v23 = vld [vmem:[%s0 + $0x10] sm:$0xf]
    %v24 = vld [vmem:[%s0 + $0x14] sm:$0xf]
    %v25 = vld [vmem:[%s0 + $0x18] sm:$0xf]
    %v26 = vld [vmem:[%s0 + $0x1c] sm:$0xf]
    %v27 = vld [vmem:[%s0 + $0x20] sm:$0xf]
    %v28 = vld [vmem:[%s0 + $0x24] sm:$0xf]
    %v29 = vld [vmem:[%s0 + $0x28] sm:$0xf]
    %v30 = vld [vmem:[%s0 + $0x2c] sm:$0xf]
    %v31 = vld [vmem:[%s0 + $0x30] sm:$0xf]
    %v32 = vld [vmem:[%s0 + $0x34] sm:$0xf]
    %v33 = vld [vmem:[%s0 + $0x38] sm:$0xf]
    %v34 = vld [vmem:[%s0 + $0x3c] sm:$0xf]
    %v35 = vld [vmem:[%s1] sm:$0xff]
    %v36 = vld [vmem:[%s1 + $0x8] sm:$0xff]
    %v37 = vld [vmem:[%s1 + $0x10] sm:$0xff]
    %v38 = vld [vmem:[%s1 + $0x18] sm:$0xff]
    %v39 = vld [vmem:[%s1 + $0x20] sm:$0xff]
    %v40 = vld [vmem:[%s1 + $0x28] sm:$0xff]
    %v41 = vld [vmem:[%s1 + $0x30] sm:$0xff]
    %v42 = vld [vmem:[%s1 + $0x38] sm:$0xff]
    %v43 = vld [vmem:[%s1 + $0x40] sm:$0xff]
    %v44 = vld [vmem:[%s1 + $0x48] sm:$0xff]
    %v45 = vld [vmem:[%s1 + $0x50] sm:$0xff]
    %v46 = vld [vmem:[%s1 + $0x58] sm:$0xff]
    %v47 = vld [vmem:[%s1 + $0x60] sm:$0xff]
    %v48 = vld [vmem:[%s1 + $0x68] sm:$0xff]
    %v49 = vld [vmem:[%s1 + $0x70] sm:$0xff]
    %v50 = vld [vmem:[%s1 + $0x78] sm:$0xff]
    %v51 = vld [vmem:[%s1 + $0x80] sm:$0xff]
    %v52 = vld [vmem:[%s1 + $0x88] sm:$0xff]
    %v53 = vld [vmem:[%s1 + $0x90] sm:$0xff]
    %v54 = vld [vmem:[%s1 + $0x98] sm:$0xff]
    %v55 = vld [vmem:[%s1 + $0xa0] sm:$0xff]
    %v56 = vld [vmem:[%s1 + $0xa8] sm:$0xff]
    %v57 = vld [vmem:[%s1 + $0xb0] sm:$0xff]
    %v58 = vld [vmem:[%s1 + $0xb8] sm:$0xff]
    %v59 = vld [vmem:[%s1 + $0xc0] sm:$0xff]
    %v60 = vld [vmem:[%s1 + $0xc8] sm:$0xff]
    %v61 = vld [vmem:[%s1 + $0xd0] sm:$0xff]
    %v62 = vld [vmem:[%s1 + $0xd8] sm:$0xff]
    %v63 = vld [vmem:[%s1 + $0xe0] sm:$0xff]
    %v64 = vld [vmem:[%s1 + $0xe8] sm:$0xff]
    %v65 = vld [vmem:[%s1 + $0xf0] sm:$0xff]
    %v66 = vld [vmem:[%s1 + $0xf8] sm:$0xff]
    %v67 = vld [vmem:[%s2] sm:$0xff]
    %v69 = vlaneseq
    %v70 = vshrl.u32 %v69, 7
    %v71 = vsub.s32 0, %v70
    %v72 = vrot.slane %v67, %v71
    %v73 = vlaneseq
    %v74 = vshrl.u32 %v73, 7
    %v75 = vsub.s32 1, %v74
    %v76 = vrot.slane %v67, %v75
    %v77 = vlaneseq
    %v78 = vshrl.u32 %v77, 7
    %v79 = vsub.s32 2, %v78
    %v80 = vrot.slane %v67, %v79
    %v81 = vlaneseq
    %v82 = vshrl.u32 %v81, 7
    %v83 = vsub.s32 3, %v82
    %v84 = vrot.slane %v67, %v83
    %v85 = vlaneseq
    %v86 = vshrl.u32 %v85, 7
    %v87 = vsub.s32 4, %v86
    %v88 = vrot.slane %v67, %v87
    %v89 = vlaneseq
    %v90 = vshrl.u32 %v89, 7
    %v91 = vsub.s32 5, %v90
    %v92 = vrot.slane %v67, %v91
    %v93 = vlaneseq
    %v94 = vshrl.u32 %v93, 7
    %v95 = vsub.s32 6, %v94
    %v96 = vrot.slane %v67, %v95
    %v97 = vlaneseq
    %v98 = vshrl.u32 %v97, 7
    %v99 = vsub.s32 7, %v98
    %v100 = vrot.slane %v67, %v99
    %v125 = vunpack.c.l.b16 %v19
    %v126 = vunpack.c.l.b16 %v20
    %v127 = vunpack.c.l.b16 %v21
    %v128 = vunpack.c.l.b16 %v22
    %v129 = vunpack.c.l.b16 %v23
    %v130 = vunpack.c.l.b16 %v24
    %v131 = vunpack.c.l.b16 %v25
    %v132 = vunpack.c.l.b16 %v26
    %v133 = vunpack.c.l.b16 %v27
    %v134 = vunpack.c.l.b16 %v28
    %v135 = vunpack.c.l.b16 %v29
    %v136 = vunpack.c.l.b16 %v30
    %v137 = vunpack.c.l.b16 %v31
    %v138 = vunpack.c.l.b16 %v32
    %v139 = vunpack.c.l.b16 %v33
    %v140 = vunpack.c.l.b16 %v34
    %v141 = vpack.c.b16 %v126, %v125
    %v142 = vpack.c.b16 %v128, %v127
    %v143 = vpack.c.b16 %v130, %v129
    %v144 = vpack.c.b16 %v132, %v131
    %v145 = vpack.c.b16 %v134, %v133
    %v146 = vpack.c.b16 %v136, %v135
    %v147 = vpack.c.b16 %v138, %v137
    %v148 = vpack.c.b16 %v140, %v139
    %v181 = vunpack.c.l.b16 %v35
    %v182 = vunpack.c.h.b16 %v35
    %v183 = vunpack.c.l.b16 %v36
    %v184 = vunpack.c.h.b16 %v36
    %v185 = vunpack.c.l.b16 %v37
    %v186 = vunpack.c.h.b16 %v37
    %v187 = vunpack.c.l.b16 %v38
    %v188 = vunpack.c.h.b16 %v38
    %v189 = vunpack.c.l.b16 %v39
    %v190 = vunpack.c.h.b16 %v39
    %v191 = vunpack.c.l.b16 %v40
    %v192 = vunpack.c.h.b16 %v40
    %v193 = vunpack.c.l.b16 %v41
    %v194 = vunpack.c.h.b16 %v41
    %v195 = vunpack.c.l.b16 %v42
    %v196 = vunpack.c.h.b16 %v42
    %v197 = vunpack.c.l.b16 %v43
    %v198 = vunpack.c.h.b16 %v43
    %v199 = vunpack.c.l.b16 %v44
    %v200 = vunpack.c.h.b16 %v44
    %v201 = vunpack.c.l.b16 %v45
    %v202 = vunpack.c.h.b16 %v45
    %v203 = vunpack.c.l.b16 %v46
    %v204 = vunpack.c.h.b16 %v46
    %v205 = vunpack.c.l.b16 %v47
    %v206 = vunpack.c.h.b16 %v47
    %v207 = vunpack.c.l.b16 %v48
    %v208 = vunpack.c.h.b16 %v48
    %v209 = vunpack.c.l.b16 %v49
    %v210 = vunpack.c.h.b16 %v49
    %v211 = vunpack.c.l.b16 %v50
    %v212 = vunpack.c.h.b16 %v50
    %v213 = vunpack.c.l.b16 %v51
    %v214 = vunpack.c.h.b16 %v51
    %v215 = vunpack.c.l.b16 %v52
    %v216 = vunpack.c.h.b16 %v52
    %v217 = vunpack.c.l.b16 %v53
    %v218 = vunpack.c.h.b16 %v53
    %v219 = vunpack.c.l.b16 %v54
    %v220 = vunpack.c.h.b16 %v54
    %v221 = vunpack.c.l.b16 %v55
    %v222 = vunpack.c.h.b16 %v55
    %v223 = vunpack.c.l.b16 %v56
    %v224 = vunpack.c.h.b16 %v56
    %v225 = vunpack.c.l.b16 %v57
    %v226 = vunpack.c.h.b16 %v57
    %v227 = vunpack.c.l.b16 %v58
    %v228 = vunpack.c.h.b16 %v58
    %v229 = vunpack.c.l.b16 %v59
    %v230 = vunpack.c.h.b16 %v59
    %v231 = vunpack.c.l.b16 %v60
    %v232 = vunpack.c.h.b16 %v60
    %v233 = vunpack.c.l.b16 %v61
    %v234 = vunpack.c.h.b16 %v61
    %v235 = vunpack.c.l.b16 %v62
    %v236 = vunpack.c.h.b16 %v62
    %v237 = vunpack.c.l.b16 %v63
    %v238 = vunpack.c.h.b16 %v63
    %v239 = vunpack.c.l.b16 %v64
    %v240 = vunpack.c.h.b16 %v64
    %v241 = vunpack.c.l.b16 %v65
    %v242 = vunpack.c.h.b16 %v65
    %v243 = vunpack.c.l.b16 %v66
    %v244 = vunpack.c.h.b16 %v66
    %v245 = vpack.c.b16 %v189, %v181
    %v246 = vpack.c.b16 %v190, %v182
    %v247 = vpack.c.b16 %v191, %v183
    %v248 = vpack.c.b16 %v192, %v184
    %v249 = vpack.c.b16 %v193, %v185
    %v250 = vpack.c.b16 %v194, %v186
    %v251 = vpack.c.b16 %v195, %v187
    %v252 = vpack.c.b16 %v196, %v188
    %v253 = vpack.c.b16 %v205, %v197
    %v254 = vpack.c.b16 %v206, %v198
    %v255 = vpack.c.b16 %v207, %v199
    %v256 = vpack.c.b16 %v208, %v200
    %v257 = vpack.c.b16 %v209, %v201
    %v258 = vpack.c.b16 %v210, %v202
    %v259 = vpack.c.b16 %v211, %v203
    %v260 = vpack.c.b16 %v212, %v204
    %v261 = vpack.c.b16 %v221, %v213
    %v262 = vpack.c.b16 %v222, %v214
    %v263 = vpack.c.b16 %v223, %v215
    %v264 = vpack.c.b16 %v224, %v216
    %v265 = vpack.c.b16 %v225, %v217
    %v266 = vpack.c.b16 %v226, %v218
    %v267 = vpack.c.b16 %v227, %v219
    %v268 = vpack.c.b16 %v228, %v220
    %v269 = vpack.c.b16 %v237, %v229
    %v270 = vpack.c.b16 %v238, %v230
    %v271 = vpack.c.b16 %v239, %v231
    %v272 = vpack.c.b16 %v240, %v232
    %v273 = vpack.c.b16 %v241, %v233
    %v274 = vpack.c.b16 %v242, %v234
    %v275 = vpack.c.b16 %v243, %v235
    %v276 = vpack.c.b16 %v244, %v236
    %vm309 = vcmask 523264
    %v311 = vsel %vm309, %v141, 0
    %v314 = vsel %vm309, %v142, 0
    %v317 = vsel %vm309, %v143, 0
    %v320 = vsel %vm309, %v144, 0
    %v323 = vsel %vm309, %v145, 0
    %v326 = vsel %vm309, %v146, 0
    %v329 = vsel %vm309, %v147, 0
    %v332 = vsel %vm309, %v148, 0
    %334 = vmatprep.subr.bf16.mxu0 %v246
    %335 = vmatpush1.bf16.msra.mxu0 %v245
    %336 = vmatprep.subr.bf16.mxu0 %v254
    %337 = vmatpush1.bf16.msra.mxu0 %v253
    %338 = vmatprep.subr.bf16.mxu0 %v262
    %339 = vmatpush1.bf16.msra.mxu0 %v261
    %340 = vmatprep.subr.bf16.mxu0 %v270
    %341 = vmatpush1.bf16.msra.mxu0 %v269
    %342 = vmatprep.subr.bf16.mxu0 0
    %343 = vmatpush1.bf16.msra.mxu0 0
    %344 = vmatprep.subr.bf16.mxu0 0
    %345 = vmatpush1.bf16.msra.mxu0 0
    %346 = vmatprep.subr.bf16.mxu0 0
    %347 = vmatpush1.bf16.msra.mxu0 0
    %348 = vmatprep.subr.bf16.mxu0 0
    %349 = vmatpush1.bf16.msra.mxu0 0
    %350 = vmatprep.subr.bf16.mxu0 0
    %351 = vmatpush1.bf16.msra.mxu0 0
    %352 = vmatprep.subr.bf16.mxu0 0
    %353 = vmatpush1.bf16.msra.mxu0 0
    %354 = vmatprep.subr.bf16.mxu0 0
    %355 = vmatpush1.bf16.msra.mxu0 0
    %356 = vmatprep.subr.bf16.mxu0 0
    %357 = vmatpush1.bf16.msra.mxu0 0
    %358 = vmatprep.subr.bf16.mxu0 0
    %359 = vmatpush1.bf16.msra.mxu0 0
    %360 = vmatprep.subr.bf16.mxu0 0
    %361 = vmatpush1.bf16.msra.mxu0 0
    %362 = vmatprep.subr.bf16.mxu0 0
    %363 = vmatpush1.bf16.msra.mxu0 0
    %364 = vmatprep.subr.bf16.mxu0 0
    %365 = vmatpush1.bf16.msra.mxu0 0
    %366 = vmatprep.mubr.bf16.mxu0 0
    %367 = vmatmul.mubr.bf16.gmra.mrb[0].mxu0 %v311
    %v368 = vpop.f32.mrb[0].mxu0
    %v369 = vadd.f32 %v72, %v368
    %v370 = vpop.f32.mrb[0].mxu0
    %v371 = vadd.f32 %v76, %v370
    %v372 = vpop.f32.mrb[0].mxu0
    %v373 = vadd.f32 %v72, %v372
    %v374 = vpop.f32.mrb[0].mxu0
    %v375 = vadd.f32 %v76, %v374
    %376 = vmatprep.mubr.bf16.mxu0 0
    %377 = vmatmul.mubr.bf16.gmra.mrb[0].mxu0 %v314
    %v378 = vpop.f32.mrb[0].mxu0
    %v379 = vadd.f32 %v72, %v378
    %v380 = vpop.f32.mrb[0].mxu0
    %v381 = vadd.f32 %v76, %v380
    %v382 = vpop.f32.mrb[0].mxu0
    %v383 = vadd.f32 %v72, %v382
    %v384 = vpop.f32.mrb[0].mxu0
    %v385 = vadd.f32 %v76, %v384
    %386 = vmatprep.mubr.bf16.mxu0 0
    %387 = vmatmul.mubr.bf16.gmra.mrb[0].mxu0 %v317
    %v388 = vpop.f32.mrb[0].mxu0
    %v389 = vadd.f32 %v72, %v388
    %v390 = vpop.f32.mrb[0].mxu0
    %v391 = vadd.f32 %v76, %v390
    %v392 = vpop.f32.mrb[0].mxu0
    %v393 = vadd.f32 %v72, %v392
    %v394 = vpop.f32.mrb[0].mxu0
    %v395 = vadd.f32 %v76, %v394
    %396 = vmatprep.mubr.bf16.mxu0 0
    %397 = vmatmul.mubr.bf16.gmra.mrb[0].mxu0 %v320
    %v398 = vpop.f32.mrb[0].mxu0
    %v399 = vadd.f32 %v72, %v398
    %v400 = vpop.f32.mrb[0].mxu0
    %v401 = vadd.f32 %v76, %v400
    %v402 = vpop.f32.mrb[0].mxu0
    %v403 = vadd.f32 %v72, %v402
    %v404 = vpop.f32.mrb[0].mxu0
    %v405 = vadd.f32 %v76, %v404
    %406 = vmatprep.mubr.bf16.mxu0 0
    %407 = vmatmul.mubr.bf16.gmra.mrb[0].mxu0 %v323
    %v408 = vpop.f32.mrb[0].mxu0
    %v409 = vadd.f32 %v72, %v408
    %v410 = vpop.f32.mrb[0].mxu0
    %v411 = vadd.f32 %v76, %v410
    %v412 = vpop.f32.mrb[0].mxu0
    %v413 = vadd.f32 %v72, %v412
    %v414 = vpop.f32.mrb[0].mxu0
    %v415 = vadd.f32 %v76, %v414
    %416 = vmatprep.mubr.bf16.mxu0 0
    %417 = vmatmul.mubr.bf16.gmra.mrb[0].mxu0 %v326
    %v418 = vpop.f32.mrb[0].mxu0
    %v419 = vadd.f32 %v72, %v418
    %v420 = vpop.f32.mrb[0].mxu0
    %v421 = vadd.f32 %v76, %v420
    %v422 = vpop.f32.mrb[0].mxu0
    %v423 = vadd.f32 %v72, %v422
    %v424 = vpop.f32.mrb[0].mxu0
    %v425 = vadd.f32 %v76, %v424
    %426 = vmatprep.mubr.bf16.mxu0 0
    %427 = vmatmul.mubr.bf16.gmra.mrb[0].mxu0 %v329
    %v428 = vpop.f32.mrb[0].mxu0
    %v429 = vadd.f32 %v72, %v428
    %v430 = vpop.f32.mrb[0].mxu0
    %v431 = vadd.f32 %v76, %v430
    %v432 = vpop.f32.mrb[0].mxu0
    %v433 = vadd.f32 %v72, %v432
    %v434 = vpop.f32.mrb[0].mxu0
    %v435 = vadd.f32 %v76, %v434
    %436 = vmatprep.mubr.bf16.mxu0 0
    %437 = vmatmul.mubr.bf16.gmra.mrb[0].mxu0 %v332
    %v438 = vpop.f32.mrb[0].mxu0
    %v439 = vadd.f32 %v72, %v438
    %v440 = vpop.f32.mrb[0].mxu0
    %v441 = vadd.f32 %v76, %v440
    %v442 = vpop.f32.mrb[0].mxu0
    %v443 = vadd.f32 %v72, %v442
    %v444 = vpop.f32.mrb[0].mxu0
    %v445 = vadd.f32 %v76, %v444
    %446 = vdwg.mxu0
    %447 = vmatprep.subr.bf16.mxu0 %v248
    %448 = vmatpush1.bf16.msra.mxu0 %v247
    %449 = vmatprep.subr.bf16.mxu0 %v256
    %450 = vmatpush1.bf16.msra.mxu0 %v255
    %451 = vmatprep.subr.bf16.mxu0 %v264
    %452 = vmatpush1.bf16.msra.mxu0 %v263
    %453 = vmatprep.subr.bf16.mxu0 %v272
    %454 = vmatpush1.bf16.msra.mxu0 %v271
    %455 = vmatprep.subr.bf16.mxu0 0
    %456 = vmatpush1.bf16.msra.mxu0 0
    %457 = vmatprep.subr.bf16.mxu0 0
    %458 = vmatpush1.bf16.msra.mxu0 0
    %459 = vmatprep.subr.bf16.mxu0 0
    %460 = vmatpush1.bf16.msra.mxu0 0
    %461 = vmatprep.subr.bf16.mxu0 0
    %462 = vmatpush1.bf16.msra.mxu0 0
    %463 = vmatprep.subr.bf16.mxu0 0
    %464 = vmatpush1.bf16.msra.mxu0 0
    %465 = vmatprep.subr.bf16.mxu0 0
    %466 = vmatpush1.bf16.msra.mxu0 0
    %467 = vmatprep.subr.bf16.mxu0 0
    %468 = vmatpush1.bf16.msra.mxu0 0
    %469 = vmatprep.subr.bf16.mxu0 0
    %470 = vmatpush1.bf16.msra.mxu0 0
    %471 = vmatprep.subr.bf16.mxu0 0
    %472 = vmatpush1.bf16.msra.mxu0 0
    %473 = vmatprep.subr.bf16.mxu0 0
    %474 = vmatpush1.bf16.msra.mxu0 0
    %475 = vmatprep.subr.bf16.mxu0 0
    %476 = vmatpush1.bf16.msra.mxu0 0
    %477 = vmatprep.subr.bf16.mxu0 0
    %478 = vmatpush1.bf16.msra.mxu0 0
    %479 = vmatprep.mubr.bf16.mxu0 0
    %480 = vmatmul.mubr.bf16.gmra.mrb[0].mxu0 %v311
    %v481 = vpop.f32.mrb[0].mxu0
    %v482 = vadd.f32 %v80, %v481
    %v483 = vpop.f32.mrb[0].mxu0
    %v484 = vadd.f32 %v84, %v483
    %v485 = vpop.f32.mrb[0].mxu0
    %v486 = vadd.f32 %v80, %v485
    %v487 = vpop.f32.mrb[0].mxu0
    %v488 = vadd.f32 %v84, %v487
    %489 = vmatprep.mubr.bf16.mxu0 0
    %490 = vmatmul.mubr.bf16.gmra.mrb[0].mxu0 %v314
    %v491 = vpop.f32.mrb[0].mxu0
    %v492 = vadd.f32 %v80, %v491
    %v493 = vpop.f32.mrb[0].mxu0
    %v494 = vadd.f32 %v84, %v493
    %v495 = vpop.f32.mrb[0].mxu0
    %v496 = vadd.f32 %v80, %v495
    %v497 = vpop.f32.mrb[0].mxu0
    %v498 = vadd.f32 %v84, %v497
    %499 = vmatprep.mubr.bf16.mxu0 0
    %500 = vmatmul.mubr.bf16.gmra.mrb[0].mxu0 %v317
    %v501 = vpop.f32.mrb[0].mxu0
    %v502 = vadd.f32 %v80, %v501
    %v503 = vpop.f32.mrb[0].mxu0
    %v504 = vadd.f32 %v84, %v503
    %v505 = vpop.f32.mrb[0].mxu0
    %v506 = vadd.f32 %v80, %v505
    %v507 = vpop.f32.mrb[0].mxu0
    %v508 = vadd.f32 %v84, %v507
    %509 = vmatprep.mubr.bf16.mxu0 0
    %510 = vmatmul.mubr.bf16.gmra.mrb[0].mxu0 %v320
    %v511 = vpop.f32.mrb[0].mxu0
    %v512 = vadd.f32 %v80, %v511
    %v513 = vpop.f32.mrb[0].mxu0
    %v514 = vadd.f32 %v84, %v513
    %v515 = vpop.f32.mrb[0].mxu0
    %v516 = vadd.f32 %v80, %v515
    %v517 = vpop.f32.mrb[0].mxu0
    %v518 = vadd.f32 %v84, %v517
    %519 = vmatprep.mubr.bf16.mxu0 0
    %520 = vmatmul.mubr.bf16.gmra.mrb[0].mxu0 %v323
    %v521 = vpop.f32.mrb[0].mxu0
    %v522 = vadd.f32 %v80, %v521
    %v523 = vpop.f32.mrb[0].mxu0
    %v524 = vadd.f32 %v84, %v523
    %v525 = vpop.f32.mrb[0].mxu0
    %v526 = vadd.f32 %v80, %v525
    %v527 = vpop.f32.mrb[0].mxu0
    %v528 = vadd.f32 %v84, %v527
    %529 = vmatprep.mubr.bf16.mxu0 0
    %530 = vmatmul.mubr.bf16.gmra.mrb[0].mxu0 %v326
    %v531 = vpop.f32.mrb[0].mxu0
    %v532 = vadd.f32 %v80, %v531
    %v533 = vpop.f32.mrb[0].mxu0
    %v534 = vadd.f32 %v84, %v533
    %v535 = vpop.f32.mrb[0].mxu0
    %v536 = vadd.f32 %v80, %v535
    %v537 = vpop.f32.mrb[0].mxu0
    %v538 = vadd.f32 %v84, %v537
    %539 = vmatprep.mubr.bf16.mxu0 0
    %540 = vmatmul.mubr.bf16.gmra.mrb[0].mxu0 %v329
    %v541 = vpop.f32.mrb[0].mxu0
    %v542 = vadd.f32 %v80, %v541
    %v543 = vpop.f32.mrb[0].mxu0
    %v544 = vadd.f32 %v84, %v543
    %v545 = vpop.f32.mrb[0].mxu0
    %v546 = vadd.f32 %v80, %v545
    %v547 = vpop.f32.mrb[0].mxu0
    %v548 = vadd.f32 %v84, %v547
    %549 = vmatprep.mubr.bf16.mxu0 0
    %550 = vmatmul.mubr.bf16.gmra.mrb[0].mxu0 %v332
    %v551 = vpop.f32.mrb[0].mxu0
    %v552 = vadd.f32 %v80, %v551
    %v553 = vpop.f32.mrb[0].mxu0
    %v554 = vadd.f32 %v84, %v553
    %v555 = vpop.f32.mrb[0].mxu0
    %v556 = vadd.f32 %v80, %v555
    %v557 = vpop.f32.mrb[0].mxu0
    %v558 = vadd.f32 %v84, %v557
    %559 = vdwg.mxu0
    %560 = vmatprep.subr.bf16.mxu0 %v250
    %561 = vmatpush1.bf16.msra.mxu0 %v249
    %562 = vmatprep.subr.bf16.mxu0 %v258
    %563 = vmatpush1.bf16.msra.mxu0 %v257
    %564 = vmatprep.subr.bf16.mxu0 %v266
    %565 = vmatpush1.bf16.msra.mxu0 %v265
    %566 = vmatprep.subr.bf16.mxu0 %v274
    %567 = vmatpush1.bf16.msra.mxu0 %v273
    %568 = vmatprep.subr.bf16.mxu0 0
    %569 = vmatpush1.bf16.msra.mxu0 0
    %570 = vmatprep.subr.bf16.mxu0 0
    %571 = vmatpush1.bf16.msra.mxu0 0
    %572 = vmatprep.subr.bf16.mxu0 0
    %573 = vmatpush1.bf16.msra.mxu0 0
    %574 = vmatprep.subr.bf16.mxu0 0
    %575 = vmatpush1.bf16.msra.mxu0 0
    %576 = vmatprep.subr.bf16.mxu0 0
    %577 = vmatpush1.bf16.msra.mxu0 0
    %578 = vmatprep.subr.bf16.mxu0 0
    %579 = vmatpush1.bf16.msra.mxu0 0
    %580 = vmatprep.subr.bf16.mxu0 0
    %581 = vmatpush1.bf16.msra.mxu0 0
    %582 = vmatprep.subr.bf16.mxu0 0
    %583 = vmatpush1.bf16.msra.mxu0 0
    %584 = vmatprep.subr.bf16.mxu0 0
    %585 = vmatpush1.bf16.msra.mxu0 0
    %586 = vmatprep.subr.bf16.mxu0 0
    %587 = vmatpush1.bf16.msra.mxu0 0
    %588 = vmatprep.subr.bf16.mxu0 0
    %589 = vmatpush1.bf16.msra.mxu0 0
    %590 = vmatprep.subr.bf16.mxu0 0
    %591 = vmatpush1.bf16.msra.mxu0 0
    %592 = vmatprep.mubr.bf16.mxu0 0
    %593 = vmatmul.mubr.bf16.gmra.mrb[0].mxu0 %v311
    %v594 = vpop.f32.mrb[0].mxu0
    %v595 = vadd.f32 %v88, %v594
    %v596 = vpop.f32.mrb[0].mxu0
    %v597 = vadd.f32 %v92, %v596
    %v598 = vpop.f32.mrb[0].mxu0
    %v599 = vadd.f32 %v88, %v598
    %v600 = vpop.f32.mrb[0].mxu0
    %v601 = vadd.f32 %v92, %v600
    %602 = vmatprep.mubr.bf16.mxu0 0
    %603 = vmatmul.mubr.bf16.gmra.mrb[0].mxu0 %v314
    %v604 = vpop.f32.mrb[0].mxu0
    %v605 = vadd.f32 %v88, %v604
    %v606 = vpop.f32.mrb[0].mxu0
    %v607 = vadd.f32 %v92, %v606
    %v608 = vpop.f32.mrb[0].mxu0
    %v609 = vadd.f32 %v88, %v608
    %v610 = vpop.f32.mrb[0].mxu0
    %v611 = vadd.f32 %v92, %v610
    %612 = vmatprep.mubr.bf16.mxu0 0
    %613 = vmatmul.mubr.bf16.gmra.mrb[0].mxu0 %v317
    %v614 = vpop.f32.mrb[0].mxu0
    %v615 = vadd.f32 %v88, %v614
    %v616 = vpop.f32.mrb[0].mxu0
    %v617 = vadd.f32 %v92, %v616
    %v618 = vpop.f32.mrb[0].mxu0
    %v619 = vadd.f32 %v88, %v618
    %v620 = vpop.f32.mrb[0].mxu0
    %v621 = vadd.f32 %v92, %v620
    %622 = vmatprep.mubr.bf16.mxu0 0
    %623 = vmatmul.mubr.bf16.gmra.mrb[0].mxu0 %v320
    %v624 = vpop.f32.mrb[0].mxu0
    %v625 = vadd.f32 %v88, %v624
    %v626 = vpop.f32.mrb[0].mxu0
    %v627 = vadd.f32 %v92, %v626
    %v628 = vpop.f32.mrb[0].mxu0
    %v629 = vadd.f32 %v88, %v628
    %v630 = vpop.f32.mrb[0].mxu0
    %v631 = vadd.f32 %v92, %v630
    %632 = vmatprep.mubr.bf16.mxu0 0
    %633 = vmatmul.mubr.bf16.gmra.mrb[0].mxu0 %v323
    %v634 = vpop.f32.mrb[0].mxu0
    %v635 = vadd.f32 %v88, %v634
    %v636 = vpop.f32.mrb[0].mxu0
    %v637 = vadd.f32 %v92, %v636
    %v638 = vpop.f32.mrb[0].mxu0
    %v639 = vadd.f32 %v88, %v638
    %v640 = vpop.f32.mrb[0].mxu0
    %v641 = vadd.f32 %v92, %v640
    %642 = vmatprep.mubr.bf16.mxu0 0
    %643 = vmatmul.mubr.bf16.gmra.mrb[0].mxu0 %v326
    %v644 = vpop.f32.mrb[0].mxu0
    %v645 = vadd.f32 %v88, %v644
    %v646 = vpop.f32.mrb[0].mxu0
    %v647 = vadd.f32 %v92, %v646
    %v648 = vpop.f32.mrb[0].mxu0
    %v649 = vadd.f32 %v88, %v648
    %v650 = vpop.f32.mrb[0].mxu0
    %v651 = vadd.f32 %v92, %v650
    %652 = vmatprep.mubr.bf16.mxu0 0
    %653 = vmatmul.mubr.bf16.gmra.mrb[0].mxu0 %v329
    %v654 = vpop.f32.mrb[0].mxu0
    %v655 = vadd.f32 %v88, %v654
    %v656 = vpop.f32.mrb[0].mxu0
    %v657 = vadd.f32 %v92, %v656
    %v658 = vpop.f32.mrb[0].mxu0
    %v659 = vadd.f32 %v88, %v658
    %v660 = vpop.f32.mrb[0].mxu0
    %v661 = vadd.f32 %v92, %v660
    %662 = vmatprep.mubr.bf16.mxu0 0
    %663 = vmatmul.mubr.bf16.gmra.mrb[0].mxu0 %v332
    %v664 = vpop.f32.mrb[0].mxu0
    %v665 = vadd.f32 %v88, %v664
    %v666 = vpop.f32.mrb[0].mxu0
    %v667 = vadd.f32 %v92, %v666
    %v668 = vpop.f32.mrb[0].mxu0
    %v669 = vadd.f32 %v88, %v668
    %v670 = vpop.f32.mrb[0].mxu0
    %v671 = vadd.f32 %v92, %v670
    %672 = vdwg.mxu0
    %673 = vmatprep.subr.bf16.mxu0 %v252
    %674 = vmatpush1.bf16.msra.mxu0 %v251
    %675 = vmatprep.subr.bf16.mxu0 %v260
    %676 = vmatpush1.bf16.msra.mxu0 %v259
    %677 = vmatprep.subr.bf16.mxu0 %v268
    %678 = vmatpush1.bf16.msra.mxu0 %v267
    %679 = vmatprep.subr.bf16.mxu0 %v276
    %680 = vmatpush1.bf16.msra.mxu0 %v275
    %681 = vmatprep.subr.bf16.mxu0 0
    %682 = vmatpush1.bf16.msra.mxu0 0
    %683 = vmatprep.subr.bf16.mxu0 0
    %684 = vmatpush1.bf16.msra.mxu0 0
    %685 = vmatprep.subr.bf16.mxu0 0
    %686 = vmatpush1.bf16.msra.mxu0 0
    %687 = vmatprep.subr.bf16.mxu0 0
    %688 = vmatpush1.bf16.msra.mxu0 0
    %689 = vmatprep.subr.bf16.mxu0 0
    %690 = vmatpush1.bf16.msra.mxu0 0
    %691 = vmatprep.subr.bf16.mxu0 0
    %692 = vmatpush1.bf16.msra.mxu0 0
    %693 = vmatprep.subr.bf16.mxu0 0
    %694 = vmatpush1.bf16.msra.mxu0 0
    %695 = vmatprep.subr.bf16.mxu0 0
    %696 = vmatpush1.bf16.msra.mxu0 0
    %697 = vmatprep.subr.bf16.mxu0 0
    %698 = vmatpush1.bf16.msra.mxu0 0
    %699 = vmatprep.subr.bf16.mxu0 0
    %700 = vmatpush1.bf16.msra.mxu0 0
    %701 = vmatprep.subr.bf16.mxu0 0
    %702 = vmatpush1.bf16.msra.mxu0 0
    %703 = vmatprep.subr.bf16.mxu0 0
    %704 = vmatpush1.bf16.msra.mxu0 0
    %705 = vmatprep.mubr.bf16.mxu0 0
    %706 = vmatmul.mubr.bf16.gmra.mrb[0].mxu0 %v311
    %v707 = vpop.f32.mrb[0].mxu0
    %v708 = vadd.f32 %v96, %v707
    %v709 = vpop.f32.mrb[0].mxu0
    %v710 = vadd.f32 %v100, %v709
    %v711 = vpop.f32.mrb[0].mxu0
    %v712 = vadd.f32 %v96, %v711
    %v713 = vpop.f32.mrb[0].mxu0
    %v714 = vadd.f32 %v100, %v713
    %715 = vmatprep.mubr.bf16.mxu0 0
    %716 = vmatmul.mubr.bf16.gmra.mrb[0].mxu0 %v314
    %v717 = vpop.f32.mrb[0].mxu0
    %v718 = vadd.f32 %v96, %v717
    %v719 = vpop.f32.mrb[0].mxu0
    %v720 = vadd.f32 %v100, %v719
    %v721 = vpop.f32.mrb[0].mxu0
    %v722 = vadd.f32 %v96, %v721
    %v723 = vpop.f32.mrb[0].mxu0
    %v724 = vadd.f32 %v100, %v723
    %725 = vmatprep.mubr.bf16.mxu0 0
    %726 = vmatmul.mubr.bf16.gmra.mrb[0].mxu0 %v317
    %v727 = vpop.f32.mrb[0].mxu0
    %v728 = vadd.f32 %v96, %v727
    %v729 = vpop.f32.mrb[0].mxu0
    %v730 = vadd.f32 %v100, %v729
    %v731 = vpop.f32.mrb[0].mxu0
    %v732 = vadd.f32 %v96, %v731
    %v733 = vpop.f32.mrb[0].mxu0
    %v734 = vadd.f32 %v100, %v733
    %735 = vmatprep.mubr.bf16.mxu0 0
    %736 = vmatmul.mubr.bf16.gmra.mrb[0].mxu0 %v320
    %v737 = vpop.f32.mrb[0].mxu0
    %v738 = vadd.f32 %v96, %v737
    %v739 = vpop.f32.mrb[0].mxu0
    %v740 = vadd.f32 %v100, %v739
    %v741 = vpop.f32.mrb[0].mxu0
    %v742 = vadd.f32 %v96, %v741
    %v743 = vpop.f32.mrb[0].mxu0
    %v744 = vadd.f32 %v100, %v743
    %745 = vmatprep.mubr.bf16.mxu0 0
    %746 = vmatmul.mubr.bf16.gmra.mrb[0].mxu0 %v323
    %v747 = vpop.f32.mrb[0].mxu0
    %v748 = vadd.f32 %v96, %v747
    %v749 = vpop.f32.mrb[0].mxu0
    %v750 = vadd.f32 %v100, %v749
    %v751 = vpop.f32.mrb[0].mxu0
    %v752 = vadd.f32 %v96, %v751
    %v753 = vpop.f32.mrb[0].mxu0
    %v754 = vadd.f32 %v100, %v753
    %755 = vmatprep.mubr.bf16.mxu0 0
    %756 = vmatmul.mubr.bf16.gmra.mrb[0].mxu0 %v326
    %v757 = vpop.f32.mrb[0].mxu0
    %v758 = vadd.f32 %v96, %v757
    %v759 = vpop.f32.mrb[0].mxu0
    %v760 = vadd.f32 %v100, %v759
    %v761 = vpop.f32.mrb[0].mxu0
    %v762 = vadd.f32 %v96, %v761
    %v763 = vpop.f32.mrb[0].mxu0
    %v764 = vadd.f32 %v100, %v763
    %765 = vmatprep.mubr.bf16.mxu0 0
    %766 = vmatmul.mubr.bf16.gmra.mrb[0].mxu0 %v329
    %v767 = vpop.f32.mrb[0].mxu0
    %v768 = vadd.f32 %v96, %v767
    %v769 = vpop.f32.mrb[0].mxu0
    %v770 = vadd.f32 %v100, %v769
    %v771 = vpop.f32.mrb[0].mxu0
    %v772 = vadd.f32 %v96, %v771
    %v773 = vpop.f32.mrb[0].mxu0
    %v774 = vadd.f32 %v100, %v773
    %775 = vmatprep.mubr.bf16.mxu0 0
    %776 = vmatmul.mubr.bf16.gmra.mrb[0].mxu0 %v332
    %v777 = vpop.f32.mrb[0].mxu0
    %v778 = vadd.f32 %v96, %v777
    %v779 = vpop.f32.mrb[0].mxu0
    %v780 = vadd.f32 %v100, %v779
    %v781 = vpop.f32.mrb[0].mxu0
    %v782 = vadd.f32 %v96, %v781
    %v783 = vpop.f32.mrb[0].mxu0
    %v784 = vadd.f32 %v100, %v783
    %785 = vdwg.mxu0
    %v786 = vld [vmem:[%s3] sm:$0xff]
    %v787 = vld [vmem:[%s3 + $0x8] sm:$0xff]
    %v788 = vld [vmem:[%s3 + $0x10] sm:$0xff]
    %v789 = vld [vmem:[%s3 + $0x18] sm:$0xff]
    %v790 = vld [vmem:[%s3 + $0x20] sm:$0xff]
    %v791 = vld [vmem:[%s3 + $0x28] sm:$0xff]
    %v792 = vld [vmem:[%s3 + $0x30] sm:$0xff]
    %v793 = vld [vmem:[%s3 + $0x38] sm:$0xff]
    %v794 = vld [vmem:[%s3 + $0x40] sm:$0xff]
    %v795 = vld [vmem:[%s3 + $0x48] sm:$0xff]
    %v796 = vld [vmem:[%s3 + $0x50] sm:$0xff]
    %v797 = vld [vmem:[%s3 + $0x58] sm:$0xff]
    %v798 = vld [vmem:[%s3 + $0x60] sm:$0xff]
    %v799 = vld [vmem:[%s3 + $0x68] sm:$0xff]
    %v800 = vld [vmem:[%s3 + $0x70] sm:$0xff]
    %v801 = vld [vmem:[%s3 + $0x78] sm:$0xff]
    %v802 = vld [vmem:[%s3 + $0x80] sm:$0xff]
    %v803 = vld [vmem:[%s3 + $0x88] sm:$0xff]
    %v804 = vld [vmem:[%s3 + $0x90] sm:$0xff]
    %v805 = vld [vmem:[%s3 + $0x98] sm:$0xff]
    %v806 = vld [vmem:[%s3 + $0xa0] sm:$0xff]
    %v807 = vld [vmem:[%s3 + $0xa8] sm:$0xff]
    %v808 = vld [vmem:[%s3 + $0xb0] sm:$0xff]
    %v809 = vld [vmem:[%s3 + $0xb8] sm:$0xff]
    %v810 = vld [vmem:[%s3 + $0xc0] sm:$0xff]
    %v811 = vld [vmem:[%s3 + $0xc8] sm:$0xff]
    %v812 = vld [vmem:[%s3 + $0xd0] sm:$0xff]
    %v813 = vld [vmem:[%s3 + $0xd8] sm:$0xff]
    %v814 = vld [vmem:[%s3 + $0xe0] sm:$0xff]
    %v815 = vld [vmem:[%s3 + $0xe8] sm:$0xff]
    %v816 = vld [vmem:[%s3 + $0xf0] sm:$0xff]
    %v817 = vld [vmem:[%s3 + $0xf8] sm:$0xff]
    %v818 = vld [vmem:[%s3 + $0x100] sm:$0xff]
    %v819 = vld [vmem:[%s3 + $0x108] sm:$0xff]
    %v820 = vld [vmem:[%s3 + $0x110] sm:$0xff]
    %v821 = vld [vmem:[%s3 + $0x118] sm:$0xff]
    %v822 = vld [vmem:[%s3 + $0x120] sm:$0xff]
    %v823 = vld [vmem:[%s3 + $0x128] sm:$0xff]
    %v824 = vld [vmem:[%s3 + $0x130] sm:$0xff]
    %v825 = vld [vmem:[%s3 + $0x138] sm:$0xff]
    %v826 = vld [vmem:[%s3 + $0x140] sm:$0xff]
    %v827 = vld [vmem:[%s3 + $0x148] sm:$0xff]
    %v828 = vld [vmem:[%s3 + $0x150] sm:$0xff]
    %v829 = vld [vmem:[%s3 + $0x158] sm:$0xff]
    %v830 = vld [vmem:[%s3 + $0x160] sm:$0xff]
    %v831 = vld [vmem:[%s3 + $0x168] sm:$0xff]
    %v832 = vld [vmem:[%s3 + $0x170] sm:$0xff]
    %v833 = vld [vmem:[%s3 + $0x178] sm:$0xff]
    %v834 = vld [vmem:[%s3 + $0x180] sm:$0xff]
    %v835 = vld [vmem:[%s3 + $0x188] sm:$0xff]
    %v836 = vld [vmem:[%s3 + $0x190] sm:$0xff]
    %v837 = vld [vmem:[%s3 + $0x198] sm:$0xff]
    %v838 = vld [vmem:[%s3 + $0x1a0] sm:$0xff]
    %v839 = vld [vmem:[%s3 + $0x1a8] sm:$0xff]
    %v840 = vld [vmem:[%s3 + $0x1b0] sm:$0xff]
    %v841 = vld [vmem:[%s3 + $0x1b8] sm:$0xff]
    %v842 = vld [vmem:[%s3 + $0x1c0] sm:$0xff]
    %v843 = vld [vmem:[%s3 + $0x1c8] sm:$0xff]
    %v844 = vld [vmem:[%s3 + $0x1d0] sm:$0xff]
    %v845 = vld [vmem:[%s3 + $0x1d8] sm:$0xff]
    %v846 = vld [vmem:[%s3 + $0x1e0] sm:$0xff]
    %v847 = vld [vmem:[%s3 + $0x1e8] sm:$0xff]
    %v848 = vld [vmem:[%s3 + $0x1f0] sm:$0xff]
    %v849 = vld [vmem:[%s3 + $0x1f8] sm:$0xff]
    %v850 = vld [vmem:[%s3 + $0x200] sm:$0xff]
    %v851 = vld [vmem:[%s3 + $0x208] sm:$0xff]
    %v852 = vld [vmem:[%s3 + $0x210] sm:$0xff]
    %v853 = vld [vmem:[%s3 + $0x218] sm:$0xff]
    %v854 = vld [vmem:[%s3 + $0x220] sm:$0xff]
    %v855 = vld [vmem:[%s3 + $0x228] sm:$0xff]
    %v856 = vld [vmem:[%s3 + $0x230] sm:$0xff]
    %v857 = vld [vmem:[%s3 + $0x238] sm:$0xff]
    %v858 = vld [vmem:[%s3 + $0x240] sm:$0xff]
    %v859 = vld [vmem:[%s3 + $0x248] sm:$0xff]
    %v860 = vld [vmem:[%s3 + $0x250] sm:$0xff]
    %v861 = vld [vmem:[%s3 + $0x258] sm:$0xff]
    %v862 = vld [vmem:[%s3 + $0x260] sm:$0xff]
    %v863 = vld [vmem:[%s3 + $0x268] sm:$0xff]
    %v864 = vld [vmem:[%s3 + $0x270] sm:$0xff]
    %v865 = vld [vmem:[%s3 + $0x278] sm:$0xff]
    %v866 = vld [vmem:[%s3 + $0x280] sm:$0xff]
    %v867 = vld [vmem:[%s3 + $0x288] sm:$0xff]
    %v868 = vld [vmem:[%s3 + $0x290] sm:$0xff]
    %v869 = vld [vmem:[%s3 + $0x298] sm:$0xff]
    %v870 = vld [vmem:[%s3 + $0x2a0] sm:$0xff]
    %v871 = vld [vmem:[%s3 + $0x2a8] sm:$0xff]
    %v872 = vld [vmem:[%s3 + $0x2b0] sm:$0xff]
    %v873 = vld [vmem:[%s3 + $0x2b8] sm:$0xff]
    %v874 = vld [vmem:[%s3 + $0x2c0] sm:$0xff]
    %v875 = vld [vmem:[%s3 + $0x2c8] sm:$0xff]
    %v876 = vld [vmem:[%s3 + $0x2d0] sm:$0xff]
    %v877 = vld [vmem:[%s3 + $0x2d8] sm:$0xff]
    %v878 = vld [vmem:[%s3 + $0x2e0] sm:$0xff]
    %v879 = vld [vmem:[%s3 + $0x2e8] sm:$0xff]
    %v880 = vld [vmem:[%s3 + $0x2f0] sm:$0xff]
    %v881 = vld [vmem:[%s3 + $0x2f8] sm:$0xff]
    %v882 = vld [vmem:[%s3 + $0x300] sm:$0xff]
    %v883 = vld [vmem:[%s3 + $0x308] sm:$0xff]
    %v884 = vld [vmem:[%s3 + $0x310] sm:$0xff]
    %v885 = vld [vmem:[%s3 + $0x318] sm:$0xff]
    %v886 = vld [vmem:[%s3 + $0x320] sm:$0xff]
    %v887 = vld [vmem:[%s3 + $0x328] sm:$0xff]
    %v888 = vld [vmem:[%s3 + $0x330] sm:$0xff]
    %v889 = vld [vmem:[%s3 + $0x338] sm:$0xff]
    %v890 = vld [vmem:[%s3 + $0x340] sm:$0xff]
    %v891 = vld [vmem:[%s3 + $0x348] sm:$0xff]
    %v892 = vld [vmem:[%s3 + $0x350] sm:$0xff]
    %v893 = vld [vmem:[%s3 + $0x358] sm:$0xff]
    %v894 = vld [vmem:[%s3 + $0x360] sm:$0xff]
    %v895 = vld [vmem:[%s3 + $0x368] sm:$0xff]
    %v896 = vld [vmem:[%s3 + $0x370] sm:$0xff]
    %v897 = vld [vmem:[%s3 + $0x378] sm:$0xff]
    %v898 = vld [vmem:[%s3 + $0x380] sm:$0xff]
    %v899 = vld [vmem:[%s3 + $0x388] sm:$0xff]
    %v900 = vld [vmem:[%s3 + $0x390] sm:$0xff]
    %v901 = vld [vmem:[%s3 + $0x398] sm:$0xff]
    %v902 = vld [vmem:[%s3 + $0x3a0] sm:$0xff]
    %v903 = vld [vmem:[%s3 + $0x3a8] sm:$0xff]
    %v904 = vld [vmem:[%s3 + $0x3b0] sm:$0xff]
    %v905 = vld [vmem:[%s3 + $0x3b8] sm:$0xff]
    %v906 = vld [vmem:[%s3 + $0x3c0] sm:$0xff]
    %v907 = vld [vmem:[%s3 + $0x3c8] sm:$0xff]
    %v908 = vld [vmem:[%s3 + $0x3d0] sm:$0xff]
    %v909 = vld [vmem:[%s3 + $0x3d8] sm:$0xff]
    %v910 = vld [vmem:[%s3 + $0x3e0] sm:$0xff]
    %v911 = vld [vmem:[%s3 + $0x3e8] sm:$0xff]
    %v912 = vld [vmem:[%s3 + $0x3f0] sm:$0xff]
    %v913 = vld [vmem:[%s3 + $0x3f8] sm:$0xff]
    %v914 = vadd.f32 %v369, %v786
    %v915 = vadd.f32 %v371, %v787
    %v916 = vadd.f32 %v482, %v788
    %v917 = vadd.f32 %v484, %v789
    %v918 = vadd.f32 %v595, %v790
    %v919 = vadd.f32 %v597, %v791
    %v920 = vadd.f32 %v708, %v792
    %v921 = vadd.f32 %v710, %v793
    %v922 = vadd.f32 %v373, %v794
    %v923 = vadd.f32 %v375, %v795
    %v924 = vadd.f32 %v486, %v796
    %v925 = vadd.f32 %v488, %v797
    %v926 = vadd.f32 %v599, %v798
    %v927 = vadd.f32 %v601, %v799
    %v928 = vadd.f32 %v712, %v800
    %v929 = vadd.f32 %v714, %v801
    %v930 = vadd.f32 %v379, %v802
    %v931 = vadd.f32 %v381, %v803
    %v932 = vadd.f32 %v492, %v804
    %v933 = vadd.f32 %v494, %v805
    %v934 = vadd.f32 %v605, %v806
    %v935 = vadd.f32 %v607, %v807
    %v936 = vadd.f32 %v718, %v808
    %v937 = vadd.f32 %v720, %v809
    %v938 = vadd.f32 %v383, %v810
    %v939 = vadd.f32 %v385, %v811
    %v940 = vadd.f32 %v496, %v812
    %v941 = vadd.f32 %v498, %v813
    %v942 = vadd.f32 %v609, %v814
    %v943 = vadd.f32 %v611, %v815
    %v944 = vadd.f32 %v722, %v816
    %v945 = vadd.f32 %v724, %v817
    %v946 = vadd.f32 %v389, %v818
    %v947 = vadd.f32 %v391, %v819
    %v948 = vadd.f32 %v502, %v820
    %v949 = vadd.f32 %v504, %v821
    %v950 = vadd.f32 %v615, %v822
    %v951 = vadd.f32 %v617, %v823
    %v952 = vadd.f32 %v728, %v824
    %v953 = vadd.f32 %v730, %v825
    %v954 = vadd.f32 %v393, %v826
    %v955 = vadd.f32 %v395, %v827
    %v956 = vadd.f32 %v506, %v828
    %v957 = vadd.f32 %v508, %v829
    %v958 = vadd.f32 %v619, %v830
    %v959 = vadd.f32 %v621, %v831
    %v960 = vadd.f32 %v732, %v832
    %v961 = vadd.f32 %v734, %v833
    %v962 = vadd.f32 %v399, %v834
    %v963 = vadd.f32 %v401, %v835
    %v964 = vadd.f32 %v512, %v836
    %v965 = vadd.f32 %v514, %v837
    %v966 = vadd.f32 %v625, %v838
    %v967 = vadd.f32 %v627, %v839
    %v968 = vadd.f32 %v738, %v840
    %v969 = vadd.f32 %v740, %v841
    %v970 = vadd.f32 %v403, %v842
    %v971 = vadd.f32 %v405, %v843
    %v972 = vadd.f32 %v516, %v844
    %v973 = vadd.f32 %v518, %v845
    %v974 = vadd.f32 %v629, %v846
    %v975 = vadd.f32 %v631, %v847
    %v976 = vadd.f32 %v742, %v848
    %v977 = vadd.f32 %v744, %v849
    %v978 = vadd.f32 %v409, %v850
    %v979 = vadd.f32 %v411, %v851
    %v980 = vadd.f32 %v522, %v852
    %v981 = vadd.f32 %v524, %v853
    %v982 = vadd.f32 %v635, %v854
    %v983 = vadd.f32 %v637, %v855
    %v984 = vadd.f32 %v748, %v856
    %v985 = vadd.f32 %v750, %v857
    %v986 = vadd.f32 %v413, %v858
    %v987 = vadd.f32 %v415, %v859
    %v988 = vadd.f32 %v526, %v860
    %v989 = vadd.f32 %v528, %v861
    %v990 = vadd.f32 %v639, %v862
    %v991 = vadd.f32 %v641, %v863
    %v992 = vadd.f32 %v752, %v864
    %v993 = vadd.f32 %v754, %v865
    %v994 = vadd.f32 %v419, %v866
    %v995 = vadd.f32 %v421, %v867
    %v996 = vadd.f32 %v532, %v868
    %v997 = vadd.f32 %v534, %v869
    %v998 = vadd.f32 %v645, %v870
    %v999 = vadd.f32 %v647, %v871
    %v1000 = vadd.f32 %v758, %v872
    %v1001 = vadd.f32 %v760, %v873
    %v1002 = vadd.f32 %v423, %v874
    %v1003 = vadd.f32 %v425, %v875
    %v1004 = vadd.f32 %v536, %v876
    %v1005 = vadd.f32 %v538, %v877
    %v1006 = vadd.f32 %v649, %v878
    %v1007 = vadd.f32 %v651, %v879
    %v1008 = vadd.f32 %v762, %v880
    %v1009 = vadd.f32 %v764, %v881
    %v1010 = vadd.f32 %v429, %v882
    %v1011 = vadd.f32 %v431, %v883
    %v1012 = vadd.f32 %v542, %v884
    %v1013 = vadd.f32 %v544, %v885
    %v1014 = vadd.f32 %v655, %v886
    %v1015 = vadd.f32 %v657, %v887
    %v1016 = vadd.f32 %v768, %v888
    %v1017 = vadd.f32 %v770, %v889
    %v1018 = vadd.f32 %v433, %v890
    %v1019 = vadd.f32 %v435, %v891
    %v1020 = vadd.f32 %v546, %v892
    %v1021 = vadd.f32 %v548, %v893
    %v1022 = vadd.f32 %v659, %v894
    %v1023 = vadd.f32 %v661, %v895
    %v1024 = vadd.f32 %v772, %v896
    %v1025 = vadd.f32 %v774, %v897
    %v1026 = vadd.f32 %v439, %v898
    %v1027 = vadd.f32 %v441, %v899
    %v1028 = vadd.f32 %v552, %v900
    %v1029 = vadd.f32 %v554, %v901
    %v1030 = vadd.f32 %v665, %v902
    %v1031 = vadd.f32 %v667, %v903
    %v1032 = vadd.f32 %v778, %v904
    %v1033 = vadd.f32 %v780, %v905
    %v1034 = vadd.f32 %v443, %v906
    %v1035 = vadd.f32 %v445, %v907
    %v1036 = vadd.f32 %v556, %v908
    %v1037 = vadd.f32 %v558, %v909
    %v1038 = vadd.f32 %v669, %v910
    %v1039 = vadd.f32 %v671, %v911
    %v1040 = vadd.f32 %v782, %v912
    %v1041 = vadd.f32 %v784, %v913
    %1042 = vst [vmem:[#allocation2] sm:$0xff] %v914
    %1043 = vst [vmem:[#allocation2 + $0x8] sm:$0xff] %v915
    %1044 = vst [vmem:[#allocation2 + $0x10] sm:$0xff] %v916
    %1045 = vst [vmem:[#allocation2 + $0x18] sm:$0xff] %v917
    %1046 = vst [vmem:[#allocation2 + $0x20] sm:$0xff] %v918
    %1047 = vst [vmem:[#allocation2 + $0x28] sm:$0xff] %v919
    %1048 = vst [vmem:[#allocation2 + $0x30] sm:$0xff] %v920
    %1049 = vst [vmem:[#allocation2 + $0x38] sm:$0xff] %v921
    %1050 = vst [vmem:[#allocation2 + $0x40] sm:$0xff] %v922
    %1051 = vst [vmem:[#allocation2 + $0x48] sm:$0xff] %v923
    %1052 = vst [vmem:[#allocation2 + $0x50] sm:$0xff] %v924
    %1053 = vst [vmem:[#allocation2 + $0x58] sm:$0xff] %v925
    %1054 = vst [vmem:[#allocation2 + $0x60] sm:$0xff] %v926
    %1055 = vst [vmem:[#allocation2 + $0x68] sm:$0xff] %v927
    %1056 = vst [vmem:[#allocation2 + $0x70] sm:$0xff] %v928
    %1057 = vst [vmem:[#allocation2 + $0x78] sm:$0xff] %v929
    %1058 = vst [vmem:[#allocation2 + $0x80] sm:$0xff] %v930
    %1059 = vst [vmem:[#allocation2 + $0x88] sm:$0xff] %v931
    %1060 = vst [vmem:[#allocation2 + $0x90] sm:$0xff] %v932
    %1061 = vst [vmem:[#allocation2 + $0x98] sm:$0xff] %v933
    %1062 = vst [vmem:[#allocation2 + $0xa0] sm:$0xff] %v934
    %1063 = vst [vmem:[#allocation2 + $0xa8] sm:$0xff] %v935
    %1064 = vst [vmem:[#allocation2 + $0xb0] sm:$0xff] %v936
    %1065 = vst [vmem:[#allocation2 + $0xb8] sm:$0xff] %v937
    %1066 = vst [vmem:[#allocation2 + $0xc0] sm:$0xff] %v938
    %1067 = vst [vmem:[#allocation2 + $0xc8] sm:$0xff] %v939
    %1068 = vst [vmem:[#allocation2 + $0xd0] sm:$0xff] %v940
    %1069 = vst [vmem:[#allocation2 + $0xd8] sm:$0xff] %v941
    %1070 = vst [vmem:[#allocation2 + $0xe0] sm:$0xff] %v942
    %1071 = vst [vmem:[#allocation2 + $0xe8] sm:$0xff] %v943
    %1072 = vst [vmem:[#allocation2 + $0xf0] sm:$0xff] %v944
    %1073 = vst [vmem:[#allocation2 + $0xf8] sm:$0xff] %v945
    %1074 = vst [vmem:[#allocation2 + $0x100] sm:$0xff] %v946
    %1075 = vst [vmem:[#allocation2 + $0x108] sm:$0xff] %v947
    %1076 = vst [vmem:[#allocation2 + $0x110] sm:$0xff] %v948
    %1077 = vst [vmem:[#allocation2 + $0x118] sm:$0xff] %v949
    %1078 = vst [vmem:[#allocation2 + $0x120] sm:$0xff] %v950
    %1079 = vst [vmem:[#allocation2 + $0x128] sm:$0xff] %v951
    %1080 = vst [vmem:[#allocation2 + $0x130] sm:$0xff] %v952
    %1081 = vst [vmem:[#allocation2 + $0x138] sm:$0xff] %v953
    %1082 = vst [vmem:[#allocation2 + $0x140] sm:$0xff] %v954
    %1083 = vst [vmem:[#allocation2 + $0x148] sm:$0xff] %v955
    %1084 = vst [vmem:[#allocation2 + $0x150] sm:$0xff] %v956
    %1085 = vst [vmem:[#allocation2 + $0x158] sm:$0xff] %v957
    %1086 = vst [vmem:[#allocation2 + $0x160] sm:$0xff] %v958
    %1087 = vst [vmem:[#allocation2 + $0x168] sm:$0xff] %v959
    %1088 = vst [vmem:[#allocation2 + $0x170] sm:$0xff] %v960
    %1089 = vst [vmem:[#allocation2 + $0x178] sm:$0xff] %v961
    %1090 = vst [vmem:[#allocation2 + $0x180] sm:$0xff] %v962
    %1091 = vst [vmem:[#allocation2 + $0x188] sm:$0xff] %v963
    %1092 = vst [vmem:[#allocation2 + $0x190] sm:$0xff] %v964
    %1093 = vst [vmem:[#allocation2 + $0x198] sm:$0xff] %v965
    %1094 = vst [vmem:[#allocation2 + $0x1a0] sm:$0xff] %v966
    %1095 = vst [vmem:[#allocation2 + $0x1a8] sm:$0xff] %v967
    %1096 = vst [vmem:[#allocation2 + $0x1b0] sm:$0xff] %v968
    %1097 = vst [vmem:[#allocation2 + $0x1b8] sm:$0xff] %v969
    %1098 = vst [vmem:[#allocation2 + $0x1c0] sm:$0xff] %v970
    %1099 = vst [vmem:[#allocation2 + $0x1c8] sm:$0xff] %v971
    %1100 = vst [vmem:[#allocation2 + $0x1d0] sm:$0xff] %v972
    %1101 = vst [vmem:[#allocation2 + $0x1d8] sm:$0xff] %v973
    %1102 = vst [vmem:[#allocation2 + $0x1e0] sm:$0xff] %v974
    %1103 = vst [vmem:[#allocation2 + $0x1e8] sm:$0xff] %v975
    %1104 = vst [vmem:[#allocation2 + $0x1f0] sm:$0xff] %v976
    %1105 = vst [vmem:[#allocation2 + $0x1f8] sm:$0xff] %v977
    %1106 = vst [vmem:[#allocation2 + $0x200] sm:$0xff] %v978
    %1107 = vst [vmem:[#allocation2 + $0x208] sm:$0xff] %v979
    %1108 = vst [vmem:[#allocation2 + $0x210] sm:$0xff] %v980
    %1109 = vst [vmem:[#allocation2 + $0x218] sm:$0xff] %v981
    %1110 = vst [vmem:[#allocation2 + $0x220] sm:$0xff] %v982
    %1111 = vst [vmem:[#allocation2 + $0x228] sm:$0xff] %v983
    %1112 = vst [vmem:[#allocation2 + $0x230] sm:$0xff] %v984
    %1113 = vst [vmem:[#allocation2 + $0x238] sm:$0xff] %v985
    %1114 = vst [vmem:[#allocation2 + $0x240] sm:$0xff] %v986
    %1115 = vst [vmem:[#allocation2 + $0x248] sm:$0xff] %v987
    %1116 = vst [vmem:[#allocation2 + $0x250] sm:$0xff] %v988
    %1117 = vst [vmem:[#allocation2 + $0x258] sm:$0xff] %v989
    %1118 = vst [vmem:[#allocation2 + $0x260] sm:$0xff] %v990
    %1119 = vst [vmem:[#allocation2 + $0x268] sm:$0xff] %v991
    %1120 = vst [vmem:[#allocation2 + $0x270] sm:$0xff] %v992
    %1121 = vst [vmem:[#allocation2 + $0x278] sm:$0xff] %v993
    %1122 = vst [vmem:[#allocation2 + $0x280] sm:$0xff] %v994
    %1123 = vst [vmem:[#allocation2 + $0x288] sm:$0xff] %v995
    %1124 = vst [vmem:[#allocation2 + $0x290] sm:$0xff] %v996
    %1125 = vst [vmem:[#allocation2 + $0x298] sm:$0xff] %v997
    %1126 = vst [vmem:[#allocation2 + $0x2a0] sm:$0xff] %v998
    %1127 = vst [vmem:[#allocation2 + $0x2a8] sm:$0xff] %v999
    %1128 = vst [vmem:[#allocation2 + $0x2b0] sm:$0xff] %v1000
    %1129 = vst [vmem:[#allocation2 + $0x2b8] sm:$0xff] %v1001
    %1130 = vst [vmem:[#allocation2 + $0x2c0] sm:$0xff] %v1002
    %1131 = vst [vmem:[#allocation2 + $0x2c8] sm:$0xff] %v1003
    %1132 = vst [vmem:[#allocation2 + $0x2d0] sm:$0xff] %v1004
    %1133 = vst [vmem:[#allocation2 + $0x2d8] sm:$0xff] %v1005
    %1134 = vst [vmem:[#allocation2 + $0x2e0] sm:$0xff] %v1006
    %1135 = vst [vmem:[#allocation2 + $0x2e8] sm:$0xff] %v1007
    %1136 = vst [vmem:[#allocation2 + $0x2f0] sm:$0xff] %v1008
    %1137 = vst [vmem:[#allocation2 + $0x2f8] sm:$0xff] %v1009
    %1138 = vst [vmem:[#allocation2 + $0x300] sm:$0xff] %v1010
    %1139 = vst [vmem:[#allocation2 + $0x308] sm:$0xff] %v1011
    %1140 = vst [vmem:[#allocation2 + $0x310] sm:$0xff] %v1012
    %1141 = vst [vmem:[#allocation2 + $0x318] sm:$0xff] %v1013
    %1142 = vst [vmem:[#allocation2 + $0x320] sm:$0xff] %v1014
    %1143 = vst [vmem:[#allocation2 + $0x328] sm:$0xff] %v1015
    %1144 = vst [vmem:[#allocation2 + $0x330] sm:$0xff] %v1016
    %1145 = vst [vmem:[#allocation2 + $0x338] sm:$0xff] %v1017
    %1146 = vst [vmem:[#allocation2 + $0x340] sm:$0xff] %v1018
    %1147 = vst [vmem:[#allocation2 + $0x348] sm:$0xff] %v1019
    %1148 = vst [vmem:[#allocation2 + $0x350] sm:$0xff] %v1020
    %1149 = vst [vmem:[#allocation2 + $0x358] sm:$0xff] %v1021
    %1150 = vst [vmem:[#allocation2 + $0x360] sm:$0xff] %v1022
    %1151 = vst [vmem:[#allocation2 + $0x368] sm:$0xff] %v1023
    %1152 = vst [vmem:[#allocation2 + $0x370] sm:$0xff] %v1024
    %1153 = vst [vmem:[#allocation2 + $0x378] sm:$0xff] %v1025
    %1154 = vst [vmem:[#allocation2 + $0x380] sm:$0xff] %v1026
    %1155 = vst [vmem:[#allocation2 + $0x388] sm:$0xff] %v1027
    %1156 = vst [vmem:[#allocation2 + $0x390] sm:$0xff] %v1028
    %1157 = vst [vmem:[#allocation2 + $0x398] sm:$0xff] %v1029
    %1158 = vst [vmem:[#allocation2 + $0x3a0] sm:$0xff] %v1030
    %1159 = vst [vmem:[#allocation2 + $0x3a8] sm:$0xff] %v1031
    %1160 = vst [vmem:[#allocation2 + $0x3b0] sm:$0xff] %v1032
    %1161 = vst [vmem:[#allocation2 + $0x3b8] sm:$0xff] %v1033
    %1162 = vst [vmem:[#allocation2 + $0x3c0] sm:$0xff] %v1034
    %1163 = vst [vmem:[#allocation2 + $0x3c8] sm:$0xff] %v1035
    %1164 = vst [vmem:[#allocation2 + $0x3d0] sm:$0xff] %v1036
    %1165 = vst [vmem:[#allocation2 + $0x3d8] sm:$0xff] %v1037
    %1166 = vst [vmem:[#allocation2 + $0x3e0] sm:$0xff] %v1038
    %1167 = vst [vmem:[#allocation2 + $0x3e8] sm:$0xff] %v1039
    %1168 = vst [vmem:[#allocation2 + $0x3f0] sm:$0xff] %v1040
    %1169 = vst [vmem:[#allocation2 + $0x3f8] sm:$0xff] %v1041
    // Predicated region
    $region18: #{detection2d_forward.17} parent=1 // pred_check
      _
    $region19: #{detection2d_forward.17} parent=1 // pred_check_branch
      %1171 = sbr.rel (0) target = $region21
    $region20: #{detection2d_forward.17} parent=1 // pred_region
      %s1173 = ssub.s32 16384, 16384
      %1174 = vsyncadd [#allocation3], %s1173
      %s1175 = sshll.u32 [#allocation2], 4
      %s1176 = int_to_ptr.vmem [resolvable:$true] %s1175
      %1181 = dma.vmem_to_hbm [thread:$0]  %s1176, 16384, %s4, [#allocation3], 1024, 1024, 64
    $region21: #{detection2d_forward.17} parent=1 // pred_fallthru
      _
    // Predicated region
    $region22: #{detection2d_forward.17} parent=1 // pred_check
      _
    $region23: #{detection2d_forward.17} parent=1 // pred_check_branch
      %1183 = sbr.rel (0) target = $region25
    $region24: #{detection2d_forward.17} parent=1 // pred_region
      %1184 = dma.done [#allocation3], 16384
    $region25: #{detection2d_forward.17} parent=1 // pred_fallthru
      _
    %1185 = vsyncpa [#allocation3], 1

</llo_original>
